<compile_context>
chip_gen: v7x
topology: tpu7x:2x2x1
jax: 0.10.0
libtpu: 0.0.40
codegen_flags: <defaults>
</compile_context>

<pallas_src>
import math

import jax
import jax.numpy as jnp
from jax import lax
from jax.experimental import pallas as pl
from jax.experimental.pallas import tpu as pltpu

COUT = 10                              # backbone output channels (max mapping idx + 1)
BOUNDARY_CHANNELS = (0, 1, 5, 6, 7)    # turbulence, bottom, surface, turb-orig, bottom-orig
PATCH_CHANNELS = (4, 8, 9)             # patch, patch-original, patch-ntob
CH_REMOVED = 2
CH_PASSIVE = 3
NB = len(BOUNDARY_CHANNELS)
NP = len(PATCH_CHANNELS)

# Default Echofilter mapping with top='boundary', bottom='boundary',
# including the ('top', 'turbulence') aliases.
MAPPING = {
    "logit_is_boundary_turbulence": 0,
    "logit_is_boundary_bottom": 1,
    "logit_is_removed": 2,
    "logit_is_passive": 3,
    "logit_is_patch": 4,
    "logit_is_boundary_surface": 5,
    "logit_is_boundary_turbulence-original": 6,
    "logit_is_boundary_bottom-original": 7,
    "logit_is_patch-original": 8,
    "logit_is_patch-ntob": 9,
    # aliases (turbulence <-> top)
    "logit_is_boundary_top": 0,
    "logit_is_boundary_top-original": 6,
}
BOUNDARY_SFX = ("turbulence", "bottom", "surface",
                "turbulence-original", "bottom-original")
PATCH_SFX = ("", "-original", "-ntob")


def _echofilter_kernel(w_ref, b_ref, x_ref, mfwd_ref,
                       logits_ref, pbnd_ref, pabove_ref, pbelow_ref, ppatch_ref,
                       reduced_ref, pkeep_ref, mask_ref, p_sc):
    f32 = jnp.float32
    cin, tile_t, d = x_ref.shape

    # Hoist input-plane loads: 10 channel convs reuse 3 loads instead of 30.
    xs = [x_ref[ci] for ci in range(cin)]

    def conv_channel(co):
        # 1x1 conv (channel mixing); scalar weights live in SMEM (scalar prefetch).
        acc = xs[0] * w_ref[co * cin]
        for ci in range(1, cin):
            acc = acc + xs[ci] * w_ref[co * cin + ci]
        return acc + b_ref[co]

    def sigmoid(v):
        # tanh formulation: transcendental on the EUP, no full-plane divide.
        return 0.5 * (jnp.tanh(0.5 * v) + 1.0)

    # ---- boundary channels: conv -> softmax ----------------------------------
    # p kept in an f32 VMEM scratch (full precision for the MXU cumsum matmul)
    # while the pbnd output plane is stored directly in bf16.
    for i, ch in enumerate(BOUNDARY_CHANNELS):
        lg = conv_channel(ch)
        logits_ref[ch] = lg
        mx = jnp.max(lg, axis=-1, keepdims=True)
        e = jnp.exp(lg - mx)
        s = jnp.sum(e, axis=-1, keepdims=True)
        p = e * pl.reciprocal(s, approx=True)          # divide on EUP, bcast mul
        p_sc[pl.ds(i * tile_t, tile_t), :] = p
        pbnd_ref[i] = p.astype(pbnd_ref.dtype)

    # One batched MXU matmul for all 5 forward cumsums (f32 inputs).
    p_cat = p_sc[...]                                                  # (5*tile_t, D)
    below = jnp.dot(p_cat, mfwd_ref[...], preferred_element_type=f32)  # (5*tile_t, D)
    pbelow_ref[...] = (jnp.clip(below, 0.0, 1.0)
                       .reshape(NB, tile_t, d).astype(pbelow_ref.dtype))
    # reversed cumsum: above[d] = sum_{k>=d} p[k] = 1 - below[d] + p[d]
    above = 1.0 - below + p_cat
    pabove_ref[...] = (jnp.clip(above, 0.0, 1.0)
                       .reshape(NB, tile_t, d).astype(pabove_ref.dtype))

    # ---- patch channels: conv -> sigmoid --------------------------------------
    for i, ch in enumerate(PATCH_CHANNELS):
        lg = conv_channel(ch)
        logits_ref[ch] = lg
        ppatch_ref[i] = sigmoid(lg).astype(ppatch_ref.dtype)

    # ---- removed / passive: conv -> logavgexp over depth -> sigmoid -----------
    log_d = jnp.float32(math.log(d))

    def logavgexp(v):
        mx = jnp.max(v, axis=-1, keepdims=True)
        s = jnp.sum(jnp.exp(v - mx), axis=-1, keepdims=True)
        return mx + jnp.log(s) - log_d

    lg_rem = conv_channel(CH_REMOVED)
    logits_ref[CH_REMOVED] = lg_rem
    lg_pas = conv_channel(CH_PASSIVE)
    logits_ref[CH_PASSIVE] = lg_pas
    lrem = logavgexp(lg_rem)               # (tile_t, 1)
    lpas = logavgexp(lg_pas)
    prem = sigmoid(lrem)
    ppas = sigmoid(lpas)

    # Pack the 4 depth-reduced quantities into one (tile_t, 4) output block
    # (single small output DMA); lane-iota select avoids a minor-dim concat.
    col = lax.broadcasted_iota(jnp.int32, (tile_t, 4), 1)
    reduced_ref[...] = jnp.where(
        col == 0, lrem,
        jnp.where(col == 1, lpas,
                  jnp.where(col == 2, prem, ppas)))

    # ---- epilogue: p_keep_pixel and mask_keep_pixel ----------------------------
    # Re-read the needed planes from the already-written output refs instead of
    # keeping 5 full planes live across the patch / logavgexp sections.
    above_turb = pabove_ref[0].astype(f32)
    below_turb = pbelow_ref[0].astype(f32)
    above_bot = pabove_ref[1].astype(f32)
    below_bot = pbelow_ref[1].astype(f32)
    p_patch0 = ppatch_ref[0].astype(f32)

    rp = (1.0 - prem) * (1.0 - ppas)                   # (tile_t, 1)
    pkeep = (0.25
             * (1.0 - above_turb + below_turb)
             * (1.0 - below_bot + above_bot)
             * (1.0 - p_patch0)) * rp
    pkeep_ref[...] = jnp.clip(pkeep, 0.0, 1.0).astype(pkeep_ref.dtype)

    rp_keep = jnp.logical_and(prem < 0.5, ppas < 0.5)  # (tile_t, 1)
    keep = jnp.logical_and(
        jnp.logical_and(above_turb < 0.5, below_bot < 0.5), p_patch0 < 0.5)
    mask_ref[...] = jnp.logical_and(keep, rp_keep).astype(mask_ref.dtype)


def _round_up(x, m):
    return -(-x // m) * m


def _round_down(x, m):
    return (x // m) * m


def _pick_tile_t(B, T, D):
    """Generation-aware T-tile: multiple of 32 (native sublane tiling for the
    bf16/int8 output planes), sized for VMEM, with >= 4 grid steps when possible."""
    try:
        vmem_cap = int(getattr(pltpu.get_tpu_info(), "vmem_capacity_bytes",
                               128 * 1024 * 1024))
    except Exception:
        vmem_cap = 128 * 1024 * 1024
    small_vmem = vmem_cap <= 64 * 1024 * 1024            # v7x-class 64 MiB part
    vmem_limit = (32 if small_vmem else 64) * 1024 * 1024
    cap = 256 if small_vmem else 512
    # ~90 live f32-equivalent rows of width D per tile row (double-buffered
    # I/O + scratch + intermediates); keep footprint well under the limit.
    per_row = 90 * D * 4
    cap = min(cap, max(32, _round_down((vmem_limit // 2) // per_row, 32)))
    tile = min(cap, _round_up(T, 32))
    # Guarantee >= 4 grid steps so each TensorCore gets a pipelined stream.
    while tile > 32 and B * (-(-T // tile)) < 4:
        tile = max(32, _round_down(tile // 2, 32))
    return tile, vmem_limit


def echofilter_forward(x, w, b):
    """x: [B, Cin, T, D] f32, w: [COUT, Cin], b: [COUT].  Returns output dict."""
    B, Cin, T, D = x.shape
    f32 = jnp.float32
    bf16 = jnp.bfloat16
    tile_t, vmem_limit = _pick_tile_t(B, T, D)
    n_t = -(-T // tile_t)
    T_pad = n_t * tile_t
    xp = x if T_pad == T else jnp.pad(x, ((0, 0), (0, 0), (0, T_pad - T), (0, 0)))

    w_flat = w.reshape(-1).astype(f32)            # (COUT*Cin,) scalar prefetch -> SMEM
    b_flat = b.astype(f32)                        # (COUT,)     scalar prefetch -> SMEM
    m_fwd = jnp.triu(jnp.ones((D, D), f32))       # cumsum matrix, resident in VMEM

    out_shape = (
        jax.ShapeDtypeStruct((COUT, B, T_pad, D), f32),    # logits (channel-major)
        jax.ShapeDtypeStruct((NB, B, T_pad, D), bf16),     # p_is_boundary_*
        jax.ShapeDtypeStruct((NB, B, T_pad, D), bf16),     # p_is_above_*
        jax.ShapeDtypeStruct((NB, B, T_pad, D), bf16),     # p_is_below_*
        jax.ShapeDtypeStruct((NP, B, T_pad, D), bf16),     # p_is_patch*
        jax.ShapeDtypeStruct((B, T_pad, 4), f32),          # [lrem, lpas, prem, ppas]
        jax.ShapeDtypeStruct((B, T_pad, D), bf16),         # p_keep_pixel
        jax.ShapeDtypeStruct((B, T_pad, D), jnp.int8),     # mask_keep_pixel
    )

    in_specs = [
        pl.BlockSpec((None, Cin, tile_t, D), lambda bi, ti, wf, bf: (bi, 0, ti, 0)),
        pl.BlockSpec((D, D), lambda bi, ti, wf, bf: (0, 0)),      # resident
    ]
    out_specs = [
        pl.BlockSpec((COUT, None, tile_t, D), lambda bi, ti, wf, bf: (0, bi, ti, 0)),
        pl.BlockSpec((NB, None, tile_t, D), lambda bi, ti, wf, bf: (0, bi, ti, 0)),
        pl.BlockSpec((NB, None, tile_t, D), lambda bi, ti, wf, bf: (0, bi, ti, 0)),
        pl.BlockSpec((NB, None, tile_t, D), lambda bi, ti, wf, bf: (0, bi, ti, 0)),
        pl.BlockSpec((NP, None, tile_t, D), lambda bi, ti, wf, bf: (0, bi, ti, 0)),
        pl.BlockSpec((None, tile_t, 4), lambda bi, ti, wf, bf: (bi, ti, 0)),
        pl.BlockSpec((None, tile_t, D), lambda bi, ti, wf, bf: (bi, ti, 0)),
        pl.BlockSpec((None, tile_t, D), lambda bi, ti, wf, bf: (bi, ti, 0)),
    ]

    # Advisory cost estimate: write-heavy elementwise kernel + one small matmul.
    R = B * T_pad
    flops = int(2 * COUT * Cin * R * D + 2 * NB * R * D * D + 40 * R * D)
    transcendentals = int(9 * R * D)
    bytes_out = sum(math.prod(s.shape) * jnp.dtype(s.dtype).itemsize
                    for s in out_shape)
    bytes_accessed = int(xp.size * 4 + D * D * 4 + bytes_out)

    outs = pl.pallas_call(
        _echofilter_kernel,
        out_shape=out_shape,
        grid_spec=pltpu.PrefetchScalarGridSpec(
            num_scalar_prefetch=2,                  # w_flat, b -> SMEM
            grid=(B, n_t),
            in_specs=in_specs,
            out_specs=out_specs,
            scratch_shapes=[pltpu.VMEM((NB * tile_t, D), f32)],
        ),
        compiler_params=pltpu.CompilerParams(
            dimension_semantics=("parallel", "parallel"),
            vmem_limit_bytes=vmem_limit,
        ),
        cost_estimate=pl.CostEstimate(
            flops=flops, transcendentals=transcendentals,
            bytes_accessed=bytes_accessed),
    )(w_flat, b_flat, xp, m_fwd)

    (logits_cm, pbnd, pabove, pbelow, ppatch, reduced, pkeep, mask) = outs
    if T_pad != T:
        logits_cm = logits_cm[:, :, :T]
        pbnd, pabove, pbelow = pbnd[:, :, :T], pabove[:, :, :T], pbelow[:, :, :T]
        ppatch = ppatch[:, :, :T]
        reduced, pkeep, mask = reduced[:, :T], pkeep[:, :T], mask[:, :T]

    outputs = {}
    for key, ch in MAPPING.items():
        outputs[key] = logits_cm[ch]                  # (B, T, D) f32
    # depth-reduced logits overwrite the raw slices (as in the torch forward)
    outputs["logit_is_removed"] = reduced[..., 0]     # (B, T) f32
    outputs["logit_is_passive"] = reduced[..., 1]
    outputs["p_is_removed"] = reduced[..., 2]
    outputs["p_is_passive"] = reduced[..., 3]
    for i, sfx in enumerate(BOUNDARY_SFX):
        outputs["p_is_boundary_" + sfx] = pbnd[i]     # bf16
        outputs["p_is_above_" + sfx] = pabove[i]
        outputs["p_is_below_" + sfx] = pbelow[i]
    for i, sfx in enumerate(PATCH_SFX):
        outputs["p_is_patch" + sfx] = ppatch[i]
    outputs["p_keep_pixel"] = pkeep                   # bf16
    outputs["mask_keep_pixel"] = mask                 # int8 {0,1}
    return outputs


def reference_forward(x, w, b):
    """Pure-JAX reference (mirrors the PyTorch Echofilter.forward)."""
    logits = jnp.einsum("oc,bctd->botd", w, x) + b[None, :, None, None]
    out = {}
    for key, ch in MAPPING.items():
        out[key] = logits[:, ch]
    lae = lambda v: jax.scipy.special.logsumexp(v, axis=-1) - jnp.log(float(v.shape[-1]))
    out["logit_is_removed"] = lae(logits[:, CH_REMOVED])
    out["logit_is_passive"] = lae(logits[:, CH_PASSIVE])
    out["p_is_removed"] = jax.nn.sigmoid(out["logit_is_removed"])
    out["p_is_passive"] = jax.nn.sigmoid(out["logit_is_passive"])
    for sfx, ch in zip(BOUNDARY_SFX, BOUNDARY_CHANNELS):
        p = jax.nn.softmax(logits[:, ch], axis=-1)
        out["p_is_boundary_" + sfx] = p
        out["p_is_below_" + sfx] = jnp.clip(jnp.cumsum(p, axis=-1), 0.0, 1.0)
        out["p_is_above_" + sfx] = jnp.clip(
            jnp.flip(jnp.cumsum(jnp.flip(p, -1), axis=-1), -1), 0.0, 1.0)
    for sfx, ch in zip(PATCH_SFX, PATCH_CHANNELS):
        out["p_is_patch" + sfx] = jax.nn.sigmoid(logits[:, ch])
    out["p_keep_pixel"] = jnp.clip(
        0.5 * (1 - out["p_is_above_turbulence"] + out["p_is_below_turbulence"])
        * 0.5 * (1 - out["p_is_below_bottom"] + out["p_is_above_bottom"])
        * (1 - out["p_is_removed"][..., None])
        * (1 - out["p_is_passive"][..., None])
        * (1 - out["p_is_patch"]), 0.0, 1.0)
    out["mask_keep_pixel"] = (1.0
        * (out["p_is_above_turbulence"] < 0.5)
        * (out["p_is_below_bottom"] < 0.5)
        * (out["p_is_removed"][..., None] < 0.5)
        * (out["p_is_passive"][..., None] < 0.5)
        * (out["p_is_patch"] < 0.5))
    return out


if __name__ == "__main__":
    # batch, input channels, timestamps, depths.  With B=2, T=256 and the
    # grid-step policy the kernel runs a (2, 2) grid -> 4 pipelined steps.
    B, Cin, T, D = 2, 3, 256, 128
    key = jax.random.PRNGKey(0)
    kx, kw, kb = jax.random.split(key, 3)
    x = jax.random.normal(kx, (B, Cin, T, D), dtype=jnp.float32)
    # deterministic synthetic backbone params (1x1 conv: Cin -> COUT channels)
    w = 0.5 * jax.random.normal(kw, (COUT, Cin), dtype=jnp.float32)
    b = 0.1 * jax.random.normal(kb, (COUT,), dtype=jnp.float32)

    outputs = echofilter_forward(x, w, b)
    jax.block_until_ready(outputs)

    ref = reference_forward(x, w, b)

    # Pixels whose hard-threshold (0.5) decision is numerically ambiguous may
    # legitimately flip under fp reordering / bf16 rounding; exclude them.
    decided = ((jnp.abs(ref["p_is_above_turbulence"] - 0.5) > 1e-2)
               & (jnp.abs(ref["p_is_below_bottom"] - 0.5) > 1e-2)
               & (jnp.abs(ref["p_is_patch"] - 0.5) > 1e-2)
               & (jnp.abs(ref["p_is_removed"][..., None] - 0.5) > 1e-2)
               & (jnp.abs(ref["p_is_passive"][..., None] - 0.5) > 1e-2)
               ).astype(jnp.float32)

    def tol_for(k):
        # f32 outputs (logits, depth-reduced logits/probs)
        if k.startswith("logit_") or k in ("p_is_removed", "p_is_passive"):
            return 1e-3
        # product of several bf16-stored planes
        if k == "p_keep_pixel":
            return 2.5e-2
        # bf16 probability planes
        return 1e-2

    for k in ref:
        got = jnp.asarray(outputs[k], jnp.float32)
        assert got.shape == ref[k].shape, (k, got.shape, ref[k].shape)
        err = jnp.abs(got - ref[k])
        if k == "mask_keep_pixel":
            err = err * decided
            tol = 0.5
        else:
            tol = tol_for(k)
        err = float(jnp.max(err))
        assert err < tol, (k, err, tol)

    print("KERNEL_OK")
</pallas_src>

<mosaic_0001>
module attributes {stable_mosaic.version = 11 : i64} {
  func.func @_echofilter_kernel(%arg0: i32, %arg1: i32, %arg2: memref<30xf32, #tpu.memory_space<smem>>, %arg3: memref<10xf32, #tpu.memory_space<smem>>, %arg4: memref<1x3x128x128xf32, #tpu.memory_space<vmem>>, %arg5: memref<128x128xf32, #tpu.memory_space<vmem>>, %arg6: memref<10x1x128x128xf32, #tpu.memory_space<vmem>>, %arg7: memref<5x1x128x128xbf16, #tpu.memory_space<vmem>>, %arg8: memref<5x1x128x128xbf16, #tpu.memory_space<vmem>>, %arg9: memref<5x1x128x128xbf16, #tpu.memory_space<vmem>>, %arg10: memref<3x1x128x128xbf16, #tpu.memory_space<vmem>>, %arg11: memref<1x128x4xf32, #tpu.memory_space<vmem>>, %arg12: memref<1x128x128xbf16, #tpu.memory_space<vmem>>, %arg13: memref<1x128x128xi8, #tpu.memory_space<vmem>>, %arg14: memref<640x128xf32, #tpu.memory_space<vmem>>) attributes {dimension_semantics = [#tpu.dimension_semantics<parallel>, #tpu.dimension_semantics<parallel>], iteration_bounds = array<i64: 2, 2>, scalar_prefetch = 2 : i64, scratch_operands = 1 : i64, tpu.core_type = #tpu.core_type<tc>, window_params = [{transform_indices = @transform_0, window_bounds = array<i64: 1, 3, 128, 128>}, {pipeline_mode = #tpu.pipeline_mode<synchronous>, transform_indices = @transform_1, window_bounds = array<i64: 128, 128>}, {transform_indices = @transform_2, window_bounds = array<i64: 10, 1, 128, 128>}, {transform_indices = @transform_3, window_bounds = array<i64: 5, 1, 128, 128>}, {transform_indices = @transform_4, window_bounds = array<i64: 5, 1, 128, 128>}, {transform_indices = @transform_5, window_bounds = array<i64: 5, 1, 128, 128>}, {transform_indices = @transform_6, window_bounds = array<i64: 3, 1, 128, 128>}, {transform_indices = @transform_7, window_bounds = array<i64: 1, 128, 4>}, {transform_indices = @transform_8, window_bounds = array<i64: 1, 128, 128>}, {transform_indices = @transform_9, window_bounds = array<i64: 1, 128, 128>}]} {
    %c0 = arith.constant 0 : index
    %c0_0 = arith.constant 0 : index
    %c0_1 = arith.constant 0 : index
    %c0_2 = arith.constant 0 : index
    %0 = vector.load %arg4[%c0, %c0_0, %c0_1, %c0_2] : memref<1x3x128x128xf32, #tpu.memory_space<vmem>>, vector<1x1x128x128xf32>
    %1 = vector.shape_cast %0 : vector<1x1x128x128xf32> to vector<128x128xf32>
    %c0_3 = arith.constant 0 : index
    %c1 = arith.constant 1 : index
    %c0_4 = arith.constant 0 : index
    %c0_5 = arith.constant 0 : index
    %2 = vector.load %arg4[%c0_3, %c1, %c0_4, %c0_5] : memref<1x3x128x128xf32, #tpu.memory_space<vmem>>, vector<1x1x128x128xf32>
    %3 = vector.shape_cast %2 : vector<1x1x128x128xf32> to vector<128x128xf32>
    %c0_6 = arith.constant 0 : index
    %c2 = arith.constant 2 : index
    %c0_7 = arith.constant 0 : index
    %c0_8 = arith.constant 0 : index
    %4 = vector.load %arg4[%c0_6, %c2, %c0_7, %c0_8] : memref<1x3x128x128xf32, #tpu.memory_space<vmem>>, vector<1x1x128x128xf32>
    %5 = vector.shape_cast %4 : vector<1x1x128x128xf32> to vector<128x128xf32>
    %c0_9 = arith.constant 0 : index
    %6 = memref.load %arg2[%c0_9] : memref<30xf32, #tpu.memory_space<smem>>
    %7 = vector.broadcast %6 : f32 to vector<128x128xf32>
    %8 = arith.mulf %1, %7 : vector<128x128xf32>
    %c1_10 = arith.constant 1 : index
    %9 = memref.load %arg2[%c1_10] : memref<30xf32, #tpu.memory_space<smem>>
    %10 = vector.broadcast %9 : f32 to vector<128x128xf32>
    %11 = arith.mulf %3, %10 : vector<128x128xf32>
    %12 = arith.addf %8, %11 : vector<128x128xf32>
    %c2_11 = arith.constant 2 : index
    %13 = memref.load %arg2[%c2_11] : memref<30xf32, #tpu.memory_space<smem>>
    %14 = vector.broadcast %13 : f32 to vector<128x128xf32>
    %15 = arith.mulf %5, %14 : vector<128x128xf32>
    %16 = arith.addf %12, %15 : vector<128x128xf32>
    %c0_12 = arith.constant 0 : index
    %17 = memref.load %arg3[%c0_12] : memref<10xf32, #tpu.memory_space<smem>>
    %18 = vector.broadcast %17 : f32 to vector<128x128xf32>
    %19 = arith.addf %16, %18 : vector<128x128xf32>
    %c0_13 = arith.constant 0 : index
    %c0_14 = arith.constant 0 : index
    %c0_15 = arith.constant 0 : index
    %c0_16 = arith.constant 0 : index
    %20 = vector.load %arg6[%c0_13, %c0_14, %c0_15, %c0_16] : memref<10x1x128x128xf32, #tpu.memory_space<vmem>>, vector<1x1x128x128xf32>
    %21 = vector.shape_cast %20 : vector<1x1x128x128xf32> to vector<128x128xf32>
    %22 = vector.shape_cast %19 : vector<128x128xf32> to vector<1x1x128x128xf32>
    tpu.vector_store %arg6[%c0_13, %c0_14, %c0_15, %c0_16], %22 {strides = array<i32>} : memref<10x1x128x128xf32, #tpu.memory_space<vmem>>, vector<1x1x128x128xf32>,
    %cst = arith.constant dense<0xFF800000> : vector<128xf32>
    %23 = vector.multi_reduction <maximumf>, %19, %cst [1] : vector<128x128xf32> to vector<128xf32>
    %24 = vector.shape_cast %23 : vector<128xf32> to vector<128x1xf32>
    %25 = vector.broadcast %24 : vector<128x1xf32> to vector<128x128xf32>
    %26 = arith.subf %19, %25 : vector<128x128xf32>
    %27 = math.exp %26 : vector<128x128xf32>
    %cst_17 = arith.constant dense<0.000000e+00> : vector<128xf32>
    %28 = vector.multi_reduction <add>, %27, %cst_17 [1] : vector<128x128xf32> to vector<128xf32>
    %29 = vector.shape_cast %28 : vector<128xf32> to vector<128x1xf32>
    %30 = tpu.reciprocal %29 {approx = true} : vector<128x1xf32> -> vector<128x1xf32>
    %31 = vector.broadcast %30 : vector<128x1xf32> to vector<128x128xf32>
    %32 = arith.mulf %27, %31 : vector<128x128xf32>
    %c0_18 = arith.constant 0 : index
    %c0_19 = arith.constant 0 : index
    %33 = vector.load %arg14[%c0_18, %c0_19] : memref<640x128xf32, #tpu.memory_space<vmem>>, vector<128x128xf32>
    tpu.vector_store %arg14[%c0_18, %c0_19], %32 {strides = array<i32>} : memref<640x128xf32, #tpu.memory_space<vmem>>, vector<128x128xf32>,
    %34 = arith.truncf %32 : vector<128x128xf32> to vector<128x128xbf16>
    %c0_20 = arith.constant 0 : index
    %c0_21 = arith.constant 0 : index
    %c0_22 = arith.constant 0 : index
    %c0_23 = arith.constant 0 : index
    %35 = vector.load %arg7[%c0_20, %c0_21, %c0_22, %c0_23] : memref<5x1x128x128xbf16, #tpu.memory_space<vmem>>, vector<1x1x128x128xbf16>
    %36 = vector.shape_cast %35 : vector<1x1x128x128xbf16> to vector<128x128xbf16>
    %37 = vector.shape_cast %34 : vector<128x128xbf16> to vector<1x1x128x128xbf16>
    tpu.vector_store %arg7[%c0_20, %c0_21, %c0_22, %c0_23], %37 {strides = array<i32>} : memref<5x1x128x128xbf16, #tpu.memory_space<vmem>>, vector<1x1x128x128xbf16>,
    %c3 = arith.constant 3 : index
    %38 = memref.load %arg2[%c3] : memref<30xf32, #tpu.memory_space<smem>>
    %39 = vector.broadcast %38 : f32 to vector<128x128xf32>
    %40 = arith.mulf %1, %39 : vector<128x128xf32>
    %c4 = arith.constant 4 : index
    %41 = memref.load %arg2[%c4] : memref<30xf32, #tpu.memory_space<smem>>
    %42 = vector.broadcast %41 : f32 to vector<128x128xf32>
    %43 = arith.mulf %3, %42 : vector<128x128xf32>
    %44 = arith.addf %40, %43 : vector<128x128xf32>
    %c5 = arith.constant 5 : index
    %45 = memref.load %arg2[%c5] : memref<30xf32, #tpu.memory_space<smem>>
    %46 = vector.broadcast %45 : f32 to vector<128x128xf32>
    %47 = arith.mulf %5, %46 : vector<128x128xf32>
    %48 = arith.addf %44, %47 : vector<128x128xf32>
    %c1_24 = arith.constant 1 : index
    %49 = memref.load %arg3[%c1_24] : memref<10xf32, #tpu.memory_space<smem>>
    %50 = vector.broadcast %49 : f32 to vector<128x128xf32>
    %51 = arith.addf %48, %50 : vector<128x128xf32>
    %c1_25 = arith.constant 1 : index
    %c0_26 = arith.constant 0 : index
    %c0_27 = arith.constant 0 : index
    %c0_28 = arith.constant 0 : index
    %52 = vector.load %arg6[%c1_25, %c0_26, %c0_27, %c0_28] : memref<10x1x128x128xf32, #tpu.memory_space<vmem>>, vector<1x1x128x128xf32>
    %53 = vector.shape_cast %52 : vector<1x1x128x128xf32> to vector<128x128xf32>
    %54 = vector.shape_cast %51 : vector<128x128xf32> to vector<1x1x128x128xf32>
    tpu.vector_store %arg6[%c1_25, %c0_26, %c0_27, %c0_28], %54 {strides = array<i32>} : memref<10x1x128x128xf32, #tpu.memory_space<vmem>>, vector<1x1x128x128xf32>,
    %cst_29 = arith.constant dense<0xFF800000> : vector<128xf32>
    %55 = vector.multi_reduction <maximumf>, %51, %cst_29 [1] : vector<128x128xf32> to vector<128xf32>
    %56 = vector.shape_cast %55 : vector<128xf32> to vector<128x1xf32>
    %57 = vector.broadcast %56 : vector<128x1xf32> to vector<128x128xf32>
    %58 = arith.subf %51, %57 : vector<128x128xf32>
    %59 = math.exp %58 : vector<128x128xf32>
    %cst_30 = arith.constant dense<0.000000e+00> : vector<128xf32>
    %60 = vector.multi_reduction <add>, %59, %cst_30 [1] : vector<128x128xf32> to vector<128xf32>
    %61 = vector.shape_cast %60 : vector<128xf32> to vector<128x1xf32>
    %62 = tpu.reciprocal %61 {approx = true} : vector<128x1xf32> -> vector<128x1xf32>
    %63 = vector.broadcast %62 : vector<128x1xf32> to vector<128x128xf32>
    %64 = arith.mulf %59, %63 : vector<128x128xf32>
    %c128 = arith.constant 128 : index
    %c0_31 = arith.constant 0 : index
    %65 = vector.load %arg14[%c128, %c0_31] : memref<640x128xf32, #tpu.memory_space<vmem>>, vector<128x128xf32>
    tpu.vector_store %arg14[%c128, %c0_31], %64 {strides = array<i32>} : memref<640x128xf32, #tpu.memory_space<vmem>>, vector<128x128xf32>,
    %66 = arith.truncf %64 : vector<128x128xf32> to vector<128x128xbf16>
    %c1_32 = arith.constant 1 : index
    %c0_33 = arith.constant 0 : index
    %c0_34 = arith.constant 0 : index
    %c0_35 = arith.constant 0 : index
    %67 = vector.load %arg7[%c1_32, %c0_33, %c0_34, %c0_35] : memref<5x1x128x128xbf16, #tpu.memory_space<vmem>>, vector<1x1x128x128xbf16>
    %68 = vector.shape_cast %67 : vector<1x1x128x128xbf16> to vector<128x128xbf16>
    %69 = vector.shape_cast %66 : vector<128x128xbf16> to vector<1x1x128x128xbf16>
    tpu.vector_store %arg7[%c1_32, %c0_33, %c0_34, %c0_35], %69 {strides = array<i32>} : memref<5x1x128x128xbf16, #tpu.memory_space<vmem>>, vector<1x1x128x128xbf16>,
    %c15 = arith.constant 15 : index
    %70 = memref.load %arg2[%c15] : memref<30xf32, #tpu.memory_space<smem>>
    %71 = vector.broadcast %70 : f32 to vector<128x128xf32>
    %72 = arith.mulf %1, %71 : vector<128x128xf32>
    %c16 = arith.constant 16 : index
    %73 = memref.load %arg2[%c16] : memref<30xf32, #tpu.memory_space<smem>>
    %74 = vector.broadcast %73 : f32 to vector<128x128xf32>
    %75 = arith.mulf %3, %74 : vector<128x128xf32>
    %76 = arith.addf %72, %75 : vector<128x128xf32>
    %c17 = arith.constant 17 : index
    %77 = memref.load %arg2[%c17] : memref<30xf32, #tpu.memory_space<smem>>
    %78 = vector.broadcast %77 : f32 to vector<128x128xf32>
    %79 = arith.mulf %5, %78 : vector<128x128xf32>
    %80 = arith.addf %76, %79 : vector<128x128xf32>
    %c5_36 = arith.constant 5 : index
    %81 = memref.load %arg3[%c5_36] : memref<10xf32, #tpu.memory_space<smem>>
    %82 = vector.broadcast %81 : f32 to vector<128x128xf32>
    %83 = arith.addf %80, %82 : vector<128x128xf32>
    %c5_37 = arith.constant 5 : index
    %c0_38 = arith.constant 0 : index
    %c0_39 = arith.constant 0 : index
    %c0_40 = arith.constant 0 : index
    %84 = vector.load %arg6[%c5_37, %c0_38, %c0_39, %c0_40] : memref<10x1x128x128xf32, #tpu.memory_space<vmem>>, vector<1x1x128x128xf32>
    %85 = vector.shape_cast %84 : vector<1x1x128x128xf32> to vector<128x128xf32>
    %86 = vector.shape_cast %83 : vector<128x128xf32> to vector<1x1x128x128xf32>
    tpu.vector_store %arg6[%c5_37, %c0_38, %c0_39, %c0_40], %86 {strides = array<i32>} : memref<10x1x128x128xf32, #tpu.memory_space<vmem>>, vector<1x1x128x128xf32>,
    %cst_41 = arith.constant dense<0xFF800000> : vector<128xf32>
    %87 = vector.multi_reduction <maximumf>, %83, %cst_41 [1] : vector<128x128xf32> to vector<128xf32>
    %88 = vector.shape_cast %87 : vector<128xf32> to vector<128x1xf32>
    %89 = vector.broadcast %88 : vector<128x1xf32> to vector<128x128xf32>
    %90 = arith.subf %83, %89 : vector<128x128xf32>
    %91 = math.exp %90 : vector<128x128xf32>
    %cst_42 = arith.constant dense<0.000000e+00> : vector<128xf32>
    %92 = vector.multi_reduction <add>, %91, %cst_42 [1] : vector<128x128xf32> to vector<128xf32>
    %93 = vector.shape_cast %92 : vector<128xf32> to vector<128x1xf32>
    %94 = tpu.reciprocal %93 {approx = true} : vector<128x1xf32> -> vector<128x1xf32>
    %95 = vector.broadcast %94 : vector<128x1xf32> to vector<128x128xf32>
    %96 = arith.mulf %91, %95 : vector<128x128xf32>
    %c256 = arith.constant 256 : index
    %c0_43 = arith.constant 0 : index
    %97 = vector.load %arg14[%c256, %c0_43] : memref<640x128xf32, #tpu.memory_space<vmem>>, vector<128x128xf32>
    tpu.vector_store %arg14[%c256, %c0_43], %96 {strides = array<i32>} : memref<640x128xf32, #tpu.memory_space<vmem>>, vector<128x128xf32>,
    %98 = arith.truncf %96 : vector<128x128xf32> to vector<128x128xbf16>
    %c2_44 = arith.constant 2 : index
    %c0_45 = arith.constant 0 : index
    %c0_46 = arith.constant 0 : index
    %c0_47 = arith.constant 0 : index
    %99 = vector.load %arg7[%c2_44, %c0_45, %c0_46, %c0_47] : memref<5x1x128x128xbf16, #tpu.memory_space<vmem>>, vector<1x1x128x128xbf16>
    %100 = vector.shape_cast %99 : vector<1x1x128x128xbf16> to vector<128x128xbf16>
    %101 = vector.shape_cast %98 : vector<128x128xbf16> to vector<1x1x128x128xbf16>
    tpu.vector_store %arg7[%c2_44, %c0_45, %c0_46, %c0_47], %101 {strides = array<i32>} : memref<5x1x128x128xbf16, #tpu.memory_space<vmem>>, vector<1x1x128x128xbf16>,
    %c18 = arith.constant 18 : index
    %102 = memref.load %arg2[%c18] : memref<30xf32, #tpu.memory_space<smem>>
    %103 = vector.broadcast %102 : f32 to vector<128x128xf32>
    %104 = arith.mulf %1, %103 : vector<128x128xf32>
    %c19 = arith.constant 19 : index
    %105 = memref.load %arg2[%c19] : memref<30xf32, #tpu.memory_space<smem>>
    %106 = vector.broadcast %105 : f32 to vector<128x128xf32>
    %107 = arith.mulf %3, %106 : vector<128x128xf32>
    %108 = arith.addf %104, %107 : vector<128x128xf32>
    %c20 = arith.constant 20 : index
    %109 = memref.load %arg2[%c20] : memref<30xf32, #tpu.memory_space<smem>>
    %110 = vector.broadcast %109 : f32 to vector<128x128xf32>
    %111 = arith.mulf %5, %110 : vector<128x128xf32>
    %112 = arith.addf %108, %111 : vector<128x128xf32>
    %c6 = arith.constant 6 : index
    %113 = memref.load %arg3[%c6] : memref<10xf32, #tpu.memory_space<smem>>
    %114 = vector.broadcast %113 : f32 to vector<128x128xf32>
    %115 = arith.addf %112, %114 : vector<128x128xf32>
    %c6_48 = arith.constant 6 : index
    %c0_49 = arith.constant 0 : index
    %c0_50 = arith.constant 0 : index
    %c0_51 = arith.constant 0 : index
    %116 = vector.load %arg6[%c6_48, %c0_49, %c0_50, %c0_51] : memref<10x1x128x128xf32, #tpu.memory_space<vmem>>, vector<1x1x128x128xf32>
    %117 = vector.shape_cast %116 : vector<1x1x128x128xf32> to vector<128x128xf32>
    %118 = vector.shape_cast %115 : vector<128x128xf32> to vector<1x1x128x128xf32>
    tpu.vector_store %arg6[%c6_48, %c0_49, %c0_50, %c0_51], %118 {strides = array<i32>} : memref<10x1x128x128xf32, #tpu.memory_space<vmem>>, vector<1x1x128x128xf32>,
    %cst_52 = arith.constant dense<0xFF800000> : vector<128xf32>
    %119 = vector.multi_reduction <maximumf>, %115, %cst_52 [1] : vector<128x128xf32> to vector<128xf32>
    %120 = vector.shape_cast %119 : vector<128xf32> to vector<128x1xf32>
    %121 = vector.broadcast %120 : vector<128x1xf32> to vector<128x128xf32>
    %122 = arith.subf %115, %121 : vector<128x128xf32>
    %123 = math.exp %122 : vector<128x128xf32>
    %cst_53 = arith.constant dense<0.000000e+00> : vector<128xf32>
    %124 = vector.multi_reduction <add>, %123, %cst_53 [1] : vector<128x128xf32> to vector<128xf32>
    %125 = vector.shape_cast %124 : vector<128xf32> to vector<128x1xf32>
    %126 = tpu.reciprocal %125 {approx = true} : vector<128x1xf32> -> vector<128x1xf32>
    %127 = vector.broadcast %126 : vector<128x1xf32> to vector<128x128xf32>
    %128 = arith.mulf %123, %127 : vector<128x128xf32>
    %c384 = arith.constant 384 : index
    %c0_54 = arith.constant 0 : index
    %129 = vector.load %arg14[%c384, %c0_54] : memref<640x128xf32, #tpu.memory_space<vmem>>, vector<128x128xf32>
    tpu.vector_store %arg14[%c384, %c0_54], %128 {strides = array<i32>} : memref<640x128xf32, #tpu.memory_space<vmem>>, vector<128x128xf32>,
    %130 = arith.truncf %128 : vector<128x128xf32> to vector<128x128xbf16>
    %c3_55 = arith.constant 3 : index
    %c0_56 = arith.constant 0 : index
    %c0_57 = arith.constant 0 : index
    %c0_58 = arith.constant 0 : index
    %131 = vector.load %arg7[%c3_55, %c0_56, %c0_57, %c0_58] : memref<5x1x128x128xbf16, #tpu.memory_space<vmem>>, vector<1x1x128x128xbf16>
    %132 = vector.shape_cast %131 : vector<1x1x128x128xbf16> to vector<128x128xbf16>
    %133 = vector.shape_cast %130 : vector<128x128xbf16> to vector<1x1x128x128xbf16>
    tpu.vector_store %arg7[%c3_55, %c0_56, %c0_57, %c0_58], %133 {strides = array<i32>} : memref<5x1x128x128xbf16, #tpu.memory_space<vmem>>, vector<1x1x128x128xbf16>,
    %c21 = arith.constant 21 : index
    %134 = memref.load %arg2[%c21] : memref<30xf32, #tpu.memory_space<smem>>
    %135 = vector.broadcast %134 : f32 to vector<128x128xf32>
    %136 = arith.mulf %1, %135 : vector<128x128xf32>
    %c22 = arith.constant 22 : index
    %137 = memref.load %arg2[%c22] : memref<30xf32, #tpu.memory_space<smem>>
    %138 = vector.broadcast %137 : f32 to vector<128x128xf32>
    %139 = arith.mulf %3, %138 : vector<128x128xf32>
    %140 = arith.addf %136, %139 : vector<128x128xf32>
    %c23 = arith.constant 23 : index
    %141 = memref.load %arg2[%c23] : memref<30xf32, #tpu.memory_space<smem>>
    %142 = vector.broadcast %141 : f32 to vector<128x128xf32>
    %143 = arith.mulf %5, %142 : vector<128x128xf32>
    %144 = arith.addf %140, %143 : vector<128x128xf32>
    %c7 = arith.constant 7 : index
    %145 = memref.load %arg3[%c7] : memref<10xf32, #tpu.memory_space<smem>>
    %146 = vector.broadcast %145 : f32 to vector<128x128xf32>
    %147 = arith.addf %144, %146 : vector<128x128xf32>
    %c7_59 = arith.constant 7 : index
    %c0_60 = arith.constant 0 : index
    %c0_61 = arith.constant 0 : index
    %c0_62 = arith.constant 0 : index
    %148 = vector.load %arg6[%c7_59, %c0_60, %c0_61, %c0_62] : memref<10x1x128x128xf32, #tpu.memory_space<vmem>>, vector<1x1x128x128xf32>
    %149 = vector.shape_cast %148 : vector<1x1x128x128xf32> to vector<128x128xf32>
    %150 = vector.shape_cast %147 : vector<128x128xf32> to vector<1x1x128x128xf32>
    tpu.vector_store %arg6[%c7_59, %c0_60, %c0_61, %c0_62], %150 {strides = array<i32>} : memref<10x1x128x128xf32, #tpu.memory_space<vmem>>, vector<1x1x128x128xf32>,
    %cst_63 = arith.constant dense<0xFF800000> : vector<128xf32>
    %151 = vector.multi_reduction <maximumf>, %147, %cst_63 [1] : vector<128x128xf32> to vector<128xf32>
    %152 = vector.shape_cast %151 : vector<128xf32> to vector<128x1xf32>
    %153 = vector.broadcast %152 : vector<128x1xf32> to vector<128x128xf32>
    %154 = arith.subf %147, %153 : vector<128x128xf32>
    %155 = math.exp %154 : vector<128x128xf32>
    %cst_64 = arith.constant dense<0.000000e+00> : vector<128xf32>
    %156 = vector.multi_reduction <add>, %155, %cst_64 [1] : vector<128x128xf32> to vector<128xf32>
    %157 = vector.shape_cast %156 : vector<128xf32> to vector<128x1xf32>
    %158 = tpu.reciprocal %157 {approx = true} : vector<128x1xf32> -> vector<128x1xf32>
    %159 = vector.broadcast %158 : vector<128x1xf32> to vector<128x128xf32>
    %160 = arith.mulf %155, %159 : vector<128x128xf32>
    %c512 = arith.constant 512 : index
    %c0_65 = arith.constant 0 : index
    %161 = vector.load %arg14[%c512, %c0_65] : memref<640x128xf32, #tpu.memory_space<vmem>>, vector<128x128xf32>
    tpu.vector_store %arg14[%c512, %c0_65], %160 {strides = array<i32>} : memref<640x128xf32, #tpu.memory_space<vmem>>, vector<128x128xf32>,
    %162 = arith.truncf %160 : vector<128x128xf32> to vector<128x128xbf16>
    %c4_66 = arith.constant 4 : index
    %c0_67 = arith.constant 0 : index
    %c0_68 = arith.constant 0 : index
    %c0_69 = arith.constant 0 : index
    %163 = vector.load %arg7[%c4_66, %c0_67, %c0_68, %c0_69] : memref<5x1x128x128xbf16, #tpu.memory_space<vmem>>, vector<1x1x128x128xbf16>
    %164 = vector.shape_cast %163 : vector<1x1x128x128xbf16> to vector<128x128xbf16>
    %165 = vector.shape_cast %162 : vector<128x128xbf16> to vector<1x1x128x128xbf16>
    tpu.vector_store %arg7[%c4_66, %c0_67, %c0_68, %c0_69], %165 {strides = array<i32>} : memref<5x1x128x128xbf16, #tpu.memory_space<vmem>>, vector<1x1x128x128xbf16>,
    %c0_70 = arith.constant 0 : index
    %c0_71 = arith.constant 0 : index
    %166 = vector.load %arg14[%c0_70, %c0_71] : memref<640x128xf32, #tpu.memory_space<vmem>>, vector<640x128xf32>
    %c0_72 = arith.constant 0 : index
    %c0_73 = arith.constant 0 : index
    %167 = vector.load %arg5[%c0_72, %c0_73] : memref<128x128xf32, #tpu.memory_space<vmem>>, vector<128x128xf32>
    %cst_74 = arith.constant dense<0.000000e+00> : vector<640x128xf32>
    %168 = tpu.matmul %166, %167, %cst_74 {dimension_numbers = #tpu.dot_dimension_numbers<[1], [0], [0], [1], [0, 0, 1, 1], [], []>} : vector<640x128xf32>, vector<128x128xf32>, vector<640x128xf32> -> vector<640x128xf32>
    %cst_75 = arith.constant 0.000000e+00 : f32
    %cst_76 = arith.constant 1.000000e+00 : f32
    %169 = vector.broadcast %cst_75 : f32 to vector<640x128xf32>
    %170 = arith.maximumf %169, %168 : vector<640x128xf32>
    %171 = vector.broadcast %cst_76 : f32 to vector<640x128xf32>
    %172 = arith.minimumf %171, %170 : vector<640x128xf32>
    %173 = vector.shape_cast %172 : vector<640x128xf32> to vector<5x128x128xf32>
    %174 = arith.truncf %173 : vector<5x128x128xf32> to vector<5x128x128xbf16>
    %c0_77 = arith.constant 0 : index
    %c0_78 = arith.constant 0 : index
    %c0_79 = arith.constant 0 : index
    %c0_80 = arith.constant 0 : index
    %175 = vector.load %arg9[%c0_77, %c0_78, %c0_79, %c0_80] : memref<5x1x128x128xbf16, #tpu.memory_space<vmem>>, vector<5x1x128x128xbf16>
    %176 = vector.shape_cast %175 : vector<5x1x128x128xbf16> to vector<5x128x128xbf16>
    %177 = vector.shape_cast %174 : vector<5x128x128xbf16> to vector<5x1x128x128xbf16>
    tpu.vector_store %arg9[%c0_77, %c0_78, %c0_79, %c0_80], %177 {strides = array<i32>} : memref<5x1x128x128xbf16, #tpu.memory_space<vmem>>, vector<5x1x128x128xbf16>,
    %cst_81 = arith.constant 1.000000e+00 : f32
    %178 = vector.broadcast %cst_81 : f32 to vector<640x128xf32>
    %179 = arith.subf %178, %168 : vector<640x128xf32>
    %180 = arith.addf %179, %166 : vector<640x128xf32>
    %cst_82 = arith.constant 0.000000e+00 : f32
    %cst_83 = arith.constant 1.000000e+00 : f32
    %181 = vector.broadcast %cst_82 : f32 to vector<640x128xf32>
    %182 = arith.maximumf %181, %180 : vector<640x128xf32>
    %183 = vector.broadcast %cst_83 : f32 to vector<640x128xf32>
    %184 = arith.minimumf %183, %182 : vector<640x128xf32>
    %185 = vector.shape_cast %184 : vector<640x128xf32> to vector<5x128x128xf32>
    %186 = arith.truncf %185 : vector<5x128x128xf32> to vector<5x128x128xbf16>
    %c0_84 = arith.constant 0 : index
    %c0_85 = arith.constant 0 : index
    %c0_86 = arith.constant 0 : index
    %c0_87 = arith.constant 0 : index
    %187 = vector.load %arg8[%c0_84, %c0_85, %c0_86, %c0_87] : memref<5x1x128x128xbf16, #tpu.memory_space<vmem>>, vector<5x1x128x128xbf16>
    %188 = vector.shape_cast %187 : vector<5x1x128x128xbf16> to vector<5x128x128xbf16>
    %189 = vector.shape_cast %186 : vector<5x128x128xbf16> to vector<5x1x128x128xbf16>
    tpu.vector_store %arg8[%c0_84, %c0_85, %c0_86, %c0_87], %189 {strides = array<i32>} : memref<5x1x128x128xbf16, #tpu.memory_space<vmem>>, vector<5x1x128x128xbf16>,
    %c12 = arith.constant 12 : index
    %190 = memref.load %arg2[%c12] : memref<30xf32, #tpu.memory_space<smem>>
    %191 = vector.broadcast %190 : f32 to vector<128x128xf32>
    %192 = arith.mulf %1, %191 : vector<128x128xf32>
    %c13 = arith.constant 13 : index
    %193 = memref.load %arg2[%c13] : memref<30xf32, #tpu.memory_space<smem>>
    %194 = vector.broadcast %193 : f32 to vector<128x128xf32>
    %195 = arith.mulf %3, %194 : vector<128x128xf32>
    %196 = arith.addf %192, %195 : vector<128x128xf32>
    %c14 = arith.constant 14 : index
    %197 = memref.load %arg2[%c14] : memref<30xf32, #tpu.memory_space<smem>>
    %198 = vector.broadcast %197 : f32 to vector<128x128xf32>
    %199 = arith.mulf %5, %198 : vector<128x128xf32>
    %200 = arith.addf %196, %199 : vector<128x128xf32>
    %c4_88 = arith.constant 4 : index
    %201 = memref.load %arg3[%c4_88] : memref<10xf32, #tpu.memory_space<smem>>
    %202 = vector.broadcast %201 : f32 to vector<128x128xf32>
    %203 = arith.addf %200, %202 : vector<128x128xf32>
    %c4_89 = arith.constant 4 : index
    %c0_90 = arith.constant 0 : index
    %c0_91 = arith.constant 0 : index
    %c0_92 = arith.constant 0 : index
    %204 = vector.load %arg6[%c4_89, %c0_90, %c0_91, %c0_92] : memref<10x1x128x128xf32, #tpu.memory_space<vmem>>, vector<1x1x128x128xf32>
    %205 = vector.shape_cast %204 : vector<1x1x128x128xf32> to vector<128x128xf32>
    %206 = vector.shape_cast %203 : vector<128x128xf32> to vector<1x1x128x128xf32>
    tpu.vector_store %arg6[%c4_89, %c0_90, %c0_91, %c0_92], %206 {strides = array<i32>} : memref<10x1x128x128xf32, #tpu.memory_space<vmem>>, vector<1x1x128x128xf32>,
    %cst_93 = arith.constant 5.000000e-01 : f32
    %207 = vector.broadcast %cst_93 : f32 to vector<128x128xf32>
    %208 = arith.mulf %207, %203 : vector<128x128xf32>
    %209 = math.tanh %208 : vector<128x128xf32>
    %cst_94 = arith.constant 1.000000e+00 : f32
    %210 = vector.broadcast %cst_94 : f32 to vector<128x128xf32>
    %211 = arith.addf %209, %210 : vector<128x128xf32>
    %cst_95 = arith.constant 5.000000e-01 : f32
    %212 = vector.broadcast %cst_95 : f32 to vector<128x128xf32>
    %213 = arith.mulf %212, %211 : vector<128x128xf32>
    %214 = arith.truncf %213 : vector<128x128xf32> to vector<128x128xbf16>
    %c0_96 = arith.constant 0 : index
    %c0_97 = arith.constant 0 : index
    %c0_98 = arith.constant 0 : index
    %c0_99 = arith.constant 0 : index
    %215 = vector.load %arg10[%c0_96, %c0_97, %c0_98, %c0_99] : memref<3x1x128x128xbf16, #tpu.memory_space<vmem>>, vector<1x1x128x128xbf16>
    %216 = vector.shape_cast %215 : vector<1x1x128x128xbf16> to vector<128x128xbf16>
    %217 = vector.shape_cast %214 : vector<128x128xbf16> to vector<1x1x128x128xbf16>
    tpu.vector_store %arg10[%c0_96, %c0_97, %c0_98, %c0_99], %217 {strides = array<i32>} : memref<3x1x128x128xbf16, #tpu.memory_space<vmem>>, vector<1x1x128x128xbf16>,
    %c24 = arith.constant 24 : index
    %218 = memref.load %arg2[%c24] : memref<30xf32, #tpu.memory_space<smem>>
    %219 = vector.broadcast %218 : f32 to vector<128x128xf32>
    %220 = arith.mulf %1, %219 : vector<128x128xf32>
    %c25 = arith.constant 25 : index
    %221 = memref.load %arg2[%c25] : memref<30xf32, #tpu.memory_space<smem>>
    %222 = vector.broadcast %221 : f32 to vector<128x128xf32>
    %223 = arith.mulf %3, %222 : vector<128x128xf32>
    %224 = arith.addf %220, %223 : vector<128x128xf32>
    %c26 = arith.constant 26 : index
    %225 = memref.load %arg2[%c26] : memref<30xf32, #tpu.memory_space<smem>>
    %226 = vector.broadcast %225 : f32 to vector<128x128xf32>
    %227 = arith.mulf %5, %226 : vector<128x128xf32>
    %228 = arith.addf %224, %227 : vector<128x128xf32>
    %c8 = arith.constant 8 : index
    %229 = memref.load %arg3[%c8] : memref<10xf32, #tpu.memory_space<smem>>
    %230 = vector.broadcast %229 : f32 to vector<128x128xf32>
    %231 = arith.addf %228, %230 : vector<128x128xf32>
    %c8_100 = arith.constant 8 : index
    %c0_101 = arith.constant 0 : index
    %c0_102 = arith.constant 0 : index
    %c0_103 = arith.constant 0 : index
    %232 = vector.load %arg6[%c8_100, %c0_101, %c0_102, %c0_103] : memref<10x1x128x128xf32, #tpu.memory_space<vmem>>, vector<1x1x128x128xf32>
    %233 = vector.shape_cast %232 : vector<1x1x128x128xf32> to vector<128x128xf32>
    %234 = vector.shape_cast %231 : vector<128x128xf32> to vector<1x1x128x128xf32>
    tpu.vector_store %arg6[%c8_100, %c0_101, %c0_102, %c0_103], %234 {strides = array<i32>} : memref<10x1x128x128xf32, #tpu.memory_space<vmem>>, vector<1x1x128x128xf32>,
    %cst_104 = arith.constant 5.000000e-01 : f32
    %235 = vector.broadcast %cst_104 : f32 to vector<128x128xf32>
    %236 = arith.mulf %235, %231 : vector<128x128xf32>
    %237 = math.tanh %236 : vector<128x128xf32>
    %cst_105 = arith.constant 1.000000e+00 : f32
    %238 = vector.broadcast %cst_105 : f32 to vector<128x128xf32>
    %239 = arith.addf %237, %238 : vector<128x128xf32>
    %cst_106 = arith.constant 5.000000e-01 : f32
    %240 = vector.broadcast %cst_106 : f32 to vector<128x128xf32>
    %241 = arith.mulf %240, %239 : vector<128x128xf32>
    %242 = arith.truncf %241 : vector<128x128xf32> to vector<128x128xbf16>
    %c1_107 = arith.constant 1 : index
    %c0_108 = arith.constant 0 : index
    %c0_109 = arith.constant 0 : index
    %c0_110 = arith.constant 0 : index
    %243 = vector.load %arg10[%c1_107, %c0_108, %c0_109, %c0_110] : memref<3x1x128x128xbf16, #tpu.memory_space<vmem>>, vector<1x1x128x128xbf16>
    %244 = vector.shape_cast %243 : vector<1x1x128x128xbf16> to vector<128x128xbf16>
    %245 = vector.shape_cast %242 : vector<128x128xbf16> to vector<1x1x128x128xbf16>
    tpu.vector_store %arg10[%c1_107, %c0_108, %c0_109, %c0_110], %245 {strides = array<i32>} : memref<3x1x128x128xbf16, #tpu.memory_space<vmem>>, vector<1x1x128x128xbf16>,
    %c27 = arith.constant 27 : index
    %246 = memref.load %arg2[%c27] : memref<30xf32, #tpu.memory_space<smem>>
    %247 = vector.broadcast %246 : f32 to vector<128x128xf32>
    %248 = arith.mulf %1, %247 : vector<128x128xf32>
    %c28 = arith.constant 28 : index
    %249 = memref.load %arg2[%c28] : memref<30xf32, #tpu.memory_space<smem>>
    %250 = vector.broadcast %249 : f32 to vector<128x128xf32>
    %251 = arith.mulf %3, %250 : vector<128x128xf32>
    %252 = arith.addf %248, %251 : vector<128x128xf32>
    %c29 = arith.constant 29 : index
    %253 = memref.load %arg2[%c29] : memref<30xf32, #tpu.memory_space<smem>>
    %254 = vector.broadcast %253 : f32 to vector<128x128xf32>
    %255 = arith.mulf %5, %254 : vector<128x128xf32>
    %256 = arith.addf %252, %255 : vector<128x128xf32>
    %c9 = arith.constant 9 : index
    %257 = memref.load %arg3[%c9] : memref<10xf32, #tpu.memory_space<smem>>
    %258 = vector.broadcast %257 : f32 to vector<128x128xf32>
    %259 = arith.addf %256, %258 : vector<128x128xf32>
    %c9_111 = arith.constant 9 : index
    %c0_112 = arith.constant 0 : index
    %c0_113 = arith.constant 0 : index
    %c0_114 = arith.constant 0 : index
    %260 = vector.load %arg6[%c9_111, %c0_112, %c0_113, %c0_114] : memref<10x1x128x128xf32, #tpu.memory_space<vmem>>, vector<1x1x128x128xf32>
    %261 = vector.shape_cast %260 : vector<1x1x128x128xf32> to vector<128x128xf32>
    %262 = vector.shape_cast %259 : vector<128x128xf32> to vector<1x1x128x128xf32>
    tpu.vector_store %arg6[%c9_111, %c0_112, %c0_113, %c0_114], %262 {strides = array<i32>} : memref<10x1x128x128xf32, #tpu.memory_space<vmem>>, vector<1x1x128x128xf32>,
    %cst_115 = arith.constant 5.000000e-01 : f32
    %263 = vector.broadcast %cst_115 : f32 to vector<128x128xf32>
    %264 = arith.mulf %263, %259 : vector<128x128xf32>
    %265 = math.tanh %264 : vector<128x128xf32>
    %cst_116 = arith.constant 1.000000e+00 : f32
    %266 = vector.broadcast %cst_116 : f32 to vector<128x128xf32>
    %267 = arith.addf %265, %266 : vector<128x128xf32>
    %cst_117 = arith.constant 5.000000e-01 : f32
    %268 = vector.broadcast %cst_117 : f32 to vector<128x128xf32>
    %269 = arith.mulf %268, %267 : vector<128x128xf32>
    %270 = arith.truncf %269 : vector<128x128xf32> to vector<128x128xbf16>
    %c2_118 = arith.constant 2 : index
    %c0_119 = arith.constant 0 : index
    %c0_120 = arith.constant 0 : index
    %c0_121 = arith.constant 0 : index
    %271 = vector.load %arg10[%c2_118, %c0_119, %c0_120, %c0_121] : memref<3x1x128x128xbf16, #tpu.memory_space<vmem>>, vector<1x1x128x128xbf16>
    %272 = vector.shape_cast %271 : vector<1x1x128x128xbf16> to vector<128x128xbf16>
    %273 = vector.shape_cast %270 : vector<128x128xbf16> to vector<1x1x128x128xbf16>
    tpu.vector_store %arg10[%c2_118, %c0_119, %c0_120, %c0_121], %273 {strides = array<i32>} : memref<3x1x128x128xbf16, #tpu.memory_space<vmem>>, vector<1x1x128x128xbf16>,
    %c6_122 = arith.constant 6 : index
    %274 = memref.load %arg2[%c6_122] : memref<30xf32, #tpu.memory_space<smem>>
    %275 = vector.broadcast %274 : f32 to vector<128x128xf32>
    %276 = arith.mulf %1, %275 : vector<128x128xf32>
    %c7_123 = arith.constant 7 : index
    %277 = memref.load %arg2[%c7_123] : memref<30xf32, #tpu.memory_space<smem>>
    %278 = vector.broadcast %277 : f32 to vector<128x128xf32>
    %279 = arith.mulf %3, %278 : vector<128x128xf32>
    %280 = arith.addf %276, %279 : vector<128x128xf32>
    %c8_124 = arith.constant 8 : index
    %281 = memref.load %arg2[%c8_124] : memref<30xf32, #tpu.memory_space<smem>>
    %282 = vector.broadcast %281 : f32 to vector<128x128xf32>
    %283 = arith.mulf %5, %282 : vector<128x128xf32>
    %284 = arith.addf %280, %283 : vector<128x128xf32>
    %c2_125 = arith.constant 2 : index
    %285 = memref.load %arg3[%c2_125] : memref<10xf32, #tpu.memory_space<smem>>
    %286 = vector.broadcast %285 : f32 to vector<128x128xf32>
    %287 = arith.addf %284, %286 : vector<128x128xf32>
    %c2_126 = arith.constant 2 : index
    %c0_127 = arith.constant 0 : index
    %c0_128 = arith.constant 0 : index
    %c0_129 = arith.constant 0 : index
    %288 = vector.load %arg6[%c2_126, %c0_127, %c0_128, %c0_129] : memref<10x1x128x128xf32, #tpu.memory_space<vmem>>, vector<1x1x128x128xf32>
    %289 = vector.shape_cast %288 : vector<1x1x128x128xf32> to vector<128x128xf32>
    %290 = vector.shape_cast %287 : vector<128x128xf32> to vector<1x1x128x128xf32>
    tpu.vector_store %arg6[%c2_126, %c0_127, %c0_128, %c0_129], %290 {strides = array<i32>} : memref<10x1x128x128xf32, #tpu.memory_space<vmem>>, vector<1x1x128x128xf32>,
    %c9_130 = arith.constant 9 : index
    %291 = memref.load %arg2[%c9_130] : memref<30xf32, #tpu.memory_space<smem>>
    %292 = vector.broadcast %291 : f32 to vector<128x128xf32>
    %293 = arith.mulf %1, %292 : vector<128x128xf32>
    %c10 = arith.constant 10 : index
    %294 = memref.load %arg2[%c10] : memref<30xf32, #tpu.memory_space<smem>>
    %295 = vector.broadcast %294 : f32 to vector<128x128xf32>
    %296 = arith.mulf %3, %295 : vector<128x128xf32>
    %297 = arith.addf %293, %296 : vector<128x128xf32>
    %c11 = arith.constant 11 : index
    %298 = memref.load %arg2[%c11] : memref<30xf32, #tpu.memory_space<smem>>
    %299 = vector.broadcast %298 : f32 to vector<128x128xf32>
    %300 = arith.mulf %5, %299 : vector<128x128xf32>
    %301 = arith.addf %297, %300 : vector<128x128xf32>
    %c3_131 = arith.constant 3 : index
    %302 = memref.load %arg3[%c3_131] : memref<10xf32, #tpu.memory_space<smem>>
    %303 = vector.broadcast %302 : f32 to vector<128x128xf32>
    %304 = arith.addf %301, %303 : vector<128x128xf32>
    %c3_132 = arith.constant 3 : index
    %c0_133 = arith.constant 0 : index
    %c0_134 = arith.constant 0 : index
    %c0_135 = arith.constant 0 : index
    %305 = vector.load %arg6[%c3_132, %c0_133, %c0_134, %c0_135] : memref<10x1x128x128xf32, #tpu.memory_space<vmem>>, vector<1x1x128x128xf32>
    %306 = vector.shape_cast %305 : vector<1x1x128x128xf32> to vector<128x128xf32>
    %307 = vector.shape_cast %304 : vector<128x128xf32> to vector<1x1x128x128xf32>
    tpu.vector_store %arg6[%c3_132, %c0_133, %c0_134, %c0_135], %307 {strides = array<i32>} : memref<10x1x128x128xf32, #tpu.memory_space<vmem>>, vector<1x1x128x128xf32>,
    %cst_136 = arith.constant dense<0xFF800000> : vector<128xf32>
    %308 = vector.multi_reduction <maximumf>, %287, %cst_136 [1] : vector<128x128xf32> to vector<128xf32>
    %309 = vector.shape_cast %308 : vector<128xf32> to vector<128x1xf32>
    %310 = vector.broadcast %309 : vector<128x1xf32> to vector<128x128xf32>
    %311 = arith.subf %287, %310 : vector<128x128xf32>
    %312 = math.exp %311 : vector<128x128xf32>
    %cst_137 = arith.constant dense<0.000000e+00> : vector<128xf32>
    %313 = vector.multi_reduction <add>, %312, %cst_137 [1] : vector<128x128xf32> to vector<128xf32>
    %314 = vector.shape_cast %313 : vector<128xf32> to vector<128x1xf32>
    %315 = math.log %314 : vector<128x1xf32>
    %316 = arith.addf %309, %315 : vector<128x1xf32>
    %cst_138 = arith.constant 4.85203028 : f32
    %317 = vector.broadcast %cst_138 : f32 to vector<128x1xf32>
    %318 = arith.subf %316, %317 : vector<128x1xf32>
    %cst_139 = arith.constant dense<0xFF800000> : vector<128xf32>
    %319 = vector.multi_reduction <maximumf>, %304, %cst_139 [1] : vector<128x128xf32> to vector<128xf32>
    %320 = vector.shape_cast %319 : vector<128xf32> to vector<128x1xf32>
    %321 = vector.broadcast %320 : vector<128x1xf32> to vector<128x128xf32>
    %322 = arith.subf %304, %321 : vector<128x128xf32>
    %323 = math.exp %322 : vector<128x128xf32>
    %cst_140 = arith.constant dense<0.000000e+00> : vector<128xf32>
    %324 = vector.multi_reduction <add>, %323, %cst_140 [1] : vector<128x128xf32> to vector<128xf32>
    %325 = vector.shape_cast %324 : vector<128xf32> to vector<128x1xf32>
    %326 = math.log %325 : vector<128x1xf32>
    %327 = arith.addf %320, %326 : vector<128x1xf32>
    %cst_141 = arith.constant 4.85203028 : f32
    %328 = vector.broadcast %cst_141 : f32 to vector<128x1xf32>
    %329 = arith.subf %327, %328 : vector<128x1xf32>
    %cst_142 = arith.constant 5.000000e-01 : f32
    %330 = vector.broadcast %cst_142 : f32 to vector<128x1xf32>
    %331 = arith.mulf %330, %318 : vector<128x1xf32>
    %332 = math.tanh %331 : vector<128x1xf32>
    %cst_143 = arith.constant 1.000000e+00 : f32
    %333 = vector.broadcast %cst_143 : f32 to vector<128x1xf32>
    %334 = arith.addf %332, %333 : vector<128x1xf32>
    %cst_144 = arith.constant 5.000000e-01 : f32
    %335 = vector.broadcast %cst_144 : f32 to vector<128x1xf32>
    %336 = arith.mulf %335, %334 : vector<128x1xf32>
    %cst_145 = arith.constant 5.000000e-01 : f32
    %337 = vector.broadcast %cst_145 : f32 to vector<128x1xf32>
    %338 = arith.mulf %337, %329 : vector<128x1xf32>
    %339 = math.tanh %338 : vector<128x1xf32>
    %cst_146 = arith.constant 1.000000e+00 : f32
    %340 = vector.broadcast %cst_146 : f32 to vector<128x1xf32>
    %341 = arith.addf %339, %340 : vector<128x1xf32>
    %cst_147 = arith.constant 5.000000e-01 : f32
    %342 = vector.broadcast %cst_147 : f32 to vector<128x1xf32>
    %343 = arith.mulf %342, %341 : vector<128x1xf32>
    %344 = tpu.iota {dimensions = array<i32: 1>} : vector<128x4xi32>
    %c0_i32 = arith.constant 0 : i32
    %345 = vector.broadcast %c0_i32 : i32 to vector<128x4xi32>
    %346 = arith.cmpi eq, %344, %345 : vector<128x4xi32>
    %c1_i32 = arith.constant 1 : i32
    %347 = vector.broadcast %c1_i32 : i32 to vector<128x4xi32>
    %348 = arith.cmpi eq, %344, %347 : vector<128x4xi32>
    %c2_i32 = arith.constant 2 : i32
    %349 = vector.broadcast %c2_i32 : i32 to vector<128x4xi32>
    %350 = arith.cmpi eq, %344, %349 : vector<128x4xi32>
    %351 = vector.shape_cast %336 : vector<128x1xf32> to vector<128x1xf32>
    %352 = vector.broadcast %351 : vector<128x1xf32> to vector<128x4xf32>
    %353 = vector.shape_cast %343 : vector<128x1xf32> to vector<128x1xf32>
    %354 = vector.broadcast %353 : vector<128x1xf32> to vector<128x4xf32>
    %355 = arith.select %350, %352, %354 : vector<128x4xi1>, vector<128x4xf32>
    %356 = vector.shape_cast %329 : vector<128x1xf32> to vector<128x1xf32>
    %357 = vector.broadcast %356 : vector<128x1xf32> to vector<128x4xf32>
    %358 = arith.select %348, %357, %355 : vector<128x4xi1>, vector<128x4xf32>
    %359 = vector.shape_cast %318 : vector<128x1xf32> to vector<128x1xf32>
    %360 = vector.broadcast %359 : vector<128x1xf32> to vector<128x4xf32>
    %361 = arith.select %346, %360, %358 : vector<128x4xi1>, vector<128x4xf32>
    %c0_148 = arith.constant 0 : index
    %c0_149 = arith.constant 0 : index
    %c0_150 = arith.constant 0 : index
    %362 = vector.load %arg11[%c0_148, %c0_149, %c0_150] : memref<1x128x4xf32, #tpu.memory_space<vmem>>, vector<1x128x4xf32>
    %363 = vector.shape_cast %362 : vector<1x128x4xf32> to vector<128x4xf32>
    %364 = vector.shape_cast %361 : vector<128x4xf32> to vector<1x128x4xf32>
    tpu.vector_store %arg11[%c0_148, %c0_149, %c0_150], %364 {strides = array<i32>} : memref<1x128x4xf32, #tpu.memory_space<vmem>>, vector<1x128x4xf32>,
    %c0_151 = arith.constant 0 : index
    %c0_152 = arith.constant 0 : index
    %c0_153 = arith.constant 0 : index
    %c0_154 = arith.constant 0 : index
    %365 = vector.load %arg8[%c0_151, %c0_152, %c0_153, %c0_154] : memref<5x1x128x128xbf16, #tpu.memory_space<vmem>>, vector<1x1x128x128xbf16>
    %366 = vector.shape_cast %365 : vector<1x1x128x128xbf16> to vector<128x128xbf16>
    %367 = arith.extf %366 : vector<128x128xbf16> to vector<128x128xf32>
    %c0_155 = arith.constant 0 : index
    %c0_156 = arith.constant 0 : index
    %c0_157 = arith.constant 0 : index
    %c0_158 = arith.constant 0 : index
    %368 = vector.load %arg9[%c0_155, %c0_156, %c0_157, %c0_158] : memref<5x1x128x128xbf16, #tpu.memory_space<vmem>>, vector<1x1x128x128xbf16>
    %369 = vector.shape_cast %368 : vector<1x1x128x128xbf16> to vector<128x128xbf16>
    %370 = arith.extf %369 : vector<128x128xbf16> to vector<128x128xf32>
    %c1_159 = arith.constant 1 : index
    %c0_160 = arith.constant 0 : index
    %c0_161 = arith.constant 0 : index
    %c0_162 = arith.constant 0 : index
    %371 = vector.load %arg8[%c1_159, %c0_160, %c0_161, %c0_162] : memref<5x1x128x128xbf16, #tpu.memory_space<vmem>>, vector<1x1x128x128xbf16>
    %372 = vector.shape_cast %371 : vector<1x1x128x128xbf16> to vector<128x128xbf16>
    %373 = arith.extf %372 : vector<128x128xbf16> to vector<128x128xf32>
    %c1_163 = arith.constant 1 : index
    %c0_164 = arith.constant 0 : index
    %c0_165 = arith.constant 0 : index
    %c0_166 = arith.constant 0 : index
    %374 = vector.load %arg9[%c1_163, %c0_164, %c0_165, %c0_166] : memref<5x1x128x128xbf16, #tpu.memory_space<vmem>>, vector<1x1x128x128xbf16>
    %375 = vector.shape_cast %374 : vector<1x1x128x128xbf16> to vector<128x128xbf16>
    %376 = arith.extf %375 : vector<128x128xbf16> to vector<128x128xf32>
    %c0_167 = arith.constant 0 : index
    %c0_168 = arith.constant 0 : index
    %c0_169 = arith.constant 0 : index
    %c0_170 = arith.constant 0 : index
    %377 = vector.load %arg10[%c0_167, %c0_168, %c0_169, %c0_170] : memref<3x1x128x128xbf16, #tpu.memory_space<vmem>>, vector<1x1x128x128xbf16>
    %378 = vector.shape_cast %377 : vector<1x1x128x128xbf16> to vector<128x128xbf16>
    %379 = arith.extf %378 : vector<128x128xbf16> to vector<128x128xf32>
    %cst_171 = arith.constant 1.000000e+00 : f32
    %380 = vector.broadcast %cst_171 : f32 to vector<128x1xf32>
    %381 = arith.subf %380, %336 : vector<128x1xf32>
    %cst_172 = arith.constant 1.000000e+00 : f32
    %382 = vector.broadcast %cst_172 : f32 to vector<128x1xf32>
    %383 = arith.subf %382, %343 : vector<128x1xf32>
    %384 = arith.mulf %381, %383 : vector<128x1xf32>
    %cst_173 = arith.constant 1.000000e+00 : f32
    %385 = vector.broadcast %cst_173 : f32 to vector<128x128xf32>
    %386 = arith.subf %385, %367 : vector<128x128xf32>
    %387 = arith.addf %386, %370 : vector<128x128xf32>
    %cst_174 = arith.constant 2.500000e-01 : f32
    %388 = vector.broadcast %cst_174 : f32 to vector<128x128xf32>
    %389 = arith.mulf %388, %387 : vector<128x128xf32>
    %cst_175 = arith.constant 1.000000e+00 : f32
    %390 = vector.broadcast %cst_175 : f32 to vector<128x128xf32>
    %391 = arith.subf %390, %376 : vector<128x128xf32>
    %392 = arith.addf %391, %373 : vector<128x128xf32>
    %393 = arith.mulf %389, %392 : vector<128x128xf32>
    %cst_176 = arith.constant 1.000000e+00 : f32
    %394 = vector.broadcast %cst_176 : f32 to vector<128x128xf32>
    %395 = arith.subf %394, %379 : vector<128x128xf32>
    %396 = arith.mulf %393, %395 : vector<128x128xf32>
    %397 = vector.broadcast %384 : vector<128x1xf32> to vector<128x128xf32>
    %398 = arith.mulf %396, %397 : vector<128x128xf32>
    %cst_177 = arith.constant 0.000000e+00 : f32
    %cst_178 = arith.constant 1.000000e+00 : f32
    %399 = vector.broadcast %cst_177 : f32 to vector<128x128xf32>
    %400 = arith.maximumf %399, %398 : vector<128x128xf32>
    %401 = vector.broadcast %cst_178 : f32 to vector<128x128xf32>
    %402 = arith.minimumf %401, %400 : vector<128x128xf32>
    %403 = arith.truncf %402 : vector<128x128xf32> to vector<128x128xbf16>
    %c0_179 = arith.constant 0 : index
    %c0_180 = arith.constant 0 : index
    %c0_181 = arith.constant 0 : index
    %404 = vector.load %arg12[%c0_179, %c0_180, %c0_181] : memref<1x128x128xbf16, #tpu.memory_space<vmem>>, vector<1x128x128xbf16>
    %405 = vector.shape_cast %404 : vector<1x128x128xbf16> to vector<128x128xbf16>
    %406 = vector.shape_cast %403 : vector<128x128xbf16> to vector<1x128x128xbf16>
    tpu.vector_store %arg12[%c0_179, %c0_180, %c0_181], %406 {strides = array<i32>} : memref<1x128x128xbf16, #tpu.memory_space<vmem>>, vector<1x128x128xbf16>,
    %cst_182 = arith.constant 5.000000e-01 : f32
    %407 = vector.broadcast %cst_182 : f32 to vector<128x1xf32>
    %408 = arith.cmpf olt, %336, %407 : vector<128x1xf32>
    %cst_183 = arith.constant 5.000000e-01 : f32
    %409 = vector.broadcast %cst_183 : f32 to vector<128x1xf32>
    %410 = arith.cmpf olt, %343, %409 : vector<128x1xf32>
    %411 = arith.andi %408, %410 : vector<128x1xi1>
    %cst_184 = arith.constant 5.000000e-01 : f32
    %412 = vector.broadcast %cst_184 : f32 to vector<128x128xf32>
    %413 = arith.cmpf olt, %367, %412 : vector<128x128xf32>
    %cst_185 = arith.constant 5.000000e-01 : f32
    %414 = vector.broadcast %cst_185 : f32 to vector<128x128xf32>
    %415 = arith.cmpf olt, %376, %414 : vector<128x128xf32>
    %416 = arith.andi %413, %415 : vector<128x128xi1>
    %cst_186 = arith.constant 5.000000e-01 : f32
    %417 = vector.broadcast %cst_186 : f32 to vector<128x128xf32>
    %418 = arith.cmpf olt, %379, %417 : vector<128x128xf32>
    %419 = arith.andi %416, %418 : vector<128x128xi1>
    %420 = vector.broadcast %411 : vector<128x1xi1> to vector<128x128xi1>
    %421 = arith.andi %419, %420 : vector<128x128xi1>
    %422 = arith.extui %421 : vector<128x128xi1> to vector<128x128xi8>
    %c0_187 = arith.constant 0 : index
    %c0_188 = arith.constant 0 : index
    %c0_189 = arith.constant 0 : index
    %423 = vector.load %arg13[%c0_187, %c0_188, %c0_189] : memref<1x128x128xi8, #tpu.memory_space<vmem>>, vector<1x128x128xi8>
    %424 = vector.shape_cast %423 : vector<1x128x128xi8> to vector<128x128xi8>
    %425 = vector.shape_cast %422 : vector<128x128xi8> to vector<1x128x128xi8>
    tpu.vector_store %arg13[%c0_187, %c0_188, %c0_189], %425 {strides = array<i32>} : memref<1x128x128xi8, #tpu.memory_space<vmem>>, vector<1x128x128xi8>,
    return
  }
  func.func @transform_0(%arg0: i32, %arg1: i32, %arg2: memref<30xf32, #tpu.memory_space<smem>>, %arg3: memref<10xf32, #tpu.memory_space<smem>>) -> (i32, i32, i32, i32) {
    %c0_i32 = arith.constant 0 : i32
    %c0_i32_0 = arith.constant 0 : i32
    %c0_i32_1 = arith.constant 0 : i32
    return %arg0, %c0_i32, %arg1, %c0_i32_0 : i32, i32, i32, i32
  }
  func.func @transform_1(%arg0: i32, %arg1: i32, %arg2: memref<30xf32, #tpu.memory_space<smem>>, %arg3: memref<10xf32, #tpu.memory_space<smem>>) -> (i32, i32) {
    %c0_i32 = arith.constant 0 : i32
    %c0_i32_0 = arith.constant 0 : i32
    %c0_i32_1 = arith.constant 0 : i32
    return %c0_i32, %c0_i32_0 : i32, i32
  }
  func.func @transform_2(%arg0: i32, %arg1: i32, %arg2: memref<30xf32, #tpu.memory_space<smem>>, %arg3: memref<10xf32, #tpu.memory_space<smem>>) -> (i32, i32, i32, i32) {
    %c0_i32 = arith.constant 0 : i32
    %c0_i32_0 = arith.constant 0 : i32
    %c0_i32_1 = arith.constant 0 : i32
    return %c0_i32, %arg0, %arg1, %c0_i32_0 : i32, i32, i32, i32
  }
  func.func @transform_3(%arg0: i32, %arg1: i32, %arg2: memref<30xf32, #tpu.memory_space<smem>>, %arg3: memref<10xf32, #tpu.memory_space<smem>>) -> (i32, i32, i32, i32) {
    %c0_i32 = arith.constant 0 : i32
    %c0_i32_0 = arith.constant 0 : i32
    %c0_i32_1 = arith.constant 0 : i32
    return %c0_i32, %arg0, %arg1, %c0_i32_0 : i32, i32, i32, i32
  }
  func.func @transform_4(%arg0: i32, %arg1: i32, %arg2: memref<30xf32, #tpu.memory_space<smem>>, %arg3: memref<10xf32, #tpu.memory_space<smem>>) -> (i32, i32, i32, i32) {
    %c0_i32 = arith.constant 0 : i32
    %c0_i32_0 = arith.constant 0 : i32
    %c0_i32_1 = arith.constant 0 : i32
    return %c0_i32, %arg0, %arg1, %c0_i32_0 : i32, i32, i32, i32
  }
  func.func @transform_5(%arg0: i32, %arg1: i32, %arg2: memref<30xf32, #tpu.memory_space<smem>>, %arg3: memref<10xf32, #tpu.memory_space<smem>>) -> (i32, i32, i32, i32) {
    %c0_i32 = arith.constant 0 : i32
    %c0_i32_0 = arith.constant 0 : i32
    %c0_i32_1 = arith.constant 0 : i32
    return %c0_i32, %arg0, %arg1, %c0_i32_0 : i32, i32, i32, i32
  }
  func.func @transform_6(%arg0: i32, %arg1: i32, %arg2: memref<30xf32, #tpu.memory_space<smem>>, %arg3: memref<10xf32, #tpu.memory_space<smem>>) -> (i32, i32, i32, i32) {
    %c0_i32 = arith.constant 0 : i32
    %c0_i32_0 = arith.constant 0 : i32
    %c0_i32_1 = arith.constant 0 : i32
    return %c0_i32, %arg0, %arg1, %c0_i32_0 : i32, i32, i32, i32
  }
  func.func @transform_7(%arg0: i32, %arg1: i32, %arg2: memref<30xf32, #tpu.memory_space<smem>>, %arg3: memref<10xf32, #tpu.memory_space<smem>>) -> (i32, i32, i32) {
    %c0_i32 = arith.constant 0 : i32
    %c0_i32_0 = arith.constant 0 : i32
    return %arg0, %arg1, %c0_i32 : i32, i32, i32
  }
  func.func @transform_8(%arg0: i32, %arg1: i32, %arg2: memref<30xf32, #tpu.memory_space<smem>>, %arg3: memref<10xf32, #tpu.memory_space<smem>>) -> (i32, i32, i32) {
    %c0_i32 = arith.constant 0 : i32
    %c0_i32_0 = arith.constant 0 : i32
    return %arg0, %arg1, %c0_i32 : i32, i32, i32
  }
  func.func @transform_9(%arg0: i32, %arg1: i32, %arg2: memref<30xf32, #tpu.memory_space<smem>>, %arg3: memref<10xf32, #tpu.memory_space<smem>>) -> (i32, i32, i32) {
    %c0_i32 = arith.constant 0 : i32
    %c0_i32_0 = arith.constant 0 : i32
    return %arg0, %arg1, %c0_i32 : i32, i32, i32
  }
}

</mosaic_0001>

<llo_original>
// kernel: tpu_custom_call.1
$region0: #{tpu_custom_call.1}
  #allocation0 [shape = 'u32[]', space=smem, size = 0x4, offset = 0x4, fixed_abs, tag = 'smem constant byte address 0x4 - core index']
  #allocation1 [shape = 'u32[144,128]{1,0:T(1,128)}', space=vmem, size = 0x12000, scoped, tag = 'internal scratch']
  #allocation2 [shape = 'f32[640,128]{1,0:T(8,128)}', space=vmem, size = 0x50000, scoped, tag = 'scratch operand']
  #allocation3 [shape = 's32[1]{0}', space=sflag, size = 0x4, scoped, tag = 'scoped memory for tpu_custom_call.1']
  #allocation4 [shape = 'u8[512]{0}', space=smem, size = 0x200, scoped, tag = 'prefetched SMEM operand 0']
  #allocation5 [shape = 'u8[512]{0}', space=smem, size = 0x200, scoped, tag = 'prefetched SMEM operand 1']
  #allocation23 [shape = 's32[]', space=sflag, size = 0x4, offset = 0, fixed_abs, tag = 'sflag constant byte address 0x0 - dummy sync flag']
  #allocation25 [shape = 's32[]', space=sflag, size = 0x4, offset = 0, fixed_abs, tag = 'sflag constant byte address 0x0 - dummy sync flag']
  #allocation27 [shape = 's32[]', space=sflag, size = 0x4, offset = 0, fixed_abs, tag = 'sflag constant byte address 0x0 - dummy sync flag']
  #allocation29 [shape = 's32[]', space=sflag, size = 0x4, offset = 0, fixed_abs, tag = 'sflag constant byte address 0x0 - dummy sync flag']
  #allocation31 [shape = 's32[]', space=sflag, size = 0x4, offset = 0, fixed_abs, tag = 'sflag constant byte address 0x0 - dummy sync flag']
  #allocation33 [shape = 's32[]', space=sflag, size = 0x4, offset = 0, fixed_abs, tag = 'sflag constant byte address 0x0 - dummy sync flag']
  %s0 = inlined_call_operand.hbm [shape: f32[30], index: 0, kind: input, shape index: {}]
  %s1 = inlined_call_operand.hbm [shape: f32[10], index: 1, kind: input, shape index: {}]
  %s2 = inlined_call_operand.hbm [shape: f32[2,3,256,128], index: 2, kind: input, shape index: {}]
  %s3 = inlined_call_operand.hbm [shape: f32[128,128], index: 3, kind: input, shape index: {}]
  %s4 = inlined_call_operand.hbm [shape: f32[10,2,256,128], index: 4, kind: output, shape index: {0}]
  %s5 = inlined_call_operand.hbm [shape: bf16[5,2,256,128], index: 5, kind: output, shape index: {1}]
  %s6 = inlined_call_operand.hbm [shape: bf16[5,2,256,128], index: 6, kind: output, shape index: {2}]
  %s7 = inlined_call_operand.hbm [shape: bf16[5,2,256,128], index: 7, kind: output, shape index: {3}]
  %s8 = inlined_call_operand.hbm [shape: bf16[3,2,256,128], index: 8, kind: output, shape index: {4}]
  %s9 = inlined_call_operand.hbm [shape: f32[2,256,4], index: 9, kind: output, shape index: {5}]
  %s10 = inlined_call_operand.hbm [shape: bf16[2,256,128], index: 10, kind: output, shape index: {6}]
  %s11 = inlined_call_operand.hbm [shape: s8[2,256,128], index: 11, kind: output, shape index: {7}]
  %12 = xla_tuple %s4, %s5, %s6, %s7, %s8, %s9, %s10, %s11
  %s13 = sld [smem:[#allocation0]]
  $region105: #{tpu_custom_call.1} parent=0
    _
  %s15 = ssub.s32 1, %s13
  %s16 = scalar_select 0, %s15, %s13
  %18 = dma.hbm_to_smem %s0, 16, [#allocation4], [#allocation3]
  %20 = dma.hbm_to_smem %s1, 16, [#allocation5], [#allocation3]
  %21 = dma.done [#allocation3], 32
  %22 = sfence
  $region1: #{tpu_custom_call.1} parent=0
    #allocation6 [shape = 'u8[393216]{0}', space=vmem, size = 0x60000, scoped, tag = 'input window, operand 2']
    #allocation7 [shape = 's32[2]{0}', space=sflag, size = 0x8, scoped, tag = 'scoped memory for tpu_custom_call.1']
    #allocation8 [shape = 's32[2]{0}', space=sflag, size = 0x8, scoped, tag = 'scoped memory for tpu_custom_call.1']
    #allocation9 [shape = 'u8[65536]{0}', space=vmem, size = 0x10000, scoped, tag = 'input window, operand 3, single buffered']
    #allocation10 [shape = 's32[1]{0}', space=sflag, size = 0x4, scoped, tag = 'scoped memory for tpu_custom_call.1']
    #allocation11 [shape = 'u8[1310720]{0}', space=vmem, size = 0x140000, scoped, tag = 'output window, operand 0']
    #allocation12 [shape = 'u8[327680]{0}', space=vmem, size = 0x50000, scoped, tag = 'output window, operand 1']
    #allocation13 [shape = 's32[2]{0}', space=sflag, size = 0x8, scoped, tag = 'scoped memory for tpu_custom_call.1']
    #allocation14 [shape = 'u8[327680]{0}', space=vmem, size = 0x50000, scoped, tag = 'output window, operand 2']
    #allocation15 [shape = 'u8[327680]{0}', space=vmem, size = 0x50000, scoped, tag = 'output window, operand 3']
    #allocation16 [shape = 's32[2]{0}', space=sflag, size = 0x8, scoped, tag = 'scoped memory for tpu_custom_call.1']
    #allocation17 [shape = 'u8[196608]{0}', space=vmem, size = 0x30000, scoped, tag = 'output window, operand 4']
    #allocation18 [shape = 'u8[131072]{0}', space=vmem, size = 0x20000, scoped, tag = 'output window, operand 5']
    #allocation19 [shape = 's32[2]{0}', space=sflag, size = 0x8, scoped, tag = 'scoped memory for tpu_custom_call.1']
    #allocation20 [shape = 'u8[65536]{0}', space=vmem, size = 0x10000, scoped, tag = 'output window, operand 6']
    #allocation21 [shape = 'u8[32768]{0}', space=vmem, size = 0x8000, scoped, tag = 'output window, operand 7']
    #allocation22 [shape = 's32[2]{0}', space=sflag, size = 0x8, scoped, tag = 'scoped memory for tpu_custom_call.1']
    %23 = vsyncpa [#allocation7], 0
    %s24 = scalar_lea.sflag [#allocation7], 1
    %25 = vsyncpa %s24, 0
    %26 = vsyncpa [#allocation10], 0
    %27 = vsyncpa [#allocation8], 0
    %s28 = scalar_lea.sflag [#allocation8], 1
    %29 = vsyncpa %s28, 0
    %30 = vsyncpa [#allocation13], 0
    %s31 = scalar_lea.sflag [#allocation13], 1
    %32 = vsyncpa %s31, 0
    %33 = vsyncpa [#allocation16], 0
    %s34 = scalar_lea.sflag [#allocation16], 1
    %35 = vsyncpa %s34, 0
    %36 = vsyncpa [#allocation19], 0
    %s37 = scalar_lea.sflag [#allocation19], 1
    %38 = vsyncpa %s37, 0
    %39 = vsyncpa [#allocation22], 0
    %s40 = scalar_lea.sflag [#allocation22], 1
    %41 = vsyncpa %s40, 0
    loop: start=0, step=1, limit=6
    $region2: #{tpu_custom_call.1} parent=1 // loop_pre_header
      _
    $region3: #{tpu_custom_call.1} parent=1 // loop_header
      %s43 = sphi 0, %s47
      %p44 = scmp.ge.s32.totalorder %s43, 6
      %s50 = sphi 0, %s62
      %s51 = sphi 0, %s58
      %s52 = sphi 0, %s50
      %s53 = sphi 0, %s51
      %s54 = sphi 0, %s52
      %s55 = sphi 0, %s53
      %s67 = sphi 0, %s69
      %s70 = sphi 0, %s67
      %s71 = sphi 0, %s70
      %s87 = sphi 0, %s71
      %s91 = sphi 0, %s91
      %s93 = sphi 0, %s91
      %s94 = sphi 0, %s93
      %s108 = sphi 0, %s94
      %s116 = sphi 0, %s118
      %s119 = sphi 0, %s116
      %s120 = sphi 0, %s119
      %s136 = sphi 0, %s120
      %s144 = sphi 0, %s146
      %s147 = sphi 0, %s144
      %s148 = sphi 0, %s147
      %s164 = sphi 0, %s148
      %s172 = sphi 0, %s174
      %s175 = sphi 0, %s172
      %s176 = sphi 0, %s175
      %s192 = sphi 0, %s176
      %s200 = sphi 0, %s202
      %s203 = sphi 0, %s200
      %s204 = sphi 0, %s203
      %s220 = sphi 0, %s204
      %s228 = sphi 0, %s230
      %s231 = sphi 0, %s228
      %s232 = sphi 0, %s231
      %s248 = sphi 0, %s232
      %s256 = sphi 0, %s258
      %s259 = sphi 0, %s256
      %s260 = sphi 0, %s259
      %s276 = sphi 0, %s260
      %s284 = sphi 0, %s286
      %s287 = sphi 0, %s284
      %s288 = sphi 0, %s287
      %s304 = sphi 0, %s288
      %s312 = sphi 0, %s314
      %s315 = sphi 0, %s312
      %s316 = sphi 0, %s315
      %s332 = sphi 0, %s316
    $region4: #{tpu_custom_call.1} parent=1 // loop_header_branch
      %46 = sbr.rel (%p44) target = $region8
    $region5: #{tpu_custom_call.1} parent=1 // loop_body
      %s48 = ssub.s32 %s43, 1
      %s49 = ssub.s32 %s43, 2
      %s56 = sadd.s32 1, %s51
      %p57 = scmp.ge.s32.totalorder %s56, 2
      %s58 = scalar_select %p57, 0, %s56
      %s59 = sadd.s32 1, %s50
      %s60 = scalar_select %p57, %s59, %s50
      %p61 = scmp.ge.s32.totalorder %s60, 2
      %s62 = scalar_select %p61, 0, %s60
      %s63 = ssub.s32 %s50, %s62
      %s64 = ssub.s32 %s51, %s58
      %s65 = sor.u32 %s63, %s64
      %p66 = scmp.eq.s32.totalorder %s65, 0
      %s68 = sadd.s32 %s67, 1
      %s69 = scalar_select %p66, %s67, %s68
      %p72 = pneg %p66
      %p73 = scmp.eq.s32.totalorder %s43, 3
      %p74 = por %p72, %p73
      %p75 = scmp.ne.s32.totalorder %s67, %s70
      %p76 = scmp.eq.s32.totalorder %s43, 0
      %p77 = por %p75, %p76
      %p78 = scmp.ne.s32.totalorder %s67, %s70
      %p79 = scmp.eq.s32.totalorder %s48, 3
      %p80 = por %p78, %p79
      %p81 = scmp.ne.s32.totalorder %s70, %s71
      %p82 = scmp.eq.s32.totalorder %s48, 0
      %p83 = por %p81, %p82
      %p84 = scmp.ne.s32.totalorder %s70, %s71
      %p85 = scmp.eq.s32.totalorder %s49, 3
      %p86 = por %p84, %p85
      %p88 = scmp.ne.s32.totalorder %s71, %s87
      %p89 = scmp.eq.s32.totalorder %s49, 0
      %p90 = por %p88, %p89
      %s92 = sadd.s32 %s91, 1
      %p95 = scmp.eq.s32.totalorder %s43, 3
      %p96 = scmp.ne.s32.totalorder %s91, %s93
      %p97 = scmp.eq.s32.totalorder %s43, 0
      %p98 = por %p96, %p97
      %p99 = scmp.ne.s32.totalorder %s91, %s93
      %p100 = scmp.eq.s32.totalorder %s48, 3
      %p101 = por %p99, %p100
      %p102 = scmp.ne.s32.totalorder %s93, %s94
      %p103 = scmp.eq.s32.totalorder %s48, 0
      %p104 = por %p102, %p103
      %p105 = scmp.ne.s32.totalorder %s93, %s94
      %p106 = scmp.eq.s32.totalorder %s49, 3
      %p107 = por %p105, %p106
      %p109 = scmp.ne.s32.totalorder %s94, %s108
      %p110 = scmp.eq.s32.totalorder %s49, 0
      %p111 = por %p109, %p110
      %s112 = ssub.s32 %s50, %s62
      %s113 = ssub.s32 %s51, %s58
      %s114 = sor.u32 %s112, %s113
      %p115 = scmp.eq.s32.totalorder %s114, 0
      %s117 = sadd.s32 %s116, 1
      %s118 = scalar_select %p115, %s116, %s117
      %p121 = pneg %p115
      %p122 = scmp.eq.s32.totalorder %s43, 3
      %p123 = por %p121, %p122
      %p124 = scmp.ne.s32.totalorder %s116, %s119
      %p125 = scmp.eq.s32.totalorder %s43, 0
      %p126 = por %p124, %p125
      %p127 = scmp.ne.s32.totalorder %s116, %s119
      %p128 = scmp.eq.s32.totalorder %s48, 3
      %p129 = por %p127, %p128
      %p130 = scmp.ne.s32.totalorder %s119, %s120
      %p131 = scmp.eq.s32.totalorder %s48, 0
      %p132 = por %p130, %p131
      %p133 = scmp.ne.s32.totalorder %s119, %s120
      %p134 = scmp.eq.s32.totalorder %s49, 3
      %p135 = por %p133, %p134
      %p137 = scmp.ne.s32.totalorder %s120, %s136
      %p138 = scmp.eq.s32.totalorder %s49, 0
      %p139 = por %p137, %p138
      %s140 = ssub.s32 %s50, %s62
      %s141 = ssub.s32 %s51, %s58
      %s142 = sor.u32 %s140, %s141
      %p143 = scmp.eq.s32.totalorder %s142, 0
      %s145 = sadd.s32 %s144, 1
      %s146 = scalar_select %p143, %s144, %s145
      %p149 = pneg %p143
      %p150 = scmp.eq.s32.totalorder %s43, 3
      %p151 = por %p149, %p150
      %p152 = scmp.ne.s32.totalorder %s144, %s147
      %p153 = scmp.eq.s32.totalorder %s43, 0
      %p154 = por %p152, %p153
      %p155 = scmp.ne.s32.totalorder %s144, %s147
      %p156 = scmp.eq.s32.totalorder %s48, 3
      %p157 = por %p155, %p156
      %p158 = scmp.ne.s32.totalorder %s147, %s148
      %p159 = scmp.eq.s32.totalorder %s48, 0
      %p160 = por %p158, %p159
      %p161 = scmp.ne.s32.totalorder %s147, %s148
      %p162 = scmp.eq.s32.totalorder %s49, 3
      %p163 = por %p161, %p162
      %p165 = scmp.ne.s32.totalorder %s148, %s164
      %p166 = scmp.eq.s32.totalorder %s49, 0
      %p167 = por %p165, %p166
      %s168 = ssub.s32 %s50, %s62
      %s169 = ssub.s32 %s51, %s58
      %s170 = sor.u32 %s168, %s169
      %p171 = scmp.eq.s32.totalorder %s170, 0
      %s173 = sadd.s32 %s172, 1
      %s174 = scalar_select %p171, %s172, %s173
      %p177 = pneg %p171
      %p178 = scmp.eq.s32.totalorder %s43, 3
      %p179 = por %p177, %p178
      %p180 = scmp.ne.s32.totalorder %s172, %s175
      %p181 = scmp.eq.s32.totalorder %s43, 0
      %p182 = por %p180, %p181
      %p183 = scmp.ne.s32.totalorder %s172, %s175
      %p184 = scmp.eq.s32.totalorder %s48, 3
      %p185 = por %p183, %p184
      %p186 = scmp.ne.s32.totalorder %s175, %s176
      %p187 = scmp.eq.s32.totalorder %s48, 0
      %p188 = por %p186, %p187
      %p189 = scmp.ne.s32.totalorder %s175, %s176
      %p190 = scmp.eq.s32.totalorder %s49, 3
      %p191 = por %p189, %p190
      %p193 = scmp.ne.s32.totalorder %s176, %s192
      %p194 = scmp.eq.s32.totalorder %s49, 0
      %p195 = por %p193, %p194
      %s196 = ssub.s32 %s50, %s62
      %s197 = ssub.s32 %s51, %s58
      %s198 = sor.u32 %s196, %s197
      %p199 = scmp.eq.s32.totalorder %s198, 0
      %s201 = sadd.s32 %s200, 1
      %s202 = scalar_select %p199, %s200, %s201
      %p205 = pneg %p199
      %p206 = scmp.eq.s32.totalorder %s43, 3
      %p207 = por %p205, %p206
      %p208 = scmp.ne.s32.totalorder %s200, %s203
      %p209 = scmp.eq.s32.totalorder %s43, 0
      %p210 = por %p208, %p209
      %p211 = scmp.ne.s32.totalorder %s200, %s203
      %p212 = scmp.eq.s32.totalorder %s48, 3
      %p213 = por %p211, %p212
      %p214 = scmp.ne.s32.totalorder %s203, %s204
      %p215 = scmp.eq.s32.totalorder %s48, 0
      %p216 = por %p214, %p215
      %p217 = scmp.ne.s32.totalorder %s203, %s204
      %p218 = scmp.eq.s32.totalorder %s49, 3
      %p219 = por %p217, %p218
      %p221 = scmp.ne.s32.totalorder %s204, %s220
      %p222 = scmp.eq.s32.totalorder %s49, 0
      %p223 = por %p221, %p222
      %s224 = ssub.s32 %s50, %s62
      %s225 = ssub.s32 %s51, %s58
      %s226 = sor.u32 %s224, %s225
      %p227 = scmp.eq.s32.totalorder %s226, 0
      %s229 = sadd.s32 %s228, 1
      %s230 = scalar_select %p227, %s228, %s229
      %p233 = pneg %p227
      %p234 = scmp.eq.s32.totalorder %s43, 3
      %p235 = por %p233, %p234
      %p236 = scmp.ne.s32.totalorder %s228, %s231
      %p237 = scmp.eq.s32.totalorder %s43, 0
      %p238 = por %p236, %p237
      %p239 = scmp.ne.s32.totalorder %s228, %s231
      %p240 = scmp.eq.s32.totalorder %s48, 3
      %p241 = por %p239, %p240
      %p242 = scmp.ne.s32.totalorder %s231, %s232
      %p243 = scmp.eq.s32.totalorder %s48, 0
      %p244 = por %p242, %p243
      %p245 = scmp.ne.s32.totalorder %s231, %s232
      %p246 = scmp.eq.s32.totalorder %s49, 3
      %p247 = por %p245, %p246
      %p249 = scmp.ne.s32.totalorder %s232, %s248
      %p250 = scmp.eq.s32.totalorder %s49, 0
      %p251 = por %p249, %p250
      %s252 = ssub.s32 %s50, %s62
      %s253 = ssub.s32 %s51, %s58
      %s254 = sor.u32 %s252, %s253
      %p255 = scmp.eq.s32.totalorder %s254, 0
      %s257 = sadd.s32 %s256, 1
      %s258 = scalar_select %p255, %s256, %s257
      %p261 = pneg %p255
      %p262 = scmp.eq.s32.totalorder %s43, 3
      %p263 = por %p261, %p262
      %p264 = scmp.ne.s32.totalorder %s256, %s259
      %p265 = scmp.eq.s32.totalorder %s43, 0
      %p266 = por %p264, %p265
      %p267 = scmp.ne.s32.totalorder %s256, %s259
      %p268 = scmp.eq.s32.totalorder %s48, 3
      %p269 = por %p267, %p268
      %p270 = scmp.ne.s32.totalorder %s259, %s260
      %p271 = scmp.eq.s32.totalorder %s48, 0
      %p272 = por %p270, %p271
      %p273 = scmp.ne.s32.totalorder %s259, %s260
      %p274 = scmp.eq.s32.totalorder %s49, 3
      %p275 = por %p273, %p274
      %p277 = scmp.ne.s32.totalorder %s260, %s276
      %p278 = scmp.eq.s32.totalorder %s49, 0
      %p279 = por %p277, %p278
      %s280 = ssub.s32 %s50, %s62
      %s281 = ssub.s32 %s51, %s58
      %s282 = sor.u32 %s280, %s281
      %p283 = scmp.eq.s32.totalorder %s282, 0
      %s285 = sadd.s32 %s284, 1
      %s286 = scalar_select %p283, %s284, %s285
      %p289 = pneg %p283
      %p290 = scmp.eq.s32.totalorder %s43, 3
      %p291 = por %p289, %p290
      %p292 = scmp.ne.s32.totalorder %s284, %s287
      %p293 = scmp.eq.s32.totalorder %s43, 0
      %p294 = por %p292, %p293
      %p295 = scmp.ne.s32.totalorder %s284, %s287
      %p296 = scmp.eq.s32.totalorder %s48, 3
      %p297 = por %p295, %p296
      %p298 = scmp.ne.s32.totalorder %s287, %s288
      %p299 = scmp.eq.s32.totalorder %s48, 0
      %p300 = por %p298, %p299
      %p301 = scmp.ne.s32.totalorder %s287, %s288
      %p302 = scmp.eq.s32.totalorder %s49, 3
      %p303 = por %p301, %p302
      %p305 = scmp.ne.s32.totalorder %s288, %s304
      %p306 = scmp.eq.s32.totalorder %s49, 0
      %p307 = por %p305, %p306
      %s308 = ssub.s32 %s50, %s62
      %s309 = ssub.s32 %s51, %s58
      %s310 = sor.u32 %s308, %s309
      %p311 = scmp.eq.s32.totalorder %s310, 0
      %s313 = sadd.s32 %s312, 1
      %s314 = scalar_select %p311, %s312, %s313
      %p317 = pneg %p311
      %p318 = scmp.eq.s32.totalorder %s43, 3
      %p319 = por %p317, %p318
      %p320 = scmp.ne.s32.totalorder %s312, %s315
      %p321 = scmp.eq.s32.totalorder %s43, 0
      %p322 = por %p320, %p321
      %p323 = scmp.ne.s32.totalorder %s312, %s315
      %p324 = scmp.eq.s32.totalorder %s48, 3
      %p325 = por %p323, %p324
      %p326 = scmp.ne.s32.totalorder %s315, %s316
      %p327 = scmp.eq.s32.totalorder %s48, 0
      %p328 = por %p326, %p327
      %p329 = scmp.ne.s32.totalorder %s315, %s316
      %p330 = scmp.eq.s32.totalorder %s49, 3
      %p331 = por %p329, %p330
      %p333 = scmp.ne.s32.totalorder %s316, %s332
      %p334 = scmp.eq.s32.totalorder %s49, 0
      %p335 = por %p333, %p334
      %p336 = scmp.le.s32.totalorder 1, %s43
      %p337 = scmp.lt.s32.totalorder %s43, 5
      %p338 = pnand %p336, %p337
      %p339 = pneg %p338
      // Predicated region
      $region9: #{tpu_custom_call.1} parent=5 // pred_check
        _
      $region10: #{tpu_custom_call.1} parent=5 // pred_check_branch
        %341 = sbr.rel (%p338) target = $region12
      $region11: #{tpu_custom_call.1} parent=5 // pred_region
        %s342 = ssub.s32 %s43, 1
        // Predicated region
        $region13: #{tpu_custom_call.1} parent=11 // pred_check
          %p343 = pneg %p104
        $region14: #{tpu_custom_call.1} parent=11 // pred_check_branch
          %345 = sbr.rel (%p343) target = $region16
        $region15: #{tpu_custom_call.1} parent=11 // pred_region
          %s347 = ssub.s32 2048, 2048
          %348 = vsyncadd [#allocation10], %s347
          %s349 = sshll.u32 [#allocation9], 4
          %s350 = int_to_ptr.vmem [resolvable:$true] %s349
          %355 = dma.hbm_to_vmem [thread:$0]  %s3, 2048, %s350, [#allocation10], 128, 128, 8
        $region16: #{tpu_custom_call.1} parent=11 // pred_fallthru
          _
      $region12: #{tpu_custom_call.1} parent=5 // pred_fallthru
        _
      %p356 = scmp.lt.s32.totalorder %s43, 4
      // Predicated region
      $region17: #{tpu_custom_call.1} parent=5 // pred_check
        %p357 = pneg %p356
      $region18: #{tpu_custom_call.1} parent=5 // pred_check_branch
        %359 = sbr.rel (%p357) target = $region20
      $region19: #{tpu_custom_call.1} parent=5 // pred_region
        // Predicated region
        $region21: #{tpu_custom_call.1} parent=19 // pred_check
          %p360 = pneg %p77
        $region22: #{tpu_custom_call.1} parent=19 // pred_check_branch
          %362 = sbr.rel (%p360) target = $region24
        $region23: #{tpu_custom_call.1} parent=19 // pred_region
          #allocation24 [shape = 'u32[6]{0}', space=smem, size = 0x18, scoped, tag = 'DMA stride descriptor']
          %s363 = sand.u32 %s67, 1
          %s364 = scalar_lea.sflag [#allocation7], %s363
          %s365 = sand.u32 %s67, 1
          %s366 = smul.addr %s365, 384
          %s367 = scalar_lea.vmem [#allocation6], %s366
          %s368 = smul.u32 16, %s51
          %s370 = ssub.s32 6144, 6144
          %371 = vsyncadd %s364, %s370
          %s372 = smul.addr %s50, 96
          %s373 = sadd.s32 %s368, %s372
          %s374 = smul.addr %s373, 128
          %s375 = scalar_lea.hbm %s2, %s374
          %s377 = sshll.u32 1, 14
          %s378 = sxor.u32 4294967295, %s377
          %s380 = sld [smem:[#allocation0]]
          %s381 = sadd.s32 2, %s380
          %s383 = sshll.u32 7, 26
          %s384 = sxor.u32 4294967295, %s383
          %s385 = sand.u32 0, %s384
          %s386 = sshll.u32 %s381, 26
          %s387 = sor.u32 %s385, %s386
          %s388 = sshll.u32 %s367, 4
          %s389 = int_to_ptr.vmem [resolvable:$true] %s388
          %395 = sst [smem:[#allocation24]] 4096
          %s396 = scalar_lea.smem [#allocation24], 1
          %397 = sst [smem:[%s396]] 2048
          %s398 = scalar_lea.smem [#allocation24], 2
          %399 = sst [smem:[%s398]] 16
          %s400 = scalar_lea.smem [#allocation24], 3
          %401 = sst [smem:[%s400]] 128
          %s402 = scalar_lea.smem [#allocation24], 4
          %403 = sst [smem:[%s402]] 128
          %s404 = scalar_lea.smem [#allocation24], 5
          %405 = sst [smem:[%s404]] 8
          %407 = dma.general %s375, 6144, %s389, %s364, [#allocation23], [#allocation24], %s387, 0
        $region24: #{tpu_custom_call.1} parent=19 // pred_fallthru
          _
      $region20: #{tpu_custom_call.1} parent=5 // pred_fallthru
        _
      %p408 = scmp.le.s32.totalorder 1, %s43
      %p409 = scmp.lt.s32.totalorder %s43, 5
      %p410 = pnand %p408, %p409
      %p411 = pneg %p410
      // Predicated region
      $region25: #{tpu_custom_call.1} parent=5 // pred_check
        _
      $region26: #{tpu_custom_call.1} parent=5 // pred_check_branch
        %413 = sbr.rel (%p410) target = $region28
      $region27: #{tpu_custom_call.1} parent=5 // pred_region
        %s414 = ssub.s32 %s43, 1
        %s415 = sand.u32 %s70, 1
        %s416 = scalar_lea.sflag [#allocation7], %s415
        %s417 = sand.u32 %s70, 1
        %s418 = smul.addr %s417, 384
        %s419 = scalar_lea.vmem [#allocation6], %s418
        // Predicated region
        $region29: #{tpu_custom_call.1} parent=27 // pred_check
          %p420 = pneg %p83
        $region30: #{tpu_custom_call.1} parent=27 // pred_check_branch
          %422 = sbr.rel (%p420) target = $region32
        $region31: #{tpu_custom_call.1} parent=27 // pred_region
          %423 = dma.done %s416, 6144
        $region32: #{tpu_custom_call.1} parent=27 // pred_fallthru
          _
        // Predicated region
        $region33: #{tpu_custom_call.1} parent=27 // pred_check
          %p424 = pneg %p104
        $region34: #{tpu_custom_call.1} parent=27 // pred_check_branch
          %426 = sbr.rel (%p424) target = $region36
        $region35: #{tpu_custom_call.1} parent=27 // pred_region
          %427 = dma.done [#allocation10], 2048
        $region36: #{tpu_custom_call.1} parent=27 // pred_fallthru
          _
        %s428 = sand.u32 %s70, 1
        %s429 = scalar_lea.sflag [#allocation7], %s428
        %s430 = sand.u32 %s70, 1
        %s431 = smul.addr %s430, 384
        %s432 = scalar_lea.vmem [#allocation6], %s431
        %p433 = pneg %p83
        %p434 = pneg %p80
        %p435 = pneg %p104
        %p436 = pneg %p101
        %p437 = pneg %p132
        %p438 = pneg %p129
        %s439 = sand.u32 %s119, 1
        %s440 = scalar_lea.sflag [#allocation8], %s439
        %s441 = sand.u32 %s119, 1
        %s442 = smul.addr %s441, 1280
        %s443 = scalar_lea.vmem [#allocation11], %s442
        %p444 = pneg %p160
        %p445 = pneg %p157
        %s446 = sand.u32 %s48, 1
        %s447 = scalar_lea.sflag [#allocation13], %s446
        %s448 = sand.u32 %s147, 1
        %s449 = smul.addr %s448, 320
        %s450 = scalar_lea.vmem [#allocation12], %s449
        %p451 = pneg %p188
        %p452 = pneg %p185
        %s453 = sand.u32 %s48, 1
        %s454 = scalar_lea.sflag [#allocation13], %s453
        %s455 = sand.u32 %s175, 1
        %s456 = smul.addr %s455, 320
        %s457 = scalar_lea.vmem [#allocation14], %s456
        %p458 = pneg %p216
        %p459 = pneg %p213
        %s460 = sand.u32 %s48, 1
        %s461 = scalar_lea.sflag [#allocation16], %s460
        %s462 = sand.u32 %s203, 1
        %s463 = smul.addr %s462, 320
        %s464 = scalar_lea.vmem [#allocation15], %s463
        %p465 = pneg %p244
        %p466 = pneg %p241
        %s467 = sand.u32 %s48, 1
        %s468 = scalar_lea.sflag [#allocation16], %s467
        %s469 = sand.u32 %s231, 1
        %s470 = smul.addr %s469, 192
        %s471 = scalar_lea.vmem [#allocation17], %s470
        %p472 = pneg %p272
        %p473 = pneg %p269
        %s474 = sand.u32 %s48, 1
        %s475 = scalar_lea.sflag [#allocation19], %s474
        %s476 = sand.u32 %s259, 1
        %s477 = smul.addr %s476, 128
        %s478 = scalar_lea.vmem [#allocation18], %s477
        %p479 = pneg %p300
        %p480 = pneg %p297
        %s481 = sand.u32 %s48, 1
        %s482 = scalar_lea.sflag [#allocation19], %s481
        %s483 = sand.u32 %s287, 1
        %s484 = smul.addr %s483, 64
        %s485 = scalar_lea.vmem [#allocation20], %s484
        %p486 = pneg %p328
        %p487 = pneg %p325
        %s488 = sand.u32 %s315, 1
        %s489 = scalar_lea.sflag [#allocation22], %s488
        %s490 = sand.u32 %s315, 1
        %s491 = smul.addr %s490, 32
        %s492 = scalar_lea.vmem [#allocation21], %s491
        %s493 = smul.u32 16, %s53
        %s494 = smul.u32 16, %s53
        %s495 = smul.u32 8, %s53
        %s496 = smul.u32 8, %s53
        %s497 = smul.u32 8, %s53
        %s498 = smul.u32 8, %s53
        %s499 = smul.u32 16, %s53
        %s500 = smul.u32 8, %s53
        %s501 = smul.u32 4, %s53
        %v504 = vld [vmem:[%s419] sm:$0xff]
        %v505 = vld [vmem:[%s419 + $0x8] sm:$0xff]
        %v506 = vld [vmem:[%s419 + $0x10] sm:$0xff]
        %v507 = vld [vmem:[%s419 + $0x18] sm:$0xff]
        %v508 = vld [vmem:[%s419 + $0x20] sm:$0xff]
        %v509 = vld [vmem:[%s419 + $0x28] sm:$0xff]
        %v510 = vld [vmem:[%s419 + $0x30] sm:$0xff]
        %v511 = vld [vmem:[%s419 + $0x38] sm:$0xff]
        %v512 = vld [vmem:[%s419 + $0x40] sm:$0xff]
        %v513 = vld [vmem:[%s419 + $0x48] sm:$0xff]
        %v514 = vld [vmem:[%s419 + $0x50] sm:$0xff]
        %v515 = vld [vmem:[%s419 + $0x58] sm:$0xff]
        %v516 = vld [vmem:[%s419 + $0x60] sm:$0xff]
        %v517 = vld [vmem:[%s419 + $0x68] sm:$0xff]
        %v518 = vld [vmem:[%s419 + $0x70] sm:$0xff]
        %v519 = vld [vmem:[%s419 + $0x78] sm:$0xff]
        %s520 = scalar_lea.vmem %s419, 128 [#allocation6]
        %v521 = vld [vmem:[%s520] sm:$0xff]
        %v522 = vld [vmem:[%s520 + $0x8] sm:$0xff]
        %v523 = vld [vmem:[%s520 + $0x10] sm:$0xff]
        %v524 = vld [vmem:[%s520 + $0x18] sm:$0xff]
        %v525 = vld [vmem:[%s520 + $0x20] sm:$0xff]
        %v526 = vld [vmem:[%s520 + $0x28] sm:$0xff]
        %v527 = vld [vmem:[%s520 + $0x30] sm:$0xff]
        %v528 = vld [vmem:[%s520 + $0x38] sm:$0xff]
        %v529 = vld [vmem:[%s520 + $0x40] sm:$0xff]
        %v530 = vld [vmem:[%s520 + $0x48] sm:$0xff]
        %v531 = vld [vmem:[%s520 + $0x50] sm:$0xff]
        %v532 = vld [vmem:[%s520 + $0x58] sm:$0xff]
        %v533 = vld [vmem:[%s520 + $0x60] sm:$0xff]
        %v534 = vld [vmem:[%s520 + $0x68] sm:$0xff]
        %v535 = vld [vmem:[%s520 + $0x70] sm:$0xff]
        %v536 = vld [vmem:[%s520 + $0x78] sm:$0xff]
        %s537 = scalar_lea.vmem %s419, 256 [#allocation6]
        %v538 = vld [vmem:[%s537] sm:$0xff]
        %v539 = vld [vmem:[%s537 + $0x8] sm:$0xff]
        %v540 = vld [vmem:[%s537 + $0x10] sm:$0xff]
        %v541 = vld [vmem:[%s537 + $0x18] sm:$0xff]
        %v542 = vld [vmem:[%s537 + $0x20] sm:$0xff]
        %v543 = vld [vmem:[%s537 + $0x28] sm:$0xff]
        %v544 = vld [vmem:[%s537 + $0x30] sm:$0xff]
        %v545 = vld [vmem:[%s537 + $0x38] sm:$0xff]
        %v546 = vld [vmem:[%s537 + $0x40] sm:$0xff]
        %v547 = vld [vmem:[%s537 + $0x48] sm:$0xff]
        %v548 = vld [vmem:[%s537 + $0x50] sm:$0xff]
        %v549 = vld [vmem:[%s537 + $0x58] sm:$0xff]
        %v550 = vld [vmem:[%s537 + $0x60] sm:$0xff]
        %v551 = vld [vmem:[%s537 + $0x68] sm:$0xff]
        %v552 = vld [vmem:[%s537 + $0x70] sm:$0xff]
        %v553 = vld [vmem:[%s537 + $0x78] sm:$0xff]
        %s554 = sld [smem:[#allocation4]]
        %v555 = vstv %s554
        %v556 = vmul.f32 %v504, %v555
        %v557 = vmul.f32 %v505, %v555
        %v558 = vmul.f32 %v506, %v555
        %v559 = vmul.f32 %v507, %v555
        %v560 = vmul.f32 %v508, %v555
        %v561 = vmul.f32 %v509, %v555
        %v562 = vmul.f32 %v510, %v555
        %v563 = vmul.f32 %v511, %v555
        %v564 = vmul.f32 %v512, %v555
        %v565 = vmul.f32 %v513, %v555
        %v566 = vmul.f32 %v514, %v555
        %v567 = vmul.f32 %v515, %v555
        %v568 = vmul.f32 %v516, %v555
        %v569 = vmul.f32 %v517, %v555
        %v570 = vmul.f32 %v518, %v555
        %v571 = vmul.f32 %v519, %v555
        %s572 = sld [smem:[#allocation4 + $0x1]]
        %v573 = vstv %s572
        %v574 = vmul.f32 %v521, %v573
        %v575 = vmul.f32 %v522, %v573
        %v576 = vmul.f32 %v523, %v573
        %v577 = vmul.f32 %v524, %v573
        %v578 = vmul.f32 %v525, %v573
        %v579 = vmul.f32 %v526, %v573
        %v580 = vmul.f32 %v527, %v573
        %v581 = vmul.f32 %v528, %v573
        %v582 = vmul.f32 %v529, %v573
        %v583 = vmul.f32 %v530, %v573
        %v584 = vmul.f32 %v531, %v573
        %v585 = vmul.f32 %v532, %v573
        %v586 = vmul.f32 %v533, %v573
        %v587 = vmul.f32 %v534, %v573
        %v588 = vmul.f32 %v535, %v573
        %v589 = vmul.f32 %v536, %v573
        %v590 = vadd.f32 %v556, %v574
        %v591 = vadd.f32 %v557, %v575
        %v592 = vadd.f32 %v558, %v576
        %v593 = vadd.f32 %v559, %v577
        %v594 = vadd.f32 %v560, %v578
        %v595 = vadd.f32 %v561, %v579
        %v596 = vadd.f32 %v562, %v580
        %v597 = vadd.f32 %v563, %v581
        %v598 = vadd.f32 %v564, %v582
        %v599 = vadd.f32 %v565, %v583
        %v600 = vadd.f32 %v566, %v584
        %v601 = vadd.f32 %v567, %v585
        %v602 = vadd.f32 %v568, %v586
        %v603 = vadd.f32 %v569, %v587
        %v604 = vadd.f32 %v570, %v588
        %v605 = vadd.f32 %v571, %v589
        %s606 = sld [smem:[#allocation4 + $0x2]]
        %v607 = vstv %s606
        %v608 = vmul.f32 %v538, %v607
        %v609 = vmul.f32 %v539, %v607
        %v610 = vmul.f32 %v540, %v607
        %v611 = vmul.f32 %v541, %v607
        %v612 = vmul.f32 %v542, %v607
        %v613 = vmul.f32 %v543, %v607
        %v614 = vmul.f32 %v544, %v607
        %v615 = vmul.f32 %v545, %v607
        %v616 = vmul.f32 %v546, %v607
        %v617 = vmul.f32 %v547, %v607
        %v618 = vmul.f32 %v548, %v607
        %v619 = vmul.f32 %v549, %v607
        %v620 = vmul.f32 %v550, %v607
        %v621 = vmul.f32 %v551, %v607
        %v622 = vmul.f32 %v552, %v607
        %v623 = vmul.f32 %v553, %v607
        %v624 = vadd.f32 %v590, %v608
        %v625 = vadd.f32 %v591, %v609
        %v626 = vadd.f32 %v592, %v610
        %v627 = vadd.f32 %v593, %v611
        %v628 = vadd.f32 %v594, %v612
        %v629 = vadd.f32 %v595, %v613
        %v630 = vadd.f32 %v596, %v614
        %v631 = vadd.f32 %v597, %v615
        %v632 = vadd.f32 %v598, %v616
        %v633 = vadd.f32 %v599, %v617
        %v634 = vadd.f32 %v600, %v618
        %v635 = vadd.f32 %v601, %v619
        %v636 = vadd.f32 %v602, %v620
        %v637 = vadd.f32 %v603, %v621
        %v638 = vadd.f32 %v604, %v622
        %v639 = vadd.f32 %v605, %v623
        %s640 = sld [smem:[#allocation5]]
        %v641 = vstv %s640
        %v642 = vadd.f32 %v624, %v641
        %v643 = vadd.f32 %v625, %v641
        %v644 = vadd.f32 %v626, %v641
        %v645 = vadd.f32 %v627, %v641
        %v646 = vadd.f32 %v628, %v641
        %v647 = vadd.f32 %v629, %v641
        %v648 = vadd.f32 %v630, %v641
        %v649 = vadd.f32 %v631, %v641
        %v650 = vadd.f32 %v632, %v641
        %v651 = vadd.f32 %v633, %v641
        %v652 = vadd.f32 %v634, %v641
        %v653 = vadd.f32 %v635, %v641
        %v654 = vadd.f32 %v636, %v641
        %v655 = vadd.f32 %v637, %v641
        %v656 = vadd.f32 %v638, %v641
        %v657 = vadd.f32 %v639, %v641
        %658 = vst [vmem:[%s443] sm:$0xff] %v642
        %659 = vst [vmem:[%s443 + $0x8] sm:$0xff] %v643
        %660 = vst [vmem:[%s443 + $0x10] sm:$0xff] %v644
        %661 = vst [vmem:[%s443 + $0x18] sm:$0xff] %v645
        %662 = vst [vmem:[%s443 + $0x20] sm:$0xff] %v646
        %663 = vst [vmem:[%s443 + $0x28] sm:$0xff] %v647
        %664 = vst [vmem:[%s443 + $0x30] sm:$0xff] %v648
        %665 = vst [vmem:[%s443 + $0x38] sm:$0xff] %v649
        %666 = vst [vmem:[%s443 + $0x40] sm:$0xff] %v650
        %667 = vst [vmem:[%s443 + $0x48] sm:$0xff] %v651
        %668 = vst [vmem:[%s443 + $0x50] sm:$0xff] %v652
        %669 = vst [vmem:[%s443 + $0x58] sm:$0xff] %v653
        %670 = vst [vmem:[%s443 + $0x60] sm:$0xff] %v654
        %671 = vst [vmem:[%s443 + $0x68] sm:$0xff] %v655
        %672 = vst [vmem:[%s443 + $0x70] sm:$0xff] %v656
        %673 = vst [vmem:[%s443 + $0x78] sm:$0xff] %v657
        %674 = vmax.xlane.f32.xlu0 %v642
        %v675 = vpop.xlane.xlu0 %674
        %676 = vmax.xlane.f32.xlu0 %v643
        %v677 = vpop.xlane.xlu0 %676
        %678 = vmax.xlane.f32.xlu0 %v644
        %v679 = vpop.xlane.xlu0 %678
        %680 = vmax.xlane.f32.xlu0 %v645
        %v681 = vpop.xlane.xlu0 %680
        %682 = vmax.xlane.f32.xlu0 %v646
        %v683 = vpop.xlane.xlu0 %682
        %684 = vmax.xlane.f32.xlu0 %v647
        %v685 = vpop.xlane.xlu0 %684
        %686 = vmax.xlane.f32.xlu0 %v648
        %v687 = vpop.xlane.xlu0 %686
        %688 = vmax.xlane.f32.xlu0 %v649
        %v689 = vpop.xlane.xlu0 %688
        %690 = vmax.xlane.f32.xlu0 %v650
        %v691 = vpop.xlane.xlu0 %690
        %692 = vmax.xlane.f32.xlu0 %v651
        %v693 = vpop.xlane.xlu0 %692
        %694 = vmax.xlane.f32.xlu0 %v652
        %v695 = vpop.xlane.xlu0 %694
        %696 = vmax.xlane.f32.xlu0 %v653
        %v697 = vpop.xlane.xlu0 %696
        %698 = vmax.xlane.f32.xlu0 %v654
        %v699 = vpop.xlane.xlu0 %698
        %700 = vmax.xlane.f32.xlu0 %v655
        %v701 = vpop.xlane.xlu0 %700
        %702 = vmax.xlane.f32.xlu0 %v656
        %v703 = vpop.xlane.xlu0 %702
        %704 = vmax.xlane.f32.xlu0 %v657
        %v705 = vpop.xlane.xlu0 %704
        %v706 = vsub.f32 %v642, %v675
        %v707 = vsub.f32 %v643, %v677
        %v708 = vsub.f32 %v644, %v679
        %v709 = vsub.f32 %v645, %v681
        %v710 = vsub.f32 %v646, %v683
        %v711 = vsub.f32 %v647, %v685
        %v712 = vsub.f32 %v648, %v687
        %v713 = vsub.f32 %v649, %v689
        %v714 = vsub.f32 %v650, %v691
        %v715 = vsub.f32 %v651, %v693
        %v716 = vsub.f32 %v652, %v695
        %v717 = vsub.f32 %v653, %v697
        %v718 = vsub.f32 %v654, %v699
        %v719 = vsub.f32 %v655, %v701
        %v720 = vsub.f32 %v656, %v703
        %v721 = vsub.f32 %v657, %v705
        %v722 = vmul.f32 %v706, 1.442695
        %v723 = vpow.pop %v722
        %v724 = vmul.f32 %v707, 1.442695
        %v725 = vpow.pop %v724
        %v726 = vmul.f32 %v708, 1.442695
        %v727 = vpow.pop %v726
        %v728 = vmul.f32 %v709, 1.442695
        %v729 = vpow.pop %v728
        %v730 = vmul.f32 %v710, 1.442695
        %v731 = vpow.pop %v730
        %v732 = vmul.f32 %v711, 1.442695
        %v733 = vpow.pop %v732
        %v734 = vmul.f32 %v712, 1.442695
        %v735 = vpow.pop %v734
        %v736 = vmul.f32 %v713, 1.442695
        %v737 = vpow.pop %v736
        %v738 = vmul.f32 %v714, 1.442695
        %v739 = vpow.pop %v738
        %v740 = vmul.f32 %v715, 1.442695
        %v741 = vpow.pop %v740
        %v742 = vmul.f32 %v716, 1.442695
        %v743 = vpow.pop %v742
        %v744 = vmul.f32 %v717, 1.442695
        %v745 = vpow.pop %v744
        %v746 = vmul.f32 %v718, 1.442695
        %v747 = vpow.pop %v746
        %v748 = vmul.f32 %v719, 1.442695
        %v749 = vpow.pop %v748
        %v750 = vmul.f32 %v720, 1.442695
        %v751 = vpow.pop %v750
        %v752 = vmul.f32 %v721, 1.442695
        %v753 = vpow.pop %v752
        %754 = vadd.xlane.f32.xlu0 %v723
        %v755 = vpop.xlane.xlu0 %754
        %756 = vadd.xlane.f32.xlu0 %v725
        %v757 = vpop.xlane.xlu0 %756
        %758 = vadd.xlane.f32.xlu0 %v727
        %v759 = vpop.xlane.xlu0 %758
        %760 = vadd.xlane.f32.xlu0 %v729
        %v761 = vpop.xlane.xlu0 %760
        %762 = vadd.xlane.f32.xlu0 %v731
        %v763 = vpop.xlane.xlu0 %762
        %764 = vadd.xlane.f32.xlu0 %v733
        %v765 = vpop.xlane.xlu0 %764
        %766 = vadd.xlane.f32.xlu0 %v735
        %v767 = vpop.xlane.xlu0 %766
        %768 = vadd.xlane.f32.xlu0 %v737
        %v769 = vpop.xlane.xlu0 %768
        %770 = vadd.xlane.f32.xlu0 %v739
        %v771 = vpop.xlane.xlu0 %770
        %772 = vadd.xlane.f32.xlu0 %v741
        %v773 = vpop.xlane.xlu0 %772
        %774 = vadd.xlane.f32.xlu0 %v743
        %v775 = vpop.xlane.xlu0 %774
        %776 = vadd.xlane.f32.xlu0 %v745
        %v777 = vpop.xlane.xlu0 %776
        %778 = vadd.xlane.f32.xlu0 %v747
        %v779 = vpop.xlane.xlu0 %778
        %780 = vadd.xlane.f32.xlu0 %v749
        %v781 = vpop.xlane.xlu0 %780
        %782 = vadd.xlane.f32.xlu0 %v751
        %v783 = vpop.xlane.xlu0 %782
        %784 = vadd.xlane.f32.xlu0 %v753
        %v785 = vpop.xlane.xlu0 %784
        %v786 = vrcp.pop %v755
        %v787 = vrcp.pop %v757
        %v788 = vrcp.pop %v759
        %v789 = vrcp.pop %v761
        %v790 = vrcp.pop %v763
        %v791 = vrcp.pop %v765
        %v792 = vrcp.pop %v767
        %v793 = vrcp.pop %v769
        %v794 = vrcp.pop %v771
        %v795 = vrcp.pop %v773
        %v796 = vrcp.pop %v775
        %v797 = vrcp.pop %v777
        %v798 = vrcp.pop %v779
        %v799 = vrcp.pop %v781
        %v800 = vrcp.pop %v783
        %v801 = vrcp.pop %v785
        %v802 = vmul.f32 %v723, %v786
        %v803 = vmul.f32 %v725, %v787
        %v804 = vmul.f32 %v727, %v788
        %v805 = vmul.f32 %v729, %v789
        %v806 = vmul.f32 %v731, %v790
        %v807 = vmul.f32 %v733, %v791
        %v808 = vmul.f32 %v735, %v792
        %v809 = vmul.f32 %v737, %v793
        %v810 = vmul.f32 %v739, %v794
        %v811 = vmul.f32 %v741, %v795
        %v812 = vmul.f32 %v743, %v796
        %v813 = vmul.f32 %v745, %v797
        %v814 = vmul.f32 %v747, %v798
        %v815 = vmul.f32 %v749, %v799
        %v816 = vmul.f32 %v751, %v800
        %v817 = vmul.f32 %v753, %v801
        %818 = vst [vmem:[#allocation2] sm:$0xff] %v802
        %819 = vst [vmem:[#allocation2 + $0x8] sm:$0xff] %v803
        %820 = vst [vmem:[#allocation2 + $0x10] sm:$0xff] %v804
        %821 = vst [vmem:[#allocation2 + $0x18] sm:$0xff] %v805
        %822 = vst [vmem:[#allocation2 + $0x20] sm:$0xff] %v806
        %823 = vst [vmem:[#allocation2 + $0x28] sm:$0xff] %v807
        %824 = vst [vmem:[#allocation2 + $0x30] sm:$0xff] %v808
        %825 = vst [vmem:[#allocation2 + $0x38] sm:$0xff] %v809
        %826 = vst [vmem:[#allocation2 + $0x40] sm:$0xff] %v810
        %827 = vst [vmem:[#allocation2 + $0x48] sm:$0xff] %v811
        %828 = vst [vmem:[#allocation2 + $0x50] sm:$0xff] %v812
        %829 = vst [vmem:[#allocation2 + $0x58] sm:$0xff] %v813
        %830 = vst [vmem:[#allocation2 + $0x60] sm:$0xff] %v814
        %831 = vst [vmem:[#allocation2 + $0x68] sm:$0xff] %v815
        %832 = vst [vmem:[#allocation2 + $0x70] sm:$0xff] %v816
        %833 = vst [vmem:[#allocation2 + $0x78] sm:$0xff] %v817
        %v834 = vpack.c.bf16 %v803, %v802
        %v835 = vpack.c.bf16 %v805, %v804
        %v836 = vpack.c.bf16 %v807, %v806
        %v837 = vpack.c.bf16 %v809, %v808
        %v838 = vpack.c.bf16 %v811, %v810
        %v839 = vpack.c.bf16 %v813, %v812
        %v840 = vpack.c.bf16 %v815, %v814
        %v841 = vpack.c.bf16 %v817, %v816
        %842 = vst [vmem:[%s450] sm:$0xff] %v834
        %843 = vst [vmem:[%s450 + $0x8] sm:$0xff] %v835
        %844 = vst [vmem:[%s450 + $0x10] sm:$0xff] %v836
        %845 = vst [vmem:[%s450 + $0x18] sm:$0xff] %v837
        %846 = vst [vmem:[%s450 + $0x20] sm:$0xff] %v838
        %847 = vst [vmem:[%s450 + $0x28] sm:$0xff] %v839
        %848 = vst [vmem:[%s450 + $0x30] sm:$0xff] %v840
        %849 = vst [vmem:[%s450 + $0x38] sm:$0xff] %v841
        %s850 = sld [smem:[#allocation4 + $0x3]]
        %v851 = vstv %s850
        %v852 = vmul.f32 %v504, %v851
        %v853 = vmul.f32 %v505, %v851
        %v854 = vmul.f32 %v506, %v851
        %v855 = vmul.f32 %v507, %v851
        %v856 = vmul.f32 %v508, %v851
        %v857 = vmul.f32 %v509, %v851
        %v858 = vmul.f32 %v510, %v851
        %v859 = vmul.f32 %v511, %v851
        %v860 = vmul.f32 %v512, %v851
        %v861 = vmul.f32 %v513, %v851
        %v862 = vmul.f32 %v514, %v851
        %v863 = vmul.f32 %v515, %v851
        %v864 = vmul.f32 %v516, %v851
        %v865 = vmul.f32 %v517, %v851
        %v866 = vmul.f32 %v518, %v851
        %v867 = vmul.f32 %v519, %v851
        %s868 = sld [smem:[#allocation4 + $0x4]]
        %v869 = vstv %s868
        %v870 = vmul.f32 %v521, %v869
        %v871 = vmul.f32 %v522, %v869
        %v872 = vmul.f32 %v523, %v869
        %v873 = vmul.f32 %v524, %v869
        %v874 = vmul.f32 %v525, %v869
        %v875 = vmul.f32 %v526, %v869
        %v876 = vmul.f32 %v527, %v869
        %v877 = vmul.f32 %v528, %v869
        %v878 = vmul.f32 %v529, %v869
        %v879 = vmul.f32 %v530, %v869
        %v880 = vmul.f32 %v531, %v869
        %v881 = vmul.f32 %v532, %v869
        %v882 = vmul.f32 %v533, %v869
        %v883 = vmul.f32 %v534, %v869
        %v884 = vmul.f32 %v535, %v869
        %v885 = vmul.f32 %v536, %v869
        %v886 = vadd.f32 %v852, %v870
        %v887 = vadd.f32 %v853, %v871
        %v888 = vadd.f32 %v854, %v872
        %v889 = vadd.f32 %v855, %v873
        %v890 = vadd.f32 %v856, %v874
        %v891 = vadd.f32 %v857, %v875
        %v892 = vadd.f32 %v858, %v876
        %v893 = vadd.f32 %v859, %v877
        %v894 = vadd.f32 %v860, %v878
        %v895 = vadd.f32 %v861, %v879
        %v896 = vadd.f32 %v862, %v880
        %v897 = vadd.f32 %v863, %v881
        %v898 = vadd.f32 %v864, %v882
        %v899 = vadd.f32 %v865, %v883
        %v900 = vadd.f32 %v866, %v884
        %v901 = vadd.f32 %v867, %v885
        %s902 = sld [smem:[#allocation4 + $0x5]]
        %v903 = vstv %s902
        %v904 = vmul.f32 %v538, %v903
        %v905 = vmul.f32 %v539, %v903
        %v906 = vmul.f32 %v540, %v903
        %v907 = vmul.f32 %v541, %v903
        %v908 = vmul.f32 %v542, %v903
        %v909 = vmul.f32 %v543, %v903
        %v910 = vmul.f32 %v544, %v903
        %v911 = vmul.f32 %v545, %v903
        %v912 = vmul.f32 %v546, %v903
        %v913 = vmul.f32 %v547, %v903
        %v914 = vmul.f32 %v548, %v903
        %v915 = vmul.f32 %v549, %v903
        %v916 = vmul.f32 %v550, %v903
        %v917 = vmul.f32 %v551, %v903
        %v918 = vmul.f32 %v552, %v903
        %v919 = vmul.f32 %v553, %v903
        %v920 = vadd.f32 %v886, %v904
        %v921 = vadd.f32 %v887, %v905
        %v922 = vadd.f32 %v888, %v906
        %v923 = vadd.f32 %v889, %v907
        %v924 = vadd.f32 %v890, %v908
        %v925 = vadd.f32 %v891, %v909
        %v926 = vadd.f32 %v892, %v910
        %v927 = vadd.f32 %v893, %v911
        %v928 = vadd.f32 %v894, %v912
        %v929 = vadd.f32 %v895, %v913
        %v930 = vadd.f32 %v896, %v914
        %v931 = vadd.f32 %v897, %v915
        %v932 = vadd.f32 %v898, %v916
        %v933 = vadd.f32 %v899, %v917
        %v934 = vadd.f32 %v900, %v918
        %v935 = vadd.f32 %v901, %v919
        %s936 = sld [smem:[#allocation5 + $0x1]]
        %v937 = vstv %s936
        %v938 = vadd.f32 %v920, %v937
        %v939 = vadd.f32 %v921, %v937
        %v940 = vadd.f32 %v922, %v937
        %v941 = vadd.f32 %v923, %v937
        %v942 = vadd.f32 %v924, %v937
        %v943 = vadd.f32 %v925, %v937
        %v944 = vadd.f32 %v926, %v937
        %v945 = vadd.f32 %v927, %v937
        %v946 = vadd.f32 %v928, %v937
        %v947 = vadd.f32 %v929, %v937
        %v948 = vadd.f32 %v930, %v937
        %v949 = vadd.f32 %v931, %v937
        %v950 = vadd.f32 %v932, %v937
        %v951 = vadd.f32 %v933, %v937
        %v952 = vadd.f32 %v934, %v937
        %v953 = vadd.f32 %v935, %v937
        %s954 = scalar_lea.vmem %s443, 128 [#allocation11]
        %955 = vst [vmem:[%s954] sm:$0xff] %v938
        %956 = vst [vmem:[%s954 + $0x8] sm:$0xff] %v939
        %957 = vst [vmem:[%s954 + $0x10] sm:$0xff] %v940
        %958 = vst [vmem:[%s954 + $0x18] sm:$0xff] %v941
        %959 = vst [vmem:[%s954 + $0x20] sm:$0xff] %v942
        %960 = vst [vmem:[%s954 + $0x28] sm:$0xff] %v943
        %961 = vst [vmem:[%s954 + $0x30] sm:$0xff] %v944
        %962 = vst [vmem:[%s954 + $0x38] sm:$0xff] %v945
        %963 = vst [vmem:[%s954 + $0x40] sm:$0xff] %v946
        %964 = vst [vmem:[%s954 + $0x48] sm:$0xff] %v947
        %965 = vst [vmem:[%s954 + $0x50] sm:$0xff] %v948
        %966 = vst [vmem:[%s954 + $0x58] sm:$0xff] %v949
        %967 = vst [vmem:[%s954 + $0x60] sm:$0xff] %v950
        %968 = vst [vmem:[%s954 + $0x68] sm:$0xff] %v951
        %969 = vst [vmem:[%s954 + $0x70] sm:$0xff] %v952
        %970 = vst [vmem:[%s954 + $0x78] sm:$0xff] %v953
        %971 = vmax.xlane.f32.xlu0 %v938
        %v972 = vpop.xlane.xlu0 %971
        %973 = vmax.xlane.f32.xlu0 %v939
        %v974 = vpop.xlane.xlu0 %973
        %975 = vmax.xlane.f32.xlu0 %v940
        %v976 = vpop.xlane.xlu0 %975
        %977 = vmax.xlane.f32.xlu0 %v941
        %v978 = vpop.xlane.xlu0 %977
        %979 = vmax.xlane.f32.xlu0 %v942
        %v980 = vpop.xlane.xlu0 %979
        %981 = vmax.xlane.f32.xlu0 %v943
        %v982 = vpop.xlane.xlu0 %981
        %983 = vmax.xlane.f32.xlu0 %v944
        %v984 = vpop.xlane.xlu0 %983
        %985 = vmax.xlane.f32.xlu0 %v945
        %v986 = vpop.xlane.xlu0 %985
        %987 = vmax.xlane.f32.xlu0 %v946
        %v988 = vpop.xlane.xlu0 %987
        %989 = vmax.xlane.f32.xlu0 %v947
        %v990 = vpop.xlane.xlu0 %989
        %991 = vmax.xlane.f32.xlu0 %v948
        %v992 = vpop.xlane.xlu0 %991
        %993 = vmax.xlane.f32.xlu0 %v949
        %v994 = vpop.xlane.xlu0 %993
        %995 = vmax.xlane.f32.xlu0 %v950
        %v996 = vpop.xlane.xlu0 %995
        %997 = vmax.xlane.f32.xlu0 %v951
        %v998 = vpop.xlane.xlu0 %997
        %999 = vmax.xlane.f32.xlu0 %v952
        %v1000 = vpop.xlane.xlu0 %999
        %1001 = vmax.xlane.f32.xlu0 %v953
        %v1002 = vpop.xlane.xlu0 %1001
        %v1003 = vsub.f32 %v938, %v972
        %v1004 = vsub.f32 %v939, %v974
        %v1005 = vsub.f32 %v940, %v976
        %v1006 = vsub.f32 %v941, %v978
        %v1007 = vsub.f32 %v942, %v980
        %v1008 = vsub.f32 %v943, %v982
        %v1009 = vsub.f32 %v944, %v984
        %v1010 = vsub.f32 %v945, %v986
        %v1011 = vsub.f32 %v946, %v988
        %v1012 = vsub.f32 %v947, %v990
        %v1013 = vsub.f32 %v948, %v992
        %v1014 = vsub.f32 %v949, %v994
        %v1015 = vsub.f32 %v950, %v996
        %v1016 = vsub.f32 %v951, %v998
        %v1017 = vsub.f32 %v952, %v1000
        %v1018 = vsub.f32 %v953, %v1002
        %v1019 = vmul.f32 %v1003, 1.442695
        %v1020 = vpow.pop %v1019
        %v1021 = vmul.f32 %v1004, 1.442695
        %v1022 = vpow.pop %v1021
        %v1023 = vmul.f32 %v1005, 1.442695
        %v1024 = vpow.pop %v1023
        %v1025 = vmul.f32 %v1006, 1.442695
        %v1026 = vpow.pop %v1025
        %v1027 = vmul.f32 %v1007, 1.442695
        %v1028 = vpow.pop %v1027
        %v1029 = vmul.f32 %v1008, 1.442695
        %v1030 = vpow.pop %v1029
        %v1031 = vmul.f32 %v1009, 1.442695
        %v1032 = vpow.pop %v1031
        %v1033 = vmul.f32 %v1010, 1.442695
        %v1034 = vpow.pop %v1033
        %v1035 = vmul.f32 %v1011, 1.442695
        %v1036 = vpow.pop %v1035
        %v1037 = vmul.f32 %v1012, 1.442695
        %v1038 = vpow.pop %v1037
        %v1039 = vmul.f32 %v1013, 1.442695
        %v1040 = vpow.pop %v1039
        %v1041 = vmul.f32 %v1014, 1.442695
        %v1042 = vpow.pop %v1041
        %v1043 = vmul.f32 %v1015, 1.442695
        %v1044 = vpow.pop %v1043
        %v1045 = vmul.f32 %v1016, 1.442695
        %v1046 = vpow.pop %v1045
        %v1047 = vmul.f32 %v1017, 1.442695
        %v1048 = vpow.pop %v1047
        %v1049 = vmul.f32 %v1018, 1.442695
        %v1050 = vpow.pop %v1049
        %1051 = vadd.xlane.f32.xlu0 %v1020
        %v1052 = vpop.xlane.xlu0 %1051
        %1053 = vadd.xlane.f32.xlu0 %v1022
        %v1054 = vpop.xlane.xlu0 %1053
        %1055 = vadd.xlane.f32.xlu0 %v1024
        %v1056 = vpop.xlane.xlu0 %1055
        %1057 = vadd.xlane.f32.xlu0 %v1026
        %v1058 = vpop.xlane.xlu0 %1057
        %1059 = vadd.xlane.f32.xlu0 %v1028
        %v1060 = vpop.xlane.xlu0 %1059
        %1061 = vadd.xlane.f32.xlu0 %v1030
        %v1062 = vpop.xlane.xlu0 %1061
        %1063 = vadd.xlane.f32.xlu0 %v1032
        %v1064 = vpop.xlane.xlu0 %1063
        %1065 = vadd.xlane.f32.xlu0 %v1034
        %v1066 = vpop.xlane.xlu0 %1065
        %1067 = vadd.xlane.f32.xlu0 %v1036
        %v1068 = vpop.xlane.xlu0 %1067
        %1069 = vadd.xlane.f32.xlu0 %v1038
        %v1070 = vpop.xlane.xlu0 %1069
        %1071 = vadd.xlane.f32.xlu0 %v1040
        %v1072 = vpop.xlane.xlu0 %1071
        %1073 = vadd.xlane.f32.xlu0 %v1042
        %v1074 = vpop.xlane.xlu0 %1073
        %1075 = vadd.xlane.f32.xlu0 %v1044
        %v1076 = vpop.xlane.xlu0 %1075
        %1077 = vadd.xlane.f32.xlu0 %v1046
        %v1078 = vpop.xlane.xlu0 %1077
        %1079 = vadd.xlane.f32.xlu0 %v1048
        %v1080 = vpop.xlane.xlu0 %1079
        %1081 = vadd.xlane.f32.xlu0 %v1050
        %v1082 = vpop.xlane.xlu0 %1081
        %v1083 = vrcp.pop %v1052
        %v1084 = vrcp.pop %v1054
        %v1085 = vrcp.pop %v1056
        %v1086 = vrcp.pop %v1058
        %v1087 = vrcp.pop %v1060
        %v1088 = vrcp.pop %v1062
        %v1089 = vrcp.pop %v1064
        %v1090 = vrcp.pop %v1066
        %v1091 = vrcp.pop %v1068
        %v1092 = vrcp.pop %v1070
        %v1093 = vrcp.pop %v1072
        %v1094 = vrcp.pop %v1074
        %v1095 = vrcp.pop %v1076
        %v1096 = vrcp.pop %v1078
        %v1097 = vrcp.pop %v1080
        %v1098 = vrcp.pop %v1082
        %v1099 = vmul.f32 %v1020, %v1083
        %v1100 = vmul.f32 %v1022, %v1084
        %v1101 = vmul.f32 %v1024, %v1085
        %v1102 = vmul.f32 %v1026, %v1086
        %v1103 = vmul.f32 %v1028, %v1087
        %v1104 = vmul.f32 %v1030, %v1088
        %v1105 = vmul.f32 %v1032, %v1089
        %v1106 = vmul.f32 %v1034, %v1090
        %v1107 = vmul.f32 %v1036, %v1091
        %v1108 = vmul.f32 %v1038, %v1092
        %v1109 = vmul.f32 %v1040, %v1093
        %v1110 = vmul.f32 %v1042, %v1094
        %v1111 = vmul.f32 %v1044, %v1095
        %v1112 = vmul.f32 %v1046, %v1096
        %v1113 = vmul.f32 %v1048, %v1097
        %v1114 = vmul.f32 %v1050, %v1098
        %1115 = vst [vmem:[#allocation2 + $0x80] sm:$0xff] %v1099
        %1116 = vst [vmem:[#allocation2 + $0x88] sm:$0xff] %v1100
        %1117 = vst [vmem:[#allocation2 + $0x90] sm:$0xff] %v1101
        %1118 = vst [vmem:[#allocation2 + $0x98] sm:$0xff] %v1102
        %1119 = vst [vmem:[#allocation2 + $0xa0] sm:$0xff] %v1103
        %1120 = vst [vmem:[#allocation2 + $0xa8] sm:$0xff] %v1104
        %1121 = vst [vmem:[#allocation2 + $0xb0] sm:$0xff] %v1105
        %1122 = vst [vmem:[#allocation2 + $0xb8] sm:$0xff] %v1106
        %1123 = vst [vmem:[#allocation2 + $0xc0] sm:$0xff] %v1107
        %1124 = vst [vmem:[#allocation2 + $0xc8] sm:$0xff] %v1108
        %1125 = vst [vmem:[#allocation2 + $0xd0] sm:$0xff] %v1109
        %1126 = vst [vmem:[#allocation2 + $0xd8] sm:$0xff] %v1110
        %1127 = vst [vmem:[#allocation2 + $0xe0] sm:$0xff] %v1111
        %1128 = vst [vmem:[#allocation2 + $0xe8] sm:$0xff] %v1112
        %1129 = vst [vmem:[#allocation2 + $0xf0] sm:$0xff] %v1113
        %1130 = vst [vmem:[#allocation2 + $0xf8] sm:$0xff] %v1114
        %v1131 = vpack.c.bf16 %v1100, %v1099
        %v1132 = vpack.c.bf16 %v1102, %v1101
        %v1133 = vpack.c.bf16 %v1104, %v1103
        %v1134 = vpack.c.bf16 %v1106, %v1105
        %v1135 = vpack.c.bf16 %v1108, %v1107
        %v1136 = vpack.c.bf16 %v1110, %v1109
        %v1137 = vpack.c.bf16 %v1112, %v1111
        %v1138 = vpack.c.bf16 %v1114, %v1113
        %s1139 = scalar_lea.vmem %s450, 64 [#allocation12]
        %1140 = vst [vmem:[%s1139] sm:$0xff] %v1131
        %1141 = vst [vmem:[%s1139 + $0x8] sm:$0xff] %v1132
        %1142 = vst [vmem:[%s1139 + $0x10] sm:$0xff] %v1133
        %1143 = vst [vmem:[%s1139 + $0x18] sm:$0xff] %v1134
        %1144 = vst [vmem:[%s1139 + $0x20] sm:$0xff] %v1135
        %1145 = vst [vmem:[%s1139 + $0x28] sm:$0xff] %v1136
        %1146 = vst [vmem:[%s1139 + $0x30] sm:$0xff] %v1137
        %1147 = vst [vmem:[%s1139 + $0x38] sm:$0xff] %v1138
        %s1148 = sld [smem:[#allocation4 + $0xf]]
        %v1149 = vstv %s1148
        %v1150 = vmul.f32 %v504, %v1149
        %v1151 = vmul.f32 %v505, %v1149
        %v1152 = vmul.f32 %v506, %v1149
        %v1153 = vmul.f32 %v507, %v1149
        %v1154 = vmul.f32 %v508, %v1149
        %v1155 = vmul.f32 %v509, %v1149
        %v1156 = vmul.f32 %v510, %v1149
        %v1157 = vmul.f32 %v511, %v1149
        %v1158 = vmul.f32 %v512, %v1149
        %v1159 = vmul.f32 %v513, %v1149
        %v1160 = vmul.f32 %v514, %v1149
        %v1161 = vmul.f32 %v515, %v1149
        %v1162 = vmul.f32 %v516, %v1149
        %v1163 = vmul.f32 %v517, %v1149
        %v1164 = vmul.f32 %v518, %v1149
        %v1165 = vmul.f32 %v519, %v1149
        %s1166 = sld [smem:[#allocation4 + $0x10]]
        %v1167 = vstv %s1166
        %v1168 = vmul.f32 %v521, %v1167
        %v1169 = vmul.f32 %v522, %v1167
        %v1170 = vmul.f32 %v523, %v1167
        %v1171 = vmul.f32 %v524, %v1167
        %v1172 = vmul.f32 %v525, %v1167
        %v1173 = vmul.f32 %v526, %v1167
        %v1174 = vmul.f32 %v527, %v1167
        %v1175 = vmul.f32 %v528, %v1167
        %v1176 = vmul.f32 %v529, %v1167
        %v1177 = vmul.f32 %v530, %v1167
        %v1178 = vmul.f32 %v531, %v1167
        %v1179 = vmul.f32 %v532, %v1167
        %v1180 = vmul.f32 %v533, %v1167
        %v1181 = vmul.f32 %v534, %v1167
        %v1182 = vmul.f32 %v535, %v1167
        %v1183 = vmul.f32 %v536, %v1167
        %v1184 = vadd.f32 %v1150, %v1168
        %v1185 = vadd.f32 %v1151, %v1169
        %v1186 = vadd.f32 %v1152, %v1170
        %v1187 = vadd.f32 %v1153, %v1171
        %v1188 = vadd.f32 %v1154, %v1172
        %v1189 = vadd.f32 %v1155, %v1173
        %v1190 = vadd.f32 %v1156, %v1174
        %v1191 = vadd.f32 %v1157, %v1175
        %v1192 = vadd.f32 %v1158, %v1176
        %v1193 = vadd.f32 %v1159, %v1177
        %v1194 = vadd.f32 %v1160, %v1178
        %v1195 = vadd.f32 %v1161, %v1179
        %v1196 = vadd.f32 %v1162, %v1180
        %v1197 = vadd.f32 %v1163, %v1181
        %v1198 = vadd.f32 %v1164, %v1182
        %v1199 = vadd.f32 %v1165, %v1183
        %s1200 = sld [smem:[#allocation4 + $0x11]]
        %v1201 = vstv %s1200
        %v1202 = vmul.f32 %v538, %v1201
        %v1203 = vmul.f32 %v539, %v1201
        %v1204 = vmul.f32 %v540, %v1201
        %v1205 = vmul.f32 %v541, %v1201
        %v1206 = vmul.f32 %v542, %v1201
        %v1207 = vmul.f32 %v543, %v1201
        %v1208 = vmul.f32 %v544, %v1201
        %v1209 = vmul.f32 %v545, %v1201
        %v1210 = vmul.f32 %v546, %v1201
        %v1211 = vmul.f32 %v547, %v1201
        %v1212 = vmul.f32 %v548, %v1201
        %v1213 = vmul.f32 %v549, %v1201
        %v1214 = vmul.f32 %v550, %v1201
        %v1215 = vmul.f32 %v551, %v1201
        %v1216 = vmul.f32 %v552, %v1201
        %v1217 = vmul.f32 %v553, %v1201
        %v1218 = vadd.f32 %v1184, %v1202
        %v1219 = vadd.f32 %v1185, %v1203
        %v1220 = vadd.f32 %v1186, %v1204
        %v1221 = vadd.f32 %v1187, %v1205
        %v1222 = vadd.f32 %v1188, %v1206
        %v1223 = vadd.f32 %v1189, %v1207
        %v1224 = vadd.f32 %v1190, %v1208
        %v1225 = vadd.f32 %v1191, %v1209
        %v1226 = vadd.f32 %v1192, %v1210
        %v1227 = vadd.f32 %v1193, %v1211
        %v1228 = vadd.f32 %v1194, %v1212
        %v1229 = vadd.f32 %v1195, %v1213
        %v1230 = vadd.f32 %v1196, %v1214
        %v1231 = vadd.f32 %v1197, %v1215
        %v1232 = vadd.f32 %v1198, %v1216
        %v1233 = vadd.f32 %v1199, %v1217
        %s1234 = sld [smem:[#allocation5 + $0x5]]
        %v1235 = vstv %s1234
        %v1236 = vadd.f32 %v1218, %v1235
        %v1237 = vadd.f32 %v1219, %v1235
        %v1238 = vadd.f32 %v1220, %v1235
        %v1239 = vadd.f32 %v1221, %v1235
        %v1240 = vadd.f32 %v1222, %v1235
        %v1241 = vadd.f32 %v1223, %v1235
        %v1242 = vadd.f32 %v1224, %v1235
        %v1243 = vadd.f32 %v1225, %v1235
        %v1244 = vadd.f32 %v1226, %v1235
        %v1245 = vadd.f32 %v1227, %v1235
        %v1246 = vadd.f32 %v1228, %v1235
        %v1247 = vadd.f32 %v1229, %v1235
        %v1248 = vadd.f32 %v1230, %v1235
        %v1249 = vadd.f32 %v1231, %v1235
        %v1250 = vadd.f32 %v1232, %v1235
        %v1251 = vadd.f32 %v1233, %v1235
        %s1252 = scalar_lea.vmem %s443, 640 [#allocation11]
        %1253 = vst [vmem:[%s1252] sm:$0xff] %v1236
        %1254 = vst [vmem:[%s1252 + $0x8] sm:$0xff] %v1237
        %1255 = vst [vmem:[%s1252 + $0x10] sm:$0xff] %v1238
        %1256 = vst [vmem:[%s1252 + $0x18] sm:$0xff] %v1239
        %1257 = vst [vmem:[%s1252 + $0x20] sm:$0xff] %v1240
        %1258 = vst [vmem:[%s1252 + $0x28] sm:$0xff] %v1241
        %1259 = vst [vmem:[%s1252 + $0x30] sm:$0xff] %v1242
        %1260 = vst [vmem:[%s1252 + $0x38] sm:$0xff] %v1243
        %1261 = vst [vmem:[%s1252 + $0x40] sm:$0xff] %v1244
        %1262 = vst [vmem:[%s1252 + $0x48] sm:$0xff] %v1245
        %1263 = vst [vmem:[%s1252 + $0x50] sm:$0xff] %v1246
        %1264 = vst [vmem:[%s1252 + $0x58] sm:$0xff] %v1247
        %1265 = vst [vmem:[%s1252 + $0x60] sm:$0xff] %v1248
        %1266 = vst [vmem:[%s1252 + $0x68] sm:$0xff] %v1249
        %1267 = vst [vmem:[%s1252 + $0x70] sm:$0xff] %v1250
        %1268 = vst [vmem:[%s1252 + $0x78] sm:$0xff] %v1251
        %1269 = vmax.xlane.f32.xlu0 %v1236
        %v1270 = vpop.xlane.xlu0 %1269
        %1271 = vmax.xlane.f32.xlu0 %v1237
        %v1272 = vpop.xlane.xlu0 %1271
        %1273 = vmax.xlane.f32.xlu0 %v1238
        %v1274 = vpop.xlane.xlu0 %1273
        %1275 = vmax.xlane.f32.xlu0 %v1239
        %v1276 = vpop.xlane.xlu0 %1275
        %1277 = vmax.xlane.f32.xlu0 %v1240
        %v1278 = vpop.xlane.xlu0 %1277
        %1279 = vmax.xlane.f32.xlu0 %v1241
        %v1280 = vpop.xlane.xlu0 %1279
        %1281 = vmax.xlane.f32.xlu0 %v1242
        %v1282 = vpop.xlane.xlu0 %1281
        %1283 = vmax.xlane.f32.xlu0 %v1243
        %v1284 = vpop.xlane.xlu0 %1283
        %1285 = vmax.xlane.f32.xlu0 %v1244
        %v1286 = vpop.xlane.xlu0 %1285
        %1287 = vmax.xlane.f32.xlu0 %v1245
        %v1288 = vpop.xlane.xlu0 %1287
        %1289 = vmax.xlane.f32.xlu0 %v1246
        %v1290 = vpop.xlane.xlu0 %1289
        %1291 = vmax.xlane.f32.xlu0 %v1247
        %v1292 = vpop.xlane.xlu0 %1291
        %1293 = vmax.xlane.f32.xlu0 %v1248
        %v1294 = vpop.xlane.xlu0 %1293
        %1295 = vmax.xlane.f32.xlu0 %v1249
        %v1296 = vpop.xlane.xlu0 %1295
        %1297 = vmax.xlane.f32.xlu0 %v1250
        %v1298 = vpop.xlane.xlu0 %1297
        %1299 = vmax.xlane.f32.xlu0 %v1251
        %v1300 = vpop.xlane.xlu0 %1299
        %v1301 = vsub.f32 %v1236, %v1270
        %v1302 = vsub.f32 %v1237, %v1272
        %v1303 = vsub.f32 %v1238, %v1274
        %v1304 = vsub.f32 %v1239, %v1276
        %v1305 = vsub.f32 %v1240, %v1278
        %v1306 = vsub.f32 %v1241, %v1280
        %v1307 = vsub.f32 %v1242, %v1282
        %v1308 = vsub.f32 %v1243, %v1284
        %v1309 = vsub.f32 %v1244, %v1286
        %v1310 = vsub.f32 %v1245, %v1288
        %v1311 = vsub.f32 %v1246, %v1290
        %v1312 = vsub.f32 %v1247, %v1292
        %v1313 = vsub.f32 %v1248, %v1294
        %v1314 = vsub.f32 %v1249, %v1296
        %v1315 = vsub.f32 %v1250, %v1298
        %v1316 = vsub.f32 %v1251, %v1300
        %v1317 = vmul.f32 %v1301, 1.442695
        %v1318 = vpow.pop %v1317
        %v1319 = vmul.f32 %v1302, 1.442695
        %v1320 = vpow.pop %v1319
        %v1321 = vmul.f32 %v1303, 1.442695
        %v1322 = vpow.pop %v1321
        %v1323 = vmul.f32 %v1304, 1.442695
        %v1324 = vpow.pop %v1323
        %v1325 = vmul.f32 %v1305, 1.442695
        %v1326 = vpow.pop %v1325
        %v1327 = vmul.f32 %v1306, 1.442695
        %v1328 = vpow.pop %v1327
        %v1329 = vmul.f32 %v1307, 1.442695
        %v1330 = vpow.pop %v1329
        %v1331 = vmul.f32 %v1308, 1.442695
        %v1332 = vpow.pop %v1331
        %v1333 = vmul.f32 %v1309, 1.442695
        %v1334 = vpow.pop %v1333
        %v1335 = vmul.f32 %v1310, 1.442695
        %v1336 = vpow.pop %v1335
        %v1337 = vmul.f32 %v1311, 1.442695
        %v1338 = vpow.pop %v1337
        %v1339 = vmul.f32 %v1312, 1.442695
        %v1340 = vpow.pop %v1339
        %v1341 = vmul.f32 %v1313, 1.442695
        %v1342 = vpow.pop %v1341
        %v1343 = vmul.f32 %v1314, 1.442695
        %v1344 = vpow.pop %v1343
        %v1345 = vmul.f32 %v1315, 1.442695
        %v1346 = vpow.pop %v1345
        %v1347 = vmul.f32 %v1316, 1.442695
        %v1348 = vpow.pop %v1347
        %1349 = vadd.xlane.f32.xlu0 %v1318
        %v1350 = vpop.xlane.xlu0 %1349
        %1351 = vadd.xlane.f32.xlu0 %v1320
        %v1352 = vpop.xlane.xlu0 %1351
        %1353 = vadd.xlane.f32.xlu0 %v1322
        %v1354 = vpop.xlane.xlu0 %1353
        %1355 = vadd.xlane.f32.xlu0 %v1324
        %v1356 = vpop.xlane.xlu0 %1355
        %1357 = vadd.xlane.f32.xlu0 %v1326
        %v1358 = vpop.xlane.xlu0 %1357
        %1359 = vadd.xlane.f32.xlu0 %v1328
        %v1360 = vpop.xlane.xlu0 %1359
        %1361 = vadd.xlane.f32.xlu0 %v1330
        %v1362 = vpop.xlane.xlu0 %1361
        %1363 = vadd.xlane.f32.xlu0 %v1332
        %v1364 = vpop.xlane.xlu0 %1363
        %1365 = vadd.xlane.f32.xlu0 %v1334
        %v1366 = vpop.xlane.xlu0 %1365
        %1367 = vadd.xlane.f32.xlu0 %v1336
        %v1368 = vpop.xlane.xlu0 %1367
        %1369 = vadd.xlane.f32.xlu0 %v1338
        %v1370 = vpop.xlane.xlu0 %1369
        %1371 = vadd.xlane.f32.xlu0 %v1340
        %v1372 = vpop.xlane.xlu0 %1371
        %1373 = vadd.xlane.f32.xlu0 %v1342
        %v1374 = vpop.xlane.xlu0 %1373
        %1375 = vadd.xlane.f32.xlu0 %v1344
        %v1376 = vpop.xlane.xlu0 %1375
        %1377 = vadd.xlane.f32.xlu0 %v1346
        %v1378 = vpop.xlane.xlu0 %1377
        %1379 = vadd.xlane.f32.xlu0 %v1348
        %v1380 = vpop.xlane.xlu0 %1379
        %v1381 = vrcp.pop %v1350
        %v1382 = vrcp.pop %v1352
        %v1383 = vrcp.pop %v1354
        %v1384 = vrcp.pop %v1356
        %v1385 = vrcp.pop %v1358
        %v1386 = vrcp.pop %v1360
        %v1387 = vrcp.pop %v1362
        %v1388 = vrcp.pop %v1364
        %v1389 = vrcp.pop %v1366
        %v1390 = vrcp.pop %v1368
        %v1391 = vrcp.pop %v1370
        %v1392 = vrcp.pop %v1372
        %v1393 = vrcp.pop %v1374
        %v1394 = vrcp.pop %v1376
        %v1395 = vrcp.pop %v1378
        %v1396 = vrcp.pop %v1380
        %v1397 = vmul.f32 %v1318, %v1381
        %v1398 = vmul.f32 %v1320, %v1382
        %v1399 = vmul.f32 %v1322, %v1383
        %v1400 = vmul.f32 %v1324, %v1384
        %v1401 = vmul.f32 %v1326, %v1385
        %v1402 = vmul.f32 %v1328, %v1386
        %v1403 = vmul.f32 %v1330, %v1387
        %v1404 = vmul.f32 %v1332, %v1388
        %v1405 = vmul.f32 %v1334, %v1389
        %v1406 = vmul.f32 %v1336, %v1390
        %v1407 = vmul.f32 %v1338, %v1391
        %v1408 = vmul.f32 %v1340, %v1392
        %v1409 = vmul.f32 %v1342, %v1393
        %v1410 = vmul.f32 %v1344, %v1394
        %v1411 = vmul.f32 %v1346, %v1395
        %v1412 = vmul.f32 %v1348, %v1396
        %1413 = vst [vmem:[#allocation2 + $0x100] sm:$0xff] %v1397
        %1414 = vst [vmem:[#allocation2 + $0x108] sm:$0xff] %v1398
        %1415 = vst [vmem:[#allocation2 + $0x110] sm:$0xff] %v1399
        %1416 = vst [vmem:[#allocation2 + $0x118] sm:$0xff] %v1400
        %1417 = vst [vmem:[#allocation2 + $0x120] sm:$0xff] %v1401
        %1418 = vst [vmem:[#allocation2 + $0x128] sm:$0xff] %v1402
        %1419 = vst [vmem:[#allocation2 + $0x130] sm:$0xff] %v1403
        %1420 = vst [vmem:[#allocation2 + $0x138] sm:$0xff] %v1404
        %1421 = vst [vmem:[#allocation2 + $0x140] sm:$0xff] %v1405
        %1422 = vst [vmem:[#allocation2 + $0x148] sm:$0xff] %v1406
        %1423 = vst [vmem:[#allocation2 + $0x150] sm:$0xff] %v1407
        %1424 = vst [vmem:[#allocation2 + $0x158] sm:$0xff] %v1408
        %1425 = vst [vmem:[#allocation2 + $0x160] sm:$0xff] %v1409
        %1426 = vst [vmem:[#allocation2 + $0x168] sm:$0xff] %v1410
        %1427 = vst [vmem:[#allocation2 + $0x170] sm:$0xff] %v1411
        %1428 = vst [vmem:[#allocation2 + $0x178] sm:$0xff] %v1412
        %v1429 = vpack.c.bf16 %v1398, %v1397
        %v1430 = vpack.c.bf16 %v1400, %v1399
        %v1431 = vpack.c.bf16 %v1402, %v1401
        %v1432 = vpack.c.bf16 %v1404, %v1403
        %v1433 = vpack.c.bf16 %v1406, %v1405
        %v1434 = vpack.c.bf16 %v1408, %v1407
        %v1435 = vpack.c.bf16 %v1410, %v1409
        %v1436 = vpack.c.bf16 %v1412, %v1411
        %s1437 = scalar_lea.vmem %s450, 128 [#allocation12]
        %1438 = vst [vmem:[%s1437] sm:$0xff] %v1429
        %1439 = vst [vmem:[%s1437 + $0x8] sm:$0xff] %v1430
        %1440 = vst [vmem:[%s1437 + $0x10] sm:$0xff] %v1431
        %1441 = vst [vmem:[%s1437 + $0x18] sm:$0xff] %v1432
        %1442 = vst [vmem:[%s1437 + $0x20] sm:$0xff] %v1433
        %1443 = vst [vmem:[%s1437 + $0x28] sm:$0xff] %v1434
        %1444 = vst [vmem:[%s1437 + $0x30] sm:$0xff] %v1435
        %1445 = vst [vmem:[%s1437 + $0x38] sm:$0xff] %v1436
        %s1446 = sld [smem:[#allocation4 + $0x12]]
        %v1447 = vstv %s1446
        %v1448 = vmul.f32 %v504, %v1447
        %v1449 = vmul.f32 %v505, %v1447
        %v1450 = vmul.f32 %v506, %v1447
        %v1451 = vmul.f32 %v507, %v1447
        %v1452 = vmul.f32 %v508, %v1447
        %v1453 = vmul.f32 %v509, %v1447
        %v1454 = vmul.f32 %v510, %v1447
        %v1455 = vmul.f32 %v511, %v1447
        %v1456 = vmul.f32 %v512, %v1447
        %v1457 = vmul.f32 %v513, %v1447
        %v1458 = vmul.f32 %v514, %v1447
        %v1459 = vmul.f32 %v515, %v1447
        %v1460 = vmul.f32 %v516, %v1447
        %v1461 = vmul.f32 %v517, %v1447
        %v1462 = vmul.f32 %v518, %v1447
        %v1463 = vmul.f32 %v519, %v1447
        %s1464 = sld [smem:[#allocation4 + $0x13]]
        %v1465 = vstv %s1464
        %v1466 = vmul.f32 %v521, %v1465
        %v1467 = vmul.f32 %v522, %v1465
        %v1468 = vmul.f32 %v523, %v1465
        %v1469 = vmul.f32 %v524, %v1465
        %v1470 = vmul.f32 %v525, %v1465
        %v1471 = vmul.f32 %v526, %v1465
        %v1472 = vmul.f32 %v527, %v1465
        %v1473 = vmul.f32 %v528, %v1465
        %v1474 = vmul.f32 %v529, %v1465
        %v1475 = vmul.f32 %v530, %v1465
        %v1476 = vmul.f32 %v531, %v1465
        %v1477 = vmul.f32 %v532, %v1465
        %v1478 = vmul.f32 %v533, %v1465
        %v1479 = vmul.f32 %v534, %v1465
        %v1480 = vmul.f32 %v535, %v1465
        %v1481 = vmul.f32 %v536, %v1465
        %v1482 = vadd.f32 %v1448, %v1466
        %v1483 = vadd.f32 %v1449, %v1467
        %v1484 = vadd.f32 %v1450, %v1468
        %v1485 = vadd.f32 %v1451, %v1469
        %v1486 = vadd.f32 %v1452, %v1470
        %v1487 = vadd.f32 %v1453, %v1471
        %v1488 = vadd.f32 %v1454, %v1472
        %v1489 = vadd.f32 %v1455, %v1473
        %v1490 = vadd.f32 %v1456, %v1474
        %v1491 = vadd.f32 %v1457, %v1475
        %v1492 = vadd.f32 %v1458, %v1476
        %v1493 = vadd.f32 %v1459, %v1477
        %v1494 = vadd.f32 %v1460, %v1478
        %v1495 = vadd.f32 %v1461, %v1479
        %v1496 = vadd.f32 %v1462, %v1480
        %v1497 = vadd.f32 %v1463, %v1481
        %s1498 = sld [smem:[#allocation4 + $0x14]]
        %v1499 = vstv %s1498
        %v1500 = vmul.f32 %v538, %v1499
        %v1501 = vmul.f32 %v539, %v1499
        %v1502 = vmul.f32 %v540, %v1499
        %v1503 = vmul.f32 %v541, %v1499
        %v1504 = vmul.f32 %v542, %v1499
        %v1505 = vmul.f32 %v543, %v1499
        %v1506 = vmul.f32 %v544, %v1499
        %v1507 = vmul.f32 %v545, %v1499
        %v1508 = vmul.f32 %v546, %v1499
        %v1509 = vmul.f32 %v547, %v1499
        %v1510 = vmul.f32 %v548, %v1499
        %v1511 = vmul.f32 %v549, %v1499
        %v1512 = vmul.f32 %v550, %v1499
        %v1513 = vmul.f32 %v551, %v1499
        %v1514 = vmul.f32 %v552, %v1499
        %v1515 = vmul.f32 %v553, %v1499
        %v1516 = vadd.f32 %v1482, %v1500
        %v1517 = vadd.f32 %v1483, %v1501
        %v1518 = vadd.f32 %v1484, %v1502
        %v1519 = vadd.f32 %v1485, %v1503
        %v1520 = vadd.f32 %v1486, %v1504
        %v1521 = vadd.f32 %v1487, %v1505
        %v1522 = vadd.f32 %v1488, %v1506
        %v1523 = vadd.f32 %v1489, %v1507
        %v1524 = vadd.f32 %v1490, %v1508
        %v1525 = vadd.f32 %v1491, %v1509
        %v1526 = vadd.f32 %v1492, %v1510
        %v1527 = vadd.f32 %v1493, %v1511
        %v1528 = vadd.f32 %v1494, %v1512
        %v1529 = vadd.f32 %v1495, %v1513
        %v1530 = vadd.f32 %v1496, %v1514
        %v1531 = vadd.f32 %v1497, %v1515
        %s1532 = sld [smem:[#allocation5 + $0x6]]
        %v1533 = vstv %s1532
        %v1534 = vadd.f32 %v1516, %v1533
        %v1535 = vadd.f32 %v1517, %v1533
        %v1536 = vadd.f32 %v1518, %v1533
        %v1537 = vadd.f32 %v1519, %v1533
        %v1538 = vadd.f32 %v1520, %v1533
        %v1539 = vadd.f32 %v1521, %v1533
        %v1540 = vadd.f32 %v1522, %v1533
        %v1541 = vadd.f32 %v1523, %v1533
        %v1542 = vadd.f32 %v1524, %v1533
        %v1543 = vadd.f32 %v1525, %v1533
        %v1544 = vadd.f32 %v1526, %v1533
        %v1545 = vadd.f32 %v1527, %v1533
        %v1546 = vadd.f32 %v1528, %v1533
        %v1547 = vadd.f32 %v1529, %v1533
        %v1548 = vadd.f32 %v1530, %v1533
        %v1549 = vadd.f32 %v1531, %v1533
        %s1550 = scalar_lea.vmem %s443, 768 [#allocation11]
        %1551 = vst [vmem:[%s1550] sm:$0xff] %v1534
        %1552 = vst [vmem:[%s1550 + $0x8] sm:$0xff] %v1535
        %1553 = vst [vmem:[%s1550 + $0x10] sm:$0xff] %v1536
        %1554 = vst [vmem:[%s1550 + $0x18] sm:$0xff] %v1537
        %1555 = vst [vmem:[%s1550 + $0x20] sm:$0xff] %v1538
        %1556 = vst [vmem:[%s1550 + $0x28] sm:$0xff] %v1539
        %1557 = vst [vmem:[%s1550 + $0x30] sm:$0xff] %v1540
        %1558 = vst [vmem:[%s1550 + $0x38] sm:$0xff] %v1541
        %1559 = vst [vmem:[%s1550 + $0x40] sm:$0xff] %v1542
        %1560 = vst [vmem:[%s1550 + $0x48] sm:$0xff] %v1543
        %1561 = vst [vmem:[%s1550 + $0x50] sm:$0xff] %v1544
        %1562 = vst [vmem:[%s1550 + $0x58] sm:$0xff] %v1545
        %1563 = vst [vmem:[%s1550 + $0x60] sm:$0xff] %v1546
        %1564 = vst [vmem:[%s1550 + $0x68] sm:$0xff] %v1547
        %1565 = vst [vmem:[%s1550 + $0x70] sm:$0xff] %v1548
        %1566 = vst [vmem:[%s1550 + $0x78] sm:$0xff] %v1549
        %1567 = vmax.xlane.f32.xlu0 %v1534
        %v1568 = vpop.xlane.xlu0 %1567
        %1569 = vmax.xlane.f32.xlu0 %v1535
        %v1570 = vpop.xlane.xlu0 %1569
        %1571 = vmax.xlane.f32.xlu0 %v1536
        %v1572 = vpop.xlane.xlu0 %1571
        %1573 = vmax.xlane.f32.xlu0 %v1537
        %v1574 = vpop.xlane.xlu0 %1573
        %1575 = vmax.xlane.f32.xlu0 %v1538
        %v1576 = vpop.xlane.xlu0 %1575
        %1577 = vmax.xlane.f32.xlu0 %v1539
        %v1578 = vpop.xlane.xlu0 %1577
        %1579 = vmax.xlane.f32.xlu0 %v1540
        %v1580 = vpop.xlane.xlu0 %1579
        %1581 = vmax.xlane.f32.xlu0 %v1541
        %v1582 = vpop.xlane.xlu0 %1581
        %1583 = vmax.xlane.f32.xlu0 %v1542
        %v1584 = vpop.xlane.xlu0 %1583
        %1585 = vmax.xlane.f32.xlu0 %v1543
        %v1586 = vpop.xlane.xlu0 %1585
        %1587 = vmax.xlane.f32.xlu0 %v1544
        %v1588 = vpop.xlane.xlu0 %1587
        %1589 = vmax.xlane.f32.xlu0 %v1545
        %v1590 = vpop.xlane.xlu0 %1589
        %1591 = vmax.xlane.f32.xlu0 %v1546
        %v1592 = vpop.xlane.xlu0 %1591
        %1593 = vmax.xlane.f32.xlu0 %v1547
        %v1594 = vpop.xlane.xlu0 %1593
        %1595 = vmax.xlane.f32.xlu0 %v1548
        %v1596 = vpop.xlane.xlu0 %1595
        %1597 = vmax.xlane.f32.xlu0 %v1549
        %v1598 = vpop.xlane.xlu0 %1597
        %v1599 = vsub.f32 %v1534, %v1568
        %v1600 = vsub.f32 %v1535, %v1570
        %v1601 = vsub.f32 %v1536, %v1572
        %v1602 = vsub.f32 %v1537, %v1574
        %v1603 = vsub.f32 %v1538, %v1576
        %v1604 = vsub.f32 %v1539, %v1578
        %v1605 = vsub.f32 %v1540, %v1580
        %v1606 = vsub.f32 %v1541, %v1582
        %v1607 = vsub.f32 %v1542, %v1584
        %v1608 = vsub.f32 %v1543, %v1586
        %v1609 = vsub.f32 %v1544, %v1588
        %v1610 = vsub.f32 %v1545, %v1590
        %v1611 = vsub.f32 %v1546, %v1592
        %v1612 = vsub.f32 %v1547, %v1594
        %v1613 = vsub.f32 %v1548, %v1596
        %v1614 = vsub.f32 %v1549, %v1598
        %v1615 = vmul.f32 %v1599, 1.442695
        %v1616 = vpow.pop %v1615
        %v1617 = vmul.f32 %v1600, 1.442695
        %v1618 = vpow.pop %v1617
        %v1619 = vmul.f32 %v1601, 1.442695
        %v1620 = vpow.pop %v1619
        %v1621 = vmul.f32 %v1602, 1.442695
        %v1622 = vpow.pop %v1621
        %v1623 = vmul.f32 %v1603, 1.442695
        %v1624 = vpow.pop %v1623
        %v1625 = vmul.f32 %v1604, 1.442695
        %v1626 = vpow.pop %v1625
        %v1627 = vmul.f32 %v1605, 1.442695
        %v1628 = vpow.pop %v1627
        %v1629 = vmul.f32 %v1606, 1.442695
        %v1630 = vpow.pop %v1629
        %v1631 = vmul.f32 %v1607, 1.442695
        %v1632 = vpow.pop %v1631
        %v1633 = vmul.f32 %v1608, 1.442695
        %v1634 = vpow.pop %v1633
        %v1635 = vmul.f32 %v1609, 1.442695
        %v1636 = vpow.pop %v1635
        %v1637 = vmul.f32 %v1610, 1.442695
        %v1638 = vpow.pop %v1637
        %v1639 = vmul.f32 %v1611, 1.442695
        %v1640 = vpow.pop %v1639
        %v1641 = vmul.f32 %v1612, 1.442695
        %v1642 = vpow.pop %v1641
        %v1643 = vmul.f32 %v1613, 1.442695
        %v1644 = vpow.pop %v1643
        %v1645 = vmul.f32 %v1614, 1.442695
        %v1646 = vpow.pop %v1645
        %1647 = vadd.xlane.f32.xlu0 %v1616
        %v1648 = vpop.xlane.xlu0 %1647
        %1649 = vadd.xlane.f32.xlu0 %v1618
        %v1650 = vpop.xlane.xlu0 %1649
        %1651 = vadd.xlane.f32.xlu0 %v1620
        %v1652 = vpop.xlane.xlu0 %1651
        %1653 = vadd.xlane.f32.xlu0 %v1622
        %v1654 = vpop.xlane.xlu0 %1653
        %1655 = vadd.xlane.f32.xlu0 %v1624
        %v1656 = vpop.xlane.xlu0 %1655
        %1657 = vadd.xlane.f32.xlu0 %v1626
        %v1658 = vpop.xlane.xlu0 %1657
        %1659 = vadd.xlane.f32.xlu0 %v1628
        %v1660 = vpop.xlane.xlu0 %1659
        %1661 = vadd.xlane.f32.xlu0 %v1630
        %v1662 = vpop.xlane.xlu0 %1661
        %1663 = vadd.xlane.f32.xlu0 %v1632
        %v1664 = vpop.xlane.xlu0 %1663
        %1665 = vadd.xlane.f32.xlu0 %v1634
        %v1666 = vpop.xlane.xlu0 %1665
        %1667 = vadd.xlane.f32.xlu0 %v1636
        %v1668 = vpop.xlane.xlu0 %1667
        %1669 = vadd.xlane.f32.xlu0 %v1638
        %v1670 = vpop.xlane.xlu0 %1669
        %1671 = vadd.xlane.f32.xlu0 %v1640
        %v1672 = vpop.xlane.xlu0 %1671
        %1673 = vadd.xlane.f32.xlu0 %v1642
        %v1674 = vpop.xlane.xlu0 %1673
        %1675 = vadd.xlane.f32.xlu0 %v1644
        %v1676 = vpop.xlane.xlu0 %1675
        %1677 = vadd.xlane.f32.xlu0 %v1646
        %v1678 = vpop.xlane.xlu0 %1677
        %v1679 = vrcp.pop %v1648
        %v1680 = vrcp.pop %v1650
        %v1681 = vrcp.pop %v1652
        %v1682 = vrcp.pop %v1654
        %v1683 = vrcp.pop %v1656
        %v1684 = vrcp.pop %v1658
        %v1685 = vrcp.pop %v1660
        %v1686 = vrcp.pop %v1662
        %v1687 = vrcp.pop %v1664
        %v1688 = vrcp.pop %v1666
        %v1689 = vrcp.pop %v1668
        %v1690 = vrcp.pop %v1670
        %v1691 = vrcp.pop %v1672
        %v1692 = vrcp.pop %v1674
        %v1693 = vrcp.pop %v1676
        %v1694 = vrcp.pop %v1678
        %v1695 = vmul.f32 %v1616, %v1679
        %v1696 = vmul.f32 %v1618, %v1680
        %v1697 = vmul.f32 %v1620, %v1681
        %v1698 = vmul.f32 %v1622, %v1682
        %v1699 = vmul.f32 %v1624, %v1683
        %v1700 = vmul.f32 %v1626, %v1684
        %v1701 = vmul.f32 %v1628, %v1685
        %v1702 = vmul.f32 %v1630, %v1686
        %v1703 = vmul.f32 %v1632, %v1687
        %v1704 = vmul.f32 %v1634, %v1688
        %v1705 = vmul.f32 %v1636, %v1689
        %v1706 = vmul.f32 %v1638, %v1690
        %v1707 = vmul.f32 %v1640, %v1691
        %v1708 = vmul.f32 %v1642, %v1692
        %v1709 = vmul.f32 %v1644, %v1693
        %v1710 = vmul.f32 %v1646, %v1694
        %1711 = vst [vmem:[#allocation2 + $0x180] sm:$0xff] %v1695
        %1712 = vst [vmem:[#allocation2 + $0x188] sm:$0xff] %v1696
        %1713 = vst [vmem:[#allocation2 + $0x190] sm:$0xff] %v1697
        %1714 = vst [vmem:[#allocation2 + $0x198] sm:$0xff] %v1698
        %1715 = vst [vmem:[#allocation2 + $0x1a0] sm:$0xff] %v1699
        %1716 = vst [vmem:[#allocation2 + $0x1a8] sm:$0xff] %v1700
        %1717 = vst [vmem:[#allocation2 + $0x1b0] sm:$0xff] %v1701
        %1718 = vst [vmem:[#allocation2 + $0x1b8] sm:$0xff] %v1702
        %1719 = vst [vmem:[#allocation2 + $0x1c0] sm:$0xff] %v1703
        %1720 = vst [vmem:[#allocation2 + $0x1c8] sm:$0xff] %v1704
        %1721 = vst [vmem:[#allocation2 + $0x1d0] sm:$0xff] %v1705
        %1722 = vst [vmem:[#allocation2 + $0x1d8] sm:$0xff] %v1706
        %1723 = vst [vmem:[#allocation2 + $0x1e0] sm:$0xff] %v1707
        %1724 = vst [vmem:[#allocation2 + $0x1e8] sm:$0xff] %v1708
        %1725 = vst [vmem:[#allocation2 + $0x1f0] sm:$0xff] %v1709
        %1726 = vst [vmem:[#allocation2 + $0x1f8] sm:$0xff] %v1710
        %v1727 = vpack.c.bf16 %v1696, %v1695
        %v1728 = vpack.c.bf16 %v1698, %v1697
        %v1729 = vpack.c.bf16 %v1700, %v1699
        %v1730 = vpack.c.bf16 %v1702, %v1701
        %v1731 = vpack.c.bf16 %v1704, %v1703
        %v1732 = vpack.c.bf16 %v1706, %v1705
        %v1733 = vpack.c.bf16 %v1708, %v1707
        %v1734 = vpack.c.bf16 %v1710, %v1709
        %s1735 = scalar_lea.vmem %s450, 192 [#allocation12]
        %1736 = vst [vmem:[%s1735] sm:$0xff] %v1727
        %1737 = vst [vmem:[%s1735 + $0x8] sm:$0xff] %v1728
        %1738 = vst [vmem:[%s1735 + $0x10] sm:$0xff] %v1729
        %1739 = vst [vmem:[%s1735 + $0x18] sm:$0xff] %v1730
        %1740 = vst [vmem:[%s1735 + $0x20] sm:$0xff] %v1731
        %1741 = vst [vmem:[%s1735 + $0x28] sm:$0xff] %v1732
        %1742 = vst [vmem:[%s1735 + $0x30] sm:$0xff] %v1733
        %1743 = vst [vmem:[%s1735 + $0x38] sm:$0xff] %v1734
        %s1744 = sld [smem:[#allocation4 + $0x15]]
        %v1745 = vstv %s1744
        %v1746 = vmul.f32 %v504, %v1745
        %v1747 = vmul.f32 %v505, %v1745
        %v1748 = vmul.f32 %v506, %v1745
        %v1749 = vmul.f32 %v507, %v1745
        %v1750 = vmul.f32 %v508, %v1745
        %v1751 = vmul.f32 %v509, %v1745
        %v1752 = vmul.f32 %v510, %v1745
        %v1753 = vmul.f32 %v511, %v1745
        %v1754 = vmul.f32 %v512, %v1745
        %v1755 = vmul.f32 %v513, %v1745
        %v1756 = vmul.f32 %v514, %v1745
        %v1757 = vmul.f32 %v515, %v1745
        %v1758 = vmul.f32 %v516, %v1745
        %v1759 = vmul.f32 %v517, %v1745
        %v1760 = vmul.f32 %v518, %v1745
        %v1761 = vmul.f32 %v519, %v1745
        %s1762 = sld [smem:[#allocation4 + $0x16]]
        %v1763 = vstv %s1762
        %v1764 = vmul.f32 %v521, %v1763
        %v1765 = vmul.f32 %v522, %v1763
        %v1766 = vmul.f32 %v523, %v1763
        %v1767 = vmul.f32 %v524, %v1763
        %v1768 = vmul.f32 %v525, %v1763
        %v1769 = vmul.f32 %v526, %v1763
        %v1770 = vmul.f32 %v527, %v1763
        %v1771 = vmul.f32 %v528, %v1763
        %v1772 = vmul.f32 %v529, %v1763
        %v1773 = vmul.f32 %v530, %v1763
        %v1774 = vmul.f32 %v531, %v1763
        %v1775 = vmul.f32 %v532, %v1763
        %v1776 = vmul.f32 %v533, %v1763
        %v1777 = vmul.f32 %v534, %v1763
        %v1778 = vmul.f32 %v535, %v1763
        %v1779 = vmul.f32 %v536, %v1763
        %v1780 = vadd.f32 %v1746, %v1764
        %v1781 = vadd.f32 %v1747, %v1765
        %v1782 = vadd.f32 %v1748, %v1766
        %v1783 = vadd.f32 %v1749, %v1767
        %v1784 = vadd.f32 %v1750, %v1768
        %v1785 = vadd.f32 %v1751, %v1769
        %v1786 = vadd.f32 %v1752, %v1770
        %v1787 = vadd.f32 %v1753, %v1771
        %v1788 = vadd.f32 %v1754, %v1772
        %v1789 = vadd.f32 %v1755, %v1773
        %v1790 = vadd.f32 %v1756, %v1774
        %v1791 = vadd.f32 %v1757, %v1775
        %v1792 = vadd.f32 %v1758, %v1776
        %v1793 = vadd.f32 %v1759, %v1777
        %v1794 = vadd.f32 %v1760, %v1778
        %v1795 = vadd.f32 %v1761, %v1779
        %s1796 = sld [smem:[#allocation4 + $0x17]]
        %v1797 = vstv %s1796
        %v1798 = vmul.f32 %v538, %v1797
        %v1799 = vmul.f32 %v539, %v1797
        %v1800 = vmul.f32 %v540, %v1797
        %v1801 = vmul.f32 %v541, %v1797
        %v1802 = vmul.f32 %v542, %v1797
        %v1803 = vmul.f32 %v543, %v1797
        %v1804 = vmul.f32 %v544, %v1797
        %v1805 = vmul.f32 %v545, %v1797
        %v1806 = vmul.f32 %v546, %v1797
        %v1807 = vmul.f32 %v547, %v1797
        %v1808 = vmul.f32 %v548, %v1797
        %v1809 = vmul.f32 %v549, %v1797
        %v1810 = vmul.f32 %v550, %v1797
        %v1811 = vmul.f32 %v551, %v1797
        %v1812 = vmul.f32 %v552, %v1797
        %v1813 = vmul.f32 %v553, %v1797
        %v1814 = vadd.f32 %v1780, %v1798
        %v1815 = vadd.f32 %v1781, %v1799
        %v1816 = vadd.f32 %v1782, %v1800
        %v1817 = vadd.f32 %v1783, %v1801
        %v1818 = vadd.f32 %v1784, %v1802
        %v1819 = vadd.f32 %v1785, %v1803
        %v1820 = vadd.f32 %v1786, %v1804
        %v1821 = vadd.f32 %v1787, %v1805
        %v1822 = vadd.f32 %v1788, %v1806
        %v1823 = vadd.f32 %v1789, %v1807
        %v1824 = vadd.f32 %v1790, %v1808
        %v1825 = vadd.f32 %v1791, %v1809
        %v1826 = vadd.f32 %v1792, %v1810
        %v1827 = vadd.f32 %v1793, %v1811
        %v1828 = vadd.f32 %v1794, %v1812
        %v1829 = vadd.f32 %v1795, %v1813
        %s1830 = sld [smem:[#allocation5 + $0x7]]
        %v1831 = vstv %s1830
        %v1832 = vadd.f32 %v1814, %v1831
        %v1833 = vadd.f32 %v1815, %v1831
        %v1834 = vadd.f32 %v1816, %v1831
        %v1835 = vadd.f32 %v1817, %v1831
        %v1836 = vadd.f32 %v1818, %v1831
        %v1837 = vadd.f32 %v1819, %v1831
        %v1838 = vadd.f32 %v1820, %v1831
        %v1839 = vadd.f32 %v1821, %v1831
        %v1840 = vadd.f32 %v1822, %v1831
        %v1841 = vadd.f32 %v1823, %v1831
        %v1842 = vadd.f32 %v1824, %v1831
        %v1843 = vadd.f32 %v1825, %v1831
        %v1844 = vadd.f32 %v1826, %v1831
        %v1845 = vadd.f32 %v1827, %v1831
        %v1846 = vadd.f32 %v1828, %v1831
        %v1847 = vadd.f32 %v1829, %v1831
        %s1848 = scalar_lea.vmem %s443, 896 [#allocation11]
        %1849 = vst [vmem:[%s1848] sm:$0xff] %v1832
        %1850 = vst [vmem:[%s1848 + $0x8] sm:$0xff] %v1833
        %1851 = vst [vmem:[%s1848 + $0x10] sm:$0xff] %v1834
        %1852 = vst [vmem:[%s1848 + $0x18] sm:$0xff] %v1835
        %1853 = vst [vmem:[%s1848 + $0x20] sm:$0xff] %v1836
        %1854 = vst [vmem:[%s1848 + $0x28] sm:$0xff] %v1837
        %1855 = vst [vmem:[%s1848 + $0x30] sm:$0xff] %v1838
        %1856 = vst [vmem:[%s1848 + $0x38] sm:$0xff] %v1839
        %1857 = vst [vmem:[%s1848 + $0x40] sm:$0xff] %v1840
        %1858 = vst [vmem:[%s1848 + $0x48] sm:$0xff] %v1841
        %1859 = vst [vmem:[%s1848 + $0x50] sm:$0xff] %v1842
        %1860 = vst [vmem:[%s1848 + $0x58] sm:$0xff] %v1843
        %1861 = vst [vmem:[%s1848 + $0x60] sm:$0xff] %v1844
        %1862 = vst [vmem:[%s1848 + $0x68] sm:$0xff] %v1845
        %1863 = vst [vmem:[%s1848 + $0x70] sm:$0xff] %v1846
        %1864 = vst [vmem:[%s1848 + $0x78] sm:$0xff] %v1847
        %1865 = vmax.xlane.f32.xlu0 %v1832
        %v1866 = vpop.xlane.xlu0 %1865
        %1867 = vmax.xlane.f32.xlu0 %v1833
        %v1868 = vpop.xlane.xlu0 %1867
        %1869 = vmax.xlane.f32.xlu0 %v1834
        %v1870 = vpop.xlane.xlu0 %1869
        %1871 = vmax.xlane.f32.xlu0 %v1835
        %v1872 = vpop.xlane.xlu0 %1871
        %1873 = vmax.xlane.f32.xlu0 %v1836
        %v1874 = vpop.xlane.xlu0 %1873
        %1875 = vmax.xlane.f32.xlu0 %v1837
        %v1876 = vpop.xlane.xlu0 %1875
        %1877 = vmax.xlane.f32.xlu0 %v1838
        %v1878 = vpop.xlane.xlu0 %1877
        %1879 = vmax.xlane.f32.xlu0 %v1839
        %v1880 = vpop.xlane.xlu0 %1879
        %1881 = vmax.xlane.f32.xlu0 %v1840
        %v1882 = vpop.xlane.xlu0 %1881
        %1883 = vmax.xlane.f32.xlu0 %v1841
        %v1884 = vpop.xlane.xlu0 %1883
        %1885 = vmax.xlane.f32.xlu0 %v1842
        %v1886 = vpop.xlane.xlu0 %1885
        %1887 = vmax.xlane.f32.xlu0 %v1843
        %v1888 = vpop.xlane.xlu0 %1887
        %1889 = vmax.xlane.f32.xlu0 %v1844
        %v1890 = vpop.xlane.xlu0 %1889
        %1891 = vmax.xlane.f32.xlu0 %v1845
        %v1892 = vpop.xlane.xlu0 %1891
        %1893 = vmax.xlane.f32.xlu0 %v1846
        %v1894 = vpop.xlane.xlu0 %1893
        %1895 = vmax.xlane.f32.xlu0 %v1847
        %v1896 = vpop.xlane.xlu0 %1895
        %v1897 = vsub.f32 %v1832, %v1866
        %v1898 = vsub.f32 %v1833, %v1868
        %v1899 = vsub.f32 %v1834, %v1870
        %v1900 = vsub.f32 %v1835, %v1872
        %v1901 = vsub.f32 %v1836, %v1874
        %v1902 = vsub.f32 %v1837, %v1876
        %v1903 = vsub.f32 %v1838, %v1878
        %v1904 = vsub.f32 %v1839, %v1880
        %v1905 = vsub.f32 %v1840, %v1882
        %v1906 = vsub.f32 %v1841, %v1884
        %v1907 = vsub.f32 %v1842, %v1886
        %v1908 = vsub.f32 %v1843, %v1888
        %v1909 = vsub.f32 %v1844, %v1890
        %v1910 = vsub.f32 %v1845, %v1892
        %v1911 = vsub.f32 %v1846, %v1894
        %v1912 = vsub.f32 %v1847, %v1896
        %v1913 = vmul.f32 %v1897, 1.442695
        %v1914 = vpow.pop %v1913
        %v1915 = vmul.f32 %v1898, 1.442695
        %v1916 = vpow.pop %v1915
        %v1917 = vmul.f32 %v1899, 1.442695
        %v1918 = vpow.pop %v1917
        %v1919 = vmul.f32 %v1900, 1.442695
        %v1920 = vpow.pop %v1919
        %v1921 = vmul.f32 %v1901, 1.442695
        %v1922 = vpow.pop %v1921
        %v1923 = vmul.f32 %v1902, 1.442695
        %v1924 = vpow.pop %v1923
        %v1925 = vmul.f32 %v1903, 1.442695
        %v1926 = vpow.pop %v1925
        %v1927 = vmul.f32 %v1904, 1.442695
        %v1928 = vpow.pop %v1927
        %v1929 = vmul.f32 %v1905, 1.442695
        %v1930 = vpow.pop %v1929
        %v1931 = vmul.f32 %v1906, 1.442695
        %v1932 = vpow.pop %v1931
        %v1933 = vmul.f32 %v1907, 1.442695
        %v1934 = vpow.pop %v1933
        %v1935 = vmul.f32 %v1908, 1.442695
        %v1936 = vpow.pop %v1935
        %v1937 = vmul.f32 %v1909, 1.442695
        %v1938 = vpow.pop %v1937
        %v1939 = vmul.f32 %v1910, 1.442695
        %v1940 = vpow.pop %v1939
        %v1941 = vmul.f32 %v1911, 1.442695
        %v1942 = vpow.pop %v1941
        %v1943 = vmul.f32 %v1912, 1.442695
        %v1944 = vpow.pop %v1943
        %1945 = vadd.xlane.f32.xlu0 %v1914
        %v1946 = vpop.xlane.xlu0 %1945
        %1947 = vadd.xlane.f32.xlu0 %v1916
        %v1948 = vpop.xlane.xlu0 %1947
        %1949 = vadd.xlane.f32.xlu0 %v1918
        %v1950 = vpop.xlane.xlu0 %1949
        %1951 = vadd.xlane.f32.xlu0 %v1920
        %v1952 = vpop.xlane.xlu0 %1951
        %1953 = vadd.xlane.f32.xlu0 %v1922
        %v1954 = vpop.xlane.xlu0 %1953
        %1955 = vadd.xlane.f32.xlu0 %v1924
        %v1956 = vpop.xlane.xlu0 %1955
        %1957 = vadd.xlane.f32.xlu0 %v1926
        %v1958 = vpop.xlane.xlu0 %1957
        %1959 = vadd.xlane.f32.xlu0 %v1928
        %v1960 = vpop.xlane.xlu0 %1959
        %1961 = vadd.xlane.f32.xlu0 %v1930
        %v1962 = vpop.xlane.xlu0 %1961
        %1963 = vadd.xlane.f32.xlu0 %v1932
        %v1964 = vpop.xlane.xlu0 %1963
        %1965 = vadd.xlane.f32.xlu0 %v1934
        %v1966 = vpop.xlane.xlu0 %1965
        %1967 = vadd.xlane.f32.xlu0 %v1936
        %v1968 = vpop.xlane.xlu0 %1967
        %1969 = vadd.xlane.f32.xlu0 %v1938
        %v1970 = vpop.xlane.xlu0 %1969
        %1971 = vadd.xlane.f32.xlu0 %v1940
        %v1972 = vpop.xlane.xlu0 %1971
        %1973 = vadd.xlane.f32.xlu0 %v1942
        %v1974 = vpop.xlane.xlu0 %1973
        %1975 = vadd.xlane.f32.xlu0 %v1944
        %v1976 = vpop.xlane.xlu0 %1975
        %v1977 = vrcp.pop %v1946
        %v1978 = vrcp.pop %v1948
        %v1979 = vrcp.pop %v1950
        %v1980 = vrcp.pop %v1952
        %v1981 = vrcp.pop %v1954
        %v1982 = vrcp.pop %v1956
        %v1983 = vrcp.pop %v1958
        %v1984 = vrcp.pop %v1960
        %v1985 = vrcp.pop %v1962
        %v1986 = vrcp.pop %v1964
        %v1987 = vrcp.pop %v1966
        %v1988 = vrcp.pop %v1968
        %v1989 = vrcp.pop %v1970
        %v1990 = vrcp.pop %v1972
        %v1991 = vrcp.pop %v1974
        %v1992 = vrcp.pop %v1976
        %v1993 = vmul.f32 %v1914, %v1977
        %v1994 = vmul.f32 %v1916, %v1978
        %v1995 = vmul.f32 %v1918, %v1979
        %v1996 = vmul.f32 %v1920, %v1980
        %v1997 = vmul.f32 %v1922, %v1981
        %v1998 = vmul.f32 %v1924, %v1982
        %v1999 = vmul.f32 %v1926, %v1983
        %v2000 = vmul.f32 %v1928, %v1984
        %v2001 = vmul.f32 %v1930, %v1985
        %v2002 = vmul.f32 %v1932, %v1986
        %v2003 = vmul.f32 %v1934, %v1987
        %v2004 = vmul.f32 %v1936, %v1988
        %v2005 = vmul.f32 %v1938, %v1989
        %v2006 = vmul.f32 %v1940, %v1990
        %v2007 = vmul.f32 %v1942, %v1991
        %v2008 = vmul.f32 %v1944, %v1992
        %2009 = vst [vmem:[#allocation2 + $0x200] sm:$0xff] %v1993
        %2010 = vst [vmem:[#allocation2 + $0x208] sm:$0xff] %v1994
        %2011 = vst [vmem:[#allocation2 + $0x210] sm:$0xff] %v1995
        %2012 = vst [vmem:[#allocation2 + $0x218] sm:$0xff] %v1996
        %2013 = vst [vmem:[#allocation2 + $0x220] sm:$0xff] %v1997
        %2014 = vst [vmem:[#allocation2 + $0x228] sm:$0xff] %v1998
        %2015 = vst [vmem:[#allocation2 + $0x230] sm:$0xff] %v1999
        %2016 = vst [vmem:[#allocation2 + $0x238] sm:$0xff] %v2000
        %2017 = vst [vmem:[#allocation2 + $0x240] sm:$0xff] %v2001
        %2018 = vst [vmem:[#allocation2 + $0x248] sm:$0xff] %v2002
        %2019 = vst [vmem:[#allocation2 + $0x250] sm:$0xff] %v2003
        %2020 = vst [vmem:[#allocation2 + $0x258] sm:$0xff] %v2004
        %2021 = vst [vmem:[#allocation2 + $0x260] sm:$0xff] %v2005
        %2022 = vst [vmem:[#allocation2 + $0x268] sm:$0xff] %v2006
        %2023 = vst [vmem:[#allocation2 + $0x270] sm:$0xff] %v2007
        %2024 = vst [vmem:[#allocation2 + $0x278] sm:$0xff] %v2008
        %v2025 = vpack.c.bf16 %v1994, %v1993
        %v2026 = vpack.c.bf16 %v1996, %v1995
        %v2027 = vpack.c.bf16 %v1998, %v1997
        %v2028 = vpack.c.bf16 %v2000, %v1999
        %v2029 = vpack.c.bf16 %v2002, %v2001
        %v2030 = vpack.c.bf16 %v2004, %v2003
        %v2031 = vpack.c.bf16 %v2006, %v2005
        %v2032 = vpack.c.bf16 %v2008, %v2007
        %s2033 = scalar_lea.vmem %s450, 256 [#allocation12]
        %2034 = vst [vmem:[%s2033] sm:$0xff] %v2025
        %2035 = vst [vmem:[%s2033 + $0x8] sm:$0xff] %v2026
        %2036 = vst [vmem:[%s2033 + $0x10] sm:$0xff] %v2027
        %2037 = vst [vmem:[%s2033 + $0x18] sm:$0xff] %v2028
        %2038 = vst [vmem:[%s2033 + $0x20] sm:$0xff] %v2029
        %2039 = vst [vmem:[%s2033 + $0x28] sm:$0xff] %v2030
        %2040 = vst [vmem:[%s2033 + $0x30] sm:$0xff] %v2031
        %2041 = vst [vmem:[%s2033 + $0x38] sm:$0xff] %v2032
        %v2042 = vld [vmem:[#allocation2] sm:$0xff]
        %v2043 = vld [vmem:[#allocation2 + $0x8] sm:$0xff]
        %v2044 = vld [vmem:[#allocation2 + $0x10] sm:$0xff]
        %v2045 = vld [vmem:[#allocation2 + $0x18] sm:$0xff]
        %v2046 = vld [vmem:[#allocation2 + $0x20] sm:$0xff]
        %v2047 = vld [vmem:[#allocation2 + $0x28] sm:$0xff]
        %v2048 = vld [vmem:[#allocation2 + $0x30] sm:$0xff]
        %v2049 = vld [vmem:[#allocation2 + $0x38] sm:$0xff]
        %v2050 = vld [vmem:[#allocation2 + $0x40] sm:$0xff]
        %v2051 = vld [vmem:[#allocation2 + $0x48] sm:$0xff]
        %v2052 = vld [vmem:[#allocation2 + $0x50] sm:$0xff]
        %v2053 = vld [vmem:[#allocation2 + $0x58] sm:$0xff]
        %v2054 = vld [vmem:[#allocation2 + $0x60] sm:$0xff]
        %v2055 = vld [vmem:[#allocation2 + $0x68] sm:$0xff]
        %v2056 = vld [vmem:[#allocation2 + $0x70] sm:$0xff]
        %v2057 = vld [vmem:[#allocation2 + $0x78] sm:$0xff]
        %v2058 = vld [vmem:[#allocation2 + $0x80] sm:$0xff]
        %v2059 = vld [vmem:[#allocation2 + $0x88] sm:$0xff]
        %v2060 = vld [vmem:[#allocation2 + $0x90] sm:$0xff]
        %v2061 = vld [vmem:[#allocation2 + $0x98] sm:$0xff]
        %v2062 = vld [vmem:[#allocation2 + $0xa0] sm:$0xff]
        %v2063 = vld [vmem:[#allocation2 + $0xa8] sm:$0xff]
        %v2064 = vld [vmem:[#allocation2 + $0xb0] sm:$0xff]
        %v2065 = vld [vmem:[#allocation2 + $0xb8] sm:$0xff]
        %v2066 = vld [vmem:[#allocation2 + $0xc0] sm:$0xff]
        %v2067 = vld [vmem:[#allocation2 + $0xc8] sm:$0xff]
        %v2068 = vld [vmem:[#allocation2 + $0xd0] sm:$0xff]
        %v2069 = vld [vmem:[#allocation2 + $0xd8] sm:$0xff]
        %v2070 = vld [vmem:[#allocation2 + $0xe0] sm:$0xff]
        %v2071 = vld [vmem:[#allocation2 + $0xe8] sm:$0xff]
        %v2072 = vld [vmem:[#allocation2 + $0xf0] sm:$0xff]
        %v2073 = vld [vmem:[#allocation2 + $0xf8] sm:$0xff]
        %v2074 = vld [vmem:[#allocation2 + $0x100] sm:$0xff]
        %v2075 = vld [vmem:[#allocation2 + $0x108] sm:$0xff]
        %v2076 = vld [vmem:[#allocation2 + $0x110] sm:$0xff]
        %v2077 = vld [vmem:[#allocation2 + $0x118] sm:$0xff]
        %v2078 = vld [vmem:[#allocation2 + $0x120] sm:$0xff]
        %v2079 = vld [vmem:[#allocation2 + $0x128] sm:$0xff]
        %v2080 = vld [vmem:[#allocation2 + $0x130] sm:$0xff]
        %v2081 = vld [vmem:[#allocation2 + $0x138] sm:$0xff]
        %v2082 = vld [vmem:[#allocation2 + $0x140] sm:$0xff]
        %v2083 = vld [vmem:[#allocation2 + $0x148] sm:$0xff]
        %v2084 = vld [vmem:[#allocation2 + $0x150] sm:$0xff]
        %v2085 = vld [vmem:[#allocation2 + $0x158] sm:$0xff]
        %v2086 = vld [vmem:[#allocation2 + $0x160] sm:$0xff]
        %v2087 = vld [vmem:[#allocation2 + $0x168] sm:$0xff]
        %v2088 = vld [vmem:[#allocation2 + $0x170] sm:$0xff]
        %v2089 = vld [vmem:[#allocation2 + $0x178] sm:$0xff]
        %v2090 = vld [vmem:[#allocation2 + $0x180] sm:$0xff]
        %v2091 = vld [vmem:[#allocation2 + $0x188] sm:$0xff]
        %v2092 = vld [vmem:[#allocation2 + $0x190] sm:$0xff]
        %v2093 = vld [vmem:[#allocation2 + $0x198] sm:$0xff]
        %v2094 = vld [vmem:[#allocation2 + $0x1a0] sm:$0xff]
        %v2095 = vld [vmem:[#allocation2 + $0x1a8] sm:$0xff]
        %v2096 = vld [vmem:[#allocation2 + $0x1b0] sm:$0xff]
        %v2097 = vld [vmem:[#allocation2 + $0x1b8] sm:$0xff]
        %v2098 = vld [vmem:[#allocation2 + $0x1c0] sm:$0xff]
        %v2099 = vld [vmem:[#allocation2 + $0x1c8] sm:$0xff]
        %v2100 = vld [vmem:[#allocation2 + $0x1d0] sm:$0xff]
        %v2101 = vld [vmem:[#allocation2 + $0x1d8] sm:$0xff]
        %v2102 = vld [vmem:[#allocation2 + $0x1e0] sm:$0xff]
        %v2103 = vld [vmem:[#allocation2 + $0x1e8] sm:$0xff]
        %v2104 = vld [vmem:[#allocation2 + $0x1f0] sm:$0xff]
        %v2105 = vld [vmem:[#allocation2 + $0x1f8] sm:$0xff]
        %v2106 = vld [vmem:[#allocation2 + $0x200] sm:$0xff]
        %v2107 = vld [vmem:[#allocation2 + $0x208] sm:$0xff]
        %v2108 = vld [vmem:[#allocation2 + $0x210] sm:$0xff]
        %v2109 = vld [vmem:[#allocation2 + $0x218] sm:$0xff]
        %v2110 = vld [vmem:[#allocation2 + $0x220] sm:$0xff]
        %v2111 = vld [vmem:[#allocation2 + $0x228] sm:$0xff]
        %v2112 = vld [vmem:[#allocation2 + $0x230] sm:$0xff]
        %v2113 = vld [vmem:[#allocation2 + $0x238] sm:$0xff]
        %v2114 = vld [vmem:[#allocation2 + $0x240] sm:$0xff]
        %v2115 = vld [vmem:[#allocation2 + $0x248] sm:$0xff]
        %v2116 = vld [vmem:[#allocation2 + $0x250] sm:$0xff]
        %v2117 = vld [vmem:[#allocation2 + $0x258] sm:$0xff]
        %v2118 = vld [vmem:[#allocation2 + $0x260] sm:$0xff]
        %v2119 = vld [vmem:[#allocation2 + $0x268] sm:$0xff]
        %v2120 = vld [vmem:[#allocation2 + $0x270] sm:$0xff]
        %v2121 = vld [vmem:[#allocation2 + $0x278] sm:$0xff]
        %v2122 = vld [vmem:[#allocation9] sm:$0xff]
        %v2123 = vld [vmem:[#allocation9 + $0x8] sm:$0xff]
        %v2124 = vld [vmem:[#allocation9 + $0x10] sm:$0xff]
        %v2125 = vld [vmem:[#allocation9 + $0x18] sm:$0xff]
        %v2126 = vld [vmem:[#allocation9 + $0x20] sm:$0xff]
        %v2127 = vld [vmem:[#allocation9 + $0x28] sm:$0xff]
        %v2128 = vld [vmem:[#allocation9 + $0x30] sm:$0xff]
        %v2129 = vld [vmem:[#allocation9 + $0x38] sm:$0xff]
        %v2130 = vld [vmem:[#allocation9 + $0x40] sm:$0xff]
        %v2131 = vld [vmem:[#allocation9 + $0x48] sm:$0xff]
        %v2132 = vld [vmem:[#allocation9 + $0x50] sm:$0xff]
        %v2133 = vld [vmem:[#allocation9 + $0x58] sm:$0xff]
        %v2134 = vld [vmem:[#allocation9 + $0x60] sm:$0xff]
        %v2135 = vld [vmem:[#allocation9 + $0x68] sm:$0xff]
        %v2136 = vld [vmem:[#allocation9 + $0x70] sm:$0xff]
        %v2137 = vld [vmem:[#allocation9 + $0x78] sm:$0xff]
        %2138 = vmatprep.subr.mxu0 0.0
        %2139 = vmatpush1.msra.mxu0 %v2122
        %2140 = vmatprep.subr.mxu0 0.0
        %2141 = vmatpush1.msra.mxu0 %v2123
        %2142 = vmatprep.subr.mxu0 0.0
        %2143 = vmatpush1.msra.mxu0 %v2124
        %2144 = vmatprep.subr.mxu0 0.0
        %2145 = vmatpush1.msra.mxu0 %v2125
        %2146 = vmatprep.subr.mxu0 0.0
        %2147 = vmatpush1.msra.mxu0 %v2126
        %2148 = vmatprep.subr.mxu0 0.0
        %2149 = vmatpush1.msra.mxu0 %v2127
        %2150 = vmatprep.subr.mxu0 0.0
        %2151 = vmatpush1.msra.mxu0 %v2128
        %2152 = vmatprep.subr.mxu0 0.0
        %2153 = vmatpush1.msra.mxu0 %v2129
        %2154 = vmatprep.subr.mxu0 0.0
        %2155 = vmatpush1.msra.mxu0 %v2130
        %2156 = vmatprep.subr.mxu0 0.0
        %2157 = vmatpush1.msra.mxu0 %v2131
        %2158 = vmatprep.subr.mxu0 0.0
        %2159 = vmatpush1.msra.mxu0 %v2132
        %2160 = vmatprep.subr.mxu0 0.0
        %2161 = vmatpush1.msra.mxu0 %v2133
        %2162 = vmatprep.subr.mxu0 0.0
        %2163 = vmatpush1.msra.mxu0 %v2134
        %2164 = vmatprep.subr.mxu0 0.0
        %2165 = vmatpush1.msra.mxu0 %v2135
        %2166 = vmatprep.subr.mxu0 0.0
        %2167 = vmatpush1.msra.mxu0 %v2136
        %2168 = vmatprep.subr.mxu0 0.0
        %2169 = vmatpush1.msra.mxu0 %v2137
        %2170 = vmatprep.subr.mxu0 0.0
        %2171 = vmatpush1.msra.mxu0 0.0
        %2172 = vmatprep.subr.mxu0 0.0
        %2173 = vmatpush1.msra.mxu0 0.0
        %2174 = vmatprep.subr.mxu0 0.0
        %2175 = vmatpush1.msra.mxu0 0.0
        %2176 = vmatprep.subr.mxu0 0.0
        %2177 = vmatpush1.msra.mxu0 0.0
        %2178 = vmatprep.subr.mxu0 0.0
        %2179 = vmatpush1.msra.mxu0 0.0
        %2180 = vmatprep.subr.mxu0 0.0
        %2181 = vmatpush1.msra.mxu0 0.0
        %2182 = vmatprep.subr.mxu0 0.0
        %2183 = vmatpush1.msra.mxu0 0.0
        %2184 = vmatprep.subr.mxu0 0.0
        %2185 = vmatpush1.msra.mxu0 0.0
        %2186 = vmatprep.subr.mxu0 0.0
        %2187 = vmatpush1.msra.mxu0 0.0
        %2188 = vmatprep.subr.mxu0 0.0
        %2189 = vmatpush1.msra.mxu0 0.0
        %2190 = vmatprep.subr.mxu0 0.0
        %2191 = vmatpush1.msra.mxu0 0.0
        %2192 = vmatprep.subr.mxu0 0.0
        %2193 = vmatpush1.msra.mxu0 0.0
        %2194 = vmatprep.subr.mxu0 0.0
        %2195 = vmatpush1.msra.mxu0 0.0
        %2196 = vmatprep.subr.mxu0 0.0
        %2197 = vmatpush1.msra.mxu0 0.0
        %2198 = vmatprep.subr.mxu0 0.0
        %2199 = vmatpush1.msra.mxu0 0.0
        %2200 = vmatprep.subr.mxu0 0.0
        %2201 = vmatpush1.msra.mxu0 0.0
        %2202 = vmatprep.mubr.f32.mxu0 0.0
        %2203 = vmatmul.mubr.f32.gmra.mrb[0].mxu0 %v2042
        %v2204 = vpop.f32.mrb[0].mxu0
        %v2205 = vadd.f32 0.0, %v2204
        %v2206 = vpop.f32.mrb[0].mxu0
        %2207 = vmatprep.mubr.f32.mxu0 0.0
        %2208 = vmatmul.mubr.f32.gmra.mrb[0].mxu0 %v2043
        %v2209 = vpop.f32.mrb[0].mxu0
        %v2210 = vadd.f32 0.0, %v2209
        %v2211 = vpop.f32.mrb[0].mxu0
        %2212 = vmatprep.mubr.f32.mxu0 0.0
        %2213 = vmatmul.mubr.f32.gmra.mrb[0].mxu0 %v2044
        %v2214 = vpop.f32.mrb[0].mxu0
        %v2215 = vadd.f32 0.0, %v2214
        %v2216 = vpop.f32.mrb[0].mxu0
        %2217 = vmatprep.mubr.f32.mxu0 0.0
        %2218 = vmatmul.mubr.f32.gmra.mrb[0].mxu0 %v2045
        %v2219 = vpop.f32.mrb[0].mxu0
        %v2220 = vadd.f32 0.0, %v2219
        %v2221 = vpop.f32.mrb[0].mxu0
        %2222 = vmatprep.mubr.f32.mxu0 0.0
        %2223 = vmatmul.mubr.f32.gmra.mrb[0].mxu0 %v2046
        %v2224 = vpop.f32.mrb[0].mxu0
        %v2225 = vadd.f32 0.0, %v2224
        %v2226 = vpop.f32.mrb[0].mxu0
        %2227 = vmatprep.mubr.f32.mxu0 0.0
        %2228 = vmatmul.mubr.f32.gmra.mrb[0].mxu0 %v2047
        %v2229 = vpop.f32.mrb[0].mxu0
        %v2230 = vadd.f32 0.0, %v2229
        %v2231 = vpop.f32.mrb[0].mxu0
        %2232 = vmatprep.mubr.f32.mxu0 0.0
        %2233 = vmatmul.mubr.f32.gmra.mrb[0].mxu0 %v2048
        %v2234 = vpop.f32.mrb[0].mxu0
        %v2235 = vadd.f32 0.0, %v2234
        %v2236 = vpop.f32.mrb[0].mxu0
        %2237 = vmatprep.mubr.f32.mxu0 0.0
        %2238 = vmatmul.mubr.f32.gmra.mrb[0].mxu0 %v2049
        %v2239 = vpop.f32.mrb[0].mxu0
        %v2240 = vadd.f32 0.0, %v2239
        %v2241 = vpop.f32.mrb[0].mxu0
        %2242 = vmatprep.mubr.f32.mxu0 0.0
        %2243 = vmatmul.mubr.f32.gmra.mrb[0].mxu0 %v2050
        %v2244 = vpop.f32.mrb[0].mxu0
        %v2245 = vadd.f32 0.0, %v2244
        %v2246 = vpop.f32.mrb[0].mxu0
        %2247 = vmatprep.mubr.f32.mxu0 0.0
        %2248 = vmatmul.mubr.f32.gmra.mrb[0].mxu0 %v2051
        %v2249 = vpop.f32.mrb[0].mxu0
        %v2250 = vadd.f32 0.0, %v2249
        %v2251 = vpop.f32.mrb[0].mxu0
        %2252 = vmatprep.mubr.f32.mxu0 0.0
        %2253 = vmatmul.mubr.f32.gmra.mrb[0].mxu0 %v2052
        %v2254 = vpop.f32.mrb[0].mxu0
        %v2255 = vadd.f32 0.0, %v2254
        %v2256 = vpop.f32.mrb[0].mxu0
        %2257 = vmatprep.mubr.f32.mxu0 0.0
        %2258 = vmatmul.mubr.f32.gmra.mrb[0].mxu0 %v2053
        %v2259 = vpop.f32.mrb[0].mxu0
        %v2260 = vadd.f32 0.0, %v2259
        %v2261 = vpop.f32.mrb[0].mxu0
        %2262 = vmatprep.mubr.f32.mxu0 0.0
        %2263 = vmatmul.mubr.f32.gmra.mrb[0].mxu0 %v2054
        %v2264 = vpop.f32.mrb[0].mxu0
        %v2265 = vadd.f32 0.0, %v2264
        %v2266 = vpop.f32.mrb[0].mxu0
        %2267 = vmatprep.mubr.f32.mxu0 0.0
        %2268 = vmatmul.mubr.f32.gmra.mrb[0].mxu0 %v2055
        %v2269 = vpop.f32.mrb[0].mxu0
        %v2270 = vadd.f32 0.0, %v2269
        %v2271 = vpop.f32.mrb[0].mxu0
        %2272 = vmatprep.mubr.f32.mxu0 0.0
        %2273 = vmatmul.mubr.f32.gmra.mrb[0].mxu0 %v2056
        %v2274 = vpop.f32.mrb[0].mxu0
        %v2275 = vadd.f32 0.0, %v2274
        %v2276 = vpop.f32.mrb[0].mxu0
        %2277 = vmatprep.mubr.f32.mxu0 0.0
        %2278 = vmatmul.mubr.f32.gmra.mrb[0].mxu0 %v2057
        %v2279 = vpop.f32.mrb[0].mxu0
        %v2280 = vadd.f32 0.0, %v2279
        %v2281 = vpop.f32.mrb[0].mxu0
        %2282 = vmatprep.mubr.f32.mxu0 0.0
        %2283 = vmatmul.mubr.f32.gmra.mrb[0].mxu0 %v2058
        %v2284 = vpop.f32.mrb[0].mxu0
        %v2285 = vadd.f32 0.0, %v2284
        %v2286 = vpop.f32.mrb[0].mxu0
        %2287 = vmatprep.mubr.f32.mxu0 0.0
        %2288 = vmatmul.mubr.f32.gmra.mrb[0].mxu0 %v2059
        %v2289 = vpop.f32.mrb[0].mxu0
        %v2290 = vadd.f32 0.0, %v2289
        %v2291 = vpop.f32.mrb[0].mxu0
        %2292 = vmatprep.mubr.f32.mxu0 0.0
        %2293 = vmatmul.mubr.f32.gmra.mrb[0].mxu0 %v2060
        %v2294 = vpop.f32.mrb[0].mxu0
        %v2295 = vadd.f32 0.0, %v2294
        %v2296 = vpop.f32.mrb[0].mxu0
        %2297 = vmatprep.mubr.f32.mxu0 0.0
        %2298 = vmatmul.mubr.f32.gmra.mrb[0].mxu0 %v2061
        %v2299 = vpop.f32.mrb[0].mxu0
        %v2300 = vadd.f32 0.0, %v2299
        %v2301 = vpop.f32.mrb[0].mxu0
        %2302 = vmatprep.mubr.f32.mxu0 0.0
        %2303 = vmatmul.mubr.f32.gmra.mrb[0].mxu0 %v2062
        %v2304 = vpop.f32.mrb[0].mxu0
        %v2305 = vadd.f32 0.0, %v2304
        %v2306 = vpop.f32.mrb[0].mxu0
        %2307 = vmatprep.mubr.f32.mxu0 0.0
        %2308 = vmatmul.mubr.f32.gmra.mrb[0].mxu0 %v2063
        %v2309 = vpop.f32.mrb[0].mxu0
        %v2310 = vadd.f32 0.0, %v2309
        %v2311 = vpop.f32.mrb[0].mxu0
        %2312 = vmatprep.mubr.f32.mxu0 0.0
        %2313 = vmatmul.mubr.f32.gmra.mrb[0].mxu0 %v2064
        %v2314 = vpop.f32.mrb[0].mxu0
        %v2315 = vadd.f32 0.0, %v2314
        %v2316 = vpop.f32.mrb[0].mxu0
        %2317 = vmatprep.mubr.f32.mxu0 0.0
        %2318 = vmatmul.mubr.f32.gmra.mrb[0].mxu0 %v2065
        %v2319 = vpop.f32.mrb[0].mxu0
        %v2320 = vadd.f32 0.0, %v2319
        %v2321 = vpop.f32.mrb[0].mxu0
        %2322 = vmatprep.mubr.f32.mxu0 0.0
        %2323 = vmatmul.mubr.f32.gmra.mrb[0].mxu0 %v2066
        %v2324 = vpop.f32.mrb[0].mxu0
        %v2325 = vadd.f32 0.0, %v2324
        %v2326 = vpop.f32.mrb[0].mxu0
        %2327 = vmatprep.mubr.f32.mxu0 0.0
        %2328 = vmatmul.mubr.f32.gmra.mrb[0].mxu0 %v2067
        %v2329 = vpop.f32.mrb[0].mxu0
        %v2330 = vadd.f32 0.0, %v2329
        %v2331 = vpop.f32.mrb[0].mxu0
        %2332 = vmatprep.mubr.f32.mxu0 0.0
        %2333 = vmatmul.mubr.f32.gmra.mrb[0].mxu0 %v2068
        %v2334 = vpop.f32.mrb[0].mxu0
        %v2335 = vadd.f32 0.0, %v2334
        %v2336 = vpop.f32.mrb[0].mxu0
        %2337 = vmatprep.mubr.f32.mxu0 0.0
        %2338 = vmatmul.mubr.f32.gmra.mrb[0].mxu0 %v2069
        %v2339 = vpop.f32.mrb[0].mxu0
        %v2340 = vadd.f32 0.0, %v2339
        %v2341 = vpop.f32.mrb[0].mxu0
        %2342 = vmatprep.mubr.f32.mxu0 0.0
        %2343 = vmatmul.mubr.f32.gmra.mrb[0].mxu0 %v2070
        %v2344 = vpop.f32.mrb[0].mxu0
        %v2345 = vadd.f32 0.0, %v2344
        %v2346 = vpop.f32.mrb[0].mxu0
        %2347 = vmatprep.mubr.f32.mxu0 0.0
        %2348 = vmatmul.mubr.f32.gmra.mrb[0].mxu0 %v2071
        %v2349 = vpop.f32.mrb[0].mxu0
        %v2350 = vadd.f32 0.0, %v2349
        %v2351 = vpop.f32.mrb[0].mxu0
        %2352 = vmatprep.mubr.f32.mxu0 0.0
        %2353 = vmatmul.mubr.f32.gmra.mrb[0].mxu0 %v2072
        %v2354 = vpop.f32.mrb[0].mxu0
        %v2355 = vadd.f32 0.0, %v2354
        %v2356 = vpop.f32.mrb[0].mxu0
        %2357 = vmatprep.mubr.f32.mxu0 0.0
        %2358 = vmatmul.mubr.f32.gmra.mrb[0].mxu0 %v2073
        %v2359 = vpop.f32.mrb[0].mxu0
        %v2360 = vadd.f32 0.0, %v2359
        %v2361 = vpop.f32.mrb[0].mxu0
        %2362 = vmatprep.mubr.f32.mxu0 0.0
        %2363 = vmatmul.mubr.f32.gmra.mrb[0].mxu0 %v2074
        %v2364 = vpop.f32.mrb[0].mxu0
        %v2365 = vadd.f32 0.0, %v2364
        %v2366 = vpop.f32.mrb[0].mxu0
        %2367 = vmatprep.mubr.f32.mxu0 0.0
        %2368 = vmatmul.mubr.f32.gmra.mrb[0].mxu0 %v2075
        %v2369 = vpop.f32.mrb[0].mxu0
        %v2370 = vadd.f32 0.0, %v2369
        %v2371 = vpop.f32.mrb[0].mxu0
        %2372 = vmatprep.mubr.f32.mxu0 0.0
        %2373 = vmatmul.mubr.f32.gmra.mrb[0].mxu0 %v2076
        %v2374 = vpop.f32.mrb[0].mxu0
        %v2375 = vadd.f32 0.0, %v2374
        %v2376 = vpop.f32.mrb[0].mxu0
        %2377 = vmatprep.mubr.f32.mxu0 0.0
        %2378 = vmatmul.mubr.f32.gmra.mrb[0].mxu0 %v2077
        %v2379 = vpop.f32.mrb[0].mxu0
        %v2380 = vadd.f32 0.0, %v2379
        %v2381 = vpop.f32.mrb[0].mxu0
        %2382 = vmatprep.mubr.f32.mxu0 0.0
        %2383 = vmatmul.mubr.f32.gmra.mrb[0].mxu0 %v2078
        %v2384 = vpop.f32.mrb[0].mxu0
        %v2385 = vadd.f32 0.0, %v2384
        %v2386 = vpop.f32.mrb[0].mxu0
        %2387 = vmatprep.mubr.f32.mxu0 0.0
        %2388 = vmatmul.mubr.f32.gmra.mrb[0].mxu0 %v2079
        %v2389 = vpop.f32.mrb[0].mxu0
        %v2390 = vadd.f32 0.0, %v2389
        %v2391 = vpop.f32.mrb[0].mxu0
        %2392 = vmatprep.mubr.f32.mxu0 0.0
        %2393 = vmatmul.mubr.f32.gmra.mrb[0].mxu0 %v2080
        %v2394 = vpop.f32.mrb[0].mxu0
        %v2395 = vadd.f32 0.0, %v2394
        %v2396 = vpop.f32.mrb[0].mxu0
        %2397 = vmatprep.mubr.f32.mxu0 0.0
        %2398 = vmatmul.mubr.f32.gmra.mrb[0].mxu0 %v2081
        %v2399 = vpop.f32.mrb[0].mxu0
        %v2400 = vadd.f32 0.0, %v2399
        %v2401 = vpop.f32.mrb[0].mxu0
        %2402 = vmatprep.mubr.f32.mxu0 0.0
        %2403 = vmatmul.mubr.f32.gmra.mrb[0].mxu0 %v2082
        %v2404 = vpop.f32.mrb[0].mxu0
        %v2405 = vadd.f32 0.0, %v2404
        %v2406 = vpop.f32.mrb[0].mxu0
        %2407 = vmatprep.mubr.f32.mxu0 0.0
        %2408 = vmatmul.mubr.f32.gmra.mrb[0].mxu0 %v2083
        %v2409 = vpop.f32.mrb[0].mxu0
        %v2410 = vadd.f32 0.0, %v2409
        %v2411 = vpop.f32.mrb[0].mxu0
        %2412 = vmatprep.mubr.f32.mxu0 0.0
        %2413 = vmatmul.mubr.f32.gmra.mrb[0].mxu0 %v2084
        %v2414 = vpop.f32.mrb[0].mxu0
        %v2415 = vadd.f32 0.0, %v2414
        %v2416 = vpop.f32.mrb[0].mxu0
        %2417 = vmatprep.mubr.f32.mxu0 0.0
        %2418 = vmatmul.mubr.f32.gmra.mrb[0].mxu0 %v2085
        %v2419 = vpop.f32.mrb[0].mxu0
        %v2420 = vadd.f32 0.0, %v2419
        %v2421 = vpop.f32.mrb[0].mxu0
        %2422 = vmatprep.mubr.f32.mxu0 0.0
        %2423 = vmatmul.mubr.f32.gmra.mrb[0].mxu0 %v2086
        %v2424 = vpop.f32.mrb[0].mxu0
        %v2425 = vadd.f32 0.0, %v2424
        %v2426 = vpop.f32.mrb[0].mxu0
        %2427 = vmatprep.mubr.f32.mxu0 0.0
        %2428 = vmatmul.mubr.f32.gmra.mrb[0].mxu0 %v2087
        %v2429 = vpop.f32.mrb[0].mxu0
        %v2430 = vadd.f32 0.0, %v2429
        %v2431 = vpop.f32.mrb[0].mxu0
        %2432 = vmatprep.mubr.f32.mxu0 0.0
        %2433 = vmatmul.mubr.f32.gmra.mrb[0].mxu0 %v2088
        %v2434 = vpop.f32.mrb[0].mxu0
        %v2435 = vadd.f32 0.0, %v2434
        %v2436 = vpop.f32.mrb[0].mxu0
        %2437 = vmatprep.mubr.f32.mxu0 0.0
        %2438 = vmatmul.mubr.f32.gmra.mrb[0].mxu0 %v2089
        %v2439 = vpop.f32.mrb[0].mxu0
        %v2440 = vadd.f32 0.0, %v2439
        %v2441 = vpop.f32.mrb[0].mxu0
        %2442 = vmatprep.mubr.f32.mxu0 0.0
        %2443 = vmatmul.mubr.f32.gmra.mrb[0].mxu0 %v2090
        %v2444 = vpop.f32.mrb[0].mxu0
        %v2445 = vadd.f32 0.0, %v2444
        %v2446 = vpop.f32.mrb[0].mxu0
        %2447 = vmatprep.mubr.f32.mxu0 0.0
        %2448 = vmatmul.mubr.f32.gmra.mrb[0].mxu0 %v2091
        %v2449 = vpop.f32.mrb[0].mxu0
        %v2450 = vadd.f32 0.0, %v2449
        %v2451 = vpop.f32.mrb[0].mxu0
        %2452 = vmatprep.mubr.f32.mxu0 0.0
        %2453 = vmatmul.mubr.f32.gmra.mrb[0].mxu0 %v2092
        %v2454 = vpop.f32.mrb[0].mxu0
        %v2455 = vadd.f32 0.0, %v2454
        %v2456 = vpop.f32.mrb[0].mxu0
        %2457 = vmatprep.mubr.f32.mxu0 0.0
        %2458 = vmatmul.mubr.f32.gmra.mrb[0].mxu0 %v2093
        %v2459 = vpop.f32.mrb[0].mxu0
        %v2460 = vadd.f32 0.0, %v2459
        %v2461 = vpop.f32.mrb[0].mxu0
        %2462 = vmatprep.mubr.f32.mxu0 0.0
        %2463 = vmatmul.mubr.f32.gmra.mrb[0].mxu0 %v2094
        %v2464 = vpop.f32.mrb[0].mxu0
        %v2465 = vadd.f32 0.0, %v2464
        %v2466 = vpop.f32.mrb[0].mxu0
        %2467 = vmatprep.mubr.f32.mxu0 0.0
        %2468 = vmatmul.mubr.f32.gmra.mrb[0].mxu0 %v2095
        %v2469 = vpop.f32.mrb[0].mxu0
        %v2470 = vadd.f32 0.0, %v2469
        %v2471 = vpop.f32.mrb[0].mxu0
        %2472 = vmatprep.mubr.f32.mxu0 0.0
        %2473 = vmatmul.mubr.f32.gmra.mrb[0].mxu0 %v2096
        %v2474 = vpop.f32.mrb[0].mxu0
        %v2475 = vadd.f32 0.0, %v2474
        %v2476 = vpop.f32.mrb[0].mxu0
        %2477 = vmatprep.mubr.f32.mxu0 0.0
        %2478 = vmatmul.mubr.f32.gmra.mrb[0].mxu0 %v2097
        %v2479 = vpop.f32.mrb[0].mxu0
        %v2480 = vadd.f32 0.0, %v2479
        %v2481 = vpop.f32.mrb[0].mxu0
        %2482 = vmatprep.mubr.f32.mxu0 0.0
        %2483 = vmatmul.mubr.f32.gmra.mrb[0].mxu0 %v2098
        %v2484 = vpop.f32.mrb[0].mxu0
        %v2485 = vadd.f32 0.0, %v2484
        %v2486 = vpop.f32.mrb[0].mxu0
        %2487 = vmatprep.mubr.f32.mxu0 0.0
        %2488 = vmatmul.mubr.f32.gmra.mrb[0].mxu0 %v2099
        %v2489 = vpop.f32.mrb[0].mxu0
        %v2490 = vadd.f32 0.0, %v2489
        %v2491 = vpop.f32.mrb[0].mxu0
        %2492 = vmatprep.mubr.f32.mxu0 0.0
        %2493 = vmatmul.mubr.f32.gmra.mrb[0].mxu0 %v2100
        %v2494 = vpop.f32.mrb[0].mxu0
        %v2495 = vadd.f32 0.0, %v2494
        %v2496 = vpop.f32.mrb[0].mxu0
        %2497 = vmatprep.mubr.f32.mxu0 0.0
        %2498 = vmatmul.mubr.f32.gmra.mrb[0].mxu0 %v2101
        %v2499 = vpop.f32.mrb[0].mxu0
        %v2500 = vadd.f32 0.0, %v2499
        %v2501 = vpop.f32.mrb[0].mxu0
        %2502 = vmatprep.mubr.f32.mxu0 0.0
        %2503 = vmatmul.mubr.f32.gmra.mrb[0].mxu0 %v2102
        %v2504 = vpop.f32.mrb[0].mxu0
        %v2505 = vadd.f32 0.0, %v2504
        %v2506 = vpop.f32.mrb[0].mxu0
        %2507 = vmatprep.mubr.f32.mxu0 0.0
        %2508 = vmatmul.mubr.f32.gmra.mrb[0].mxu0 %v2103
        %v2509 = vpop.f32.mrb[0].mxu0
        %v2510 = vadd.f32 0.0, %v2509
        %v2511 = vpop.f32.mrb[0].mxu0
        %2512 = vmatprep.mubr.f32.mxu0 0.0
        %2513 = vmatmul.mubr.f32.gmra.mrb[0].mxu0 %v2104
        %v2514 = vpop.f32.mrb[0].mxu0
        %v2515 = vadd.f32 0.0, %v2514
        %v2516 = vpop.f32.mrb[0].mxu0
        %2517 = vmatprep.mubr.f32.mxu0 0.0
        %2518 = vmatmul.mubr.f32.gmra.mrb[0].mxu0 %v2105
        %v2519 = vpop.f32.mrb[0].mxu0
        %v2520 = vadd.f32 0.0, %v2519
        %v2521 = vpop.f32.mrb[0].mxu0
        %2522 = vmatprep.mubr.f32.mxu0 0.0
        %2523 = vmatmul.mubr.f32.gmra.mrb[0].mxu0 %v2106
        %v2524 = vpop.f32.mrb[0].mxu0
        %v2525 = vadd.f32 0.0, %v2524
        %v2526 = vpop.f32.mrb[0].mxu0
        %2527 = vmatprep.mubr.f32.mxu0 0.0
        %2528 = vmatmul.mubr.f32.gmra.mrb[0].mxu0 %v2107
        %v2529 = vpop.f32.mrb[0].mxu0
        %v2530 = vadd.f32 0.0, %v2529
        %v2531 = vpop.f32.mrb[0].mxu0
        %2532 = vmatprep.mubr.f32.mxu0 0.0
        %2533 = vmatmul.mubr.f32.gmra.mrb[0].mxu0 %v2108
        %v2534 = vpop.f32.mrb[0].mxu0
        %v2535 = vadd.f32 0.0, %v2534
        %v2536 = vpop.f32.mrb[0].mxu0
        %2537 = vmatprep.mubr.f32.mxu0 0.0
        %2538 = vmatmul.mubr.f32.gmra.mrb[0].mxu0 %v2109
        %v2539 = vpop.f32.mrb[0].mxu0
        %v2540 = vadd.f32 0.0, %v2539
        %v2541 = vpop.f32.mrb[0].mxu0
        %2542 = vmatprep.mubr.f32.mxu0 0.0
        %2543 = vmatmul.mubr.f32.gmra.mrb[0].mxu0 %v2110
        %v2544 = vpop.f32.mrb[0].mxu0
        %v2545 = vadd.f32 0.0, %v2544
        %v2546 = vpop.f32.mrb[0].mxu0
        %2547 = vmatprep.mubr.f32.mxu0 0.0
        %2548 = vmatmul.mubr.f32.gmra.mrb[0].mxu0 %v2111
        %v2549 = vpop.f32.mrb[0].mxu0
        %v2550 = vadd.f32 0.0, %v2549
        %v2551 = vpop.f32.mrb[0].mxu0
        %2552 = vmatprep.mubr.f32.mxu0 0.0
        %2553 = vmatmul.mubr.f32.gmra.mrb[0].mxu0 %v2112
        %v2554 = vpop.f32.mrb[0].mxu0
        %v2555 = vadd.f32 0.0, %v2554
        %v2556 = vpop.f32.mrb[0].mxu0
        %2557 = vmatprep.mubr.f32.mxu0 0.0
        %2558 = vmatmul.mubr.f32.gmra.mrb[0].mxu0 %v2113
        %v2559 = vpop.f32.mrb[0].mxu0
        %v2560 = vadd.f32 0.0, %v2559
        %v2561 = vpop.f32.mrb[0].mxu0
        %2562 = vmatprep.mubr.f32.mxu0 0.0
        %2563 = vmatmul.mubr.f32.gmra.mrb[0].mxu0 %v2114
        %v2564 = vpop.f32.mrb[0].mxu0
        %v2565 = vadd.f32 0.0, %v2564
        %v2566 = vpop.f32.mrb[0].mxu0
        %2567 = vmatprep.mubr.f32.mxu0 0.0
        %2568 = vmatmul.mubr.f32.gmra.mrb[0].mxu0 %v2115
        %v2569 = vpop.f32.mrb[0].mxu0
        %v2570 = vadd.f32 0.0, %v2569
        %v2571 = vpop.f32.mrb[0].mxu0
        %2572 = vmatprep.mubr.f32.mxu0 0.0
        %2573 = vmatmul.mubr.f32.gmra.mrb[0].mxu0 %v2116
        %v2574 = vpop.f32.mrb[0].mxu0
        %v2575 = vadd.f32 0.0, %v2574
        %v2576 = vpop.f32.mrb[0].mxu0
        %2577 = vmatprep.mubr.f32.mxu0 0.0
        %2578 = vmatmul.mubr.f32.gmra.mrb[0].mxu0 %v2117
        %v2579 = vpop.f32.mrb[0].mxu0
        %v2580 = vadd.f32 0.0, %v2579
        %v2581 = vpop.f32.mrb[0].mxu0
        %2582 = vmatprep.mubr.f32.mxu0 0.0
        %2583 = vmatmul.mubr.f32.gmra.mrb[0].mxu0 %v2118
        %v2584 = vpop.f32.mrb[0].mxu0
        %v2585 = vadd.f32 0.0, %v2584
        %v2586 = vpop.f32.mrb[0].mxu0
        %2587 = vmatprep.mubr.f32.mxu0 0.0
        %2588 = vmatmul.mubr.f32.gmra.mrb[0].mxu0 %v2119
        %v2589 = vpop.f32.mrb[0].mxu0
        %v2590 = vadd.f32 0.0, %v2589
        %v2591 = vpop.f32.mrb[0].mxu0
        %2592 = vmatprep.mubr.f32.mxu0 0.0
        %2593 = vmatmul.mubr.f32.gmra.mrb[0].mxu0 %v2120
        %v2594 = vpop.f32.mrb[0].mxu0
        %v2595 = vadd.f32 0.0, %v2594
        %v2596 = vpop.f32.mrb[0].mxu0
        %2597 = vmatprep.mubr.f32.mxu0 0.0
        %2598 = vmatmul.mubr.f32.gmra.mrb[0].mxu0 %v2121
        %v2599 = vpop.f32.mrb[0].mxu0
        %v2600 = vadd.f32 0.0, %v2599
        %v2601 = vpop.f32.mrb[0].mxu0
        %2602 = vdwg.mxu0
        %v2603 = vmax.f32 %v2205, 0.0
        %v2604 = vmax.f32 %v2210, 0.0
        %v2605 = vmax.f32 %v2215, 0.0
        %v2606 = vmax.f32 %v2220, 0.0
        %v2607 = vmax.f32 %v2225, 0.0
        %v2608 = vmax.f32 %v2230, 0.0
        %v2609 = vmax.f32 %v2235, 0.0
        %v2610 = vmax.f32 %v2240, 0.0
        %v2611 = vmax.f32 %v2245, 0.0
        %v2612 = vmax.f32 %v2250, 0.0
        %v2613 = vmax.f32 %v2255, 0.0
        %v2614 = vmax.f32 %v2260, 0.0
        %v2615 = vmax.f32 %v2265, 0.0
        %v2616 = vmax.f32 %v2270, 0.0
        %v2617 = vmax.f32 %v2275, 0.0
        %v2618 = vmax.f32 %v2280, 0.0
        %v2619 = vmax.f32 %v2285, 0.0
        %v2620 = vmax.f32 %v2290, 0.0
        %v2621 = vmax.f32 %v2295, 0.0
        %v2622 = vmax.f32 %v2300, 0.0
        %v2623 = vmax.f32 %v2305, 0.0
        %v2624 = vmax.f32 %v2310, 0.0
        %v2625 = vmax.f32 %v2315, 0.0
        %v2626 = vmax.f32 %v2320, 0.0
        %v2627 = vmax.f32 %v2325, 0.0
        %v2628 = vmax.f32 %v2330, 0.0
        %v2629 = vmax.f32 %v2335, 0.0
        %v2630 = vmax.f32 %v2340, 0.0
        %v2631 = vmax.f32 %v2345, 0.0
        %v2632 = vmax.f32 %v2350, 0.0
        %v2633 = vmax.f32 %v2355, 0.0
        %v2634 = vmax.f32 %v2360, 0.0
        %v2635 = vmax.f32 %v2365, 0.0
        %v2636 = vmax.f32 %v2370, 0.0
        %v2637 = vmax.f32 %v2375, 0.0
        %v2638 = vmax.f32 %v2380, 0.0
        %v2639 = vmax.f32 %v2385, 0.0
        %v2640 = vmax.f32 %v2390, 0.0
        %v2641 = vmax.f32 %v2395, 0.0
        %v2642 = vmax.f32 %v2400, 0.0
        %v2643 = vmax.f32 %v2405, 0.0
        %v2644 = vmax.f32 %v2410, 0.0
        %v2645 = vmax.f32 %v2415, 0.0
        %v2646 = vmax.f32 %v2420, 0.0
        %v2647 = vmax.f32 %v2425, 0.0
        %v2648 = vmax.f32 %v2430, 0.0
        %v2649 = vmax.f32 %v2435, 0.0
        %v2650 = vmax.f32 %v2440, 0.0
        %v2651 = vmax.f32 %v2445, 0.0
        %v2652 = vmax.f32 %v2450, 0.0
        %v2653 = vmax.f32 %v2455, 0.0
        %v2654 = vmax.f32 %v2460, 0.0
        %v2655 = vmax.f32 %v2465, 0.0
        %v2656 = vmax.f32 %v2470, 0.0
        %v2657 = vmax.f32 %v2475, 0.0
        %v2658 = vmax.f32 %v2480, 0.0
        %v2659 = vmax.f32 %v2485, 0.0
        %v2660 = vmax.f32 %v2490, 0.0
        %v2661 = vmax.f32 %v2495, 0.0
        %v2662 = vmax.f32 %v2500, 0.0
        %v2663 = vmax.f32 %v2505, 0.0
        %v2664 = vmax.f32 %v2510, 0.0
        %v2665 = vmax.f32 %v2515, 0.0
        %v2666 = vmax.f32 %v2520, 0.0
        %v2667 = vmax.f32 %v2525, 0.0
        %v2668 = vmax.f32 %v2530, 0.0
        %v2669 = vmax.f32 %v2535, 0.0
        %v2670 = vmax.f32 %v2540, 0.0
        %v2671 = vmax.f32 %v2545, 0.0
        %v2672 = vmax.f32 %v2550, 0.0
        %v2673 = vmax.f32 %v2555, 0.0
        %v2674 = vmax.f32 %v2560, 0.0
        %v2675 = vmax.f32 %v2565, 0.0
        %v2676 = vmax.f32 %v2570, 0.0
        %v2677 = vmax.f32 %v2575, 0.0
        %v2678 = vmax.f32 %v2580, 0.0
        %v2679 = vmax.f32 %v2585, 0.0
        %v2680 = vmax.f32 %v2590, 0.0
        %v2681 = vmax.f32 %v2595, 0.0
        %v2682 = vmax.f32 %v2600, 0.0
        %v2683 = vmin.f32 %v2603, 1.0
        %v2684 = vmin.f32 %v2604, 1.0
        %v2685 = vmin.f32 %v2605, 1.0
        %v2686 = vmin.f32 %v2606, 1.0
        %v2687 = vmin.f32 %v2607, 1.0
        %v2688 = vmin.f32 %v2608, 1.0
        %v2689 = vmin.f32 %v2609, 1.0
        %v2690 = vmin.f32 %v2610, 1.0
        %v2691 = vmin.f32 %v2611, 1.0
        %v2692 = vmin.f32 %v2612, 1.0
        %v2693 = vmin.f32 %v2613, 1.0
        %v2694 = vmin.f32 %v2614, 1.0
        %v2695 = vmin.f32 %v2615, 1.0
        %v2696 = vmin.f32 %v2616, 1.0
        %v2697 = vmin.f32 %v2617, 1.0
        %v2698 = vmin.f32 %v2618, 1.0
        %v2699 = vmin.f32 %v2619, 1.0
        %v2700 = vmin.f32 %v2620, 1.0
        %v2701 = vmin.f32 %v2621, 1.0
        %v2702 = vmin.f32 %v2622, 1.0
        %v2703 = vmin.f32 %v2623, 1.0
        %v2704 = vmin.f32 %v2624, 1.0
        %v2705 = vmin.f32 %v2625, 1.0
        %v2706 = vmin.f32 %v2626, 1.0
        %v2707 = vmin.f32 %v2627, 1.0
        %v2708 = vmin.f32 %v2628, 1.0
        %v2709 = vmin.f32 %v2629, 1.0
        %v2710 = vmin.f32 %v2630, 1.0
        %v2711 = vmin.f32 %v2631, 1.0
        %v2712 = vmin.f32 %v2632, 1.0
        %v2713 = vmin.f32 %v2633, 1.0
        %v2714 = vmin.f32 %v2634, 1.0
        %v2715 = vmin.f32 %v2635, 1.0
        %v2716 = vmin.f32 %v2636, 1.0
        %v2717 = vmin.f32 %v2637, 1.0
        %v2718 = vmin.f32 %v2638, 1.0
        %v2719 = vmin.f32 %v2639, 1.0
        %v2720 = vmin.f32 %v2640, 1.0
        %v2721 = vmin.f32 %v2641, 1.0
        %v2722 = vmin.f32 %v2642, 1.0
        %v2723 = vmin.f32 %v2643, 1.0
        %v2724 = vmin.f32 %v2644, 1.0
        %v2725 = vmin.f32 %v2645, 1.0
        %v2726 = vmin.f32 %v2646, 1.0
        %v2727 = vmin.f32 %v2647, 1.0
        %v2728 = vmin.f32 %v2648, 1.0
        %v2729 = vmin.f32 %v2649, 1.0
        %v2730 = vmin.f32 %v2650, 1.0
        %v2731 = vmin.f32 %v2651, 1.0
        %v2732 = vmin.f32 %v2652, 1.0
        %v2733 = vmin.f32 %v2653, 1.0
        %v2734 = vmin.f32 %v2654, 1.0
        %v2735 = vmin.f32 %v2655, 1.0
        %v2736 = vmin.f32 %v2656, 1.0
        %v2737 = vmin.f32 %v2657, 1.0
        %v2738 = vmin.f32 %v2658, 1.0
        %v2739 = vmin.f32 %v2659, 1.0
        %v2740 = vmin.f32 %v2660, 1.0
        %v2741 = vmin.f32 %v2661, 1.0
        %v2742 = vmin.f32 %v2662, 1.0
        %v2743 = vmin.f32 %v2663, 1.0
        %v2744 = vmin.f32 %v2664, 1.0
        %v2745 = vmin.f32 %v2665, 1.0
        %v2746 = vmin.f32 %v2666, 1.0
        %v2747 = vmin.f32 %v2667, 1.0
        %v2748 = vmin.f32 %v2668, 1.0
        %v2749 = vmin.f32 %v2669, 1.0
        %v2750 = vmin.f32 %v2670, 1.0
        %v2751 = vmin.f32 %v2671, 1.0
        %v2752 = vmin.f32 %v2672, 1.0
        %v2753 = vmin.f32 %v2673, 1.0
        %v2754 = vmin.f32 %v2674, 1.0
        %v2755 = vmin.f32 %v2675, 1.0
        %v2756 = vmin.f32 %v2676, 1.0
        %v2757 = vmin.f32 %v2677, 1.0
        %v2758 = vmin.f32 %v2678, 1.0
        %v2759 = vmin.f32 %v2679, 1.0
        %v2760 = vmin.f32 %v2680, 1.0
        %v2761 = vmin.f32 %v2681, 1.0
        %v2762 = vmin.f32 %v2682, 1.0
        %v2763 = vpack.c.bf16 %v2684, %v2683
        %v2764 = vpack.c.bf16 %v2686, %v2685
        %v2765 = vpack.c.bf16 %v2688, %v2687
        %v2766 = vpack.c.bf16 %v2690, %v2689
        %v2767 = vpack.c.bf16 %v2692, %v2691
        %v2768 = vpack.c.bf16 %v2694, %v2693
        %v2769 = vpack.c.bf16 %v2696, %v2695
        %v2770 = vpack.c.bf16 %v2698, %v2697
        %v2771 = vpack.c.bf16 %v2700, %v2699
        %v2772 = vpack.c.bf16 %v2702, %v2701
        %v2773 = vpack.c.bf16 %v2704, %v2703
        %v2774 = vpack.c.bf16 %v2706, %v2705
        %v2775 = vpack.c.bf16 %v2708, %v2707
        %v2776 = vpack.c.bf16 %v2710, %v2709
        %v2777 = vpack.c.bf16 %v2712, %v2711
        %v2778 = vpack.c.bf16 %v2714, %v2713
        %v2779 = vpack.c.bf16 %v2716, %v2715
        %v2780 = vpack.c.bf16 %v2718, %v2717
        %v2781 = vpack.c.bf16 %v2720, %v2719
        %v2782 = vpack.c.bf16 %v2722, %v2721
        %v2783 = vpack.c.bf16 %v2724, %v2723
        %v2784 = vpack.c.bf16 %v2726, %v2725
        %v2785 = vpack.c.bf16 %v2728, %v2727
        %v2786 = vpack.c.bf16 %v2730, %v2729
        %v2787 = vpack.c.bf16 %v2732, %v2731
        %v2788 = vpack.c.bf16 %v2734, %v2733
        %v2789 = vpack.c.bf16 %v2736, %v2735
        %v2790 = vpack.c.bf16 %v2738, %v2737
        %v2791 = vpack.c.bf16 %v2740, %v2739
        %v2792 = vpack.c.bf16 %v2742, %v2741
        %v2793 = vpack.c.bf16 %v2744, %v2743
        %v2794 = vpack.c.bf16 %v2746, %v2745
        %v2795 = vpack.c.bf16 %v2748, %v2747
        %v2796 = vpack.c.bf16 %v2750, %v2749
        %v2797 = vpack.c.bf16 %v2752, %v2751
        %v2798 = vpack.c.bf16 %v2754, %v2753
        %v2799 = vpack.c.bf16 %v2756, %v2755
        %v2800 = vpack.c.bf16 %v2758, %v2757
        %v2801 = vpack.c.bf16 %v2760, %v2759
        %v2802 = vpack.c.bf16 %v2762, %v2761
        %2803 = vst [vmem:[%s464] sm:$0xff] %v2763
        %2804 = vst [vmem:[%s464 + $0x8] sm:$0xff] %v2764
        %2805 = vst [vmem:[%s464 + $0x10] sm:$0xff] %v2765
        %2806 = vst [vmem:[%s464 + $0x18] sm:$0xff] %v2766
        %2807 = vst [vmem:[%s464 + $0x20] sm:$0xff] %v2767
        %2808 = vst [vmem:[%s464 + $0x28] sm:$0xff] %v2768
        %2809 = vst [vmem:[%s464 + $0x30] sm:$0xff] %v2769
        %2810 = vst [vmem:[%s464 + $0x38] sm:$0xff] %v2770
        %2811 = vst [vmem:[%s464 + $0x40] sm:$0xff] %v2771
        %2812 = vst [vmem:[%s464 + $0x48] sm:$0xff] %v2772
        %2813 = vst [vmem:[%s464 + $0x50] sm:$0xff] %v2773
        %2814 = vst [vmem:[%s464 + $0x58] sm:$0xff] %v2774
        %2815 = vst [vmem:[%s464 + $0x60] sm:$0xff] %v2775
        %2816 = vst [vmem:[%s464 + $0x68] sm:$0xff] %v2776
        %2817 = vst [vmem:[%s464 + $0x70] sm:$0xff] %v2777
        %2818 = vst [vmem:[%s464 + $0x78] sm:$0xff] %v2778
        %2819 = vst [vmem:[%s464 + $0x80] sm:$0xff] %v2779
        %2820 = vst [vmem:[%s464 + $0x88] sm:$0xff] %v2780
        %2821 = vst [vmem:[%s464 + $0x90] sm:$0xff] %v2781
        %2822 = vst [vmem:[%s464 + $0x98] sm:$0xff] %v2782
        %2823 = vst [vmem:[%s464 + $0xa0] sm:$0xff] %v2783
        %2824 = vst [vmem:[%s464 + $0xa8] sm:$0xff] %v2784
        %2825 = vst [vmem:[%s464 + $0xb0] sm:$0xff] %v2785
        %2826 = vst [vmem:[%s464 + $0xb8] sm:$0xff] %v2786
        %2827 = vst [vmem:[%s464 + $0xc0] sm:$0xff] %v2787
        %2828 = vst [vmem:[%s464 + $0xc8] sm:$0xff] %v2788
        %2829 = vst [vmem:[%s464 + $0xd0] sm:$0xff] %v2789
        %2830 = vst [vmem:[%s464 + $0xd8] sm:$0xff] %v2790
        %2831 = vst [vmem:[%s464 + $0xe0] sm:$0xff] %v2791
        %2832 = vst [vmem:[%s464 + $0xe8] sm:$0xff] %v2792
        %2833 = vst [vmem:[%s464 + $0xf0] sm:$0xff] %v2793
        %2834 = vst [vmem:[%s464 + $0xf8] sm:$0xff] %v2794
        %2835 = vst [vmem:[%s464 + $0x100] sm:$0xff] %v2795
        %2836 = vst [vmem:[%s464 + $0x108] sm:$0xff] %v2796
        %2837 = vst [vmem:[%s464 + $0x110] sm:$0xff] %v2797
        %2838 = vst [vmem:[%s464 + $0x118] sm:$0xff] %v2798
        %2839 = vst [vmem:[%s464 + $0x120] sm:$0xff] %v2799
        %2840 = vst [vmem:[%s464 + $0x128] sm:$0xff] %v2800
        %2841 = vst [vmem:[%s464 + $0x130] sm:$0xff] %v2801
        %2842 = vst [vmem:[%s464 + $0x138] sm:$0xff] %v2802
        %v2843 = vsub.f32 1.0, %v2205
        %v2844 = vsub.f32 1.0, %v2210
        %v2845 = vsub.f32 1.0, %v2215
        %v2846 = vsub.f32 1.0, %v2220
        %v2847 = vsub.f32 1.0, %v2225
        %v2848 = vsub.f32 1.0, %v2230
        %v2849 = vsub.f32 1.0, %v2235
        %v2850 = vsub.f32 1.0, %v2240
        %v2851 = vsub.f32 1.0, %v2245
        %v2852 = vsub.f32 1.0, %v2250
        %v2853 = vsub.f32 1.0, %v2255
        %v2854 = vsub.f32 1.0, %v2260
        %v2855 = vsub.f32 1.0, %v2265
        %v2856 = vsub.f32 1.0, %v2270
        %v2857 = vsub.f32 1.0, %v2275
        %v2858 = vsub.f32 1.0, %v2280
        %v2859 = vsub.f32 1.0, %v2285
        %v2860 = vsub.f32 1.0, %v2290
        %v2861 = vsub.f32 1.0, %v2295
        %v2862 = vsub.f32 1.0, %v2300
        %v2863 = vsub.f32 1.0, %v2305
        %v2864 = vsub.f32 1.0, %v2310
        %v2865 = vsub.f32 1.0, %v2315
        %v2866 = vsub.f32 1.0, %v2320
        %v2867 = vsub.f32 1.0, %v2325
        %v2868 = vsub.f32 1.0, %v2330
        %v2869 = vsub.f32 1.0, %v2335
        %v2870 = vsub.f32 1.0, %v2340
        %v2871 = vsub.f32 1.0, %v2345
        %v2872 = vsub.f32 1.0, %v2350
        %v2873 = vsub.f32 1.0, %v2355
        %v2874 = vsub.f32 1.0, %v2360
        %v2875 = vsub.f32 1.0, %v2365
        %v2876 = vsub.f32 1.0, %v2370
        %v2877 = vsub.f32 1.0, %v2375
        %v2878 = vsub.f32 1.0, %v2380
        %v2879 = vsub.f32 1.0, %v2385
        %v2880 = vsub.f32 1.0, %v2390
        %v2881 = vsub.f32 1.0, %v2395
        %v2882 = vsub.f32 1.0, %v2400
        %v2883 = vsub.f32 1.0, %v2405
        %v2884 = vsub.f32 1.0, %v2410
        %v2885 = vsub.f32 1.0, %v2415
        %v2886 = vsub.f32 1.0, %v2420
        %v2887 = vsub.f32 1.0, %v2425
        %v2888 = vsub.f32 1.0, %v2430
        %v2889 = vsub.f32 1.0, %v2435
        %v2890 = vsub.f32 1.0, %v2440
        %v2891 = vsub.f32 1.0, %v2445
        %v2892 = vsub.f32 1.0, %v2450
        %v2893 = vsub.f32 1.0, %v2455
        %v2894 = vsub.f32 1.0, %v2460
        %v2895 = vsub.f32 1.0, %v2465
        %v2896 = vsub.f32 1.0, %v2470
        %v2897 = vsub.f32 1.0, %v2475
        %v2898 = vsub.f32 1.0, %v2480
        %v2899 = vsub.f32 1.0, %v2485
        %v2900 = vsub.f32 1.0, %v2490
        %v2901 = vsub.f32 1.0, %v2495
        %v2902 = vsub.f32 1.0, %v2500
        %v2903 = vsub.f32 1.0, %v2505
        %v2904 = vsub.f32 1.0, %v2510
        %v2905 = vsub.f32 1.0, %v2515
        %v2906 = vsub.f32 1.0, %v2520
        %v2907 = vsub.f32 1.0, %v2525
        %v2908 = vsub.f32 1.0, %v2530
        %v2909 = vsub.f32 1.0, %v2535
        %v2910 = vsub.f32 1.0, %v2540
        %v2911 = vsub.f32 1.0, %v2545
        %v2912 = vsub.f32 1.0, %v2550
        %v2913 = vsub.f32 1.0, %v2555
        %v2914 = vsub.f32 1.0, %v2560
        %v2915 = vsub.f32 1.0, %v2565
        %v2916 = vsub.f32 1.0, %v2570
        %v2917 = vsub.f32 1.0, %v2575
        %v2918 = vsub.f32 1.0, %v2580
        %v2919 = vsub.f32 1.0, %v2585
        %v2920 = vsub.f32 1.0, %v2590
        %v2921 = vsub.f32 1.0, %v2595
        %v2922 = vsub.f32 1.0, %v2600
        %v2923 = vadd.f32 %v2843, %v2042
        %v2924 = vadd.f32 %v2844, %v2043
        %v2925 = vadd.f32 %v2845, %v2044
        %v2926 = vadd.f32 %v2846, %v2045
        %v2927 = vadd.f32 %v2847, %v2046
        %v2928 = vadd.f32 %v2848, %v2047
        %v2929 = vadd.f32 %v2849, %v2048
        %v2930 = vadd.f32 %v2850, %v2049
        %v2931 = vadd.f32 %v2851, %v2050
        %v2932 = vadd.f32 %v2852, %v2051
        %v2933 = vadd.f32 %v2853, %v2052
        %v2934 = vadd.f32 %v2854, %v2053
        %v2935 = vadd.f32 %v2855, %v2054
        %v2936 = vadd.f32 %v2856, %v2055
        %v2937 = vadd.f32 %v2857, %v2056
        %v2938 = vadd.f32 %v2858, %v2057
        %v2939 = vadd.f32 %v2859, %v2058
        %v2940 = vadd.f32 %v2860, %v2059
        %v2941 = vadd.f32 %v2861, %v2060
        %v2942 = vadd.f32 %v2862, %v2061
        %v2943 = vadd.f32 %v2863, %v2062
        %v2944 = vadd.f32 %v2864, %v2063
        %v2945 = vadd.f32 %v2865, %v2064
        %v2946 = vadd.f32 %v2866, %v2065
        %v2947 = vadd.f32 %v2867, %v2066
        %v2948 = vadd.f32 %v2868, %v2067
        %v2949 = vadd.f32 %v2869, %v2068
        %v2950 = vadd.f32 %v2870, %v2069
        %v2951 = vadd.f32 %v2871, %v2070
        %v2952 = vadd.f32 %v2872, %v2071
        %v2953 = vadd.f32 %v2873, %v2072
        %v2954 = vadd.f32 %v2874, %v2073
        %v2955 = vadd.f32 %v2875, %v2074
        %v2956 = vadd.f32 %v2876, %v2075
        %v2957 = vadd.f32 %v2877, %v2076
        %v2958 = vadd.f32 %v2878, %v2077
        %v2959 = vadd.f32 %v2879, %v2078
        %v2960 = vadd.f32 %v2880, %v2079
        %v2961 = vadd.f32 %v2881, %v2080
        %v2962 = vadd.f32 %v2882, %v2081
        %v2963 = vadd.f32 %v2883, %v2082
        %v2964 = vadd.f32 %v2884, %v2083
        %v2965 = vadd.f32 %v2885, %v2084
        %v2966 = vadd.f32 %v2886, %v2085
        %v2967 = vadd.f32 %v2887, %v2086
        %v2968 = vadd.f32 %v2888, %v2087
        %v2969 = vadd.f32 %v2889, %v2088
        %v2970 = vadd.f32 %v2890, %v2089
        %v2971 = vadd.f32 %v2891, %v2090
        %v2972 = vadd.f32 %v2892, %v2091
        %v2973 = vadd.f32 %v2893, %v2092
        %v2974 = vadd.f32 %v2894, %v2093
        %v2975 = vadd.f32 %v2895, %v2094
        %v2976 = vadd.f32 %v2896, %v2095
        %v2977 = vadd.f32 %v2897, %v2096
        %v2978 = vadd.f32 %v2898, %v2097
        %v2979 = vadd.f32 %v2899, %v2098
        %v2980 = vadd.f32 %v2900, %v2099
        %v2981 = vadd.f32 %v2901, %v2100
        %v2982 = vadd.f32 %v2902, %v2101
        %v2983 = vadd.f32 %v2903, %v2102
        %v2984 = vadd.f32 %v2904, %v2103
        %v2985 = vadd.f32 %v2905, %v2104
        %v2986 = vadd.f32 %v2906, %v2105
        %v2987 = vadd.f32 %v2907, %v2106
        %v2988 = vadd.f32 %v2908, %v2107
        %v2989 = vadd.f32 %v2909, %v2108
        %v2990 = vadd.f32 %v2910, %v2109
        %v2991 = vadd.f32 %v2911, %v2110
        %v2992 = vadd.f32 %v2912, %v2111
        %v2993 = vadd.f32 %v2913, %v2112
        %v2994 = vadd.f32 %v2914, %v2113
        %v2995 = vadd.f32 %v2915, %v2114
        %v2996 = vadd.f32 %v2916, %v2115
        %v2997 = vadd.f32 %v2917, %v2116
        %v2998 = vadd.f32 %v2918, %v2117
        %v2999 = vadd.f32 %v2919, %v2118
        %v3000 = vadd.f32 %v2920, %v2119
        %v3001 = vadd.f32 %v2921, %v2120
        %v3002 = vadd.f32 %v2922, %v2121
        %v3003 = vmax.f32 %v2923, 0.0
        %v3004 = vmax.f32 %v2924, 0.0
        %v3005 = vmax.f32 %v2925, 0.0
        %v3006 = vmax.f32 %v2926, 0.0
        %v3007 = vmax.f32 %v2927, 0.0
        %v3008 = vmax.f32 %v2928, 0.0
        %v3009 = vmax.f32 %v2929, 0.0
        %v3010 = vmax.f32 %v2930, 0.0
        %v3011 = vmax.f32 %v2931, 0.0
        %v3012 = vmax.f32 %v2932, 0.0
        %v3013 = vmax.f32 %v2933, 0.0
        %v3014 = vmax.f32 %v2934, 0.0
        %v3015 = vmax.f32 %v2935, 0.0
        %v3016 = vmax.f32 %v2936, 0.0
        %v3017 = vmax.f32 %v2937, 0.0
        %v3018 = vmax.f32 %v2938, 0.0
        %v3019 = vmax.f32 %v2939, 0.0
        %v3020 = vmax.f32 %v2940, 0.0
        %v3021 = vmax.f32 %v2941, 0.0
        %v3022 = vmax.f32 %v2942, 0.0
        %v3023 = vmax.f32 %v2943, 0.0
        %v3024 = vmax.f32 %v2944, 0.0
        %v3025 = vmax.f32 %v2945, 0.0
        %v3026 = vmax.f32 %v2946, 0.0
        %v3027 = vmax.f32 %v2947, 0.0
        %v3028 = vmax.f32 %v2948, 0.0
        %v3029 = vmax.f32 %v2949, 0.0
        %v3030 = vmax.f32 %v2950, 0.0
        %v3031 = vmax.f32 %v2951, 0.0
        %v3032 = vmax.f32 %v2952, 0.0
        %v3033 = vmax.f32 %v2953, 0.0
        %v3034 = vmax.f32 %v2954, 0.0
        %v3035 = vmax.f32 %v2955, 0.0
        %v3036 = vmax.f32 %v2956, 0.0
        %v3037 = vmax.f32 %v2957, 0.0
        %v3038 = vmax.f32 %v2958, 0.0
        %v3039 = vmax.f32 %v2959, 0.0
        %v3040 = vmax.f32 %v2960, 0.0
        %v3041 = vmax.f32 %v2961, 0.0
        %v3042 = vmax.f32 %v2962, 0.0
        %v3043 = vmax.f32 %v2963, 0.0
        %v3044 = vmax.f32 %v2964, 0.0
        %v3045 = vmax.f32 %v2965, 0.0
        %v3046 = vmax.f32 %v2966, 0.0
        %v3047 = vmax.f32 %v2967, 0.0
        %v3048 = vmax.f32 %v2968, 0.0
        %v3049 = vmax.f32 %v2969, 0.0
        %v3050 = vmax.f32 %v2970, 0.0
        %v3051 = vmax.f32 %v2971, 0.0
        %v3052 = vmax.f32 %v2972, 0.0
        %v3053 = vmax.f32 %v2973, 0.0
        %v3054 = vmax.f32 %v2974, 0.0
        %v3055 = vmax.f32 %v2975, 0.0
        %v3056 = vmax.f32 %v2976, 0.0
        %v3057 = vmax.f32 %v2977, 0.0
        %v3058 = vmax.f32 %v2978, 0.0
        %v3059 = vmax.f32 %v2979, 0.0
        %v3060 = vmax.f32 %v2980, 0.0
        %v3061 = vmax.f32 %v2981, 0.0
        %v3062 = vmax.f32 %v2982, 0.0
        %v3063 = vmax.f32 %v2983, 0.0
        %v3064 = vmax.f32 %v2984, 0.0
        %v3065 = vmax.f32 %v2985, 0.0
        %v3066 = vmax.f32 %v2986, 0.0
        %v3067 = vmax.f32 %v2987, 0.0
        %v3068 = vmax.f32 %v2988, 0.0
        %v3069 = vmax.f32 %v2989, 0.0
        %v3070 = vmax.f32 %v2990, 0.0
        %v3071 = vmax.f32 %v2991, 0.0
        %v3072 = vmax.f32 %v2992, 0.0
        %v3073 = vmax.f32 %v2993, 0.0
        %v3074 = vmax.f32 %v2994, 0.0
        %v3075 = vmax.f32 %v2995, 0.0
        %v3076 = vmax.f32 %v2996, 0.0
        %v3077 = vmax.f32 %v2997, 0.0
        %v3078 = vmax.f32 %v2998, 0.0
        %v3079 = vmax.f32 %v2999, 0.0
        %v3080 = vmax.f32 %v3000, 0.0
        %v3081 = vmax.f32 %v3001, 0.0
        %v3082 = vmax.f32 %v3002, 0.0
        %v3083 = vmin.f32 %v3003, 1.0
        %v3084 = vmin.f32 %v3004, 1.0
        %v3085 = vmin.f32 %v3005, 1.0
        %v3086 = vmin.f32 %v3006, 1.0
        %v3087 = vmin.f32 %v3007, 1.0
        %v3088 = vmin.f32 %v3008, 1.0
        %v3089 = vmin.f32 %v3009, 1.0
        %v3090 = vmin.f32 %v3010, 1.0
        %v3091 = vmin.f32 %v3011, 1.0
        %v3092 = vmin.f32 %v3012, 1.0
        %v3093 = vmin.f32 %v3013, 1.0
        %v3094 = vmin.f32 %v3014, 1.0
        %v3095 = vmin.f32 %v3015, 1.0
        %v3096 = vmin.f32 %v3016, 1.0
        %v3097 = vmin.f32 %v3017, 1.0
        %v3098 = vmin.f32 %v3018, 1.0
        %v3099 = vmin.f32 %v3019, 1.0
        %v3100 = vmin.f32 %v3020, 1.0
        %v3101 = vmin.f32 %v3021, 1.0
        %v3102 = vmin.f32 %v3022, 1.0
        %v3103 = vmin.f32 %v3023, 1.0
        %v3104 = vmin.f32 %v3024, 1.0
        %v3105 = vmin.f32 %v3025, 1.0
        %v3106 = vmin.f32 %v3026, 1.0
        %v3107 = vmin.f32 %v3027, 1.0
        %v3108 = vmin.f32 %v3028, 1.0
        %v3109 = vmin.f32 %v3029, 1.0
        %v3110 = vmin.f32 %v3030, 1.0
        %v3111 = vmin.f32 %v3031, 1.0
        %v3112 = vmin.f32 %v3032, 1.0
        %v3113 = vmin.f32 %v3033, 1.0
        %v3114 = vmin.f32 %v3034, 1.0
        %v3115 = vmin.f32 %v3035, 1.0
        %v3116 = vmin.f32 %v3036, 1.0
        %v3117 = vmin.f32 %v3037, 1.0
        %v3118 = vmin.f32 %v3038, 1.0
        %v3119 = vmin.f32 %v3039, 1.0
        %v3120 = vmin.f32 %v3040, 1.0
        %v3121 = vmin.f32 %v3041, 1.0
        %v3122 = vmin.f32 %v3042, 1.0
        %v3123 = vmin.f32 %v3043, 1.0
        %v3124 = vmin.f32 %v3044, 1.0
        %v3125 = vmin.f32 %v3045, 1.0
        %v3126 = vmin.f32 %v3046, 1.0
        %v3127 = vmin.f32 %v3047, 1.0
        %v3128 = vmin.f32 %v3048, 1.0
        %v3129 = vmin.f32 %v3049, 1.0
        %v3130 = vmin.f32 %v3050, 1.0
        %v3131 = vmin.f32 %v3051, 1.0
        %v3132 = vmin.f32 %v3052, 1.0
        %v3133 = vmin.f32 %v3053, 1.0
        %v3134 = vmin.f32 %v3054, 1.0
        %v3135 = vmin.f32 %v3055, 1.0
        %v3136 = vmin.f32 %v3056, 1.0
        %v3137 = vmin.f32 %v3057, 1.0
        %v3138 = vmin.f32 %v3058, 1.0
        %v3139 = vmin.f32 %v3059, 1.0
        %v3140 = vmin.f32 %v3060, 1.0
        %v3141 = vmin.f32 %v3061, 1.0
        %v3142 = vmin.f32 %v3062, 1.0
        %v3143 = vmin.f32 %v3063, 1.0
        %v3144 = vmin.f32 %v3064, 1.0
        %v3145 = vmin.f32 %v3065, 1.0
        %v3146 = vmin.f32 %v3066, 1.0
        %v3147 = vmin.f32 %v3067, 1.0
        %v3148 = vmin.f32 %v3068, 1.0
        %v3149 = vmin.f32 %v3069, 1.0
        %v3150 = vmin.f32 %v3070, 1.0
        %v3151 = vmin.f32 %v3071, 1.0
        %v3152 = vmin.f32 %v3072, 1.0
        %v3153 = vmin.f32 %v3073, 1.0
        %v3154 = vmin.f32 %v3074, 1.0
        %v3155 = vmin.f32 %v3075, 1.0
        %v3156 = vmin.f32 %v3076, 1.0
        %v3157 = vmin.f32 %v3077, 1.0
        %v3158 = vmin.f32 %v3078, 1.0
        %v3159 = vmin.f32 %v3079, 1.0
        %v3160 = vmin.f32 %v3080, 1.0
        %v3161 = vmin.f32 %v3081, 1.0
        %v3162 = vmin.f32 %v3082, 1.0
        %v3163 = vpack.c.bf16 %v3084, %v3083
        %v3164 = vpack.c.bf16 %v3086, %v3085
        %v3165 = vpack.c.bf16 %v3088, %v3087
        %v3166 = vpack.c.bf16 %v3090, %v3089
        %v3167 = vpack.c.bf16 %v3092, %v3091
        %v3168 = vpack.c.bf16 %v3094, %v3093
        %v3169 = vpack.c.bf16 %v3096, %v3095
        %v3170 = vpack.c.bf16 %v3098, %v3097
        %v3171 = vpack.c.bf16 %v3100, %v3099
        %v3172 = vpack.c.bf16 %v3102, %v3101
        %v3173 = vpack.c.bf16 %v3104, %v3103
        %v3174 = vpack.c.bf16 %v3106, %v3105
        %v3175 = vpack.c.bf16 %v3108, %v3107
        %v3176 = vpack.c.bf16 %v3110, %v3109
        %v3177 = vpack.c.bf16 %v3112, %v3111
        %v3178 = vpack.c.bf16 %v3114, %v3113
        %v3179 = vpack.c.bf16 %v3116, %v3115
        %v3180 = vpack.c.bf16 %v3118, %v3117
        %v3181 = vpack.c.bf16 %v3120, %v3119
        %v3182 = vpack.c.bf16 %v3122, %v3121
        %v3183 = vpack.c.bf16 %v3124, %v3123
        %v3184 = vpack.c.bf16 %v3126, %v3125
        %v3185 = vpack.c.bf16 %v3128, %v3127
        %v3186 = vpack.c.bf16 %v3130, %v3129
        %v3187 = vpack.c.bf16 %v3132, %v3131
        %v3188 = vpack.c.bf16 %v3134, %v3133
        %v3189 = vpack.c.bf16 %v3136, %v3135
        %v3190 = vpack.c.bf16 %v3138, %v3137
        %v3191 = vpack.c.bf16 %v3140, %v3139
        %v3192 = vpack.c.bf16 %v3142, %v3141
        %v3193 = vpack.c.bf16 %v3144, %v3143
        %v3194 = vpack.c.bf16 %v3146, %v3145
        %v3195 = vpack.c.bf16 %v3148, %v3147
        %v3196 = vpack.c.bf16 %v3150, %v3149
        %v3197 = vpack.c.bf16 %v3152, %v3151
        %v3198 = vpack.c.bf16 %v3154, %v3153
        %v3199 = vpack.c.bf16 %v3156, %v3155
        %v3200 = vpack.c.bf16 %v3158, %v3157
        %v3201 = vpack.c.bf16 %v3160, %v3159
        %v3202 = vpack.c.bf16 %v3162, %v3161
        %3203 = vst [vmem:[%s457] sm:$0xff] %v3163
        %3204 = vst [vmem:[%s457 + $0x8] sm:$0xff] %v3164
        %3205 = vst [vmem:[%s457 + $0x10] sm:$0xff] %v3165
        %3206 = vst [vmem:[%s457 + $0x18] sm:$0xff] %v3166
        %3207 = vst [vmem:[%s457 + $0x20] sm:$0xff] %v3167
        %3208 = vst [vmem:[%s457 + $0x28] sm:$0xff] %v3168
        %3209 = vst [vmem:[%s457 + $0x30] sm:$0xff] %v3169
        %3210 = vst [vmem:[%s457 + $0x38] sm:$0xff] %v3170
        %3211 = vst [vmem:[%s457 + $0x40] sm:$0xff] %v3171
        %3212 = vst [vmem:[%s457 + $0x48] sm:$0xff] %v3172
        %3213 = vst [vmem:[%s457 + $0x50] sm:$0xff] %v3173
        %3214 = vst [vmem:[%s457 + $0x58] sm:$0xff] %v3174
        %3215 = vst [vmem:[%s457 + $0x60] sm:$0xff] %v3175
        %3216 = vst [vmem:[%s457 + $0x68] sm:$0xff] %v3176
        %3217 = vst [vmem:[%s457 + $0x70] sm:$0xff] %v3177
        %3218 = vst [vmem:[%s457 + $0x78] sm:$0xff] %v3178
        %3219 = vst [vmem:[%s457 + $0x80] sm:$0xff] %v3179
        %3220 = vst [vmem:[%s457 + $0x88] sm:$0xff] %v3180
        %3221 = vst [vmem:[%s457 + $0x90] sm:$0xff] %v3181
        %3222 = vst [vmem:[%s457 + $0x98] sm:$0xff] %v3182
        %3223 = vst [vmem:[%s457 + $0xa0] sm:$0xff] %v3183
        %3224 = vst [vmem:[%s457 + $0xa8] sm:$0xff] %v3184
        %3225 = vst [vmem:[%s457 + $0xb0] sm:$0xff] %v3185
        %3226 = vst [vmem:[%s457 + $0xb8] sm:$0xff] %v3186
        %3227 = vst [vmem:[%s457 + $0xc0] sm:$0xff] %v3187
        %3228 = vst [vmem:[%s457 + $0xc8] sm:$0xff] %v3188
        %3229 = vst [vmem:[%s457 + $0xd0] sm:$0xff] %v3189
        %3230 = vst [vmem:[%s457 + $0xd8] sm:$0xff] %v3190
        %3231 = vst [vmem:[%s457 + $0xe0] sm:$0xff] %v3191
        %3232 = vst [vmem:[%s457 + $0xe8] sm:$0xff] %v3192
        %3233 = vst [vmem:[%s457 + $0xf0] sm:$0xff] %v3193
        %3234 = vst [vmem:[%s457 + $0xf8] sm:$0xff] %v3194
        %3235 = vst [vmem:[%s457 + $0x100] sm:$0xff] %v3195
        %3236 = vst [vmem:[%s457 + $0x108] sm:$0xff] %v3196
        %3237 = vst [vmem:[%s457 + $0x110] sm:$0xff] %v3197
        %3238 = vst [vmem:[%s457 + $0x118] sm:$0xff] %v3198
        %3239 = vst [vmem:[%s457 + $0x120] sm:$0xff] %v3199
        %3240 = vst [vmem:[%s457 + $0x128] sm:$0xff] %v3200
        %3241 = vst [vmem:[%s457 + $0x130] sm:$0xff] %v3201
        %3242 = vst [vmem:[%s457 + $0x138] sm:$0xff] %v3202
        %s3243 = sld [smem:[#allocation4 + $0xc]]
        %v3244 = vstv %s3243
        %v3245 = vmul.f32 %v504, %v3244
        %v3246 = vmul.f32 %v505, %v3244
        %v3247 = vmul.f32 %v506, %v3244
        %v3248 = vmul.f32 %v507, %v3244
        %v3249 = vmul.f32 %v508, %v3244
        %v3250 = vmul.f32 %v509, %v3244
        %v3251 = vmul.f32 %v510, %v3244
        %v3252 = vmul.f32 %v511, %v3244
        %v3253 = vmul.f32 %v512, %v3244
        %v3254 = vmul.f32 %v513, %v3244
        %v3255 = vmul.f32 %v514, %v3244
        %v3256 = vmul.f32 %v515, %v3244
        %v3257 = vmul.f32 %v516, %v3244
        %v3258 = vmul.f32 %v517, %v3244
        %v3259 = vmul.f32 %v518, %v3244
        %v3260 = vmul.f32 %v519, %v3244
        %s3261 = sld [smem:[#allocation4 + $0xd]]
        %v3262 = vstv %s3261
        %v3263 = vmul.f32 %v521, %v3262
        %v3264 = vmul.f32 %v522, %v3262
        %v3265 = vmul.f32 %v523, %v3262
        %v3266 = vmul.f32 %v524, %v3262
        %v3267 = vmul.f32 %v525, %v3262
        %v3268 = vmul.f32 %v526, %v3262
        %v3269 = vmul.f32 %v527, %v3262
        %v3270 = vmul.f32 %v528, %v3262
        %v3271 = vmul.f32 %v529, %v3262
        %v3272 = vmul.f32 %v530, %v3262
        %v3273 = vmul.f32 %v531, %v3262
        %v3274 = vmul.f32 %v532, %v3262
        %v3275 = vmul.f32 %v533, %v3262
        %v3276 = vmul.f32 %v534, %v3262
        %v3277 = vmul.f32 %v535, %v3262
        %v3278 = vmul.f32 %v536, %v3262
        %v3279 = vadd.f32 %v3245, %v3263
        %v3280 = vadd.f32 %v3246, %v3264
        %v3281 = vadd.f32 %v3247, %v3265
        %v3282 = vadd.f32 %v3248, %v3266
        %v3283 = vadd.f32 %v3249, %v3267
        %v3284 = vadd.f32 %v3250, %v3268
        %v3285 = vadd.f32 %v3251, %v3269
        %v3286 = vadd.f32 %v3252, %v3270
        %v3287 = vadd.f32 %v3253, %v3271
        %v3288 = vadd.f32 %v3254, %v3272
        %v3289 = vadd.f32 %v3255, %v3273
        %v3290 = vadd.f32 %v3256, %v3274
        %v3291 = vadd.f32 %v3257, %v3275
        %v3292 = vadd.f32 %v3258, %v3276
        %v3293 = vadd.f32 %v3259, %v3277
        %v3294 = vadd.f32 %v3260, %v3278
        %s3295 = sld [smem:[#allocation4 + $0xe]]
        %v3296 = vstv %s3295
        %v3297 = vmul.f32 %v538, %v3296
        %v3298 = vmul.f32 %v539, %v3296
        %v3299 = vmul.f32 %v540, %v3296
        %v3300 = vmul.f32 %v541, %v3296
        %v3301 = vmul.f32 %v542, %v3296
        %v3302 = vmul.f32 %v543, %v3296
        %v3303 = vmul.f32 %v544, %v3296
        %v3304 = vmul.f32 %v545, %v3296
        %v3305 = vmul.f32 %v546, %v3296
        %v3306 = vmul.f32 %v547, %v3296
        %v3307 = vmul.f32 %v548, %v3296
        %v3308 = vmul.f32 %v549, %v3296
        %v3309 = vmul.f32 %v550, %v3296
        %v3310 = vmul.f32 %v551, %v3296
        %v3311 = vmul.f32 %v552, %v3296
        %v3312 = vmul.f32 %v553, %v3296
        %v3313 = vadd.f32 %v3279, %v3297
        %v3314 = vadd.f32 %v3280, %v3298
        %v3315 = vadd.f32 %v3281, %v3299
        %v3316 = vadd.f32 %v3282, %v3300
        %v3317 = vadd.f32 %v3283, %v3301
        %v3318 = vadd.f32 %v3284, %v3302
        %v3319 = vadd.f32 %v3285, %v3303
        %v3320 = vadd.f32 %v3286, %v3304
        %v3321 = vadd.f32 %v3287, %v3305
        %v3322 = vadd.f32 %v3288, %v3306
        %v3323 = vadd.f32 %v3289, %v3307
        %v3324 = vadd.f32 %v3290, %v3308
        %v3325 = vadd.f32 %v3291, %v3309
        %v3326 = vadd.f32 %v3292, %v3310
        %v3327 = vadd.f32 %v3293, %v3311
        %v3328 = vadd.f32 %v3294, %v3312
        %s3329 = sld [smem:[#allocation5 + $0x4]]
        %v3330 = vstv %s3329
        %v3331 = vadd.f32 %v3313, %v3330
        %v3332 = vadd.f32 %v3314, %v3330
        %v3333 = vadd.f32 %v3315, %v3330
        %v3334 = vadd.f32 %v3316, %v3330
        %v3335 = vadd.f32 %v3317, %v3330
        %v3336 = vadd.f32 %v3318, %v3330
        %v3337 = vadd.f32 %v3319, %v3330
        %v3338 = vadd.f32 %v3320, %v3330
        %v3339 = vadd.f32 %v3321, %v3330
        %v3340 = vadd.f32 %v3322, %v3330
        %v3341 = vadd.f32 %v3323, %v3330
        %v3342 = vadd.f32 %v3324, %v3330
        %v3343 = vadd.f32 %v3325, %v3330
        %v3344 = vadd.f32 %v3326, %v3330
        %v3345 = vadd.f32 %v3327, %v3330
        %v3346 = vadd.f32 %v3328, %v3330
        %s3347 = scalar_lea.vmem %s443, 512 [#allocation11]
        %3348 = vst [vmem:[%s3347] sm:$0xff] %v3331
        %3349 = vst [vmem:[%s3347 + $0x8] sm:$0xff] %v3332
        %3350 = vst [vmem:[%s3347 + $0x10] sm:$0xff] %v3333
        %3351 = vst [vmem:[%s3347 + $0x18] sm:$0xff] %v3334
        %3352 = vst [vmem:[%s3347 + $0x20] sm:$0xff] %v3335
        %3353 = vst [vmem:[%s3347 + $0x28] sm:$0xff] %v3336
        %3354 = vst [vmem:[%s3347 + $0x30] sm:$0xff] %v3337
        %3355 = vst [vmem:[%s3347 + $0x38] sm:$0xff] %v3338
        %3356 = vst [vmem:[%s3347 + $0x40] sm:$0xff] %v3339
        %3357 = vst [vmem:[%s3347 + $0x48] sm:$0xff] %v3340
        %3358 = vst [vmem:[%s3347 + $0x50] sm:$0xff] %v3341
        %3359 = vst [vmem:[%s3347 + $0x58] sm:$0xff] %v3342
        %3360 = vst [vmem:[%s3347 + $0x60] sm:$0xff] %v3343
        %3361 = vst [vmem:[%s3347 + $0x68] sm:$0xff] %v3344
        %3362 = vst [vmem:[%s3347 + $0x70] sm:$0xff] %v3345
        %3363 = vst [vmem:[%s3347 + $0x78] sm:$0xff] %v3346
        %v3364 = vmul.f32 %v3331, 0.5
        %v3365 = vmul.f32 %v3332, 0.5
        %v3366 = vmul.f32 %v3333, 0.5
        %v3367 = vmul.f32 %v3334, 0.5
        %v3368 = vmul.f32 %v3335, 0.5
        %v3369 = vmul.f32 %v3336, 0.5
        %v3370 = vmul.f32 %v3337, 0.5
        %v3371 = vmul.f32 %v3338, 0.5
        %v3372 = vmul.f32 %v3339, 0.5
        %v3373 = vmul.f32 %v3340, 0.5
        %v3374 = vmul.f32 %v3341, 0.5
        %v3375 = vmul.f32 %v3342, 0.5
        %v3376 = vmul.f32 %v3343, 0.5
        %v3377 = vmul.f32 %v3344, 0.5
        %v3378 = vmul.f32 %v3345, 0.5
        %v3379 = vmul.f32 %v3346, 0.5
        %v3380 = vtanh.pop %v3364
        %v3381 = vtanh.pop %v3365
        %v3382 = vtanh.pop %v3366
        %v3383 = vtanh.pop %v3367
        %v3384 = vtanh.pop %v3368
        %v3385 = vtanh.pop %v3369
        %v3386 = vtanh.pop %v3370
        %v3387 = vtanh.pop %v3371
        %v3388 = vtanh.pop %v3372
        %v3389 = vtanh.pop %v3373
        %v3390 = vtanh.pop %v3374
        %v3391 = vtanh.pop %v3375
        %v3392 = vtanh.pop %v3376
        %v3393 = vtanh.pop %v3377
        %v3394 = vtanh.pop %v3378
        %v3395 = vtanh.pop %v3379
        %v3396 = vadd.f32 %v3380, 1.0
        %v3397 = vadd.f32 %v3381, 1.0
        %v3398 = vadd.f32 %v3382, 1.0
        %v3399 = vadd.f32 %v3383, 1.0
        %v3400 = vadd.f32 %v3384, 1.0
        %v3401 = vadd.f32 %v3385, 1.0
        %v3402 = vadd.f32 %v3386, 1.0
        %v3403 = vadd.f32 %v3387, 1.0
        %v3404 = vadd.f32 %v3388, 1.0
        %v3405 = vadd.f32 %v3389, 1.0
        %v3406 = vadd.f32 %v3390, 1.0
        %v3407 = vadd.f32 %v3391, 1.0
        %v3408 = vadd.f32 %v3392, 1.0
        %v3409 = vadd.f32 %v3393, 1.0
        %v3410 = vadd.f32 %v3394, 1.0
        %v3411 = vadd.f32 %v3395, 1.0
        %v3412 = vmul.f32 %v3396, 0.5
        %v3413 = vmul.f32 %v3397, 0.5
        %v3414 = vmul.f32 %v3398, 0.5
        %v3415 = vmul.f32 %v3399, 0.5
        %v3416 = vmul.f32 %v3400, 0.5
        %v3417 = vmul.f32 %v3401, 0.5
        %v3418 = vmul.f32 %v3402, 0.5
        %v3419 = vmul.f32 %v3403, 0.5
        %v3420 = vmul.f32 %v3404, 0.5
        %v3421 = vmul.f32 %v3405, 0.5
        %v3422 = vmul.f32 %v3406, 0.5
        %v3423 = vmul.f32 %v3407, 0.5
        %v3424 = vmul.f32 %v3408, 0.5
        %v3425 = vmul.f32 %v3409, 0.5
        %v3426 = vmul.f32 %v3410, 0.5
        %v3427 = vmul.f32 %v3411, 0.5
        %v3428 = vpack.c.bf16 %v3413, %v3412
        %v3429 = vpack.c.bf16 %v3415, %v3414
        %v3430 = vpack.c.bf16 %v3417, %v3416
        %v3431 = vpack.c.bf16 %v3419, %v3418
        %v3432 = vpack.c.bf16 %v3421, %v3420
        %v3433 = vpack.c.bf16 %v3423, %v3422
        %v3434 = vpack.c.bf16 %v3425, %v3424
        %v3435 = vpack.c.bf16 %v3427, %v3426
        %3436 = vst [vmem:[%s471] sm:$0xff] %v3428
        %3437 = vst [vmem:[%s471 + $0x8] sm:$0xff] %v3429
        %3438 = vst [vmem:[%s471 + $0x10] sm:$0xff] %v3430
        %3439 = vst [vmem:[%s471 + $0x18] sm:$0xff] %v3431
        %3440 = vst [vmem:[%s471 + $0x20] sm:$0xff] %v3432
        %3441 = vst [vmem:[%s471 + $0x28] sm:$0xff] %v3433
        %3442 = vst [vmem:[%s471 + $0x30] sm:$0xff] %v3434
        %3443 = vst [vmem:[%s471 + $0x38] sm:$0xff] %v3435
        %s3444 = sld [smem:[#allocation4 + $0x18]]
        %v3445 = vstv %s3444
        %v3446 = vmul.f32 %v504, %v3445
        %v3447 = vmul.f32 %v505, %v3445
        %v3448 = vmul.f32 %v506, %v3445
        %v3449 = vmul.f32 %v507, %v3445
        %v3450 = vmul.f32 %v508, %v3445
        %v3451 = vmul.f32 %v509, %v3445
        %v3452 = vmul.f32 %v510, %v3445
        %v3453 = vmul.f32 %v511, %v3445
        %v3454 = vmul.f32 %v512, %v3445
        %v3455 = vmul.f32 %v513, %v3445
        %v3456 = vmul.f32 %v514, %v3445
        %v3457 = vmul.f32 %v515, %v3445
        %v3458 = vmul.f32 %v516, %v3445
        %v3459 = vmul.f32 %v517, %v3445
        %v3460 = vmul.f32 %v518, %v3445
        %v3461 = vmul.f32 %v519, %v3445
        %s3462 = sld [smem:[#allocation4 + $0x19]]
        %v3463 = vstv %s3462
        %v3464 = vmul.f32 %v521, %v3463
        %v3465 = vmul.f32 %v522, %v3463
        %v3466 = vmul.f32 %v523, %v3463
        %v3467 = vmul.f32 %v524, %v3463
        %v3468 = vmul.f32 %v525, %v3463
        %v3469 = vmul.f32 %v526, %v3463
        %v3470 = vmul.f32 %v527, %v3463
        %v3471 = vmul.f32 %v528, %v3463
        %v3472 = vmul.f32 %v529, %v3463
        %v3473 = vmul.f32 %v530, %v3463
        %v3474 = vmul.f32 %v531, %v3463
        %v3475 = vmul.f32 %v532, %v3463
        %v3476 = vmul.f32 %v533, %v3463
        %v3477 = vmul.f32 %v534, %v3463
        %v3478 = vmul.f32 %v535, %v3463
        %v3479 = vmul.f32 %v536, %v3463
        %v3480 = vadd.f32 %v3446, %v3464
        %v3481 = vadd.f32 %v3447, %v3465
        %v3482 = vadd.f32 %v3448, %v3466
        %v3483 = vadd.f32 %v3449, %v3467
        %v3484 = vadd.f32 %v3450, %v3468
        %v3485 = vadd.f32 %v3451, %v3469
        %v3486 = vadd.f32 %v3452, %v3470
        %v3487 = vadd.f32 %v3453, %v3471
        %v3488 = vadd.f32 %v3454, %v3472
        %v3489 = vadd.f32 %v3455, %v3473
        %v3490 = vadd.f32 %v3456, %v3474
        %v3491 = vadd.f32 %v3457, %v3475
        %v3492 = vadd.f32 %v3458, %v3476
        %v3493 = vadd.f32 %v3459, %v3477
        %v3494 = vadd.f32 %v3460, %v3478
        %v3495 = vadd.f32 %v3461, %v3479
        %s3496 = sld [smem:[#allocation4 + $0x1a]]
        %v3497 = vstv %s3496
        %v3498 = vmul.f32 %v538, %v3497
        %v3499 = vmul.f32 %v539, %v3497
        %v3500 = vmul.f32 %v540, %v3497
        %v3501 = vmul.f32 %v541, %v3497
        %v3502 = vmul.f32 %v542, %v3497
        %v3503 = vmul.f32 %v543, %v3497
        %v3504 = vmul.f32 %v544, %v3497
        %v3505 = vmul.f32 %v545, %v3497
        %v3506 = vmul.f32 %v546, %v3497
        %v3507 = vmul.f32 %v547, %v3497
        %v3508 = vmul.f32 %v548, %v3497
        %v3509 = vmul.f32 %v549, %v3497
        %v3510 = vmul.f32 %v550, %v3497
        %v3511 = vmul.f32 %v551, %v3497
        %v3512 = vmul.f32 %v552, %v3497
        %v3513 = vmul.f32 %v553, %v3497
        %v3514 = vadd.f32 %v3480, %v3498
        %v3515 = vadd.f32 %v3481, %v3499
        %v3516 = vadd.f32 %v3482, %v3500
        %v3517 = vadd.f32 %v3483, %v3501
        %v3518 = vadd.f32 %v3484, %v3502
        %v3519 = vadd.f32 %v3485, %v3503
        %v3520 = vadd.f32 %v3486, %v3504
        %v3521 = vadd.f32 %v3487, %v3505
        %v3522 = vadd.f32 %v3488, %v3506
        %v3523 = vadd.f32 %v3489, %v3507
        %v3524 = vadd.f32 %v3490, %v3508
        %v3525 = vadd.f32 %v3491, %v3509
        %v3526 = vadd.f32 %v3492, %v3510
        %v3527 = vadd.f32 %v3493, %v3511
        %v3528 = vadd.f32 %v3494, %v3512
        %v3529 = vadd.f32 %v3495, %v3513
        %s3530 = sld [smem:[#allocation5 + $0x8]]
        %v3531 = vstv %s3530
        %v3532 = vadd.f32 %v3514, %v3531
        %v3533 = vadd.f32 %v3515, %v3531
        %v3534 = vadd.f32 %v3516, %v3531
        %v3535 = vadd.f32 %v3517, %v3531
        %v3536 = vadd.f32 %v3518, %v3531
        %v3537 = vadd.f32 %v3519, %v3531
        %v3538 = vadd.f32 %v3520, %v3531
        %v3539 = vadd.f32 %v3521, %v3531
        %v3540 = vadd.f32 %v3522, %v3531
        %v3541 = vadd.f32 %v3523, %v3531
        %v3542 = vadd.f32 %v3524, %v3531
        %v3543 = vadd.f32 %v3525, %v3531
        %v3544 = vadd.f32 %v3526, %v3531
        %v3545 = vadd.f32 %v3527, %v3531
        %v3546 = vadd.f32 %v3528, %v3531
        %v3547 = vadd.f32 %v3529, %v3531
        %s3548 = scalar_lea.vmem %s443, 1024 [#allocation11]
        %3549 = vst [vmem:[%s3548] sm:$0xff] %v3532
        %3550 = vst [vmem:[%s3548 + $0x8] sm:$0xff] %v3533
        %3551 = vst [vmem:[%s3548 + $0x10] sm:$0xff] %v3534
        %3552 = vst [vmem:[%s3548 + $0x18] sm:$0xff] %v3535
        %3553 = vst [vmem:[%s3548 + $0x20] sm:$0xff] %v3536
        %3554 = vst [vmem:[%s3548 + $0x28] sm:$0xff] %v3537
        %3555 = vst [vmem:[%s3548 + $0x30] sm:$0xff] %v3538
        %3556 = vst [vmem:[%s3548 + $0x38] sm:$0xff] %v3539
        %3557 = vst [vmem:[%s3548 + $0x40] sm:$0xff] %v3540
        %3558 = vst [vmem:[%s3548 + $0x48] sm:$0xff] %v3541
        %3559 = vst [vmem:[%s3548 + $0x50] sm:$0xff] %v3542
        %3560 = vst [vmem:[%s3548 + $0x58] sm:$0xff] %v3543
        %3561 = vst [vmem:[%s3548 + $0x60] sm:$0xff] %v3544
        %3562 = vst [vmem:[%s3548 + $0x68] sm:$0xff] %v3545
        %3563 = vst [vmem:[%s3548 + $0x70] sm:$0xff] %v3546
        %3564 = vst [vmem:[%s3548 + $0x78] sm:$0xff] %v3547
        %v3565 = vmul.f32 %v3532, 0.5
        %v3566 = vmul.f32 %v3533, 0.5
        %v3567 = vmul.f32 %v3534, 0.5
        %v3568 = vmul.f32 %v3535, 0.5
        %v3569 = vmul.f32 %v3536, 0.5
        %v3570 = vmul.f32 %v3537, 0.5
        %v3571 = vmul.f32 %v3538, 0.5
        %v3572 = vmul.f32 %v3539, 0.5
        %v3573 = vmul.f32 %v3540, 0.5
        %v3574 = vmul.f32 %v3541, 0.5
        %v3575 = vmul.f32 %v3542, 0.5
        %v3576 = vmul.f32 %v3543, 0.5
        %v3577 = vmul.f32 %v3544, 0.5
        %v3578 = vmul.f32 %v3545, 0.5
        %v3579 = vmul.f32 %v3546, 0.5
        %v3580 = vmul.f32 %v3547, 0.5
        %v3581 = vtanh.pop %v3565
        %v3582 = vtanh.pop %v3566
        %v3583 = vtanh.pop %v3567
        %v3584 = vtanh.pop %v3568
        %v3585 = vtanh.pop %v3569
        %v3586 = vtanh.pop %v3570
        %v3587 = vtanh.pop %v3571
        %v3588 = vtanh.pop %v3572
        %v3589 = vtanh.pop %v3573
        %v3590 = vtanh.pop %v3574
        %v3591 = vtanh.pop %v3575
        %v3592 = vtanh.pop %v3576
        %v3593 = vtanh.pop %v3577
        %v3594 = vtanh.pop %v3578
        %v3595 = vtanh.pop %v3579
        %v3596 = vtanh.pop %v3580
        %v3597 = vadd.f32 %v3581, 1.0
        %v3598 = vadd.f32 %v3582, 1.0
        %v3599 = vadd.f32 %v3583, 1.0
        %v3600 = vadd.f32 %v3584, 1.0
        %v3601 = vadd.f32 %v3585, 1.0
        %v3602 = vadd.f32 %v3586, 1.0
        %v3603 = vadd.f32 %v3587, 1.0
        %v3604 = vadd.f32 %v3588, 1.0
        %v3605 = vadd.f32 %v3589, 1.0
        %v3606 = vadd.f32 %v3590, 1.0
        %v3607 = vadd.f32 %v3591, 1.0
        %v3608 = vadd.f32 %v3592, 1.0
        %v3609 = vadd.f32 %v3593, 1.0
        %v3610 = vadd.f32 %v3594, 1.0
        %v3611 = vadd.f32 %v3595, 1.0
        %v3612 = vadd.f32 %v3596, 1.0
        %v3613 = vmul.f32 %v3597, 0.5
        %v3614 = vmul.f32 %v3598, 0.5
        %v3615 = vmul.f32 %v3599, 0.5
        %v3616 = vmul.f32 %v3600, 0.5
        %v3617 = vmul.f32 %v3601, 0.5
        %v3618 = vmul.f32 %v3602, 0.5
        %v3619 = vmul.f32 %v3603, 0.5
        %v3620 = vmul.f32 %v3604, 0.5
        %v3621 = vmul.f32 %v3605, 0.5
        %v3622 = vmul.f32 %v3606, 0.5
        %v3623 = vmul.f32 %v3607, 0.5
        %v3624 = vmul.f32 %v3608, 0.5
        %v3625 = vmul.f32 %v3609, 0.5
        %v3626 = vmul.f32 %v3610, 0.5
        %v3627 = vmul.f32 %v3611, 0.5
        %v3628 = vmul.f32 %v3612, 0.5
        %v3629 = vpack.c.bf16 %v3614, %v3613
        %v3630 = vpack.c.bf16 %v3616, %v3615
        %v3631 = vpack.c.bf16 %v3618, %v3617
        %v3632 = vpack.c.bf16 %v3620, %v3619
        %v3633 = vpack.c.bf16 %v3622, %v3621
        %v3634 = vpack.c.bf16 %v3624, %v3623
        %v3635 = vpack.c.bf16 %v3626, %v3625
        %v3636 = vpack.c.bf16 %v3628, %v3627
        %s3637 = scalar_lea.vmem %s471, 64 [#allocation17]
        %3638 = vst [vmem:[%s3637] sm:$0xff] %v3629
        %3639 = vst [vmem:[%s3637 + $0x8] sm:$0xff] %v3630
        %3640 = vst [vmem:[%s3637 + $0x10] sm:$0xff] %v3631
        %3641 = vst [vmem:[%s3637 + $0x18] sm:$0xff] %v3632
        %3642 = vst [vmem:[%s3637 + $0x20] sm:$0xff] %v3633
        %3643 = vst [vmem:[%s3637 + $0x28] sm:$0xff] %v3634
        %3644 = vst [vmem:[%s3637 + $0x30] sm:$0xff] %v3635
        %3645 = vst [vmem:[%s3637 + $0x38] sm:$0xff] %v3636
        %s3646 = sld [smem:[#allocation4 + $0x1b]]
        %v3647 = vstv %s3646
        %v3648 = vmul.f32 %v504, %v3647
        %v3649 = vmul.f32 %v505, %v3647
        %v3650 = vmul.f32 %v506, %v3647
        %v3651 = vmul.f32 %v507, %v3647
        %v3652 = vmul.f32 %v508, %v3647
        %v3653 = vmul.f32 %v509, %v3647
        %v3654 = vmul.f32 %v510, %v3647
        %v3655 = vmul.f32 %v511, %v3647
        %v3656 = vmul.f32 %v512, %v3647
        %v3657 = vmul.f32 %v513, %v3647
        %v3658 = vmul.f32 %v514, %v3647
        %v3659 = vmul.f32 %v515, %v3647
        %v3660 = vmul.f32 %v516, %v3647
        %v3661 = vmul.f32 %v517, %v3647
        %v3662 = vmul.f32 %v518, %v3647
        %v3663 = vmul.f32 %v519, %v3647
        %s3664 = sld [smem:[#allocation4 + $0x1c]]
        %v3665 = vstv %s3664
        %v3666 = vmul.f32 %v521, %v3665
        %v3667 = vmul.f32 %v522, %v3665
        %v3668 = vmul.f32 %v523, %v3665
        %v3669 = vmul.f32 %v524, %v3665
        %v3670 = vmul.f32 %v525, %v3665
        %v3671 = vmul.f32 %v526, %v3665
        %v3672 = vmul.f32 %v527, %v3665
        %v3673 = vmul.f32 %v528, %v3665
        %v3674 = vmul.f32 %v529, %v3665
        %v3675 = vmul.f32 %v530, %v3665
        %v3676 = vmul.f32 %v531, %v3665
        %v3677 = vmul.f32 %v532, %v3665
        %v3678 = vmul.f32 %v533, %v3665
        %v3679 = vmul.f32 %v534, %v3665
        %v3680 = vmul.f32 %v535, %v3665
        %v3681 = vmul.f32 %v536, %v3665
        %v3682 = vadd.f32 %v3648, %v3666
        %v3683 = vadd.f32 %v3649, %v3667
        %v3684 = vadd.f32 %v3650, %v3668
        %v3685 = vadd.f32 %v3651, %v3669
        %v3686 = vadd.f32 %v3652, %v3670
        %v3687 = vadd.f32 %v3653, %v3671
        %v3688 = vadd.f32 %v3654, %v3672
        %v3689 = vadd.f32 %v3655, %v3673
        %v3690 = vadd.f32 %v3656, %v3674
        %v3691 = vadd.f32 %v3657, %v3675
        %v3692 = vadd.f32 %v3658, %v3676
        %v3693 = vadd.f32 %v3659, %v3677
        %v3694 = vadd.f32 %v3660, %v3678
        %v3695 = vadd.f32 %v3661, %v3679
        %v3696 = vadd.f32 %v3662, %v3680
        %v3697 = vadd.f32 %v3663, %v3681
        %s3698 = sld [smem:[#allocation4 + $0x1d]]
        %v3699 = vstv %s3698
        %v3700 = vmul.f32 %v538, %v3699
        %v3701 = vmul.f32 %v539, %v3699
        %v3702 = vmul.f32 %v540, %v3699
        %v3703 = vmul.f32 %v541, %v3699
        %v3704 = vmul.f32 %v542, %v3699
        %v3705 = vmul.f32 %v543, %v3699
        %v3706 = vmul.f32 %v544, %v3699
        %v3707 = vmul.f32 %v545, %v3699
        %v3708 = vmul.f32 %v546, %v3699
        %v3709 = vmul.f32 %v547, %v3699
        %v3710 = vmul.f32 %v548, %v3699
        %v3711 = vmul.f32 %v549, %v3699
        %v3712 = vmul.f32 %v550, %v3699
        %v3713 = vmul.f32 %v551, %v3699
        %v3714 = vmul.f32 %v552, %v3699
        %v3715 = vmul.f32 %v553, %v3699
        %v3716 = vadd.f32 %v3682, %v3700
        %v3717 = vadd.f32 %v3683, %v3701
        %v3718 = vadd.f32 %v3684, %v3702
        %v3719 = vadd.f32 %v3685, %v3703
        %v3720 = vadd.f32 %v3686, %v3704
        %v3721 = vadd.f32 %v3687, %v3705
        %v3722 = vadd.f32 %v3688, %v3706
        %v3723 = vadd.f32 %v3689, %v3707
        %v3724 = vadd.f32 %v3690, %v3708
        %v3725 = vadd.f32 %v3691, %v3709
        %v3726 = vadd.f32 %v3692, %v3710
        %v3727 = vadd.f32 %v3693, %v3711
        %v3728 = vadd.f32 %v3694, %v3712
        %v3729 = vadd.f32 %v3695, %v3713
        %v3730 = vadd.f32 %v3696, %v3714
        %v3731 = vadd.f32 %v3697, %v3715
        %s3732 = sld [smem:[#allocation5 + $0x9]]
        %v3733 = vstv %s3732
        %v3734 = vadd.f32 %v3716, %v3733
        %v3735 = vadd.f32 %v3717, %v3733
        %v3736 = vadd.f32 %v3718, %v3733
        %v3737 = vadd.f32 %v3719, %v3733
        %v3738 = vadd.f32 %v3720, %v3733
        %v3739 = vadd.f32 %v3721, %v3733
        %v3740 = vadd.f32 %v3722, %v3733
        %v3741 = vadd.f32 %v3723, %v3733
        %v3742 = vadd.f32 %v3724, %v3733
        %v3743 = vadd.f32 %v3725, %v3733
        %v3744 = vadd.f32 %v3726, %v3733
        %v3745 = vadd.f32 %v3727, %v3733
        %v3746 = vadd.f32 %v3728, %v3733
        %v3747 = vadd.f32 %v3729, %v3733
        %v3748 = vadd.f32 %v3730, %v3733
        %v3749 = vadd.f32 %v3731, %v3733
        %s3750 = scalar_lea.vmem %s443, 1152 [#allocation11]
        %3751 = vst [vmem:[%s3750] sm:$0xff] %v3734
        %3752 = vst [vmem:[%s3750 + $0x8] sm:$0xff] %v3735
        %3753 = vst [vmem:[%s3750 + $0x10] sm:$0xff] %v3736
        %3754 = vst [vmem:[%s3750 + $0x18] sm:$0xff] %v3737
        %3755 = vst [vmem:[%s3750 + $0x20] sm:$0xff] %v3738
        %3756 = vst [vmem:[%s3750 + $0x28] sm:$0xff] %v3739
        %3757 = vst [vmem:[%s3750 + $0x30] sm:$0xff] %v3740
        %3758 = vst [vmem:[%s3750 + $0x38] sm:$0xff] %v3741
        %3759 = vst [vmem:[%s3750 + $0x40] sm:$0xff] %v3742
        %3760 = vst [vmem:[%s3750 + $0x48] sm:$0xff] %v3743
        %3761 = vst [vmem:[%s3750 + $0x50] sm:$0xff] %v3744
        %3762 = vst [vmem:[%s3750 + $0x58] sm:$0xff] %v3745
        %3763 = vst [vmem:[%s3750 + $0x60] sm:$0xff] %v3746
        %3764 = vst [vmem:[%s3750 + $0x68] sm:$0xff] %v3747
        %3765 = vst [vmem:[%s3750 + $0x70] sm:$0xff] %v3748
        %3766 = vst [vmem:[%s3750 + $0x78] sm:$0xff] %v3749
        %v3767 = vmul.f32 %v3734, 0.5
        %v3768 = vmul.f32 %v3735, 0.5
        %v3769 = vmul.f32 %v3736, 0.5
        %v3770 = vmul.f32 %v3737, 0.5
        %v3771 = vmul.f32 %v3738, 0.5
        %v3772 = vmul.f32 %v3739, 0.5
        %v3773 = vmul.f32 %v3740, 0.5
        %v3774 = vmul.f32 %v3741, 0.5
        %v3775 = vmul.f32 %v3742, 0.5
        %v3776 = vmul.f32 %v3743, 0.5
        %v3777 = vmul.f32 %v3744, 0.5
        %v3778 = vmul.f32 %v3745, 0.5
        %v3779 = vmul.f32 %v3746, 0.5
        %v3780 = vmul.f32 %v3747, 0.5
        %v3781 = vmul.f32 %v3748, 0.5
        %v3782 = vmul.f32 %v3749, 0.5
        %v3783 = vtanh.pop %v3767
        %v3784 = vtanh.pop %v3768
        %v3785 = vtanh.pop %v3769
        %v3786 = vtanh.pop %v3770
        %v3787 = vtanh.pop %v3771
        %v3788 = vtanh.pop %v3772
        %v3789 = vtanh.pop %v3773
        %v3790 = vtanh.pop %v3774
        %v3791 = vtanh.pop %v3775
        %v3792 = vtanh.pop %v3776
        %v3793 = vtanh.pop %v3777
        %v3794 = vtanh.pop %v3778
        %v3795 = vtanh.pop %v3779
        %v3796 = vtanh.pop %v3780
        %v3797 = vtanh.pop %v3781
        %v3798 = vtanh.pop %v3782
        %v3799 = vadd.f32 %v3783, 1.0
        %v3800 = vadd.f32 %v3784, 1.0
        %v3801 = vadd.f32 %v3785, 1.0
        %v3802 = vadd.f32 %v3786, 1.0
        %v3803 = vadd.f32 %v3787, 1.0
        %v3804 = vadd.f32 %v3788, 1.0
        %v3805 = vadd.f32 %v3789, 1.0
        %v3806 = vadd.f32 %v3790, 1.0
        %v3807 = vadd.f32 %v3791, 1.0
        %v3808 = vadd.f32 %v3792, 1.0
        %v3809 = vadd.f32 %v3793, 1.0
        %v3810 = vadd.f32 %v3794, 1.0
        %v3811 = vadd.f32 %v3795, 1.0
        %v3812 = vadd.f32 %v3796, 1.0
        %v3813 = vadd.f32 %v3797, 1.0
        %v3814 = vadd.f32 %v3798, 1.0
        %v3815 = vmul.f32 %v3799, 0.5
        %v3816 = vmul.f32 %v3800, 0.5
        %v3817 = vmul.f32 %v3801, 0.5
        %v3818 = vmul.f32 %v3802, 0.5
        %v3819 = vmul.f32 %v3803, 0.5
        %v3820 = vmul.f32 %v3804, 0.5
        %v3821 = vmul.f32 %v3805, 0.5
        %v3822 = vmul.f32 %v3806, 0.5
        %v3823 = vmul.f32 %v3807, 0.5
        %v3824 = vmul.f32 %v3808, 0.5
        %v3825 = vmul.f32 %v3809, 0.5
        %v3826 = vmul.f32 %v3810, 0.5
        %v3827 = vmul.f32 %v3811, 0.5
        %v3828 = vmul.f32 %v3812, 0.5
        %v3829 = vmul.f32 %v3813, 0.5
        %v3830 = vmul.f32 %v3814, 0.5
        %v3831 = vpack.c.bf16 %v3816, %v3815
        %v3832 = vpack.c.bf16 %v3818, %v3817
        %v3833 = vpack.c.bf16 %v3820, %v3819
        %v3834 = vpack.c.bf16 %v3822, %v3821
        %v3835 = vpack.c.bf16 %v3824, %v3823
        %v3836 = vpack.c.bf16 %v3826, %v3825
        %v3837 = vpack.c.bf16 %v3828, %v3827
        %v3838 = vpack.c.bf16 %v3830, %v3829
        %s3839 = scalar_lea.vmem %s471, 128 [#allocation17]
        %3840 = vst [vmem:[%s3839] sm:$0xff] %v3831
        %3841 = vst [vmem:[%s3839 + $0x8] sm:$0xff] %v3832
        %3842 = vst [vmem:[%s3839 + $0x10] sm:$0xff] %v3833
        %3843 = vst [vmem:[%s3839 + $0x18] sm:$0xff] %v3834
        %3844 = vst [vmem:[%s3839 + $0x20] sm:$0xff] %v3835
        %3845 = vst [vmem:[%s3839 + $0x28] sm:$0xff] %v3836
        %3846 = vst [vmem:[%s3839 + $0x30] sm:$0xff] %v3837
        %3847 = vst [vmem:[%s3839 + $0x38] sm:$0xff] %v3838
        %s3848 = sld [smem:[#allocation4 + $0x6]]
        %v3849 = vstv %s3848
        %v3850 = vmul.f32 %v504, %v3849
        %v3851 = vmul.f32 %v505, %v3849
        %v3852 = vmul.f32 %v506, %v3849
        %v3853 = vmul.f32 %v507, %v3849
        %v3854 = vmul.f32 %v508, %v3849
        %v3855 = vmul.f32 %v509, %v3849
        %v3856 = vmul.f32 %v510, %v3849
        %v3857 = vmul.f32 %v511, %v3849
        %v3858 = vmul.f32 %v512, %v3849
        %v3859 = vmul.f32 %v513, %v3849
        %v3860 = vmul.f32 %v514, %v3849
        %v3861 = vmul.f32 %v515, %v3849
        %v3862 = vmul.f32 %v516, %v3849
        %v3863 = vmul.f32 %v517, %v3849
        %v3864 = vmul.f32 %v518, %v3849
        %v3865 = vmul.f32 %v519, %v3849
        %s3866 = sld [smem:[#allocation4 + $0x7]]
        %v3867 = vstv %s3866
        %v3868 = vmul.f32 %v521, %v3867
        %v3869 = vmul.f32 %v522, %v3867
        %v3870 = vmul.f32 %v523, %v3867
        %v3871 = vmul.f32 %v524, %v3867
        %v3872 = vmul.f32 %v525, %v3867
        %v3873 = vmul.f32 %v526, %v3867
        %v3874 = vmul.f32 %v527, %v3867
        %v3875 = vmul.f32 %v528, %v3867
        %v3876 = vmul.f32 %v529, %v3867
        %v3877 = vmul.f32 %v530, %v3867
        %v3878 = vmul.f32 %v531, %v3867
        %v3879 = vmul.f32 %v532, %v3867
        %v3880 = vmul.f32 %v533, %v3867
        %v3881 = vmul.f32 %v534, %v3867
        %v3882 = vmul.f32 %v535, %v3867
        %v3883 = vmul.f32 %v536, %v3867
        %v3884 = vadd.f32 %v3850, %v3868
        %v3885 = vadd.f32 %v3851, %v3869
        %v3886 = vadd.f32 %v3852, %v3870
        %v3887 = vadd.f32 %v3853, %v3871
        %v3888 = vadd.f32 %v3854, %v3872
        %v3889 = vadd.f32 %v3855, %v3873
        %v3890 = vadd.f32 %v3856, %v3874
        %v3891 = vadd.f32 %v3857, %v3875
        %v3892 = vadd.f32 %v3858, %v3876
        %v3893 = vadd.f32 %v3859, %v3877
        %v3894 = vadd.f32 %v3860, %v3878
        %v3895 = vadd.f32 %v3861, %v3879
        %v3896 = vadd.f32 %v3862, %v3880
        %v3897 = vadd.f32 %v3863, %v3881
        %v3898 = vadd.f32 %v3864, %v3882
        %v3899 = vadd.f32 %v3865, %v3883
        %s3900 = sld [smem:[#allocation4 + $0x8]]
        %v3901 = vstv %s3900
        %v3902 = vmul.f32 %v538, %v3901
        %v3903 = vmul.f32 %v539, %v3901
        %v3904 = vmul.f32 %v540, %v3901
        %v3905 = vmul.f32 %v541, %v3901
        %v3906 = vmul.f32 %v542, %v3901
        %v3907 = vmul.f32 %v543, %v3901
        %v3908 = vmul.f32 %v544, %v3901
        %v3909 = vmul.f32 %v545, %v3901
        %v3910 = vmul.f32 %v546, %v3901
        %v3911 = vmul.f32 %v547, %v3901
        %v3912 = vmul.f32 %v548, %v3901
        %v3913 = vmul.f32 %v549, %v3901
        %v3914 = vmul.f32 %v550, %v3901
        %v3915 = vmul.f32 %v551, %v3901
        %v3916 = vmul.f32 %v552, %v3901
        %v3917 = vmul.f32 %v553, %v3901
        %v3918 = vadd.f32 %v3884, %v3902
        %v3919 = vadd.f32 %v3885, %v3903
        %v3920 = vadd.f32 %v3886, %v3904
        %v3921 = vadd.f32 %v3887, %v3905
        %v3922 = vadd.f32 %v3888, %v3906
        %v3923 = vadd.f32 %v3889, %v3907
        %v3924 = vadd.f32 %v3890, %v3908
        %v3925 = vadd.f32 %v3891, %v3909
        %v3926 = vadd.f32 %v3892, %v3910
        %v3927 = vadd.f32 %v3893, %v3911
        %v3928 = vadd.f32 %v3894, %v3912
        %v3929 = vadd.f32 %v3895, %v3913
        %v3930 = vadd.f32 %v3896, %v3914
        %v3931 = vadd.f32 %v3897, %v3915
        %v3932 = vadd.f32 %v3898, %v3916
        %v3933 = vadd.f32 %v3899, %v3917
        %s3934 = sld [smem:[#allocation5 + $0x2]]
        %v3935 = vstv %s3934
        %v3936 = vadd.f32 %v3918, %v3935
        %v3937 = vadd.f32 %v3919, %v3935
        %v3938 = vadd.f32 %v3920, %v3935
        %v3939 = vadd.f32 %v3921, %v3935
        %v3940 = vadd.f32 %v3922, %v3935
        %v3941 = vadd.f32 %v3923, %v3935
        %v3942 = vadd.f32 %v3924, %v3935
        %v3943 = vadd.f32 %v3925, %v3935
        %v3944 = vadd.f32 %v3926, %v3935
        %v3945 = vadd.f32 %v3927, %v3935
        %v3946 = vadd.f32 %v3928, %v3935
        %v3947 = vadd.f32 %v3929, %v3935
        %v3948 = vadd.f32 %v3930, %v3935
        %v3949 = vadd.f32 %v3931, %v3935
        %v3950 = vadd.f32 %v3932, %v3935
        %v3951 = vadd.f32 %v3933, %v3935
        %s3952 = scalar_lea.vmem %s443, 256 [#allocation11]
        %3953 = vst [vmem:[%s3952] sm:$0xff] %v3936
        %3954 = vst [vmem:[%s3952 + $0x8] sm:$0xff] %v3937
        %3955 = vst [vmem:[%s3952 + $0x10] sm:$0xff] %v3938
        %3956 = vst [vmem:[%s3952 + $0x18] sm:$0xff] %v3939
        %3957 = vst [vmem:[%s3952 + $0x20] sm:$0xff] %v3940
        %3958 = vst [vmem:[%s3952 + $0x28] sm:$0xff] %v3941
        %3959 = vst [vmem:[%s3952 + $0x30] sm:$0xff] %v3942
        %3960 = vst [vmem:[%s3952 + $0x38] sm:$0xff] %v3943
        %3961 = vst [vmem:[%s3952 + $0x40] sm:$0xff] %v3944
        %3962 = vst [vmem:[%s3952 + $0x48] sm:$0xff] %v3945
        %3963 = vst [vmem:[%s3952 + $0x50] sm:$0xff] %v3946
        %3964 = vst [vmem:[%s3952 + $0x58] sm:$0xff] %v3947
        %3965 = vst [vmem:[%s3952 + $0x60] sm:$0xff] %v3948
        %3966 = vst [vmem:[%s3952 + $0x68] sm:$0xff] %v3949
        %3967 = vst [vmem:[%s3952 + $0x70] sm:$0xff] %v3950
        %3968 = vst [vmem:[%s3952 + $0x78] sm:$0xff] %v3951
        %s3969 = sld [smem:[#allocation4 + $0x9]]
        %v3970 = vstv %s3969
        %v3971 = vmul.f32 %v504, %v3970
        %v3972 = vmul.f32 %v505, %v3970
        %v3973 = vmul.f32 %v506, %v3970
        %v3974 = vmul.f32 %v507, %v3970
        %v3975 = vmul.f32 %v508, %v3970
        %v3976 = vmul.f32 %v509, %v3970
        %v3977 = vmul.f32 %v510, %v3970
        %v3978 = vmul.f32 %v511, %v3970
        %v3979 = vmul.f32 %v512, %v3970
        %v3980 = vmul.f32 %v513, %v3970
        %v3981 = vmul.f32 %v514, %v3970
        %v3982 = vmul.f32 %v515, %v3970
        %v3983 = vmul.f32 %v516, %v3970
        %v3984 = vmul.f32 %v517, %v3970
        %v3985 = vmul.f32 %v518, %v3970
        %v3986 = vmul.f32 %v519, %v3970
        %s3987 = sld [smem:[#allocation4 + $0xa]]
        %v3988 = vstv %s3987
        %v3989 = vmul.f32 %v521, %v3988
        %v3990 = vmul.f32 %v522, %v3988
        %v3991 = vmul.f32 %v523, %v3988
        %v3992 = vmul.f32 %v524, %v3988
        %v3993 = vmul.f32 %v525, %v3988
        %v3994 = vmul.f32 %v526, %v3988
        %v3995 = vmul.f32 %v527, %v3988
        %v3996 = vmul.f32 %v528, %v3988
        %v3997 = vmul.f32 %v529, %v3988
        %v3998 = vmul.f32 %v530, %v3988
        %v3999 = vmul.f32 %v531, %v3988
        %v4000 = vmul.f32 %v532, %v3988
        %v4001 = vmul.f32 %v533, %v3988
        %v4002 = vmul.f32 %v534, %v3988
        %v4003 = vmul.f32 %v535, %v3988
        %v4004 = vmul.f32 %v536, %v3988
        %v4005 = vadd.f32 %v3971, %v3989
        %v4006 = vadd.f32 %v3972, %v3990
        %v4007 = vadd.f32 %v3973, %v3991
        %v4008 = vadd.f32 %v3974, %v3992
        %v4009 = vadd.f32 %v3975, %v3993
        %v4010 = vadd.f32 %v3976, %v3994
        %v4011 = vadd.f32 %v3977, %v3995
        %v4012 = vadd.f32 %v3978, %v3996
        %v4013 = vadd.f32 %v3979, %v3997
        %v4014 = vadd.f32 %v3980, %v3998
        %v4015 = vadd.f32 %v3981, %v3999
        %v4016 = vadd.f32 %v3982, %v4000
        %v4017 = vadd.f32 %v3983, %v4001
        %v4018 = vadd.f32 %v3984, %v4002
        %v4019 = vadd.f32 %v3985, %v4003
        %v4020 = vadd.f32 %v3986, %v4004
        %s4021 = sld [smem:[#allocation4 + $0xb]]
        %v4022 = vstv %s4021
        %v4023 = vmul.f32 %v538, %v4022
        %v4024 = vmul.f32 %v539, %v4022
        %v4025 = vmul.f32 %v540, %v4022
        %v4026 = vmul.f32 %v541, %v4022
        %v4027 = vmul.f32 %v542, %v4022
        %v4028 = vmul.f32 %v543, %v4022
        %v4029 = vmul.f32 %v544, %v4022
        %v4030 = vmul.f32 %v545, %v4022
        %v4031 = vmul.f32 %v546, %v4022
        %v4032 = vmul.f32 %v547, %v4022
        %v4033 = vmul.f32 %v548, %v4022
        %v4034 = vmul.f32 %v549, %v4022
        %v4035 = vmul.f32 %v550, %v4022
        %v4036 = vmul.f32 %v551, %v4022
        %v4037 = vmul.f32 %v552, %v4022
        %v4038 = vmul.f32 %v553, %v4022
        %v4039 = vadd.f32 %v4005, %v4023
        %v4040 = vadd.f32 %v4006, %v4024
        %v4041 = vadd.f32 %v4007, %v4025
        %v4042 = vadd.f32 %v4008, %v4026
        %v4043 = vadd.f32 %v4009, %v4027
        %v4044 = vadd.f32 %v4010, %v4028
        %v4045 = vadd.f32 %v4011, %v4029
        %v4046 = vadd.f32 %v4012, %v4030
        %v4047 = vadd.f32 %v4013, %v4031
        %v4048 = vadd.f32 %v4014, %v4032
        %v4049 = vadd.f32 %v4015, %v4033
        %v4050 = vadd.f32 %v4016, %v4034
        %v4051 = vadd.f32 %v4017, %v4035
        %v4052 = vadd.f32 %v4018, %v4036
        %v4053 = vadd.f32 %v4019, %v4037
        %v4054 = vadd.f32 %v4020, %v4038
        %s4055 = sld [smem:[#allocation5 + $0x3]]
        %v4056 = vstv %s4055
        %v4057 = vadd.f32 %v4039, %v4056
        %v4058 = vadd.f32 %v4040, %v4056
        %v4059 = vadd.f32 %v4041, %v4056
        %v4060 = vadd.f32 %v4042, %v4056
        %v4061 = vadd.f32 %v4043, %v4056
        %v4062 = vadd.f32 %v4044, %v4056
        %v4063 = vadd.f32 %v4045, %v4056
        %v4064 = vadd.f32 %v4046, %v4056
        %v4065 = vadd.f32 %v4047, %v4056
        %v4066 = vadd.f32 %v4048, %v4056
        %v4067 = vadd.f32 %v4049, %v4056
        %v4068 = vadd.f32 %v4050, %v4056
        %v4069 = vadd.f32 %v4051, %v4056
        %v4070 = vadd.f32 %v4052, %v4056
        %v4071 = vadd.f32 %v4053, %v4056
        %v4072 = vadd.f32 %v4054, %v4056
        %s4073 = scalar_lea.vmem %s443, 384 [#allocation11]
        %4074 = vst [vmem:[%s4073] sm:$0xff] %v4057
        %4075 = vst [vmem:[%s4073 + $0x8] sm:$0xff] %v4058
        %4076 = vst [vmem:[%s4073 + $0x10] sm:$0xff] %v4059
        %4077 = vst [vmem:[%s4073 + $0x18] sm:$0xff] %v4060
        %4078 = vst [vmem:[%s4073 + $0x20] sm:$0xff] %v4061
        %4079 = vst [vmem:[%s4073 + $0x28] sm:$0xff] %v4062
        %4080 = vst [vmem:[%s4073 + $0x30] sm:$0xff] %v4063
        %4081 = vst [vmem:[%s4073 + $0x38] sm:$0xff] %v4064
        %4082 = vst [vmem:[%s4073 + $0x40] sm:$0xff] %v4065
        %4083 = vst [vmem:[%s4073 + $0x48] sm:$0xff] %v4066
        %4084 = vst [vmem:[%s4073 + $0x50] sm:$0xff] %v4067
        %4085 = vst [vmem:[%s4073 + $0x58] sm:$0xff] %v4068
        %4086 = vst [vmem:[%s4073 + $0x60] sm:$0xff] %v4069
        %4087 = vst [vmem:[%s4073 + $0x68] sm:$0xff] %v4070
        %4088 = vst [vmem:[%s4073 + $0x70] sm:$0xff] %v4071
        %4089 = vst [vmem:[%s4073 + $0x78] sm:$0xff] %v4072
        %4090 = vmax.xlane.f32.xlu0 %v3936
        %v4091 = vpop.xlane.xlu0 %4090
        %4092 = vmax.xlane.f32.xlu0 %v3937
        %v4093 = vpop.xlane.xlu0 %4092
        %4094 = vmax.xlane.f32.xlu0 %v3938
        %v4095 = vpop.xlane.xlu0 %4094
        %4096 = vmax.xlane.f32.xlu0 %v3939
        %v4097 = vpop.xlane.xlu0 %4096
        %4098 = vmax.xlane.f32.xlu0 %v3940
        %v4099 = vpop.xlane.xlu0 %4098
        %4100 = vmax.xlane.f32.xlu0 %v3941
        %v4101 = vpop.xlane.xlu0 %4100
        %4102 = vmax.xlane.f32.xlu0 %v3942
        %v4103 = vpop.xlane.xlu0 %4102
        %4104 = vmax.xlane.f32.xlu0 %v3943
        %v4105 = vpop.xlane.xlu0 %4104
        %4106 = vmax.xlane.f32.xlu0 %v3944
        %v4107 = vpop.xlane.xlu0 %4106
        %4108 = vmax.xlane.f32.xlu0 %v3945
        %v4109 = vpop.xlane.xlu0 %4108
        %4110 = vmax.xlane.f32.xlu0 %v3946
        %v4111 = vpop.xlane.xlu0 %4110
        %4112 = vmax.xlane.f32.xlu0 %v3947
        %v4113 = vpop.xlane.xlu0 %4112
        %4114 = vmax.xlane.f32.xlu0 %v3948
        %v4115 = vpop.xlane.xlu0 %4114
        %4116 = vmax.xlane.f32.xlu0 %v3949
        %v4117 = vpop.xlane.xlu0 %4116
        %4118 = vmax.xlane.f32.xlu0 %v3950
        %v4119 = vpop.xlane.xlu0 %4118
        %4120 = vmax.xlane.f32.xlu0 %v3951
        %v4121 = vpop.xlane.xlu0 %4120
        %v4122 = vsub.f32 %v3936, %v4091
        %v4123 = vsub.f32 %v3937, %v4093
        %v4124 = vsub.f32 %v3938, %v4095
        %v4125 = vsub.f32 %v3939, %v4097
        %v4126 = vsub.f32 %v3940, %v4099
        %v4127 = vsub.f32 %v3941, %v4101
        %v4128 = vsub.f32 %v3942, %v4103
        %v4129 = vsub.f32 %v3943, %v4105
        %v4130 = vsub.f32 %v3944, %v4107
        %v4131 = vsub.f32 %v3945, %v4109
        %v4132 = vsub.f32 %v3946, %v4111
        %v4133 = vsub.f32 %v3947, %v4113
        %v4134 = vsub.f32 %v3948, %v4115
        %v4135 = vsub.f32 %v3949, %v4117
        %v4136 = vsub.f32 %v3950, %v4119
        %v4137 = vsub.f32 %v3951, %v4121
        %v4138 = vmul.f32 %v4122, 1.442695
        %v4139 = vpow.pop %v4138
        %v4140 = vmul.f32 %v4123, 1.442695
        %v4141 = vpow.pop %v4140
        %v4142 = vmul.f32 %v4124, 1.442695
        %v4143 = vpow.pop %v4142
        %v4144 = vmul.f32 %v4125, 1.442695
        %v4145 = vpow.pop %v4144
        %v4146 = vmul.f32 %v4126, 1.442695
        %v4147 = vpow.pop %v4146
        %v4148 = vmul.f32 %v4127, 1.442695
        %v4149 = vpow.pop %v4148
        %v4150 = vmul.f32 %v4128, 1.442695
        %v4151 = vpow.pop %v4150
        %v4152 = vmul.f32 %v4129, 1.442695
        %v4153 = vpow.pop %v4152
        %v4154 = vmul.f32 %v4130, 1.442695
        %v4155 = vpow.pop %v4154
        %v4156 = vmul.f32 %v4131, 1.442695
        %v4157 = vpow.pop %v4156
        %v4158 = vmul.f32 %v4132, 1.442695
        %v4159 = vpow.pop %v4158
        %v4160 = vmul.f32 %v4133, 1.442695
        %v4161 = vpow.pop %v4160
        %v4162 = vmul.f32 %v4134, 1.442695
        %v4163 = vpow.pop %v4162
        %v4164 = vmul.f32 %v4135, 1.442695
        %v4165 = vpow.pop %v4164
        %v4166 = vmul.f32 %v4136, 1.442695
        %v4167 = vpow.pop %v4166
        %v4168 = vmul.f32 %v4137, 1.442695
        %v4169 = vpow.pop %v4168
        %4170 = vadd.xlane.f32.xlu0 %v4139
        %v4171 = vpop.xlane.xlu0 %4170
        %4172 = vadd.xlane.f32.xlu0 %v4141
        %v4173 = vpop.xlane.xlu0 %4172
        %4174 = vadd.xlane.f32.xlu0 %v4143
        %v4175 = vpop.xlane.xlu0 %4174
        %4176 = vadd.xlane.f32.xlu0 %v4145
        %v4177 = vpop.xlane.xlu0 %4176
        %4178 = vadd.xlane.f32.xlu0 %v4147
        %v4179 = vpop.xlane.xlu0 %4178
        %4180 = vadd.xlane.f32.xlu0 %v4149
        %v4181 = vpop.xlane.xlu0 %4180
        %4182 = vadd.xlane.f32.xlu0 %v4151
        %v4183 = vpop.xlane.xlu0 %4182
        %4184 = vadd.xlane.f32.xlu0 %v4153
        %v4185 = vpop.xlane.xlu0 %4184
        %4186 = vadd.xlane.f32.xlu0 %v4155
        %v4187 = vpop.xlane.xlu0 %4186
        %4188 = vadd.xlane.f32.xlu0 %v4157
        %v4189 = vpop.xlane.xlu0 %4188
        %4190 = vadd.xlane.f32.xlu0 %v4159
        %v4191 = vpop.xlane.xlu0 %4190
        %4192 = vadd.xlane.f32.xlu0 %v4161
        %v4193 = vpop.xlane.xlu0 %4192
        %4194 = vadd.xlane.f32.xlu0 %v4163
        %v4195 = vpop.xlane.xlu0 %4194
        %4196 = vadd.xlane.f32.xlu0 %v4165
        %v4197 = vpop.xlane.xlu0 %4196
        %4198 = vadd.xlane.f32.xlu0 %v4167
        %v4199 = vpop.xlane.xlu0 %4198
        %4200 = vadd.xlane.f32.xlu0 %v4169
        %v4201 = vpop.xlane.xlu0 %4200
        %v4202 = vlog2.pop %v4171
        %v4203 = vmul.f32 %v4202, 0.6931472
        %v4204 = vlog2.pop %v4173
        %v4205 = vmul.f32 %v4204, 0.6931472
        %v4206 = vlog2.pop %v4175
        %v4207 = vmul.f32 %v4206, 0.6931472
        %v4208 = vlog2.pop %v4177
        %v4209 = vmul.f32 %v4208, 0.6931472
        %v4210 = vlog2.pop %v4179
        %v4211 = vmul.f32 %v4210, 0.6931472
        %v4212 = vlog2.pop %v4181
        %v4213 = vmul.f32 %v4212, 0.6931472
        %v4214 = vlog2.pop %v4183
        %v4215 = vmul.f32 %v4214, 0.6931472
        %v4216 = vlog2.pop %v4185
        %v4217 = vmul.f32 %v4216, 0.6931472
        %v4218 = vlog2.pop %v4187
        %v4219 = vmul.f32 %v4218, 0.6931472
        %v4220 = vlog2.pop %v4189
        %v4221 = vmul.f32 %v4220, 0.6931472
        %v4222 = vlog2.pop %v4191
        %v4223 = vmul.f32 %v4222, 0.6931472
        %v4224 = vlog2.pop %v4193
        %v4225 = vmul.f32 %v4224, 0.6931472
        %v4226 = vlog2.pop %v4195
        %v4227 = vmul.f32 %v4226, 0.6931472
        %v4228 = vlog2.pop %v4197
        %v4229 = vmul.f32 %v4228, 0.6931472
        %v4230 = vlog2.pop %v4199
        %v4231 = vmul.f32 %v4230, 0.6931472
        %v4232 = vlog2.pop %v4201
        %v4233 = vmul.f32 %v4232, 0.6931472
        %v4234 = vadd.f32 %v4091, %v4203
        %v4235 = vadd.f32 %v4093, %v4205
        %v4236 = vadd.f32 %v4095, %v4207
        %v4237 = vadd.f32 %v4097, %v4209
        %v4238 = vadd.f32 %v4099, %v4211
        %v4239 = vadd.f32 %v4101, %v4213
        %v4240 = vadd.f32 %v4103, %v4215
        %v4241 = vadd.f32 %v4105, %v4217
        %v4242 = vadd.f32 %v4107, %v4219
        %v4243 = vadd.f32 %v4109, %v4221
        %v4244 = vadd.f32 %v4111, %v4223
        %v4245 = vadd.f32 %v4113, %v4225
        %v4246 = vadd.f32 %v4115, %v4227
        %v4247 = vadd.f32 %v4117, %v4229
        %v4248 = vadd.f32 %v4119, %v4231
        %v4249 = vadd.f32 %v4121, %v4233
        %v4250 = vsub.f32 %v4234, 4.8520303
        %v4251 = vsub.f32 %v4235, 4.8520303
        %v4252 = vsub.f32 %v4236, 4.8520303
        %v4253 = vsub.f32 %v4237, 4.8520303
        %v4254 = vsub.f32 %v4238, 4.8520303
        %v4255 = vsub.f32 %v4239, 4.8520303
        %v4256 = vsub.f32 %v4240, 4.8520303
        %v4257 = vsub.f32 %v4241, 4.8520303
        %v4258 = vsub.f32 %v4242, 4.8520303
        %v4259 = vsub.f32 %v4243, 4.8520303
        %v4260 = vsub.f32 %v4244, 4.8520303
        %v4261 = vsub.f32 %v4245, 4.8520303
        %v4262 = vsub.f32 %v4246, 4.8520303
        %v4263 = vsub.f32 %v4247, 4.8520303
        %v4264 = vsub.f32 %v4248, 4.8520303
        %v4265 = vsub.f32 %v4249, 4.8520303
        %4266 = vmax.xlane.f32.xlu0 %v4057
        %v4267 = vpop.xlane.xlu0 %4266
        %4268 = vmax.xlane.f32.xlu0 %v4058
        %v4269 = vpop.xlane.xlu0 %4268
        %4270 = vmax.xlane.f32.xlu0 %v4059
        %v4271 = vpop.xlane.xlu0 %4270
        %4272 = vmax.xlane.f32.xlu0 %v4060
        %v4273 = vpop.xlane.xlu0 %4272
        %4274 = vmax.xlane.f32.xlu0 %v4061
        %v4275 = vpop.xlane.xlu0 %4274
        %4276 = vmax.xlane.f32.xlu0 %v4062
        %v4277 = vpop.xlane.xlu0 %4276
        %4278 = vmax.xlane.f32.xlu0 %v4063
        %v4279 = vpop.xlane.xlu0 %4278
        %4280 = vmax.xlane.f32.xlu0 %v4064
        %v4281 = vpop.xlane.xlu0 %4280
        %4282 = vmax.xlane.f32.xlu0 %v4065
        %v4283 = vpop.xlane.xlu0 %4282
        %4284 = vmax.xlane.f32.xlu0 %v4066
        %v4285 = vpop.xlane.xlu0 %4284
        %4286 = vmax.xlane.f32.xlu0 %v4067
        %v4287 = vpop.xlane.xlu0 %4286
        %4288 = vmax.xlane.f32.xlu0 %v4068
        %v4289 = vpop.xlane.xlu0 %4288
        %4290 = vmax.xlane.f32.xlu0 %v4069
        %v4291 = vpop.xlane.xlu0 %4290
        %4292 = vmax.xlane.f32.xlu0 %v4070
        %v4293 = vpop.xlane.xlu0 %4292
        %4294 = vmax.xlane.f32.xlu0 %v4071
        %v4295 = vpop.xlane.xlu0 %4294
        %4296 = vmax.xlane.f32.xlu0 %v4072
        %v4297 = vpop.xlane.xlu0 %4296
        %v4298 = vsub.f32 %v4057, %v4267
        %v4299 = vsub.f32 %v4058, %v4269
        %v4300 = vsub.f32 %v4059, %v4271
        %v4301 = vsub.f32 %v4060, %v4273
        %v4302 = vsub.f32 %v4061, %v4275
        %v4303 = vsub.f32 %v4062, %v4277
        %v4304 = vsub.f32 %v4063, %v4279
        %v4305 = vsub.f32 %v4064, %v4281
        %v4306 = vsub.f32 %v4065, %v4283
        %v4307 = vsub.f32 %v4066, %v4285
        %v4308 = vsub.f32 %v4067, %v4287
        %v4309 = vsub.f32 %v4068, %v4289
        %v4310 = vsub.f32 %v4069, %v4291
        %v4311 = vsub.f32 %v4070, %v4293
        %v4312 = vsub.f32 %v4071, %v4295
        %v4313 = vsub.f32 %v4072, %v4297
        %v4314 = vmul.f32 %v4298, 1.442695
        %v4315 = vpow.pop %v4314
        %v4316 = vmul.f32 %v4299, 1.442695
        %v4317 = vpow.pop %v4316
        %v4318 = vmul.f32 %v4300, 1.442695
        %v4319 = vpow.pop %v4318
        %v4320 = vmul.f32 %v4301, 1.442695
        %v4321 = vpow.pop %v4320
        %v4322 = vmul.f32 %v4302, 1.442695
        %v4323 = vpow.pop %v4322
        %v4324 = vmul.f32 %v4303, 1.442695
        %v4325 = vpow.pop %v4324
        %v4326 = vmul.f32 %v4304, 1.442695
        %v4327 = vpow.pop %v4326
        %v4328 = vmul.f32 %v4305, 1.442695
        %v4329 = vpow.pop %v4328
        %v4330 = vmul.f32 %v4306, 1.442695
        %v4331 = vpow.pop %v4330
        %v4332 = vmul.f32 %v4307, 1.442695
        %v4333 = vpow.pop %v4332
        %v4334 = vmul.f32 %v4308, 1.442695
        %v4335 = vpow.pop %v4334
        %v4336 = vmul.f32 %v4309, 1.442695
        %v4337 = vpow.pop %v4336
        %v4338 = vmul.f32 %v4310, 1.442695
        %v4339 = vpow.pop %v4338
        %v4340 = vmul.f32 %v4311, 1.442695
        %v4341 = vpow.pop %v4340
        %v4342 = vmul.f32 %v4312, 1.442695
        %v4343 = vpow.pop %v4342
        %v4344 = vmul.f32 %v4313, 1.442695
        %v4345 = vpow.pop %v4344
        %4346 = vadd.xlane.f32.xlu0 %v4315
        %v4347 = vpop.xlane.xlu0 %4346
        %4348 = vadd.xlane.f32.xlu0 %v4317
        %v4349 = vpop.xlane.xlu0 %4348
        %4350 = vadd.xlane.f32.xlu0 %v4319
        %v4351 = vpop.xlane.xlu0 %4350
        %4352 = vadd.xlane.f32.xlu0 %v4321
        %v4353 = vpop.xlane.xlu0 %4352
        %4354 = vadd.xlane.f32.xlu0 %v4323
        %v4355 = vpop.xlane.xlu0 %4354
        %4356 = vadd.xlane.f32.xlu0 %v4325
        %v4357 = vpop.xlane.xlu0 %4356
        %4358 = vadd.xlane.f32.xlu0 %v4327
        %v4359 = vpop.xlane.xlu0 %4358
        %4360 = vadd.xlane.f32.xlu0 %v4329
        %v4361 = vpop.xlane.xlu0 %4360
        %4362 = vadd.xlane.f32.xlu0 %v4331
        %v4363 = vpop.xlane.xlu0 %4362
        %4364 = vadd.xlane.f32.xlu0 %v4333
        %v4365 = vpop.xlane.xlu0 %4364
        %4366 = vadd.xlane.f32.xlu0 %v4335
        %v4367 = vpop.xlane.xlu0 %4366
        %4368 = vadd.xlane.f32.xlu0 %v4337
        %v4369 = vpop.xlane.xlu0 %4368
        %4370 = vadd.xlane.f32.xlu0 %v4339
        %v4371 = vpop.xlane.xlu0 %4370
        %4372 = vadd.xlane.f32.xlu0 %v4341
        %v4373 = vpop.xlane.xlu0 %4372
        %4374 = vadd.xlane.f32.xlu0 %v4343
        %v4375 = vpop.xlane.xlu0 %4374
        %4376 = vadd.xlane.f32.xlu0 %v4345
        %v4377 = vpop.xlane.xlu0 %4376
        %v4378 = vlog2.pop %v4347
        %v4379 = vmul.f32 %v4378, 0.6931472
        %v4380 = vlog2.pop %v4349
        %v4381 = vmul.f32 %v4380, 0.6931472
        %v4382 = vlog2.pop %v4351
        %v4383 = vmul.f32 %v4382, 0.6931472
        %v4384 = vlog2.pop %v4353
        %v4385 = vmul.f32 %v4384, 0.6931472
        %v4386 = vlog2.pop %v4355
        %v4387 = vmul.f32 %v4386, 0.6931472
        %v4388 = vlog2.pop %v4357
        %v4389 = vmul.f32 %v4388, 0.6931472
        %v4390 = vlog2.pop %v4359
        %v4391 = vmul.f32 %v4390, 0.6931472
        %v4392 = vlog2.pop %v4361
        %v4393 = vmul.f32 %v4392, 0.6931472
        %v4394 = vlog2.pop %v4363
        %v4395 = vmul.f32 %v4394, 0.6931472
        %v4396 = vlog2.pop %v4365
        %v4397 = vmul.f32 %v4396, 0.6931472
        %v4398 = vlog2.pop %v4367
        %v4399 = vmul.f32 %v4398, 0.6931472
        %v4400 = vlog2.pop %v4369
        %v4401 = vmul.f32 %v4400, 0.6931472
        %v4402 = vlog2.pop %v4371
        %v4403 = vmul.f32 %v4402, 0.6931472
        %v4404 = vlog2.pop %v4373
        %v4405 = vmul.f32 %v4404, 0.6931472
        %v4406 = vlog2.pop %v4375
        %v4407 = vmul.f32 %v4406, 0.6931472
        %v4408 = vlog2.pop %v4377
        %v4409 = vmul.f32 %v4408, 0.6931472
        %v4410 = vadd.f32 %v4267, %v4379
        %v4411 = vadd.f32 %v4269, %v4381
        %v4412 = vadd.f32 %v4271, %v4383
        %v4413 = vadd.f32 %v4273, %v4385
        %v4414 = vadd.f32 %v4275, %v4387
        %v4415 = vadd.f32 %v4277, %v4389
        %v4416 = vadd.f32 %v4279, %v4391
        %v4417 = vadd.f32 %v4281, %v4393
        %v4418 = vadd.f32 %v4283, %v4395
        %v4419 = vadd.f32 %v4285, %v4397
        %v4420 = vadd.f32 %v4287, %v4399
        %v4421 = vadd.f32 %v4289, %v4401
        %v4422 = vadd.f32 %v4291, %v4403
        %v4423 = vadd.f32 %v4293, %v4405
        %v4424 = vadd.f32 %v4295, %v4407
        %v4425 = vadd.f32 %v4297, %v4409
        %v4426 = vsub.f32 %v4410, 4.8520303
        %v4427 = vsub.f32 %v4411, 4.8520303
        %v4428 = vsub.f32 %v4412, 4.8520303
        %v4429 = vsub.f32 %v4413, 4.8520303
        %v4430 = vsub.f32 %v4414, 4.8520303
        %v4431 = vsub.f32 %v4415, 4.8520303
        %v4432 = vsub.f32 %v4416, 4.8520303
        %v4433 = vsub.f32 %v4417, 4.8520303
        %v4434 = vsub.f32 %v4418, 4.8520303
        %v4435 = vsub.f32 %v4419, 4.8520303
        %v4436 = vsub.f32 %v4420, 4.8520303
        %v4437 = vsub.f32 %v4421, 4.8520303
        %v4438 = vsub.f32 %v4422, 4.8520303
        %v4439 = vsub.f32 %v4423, 4.8520303
        %v4440 = vsub.f32 %v4424, 4.8520303
        %v4441 = vsub.f32 %v4425, 4.8520303
        %v4442 = vmul.f32 %v4250, 0.5
        %v4443 = vmul.f32 %v4251, 0.5
        %v4444 = vmul.f32 %v4252, 0.5
        %v4445 = vmul.f32 %v4253, 0.5
        %v4446 = vmul.f32 %v4254, 0.5
        %v4447 = vmul.f32 %v4255, 0.5
        %v4448 = vmul.f32 %v4256, 0.5
        %v4449 = vmul.f32 %v4257, 0.5
        %v4450 = vmul.f32 %v4258, 0.5
        %v4451 = vmul.f32 %v4259, 0.5
        %v4452 = vmul.f32 %v4260, 0.5
        %v4453 = vmul.f32 %v4261, 0.5
        %v4454 = vmul.f32 %v4262, 0.5
        %v4455 = vmul.f32 %v4263, 0.5
        %v4456 = vmul.f32 %v4264, 0.5
        %v4457 = vmul.f32 %v4265, 0.5
        %v4458 = vtanh.pop %v4442
        %v4459 = vtanh.pop %v4443
        %v4460 = vtanh.pop %v4444
        %v4461 = vtanh.pop %v4445
        %v4462 = vtanh.pop %v4446
        %v4463 = vtanh.pop %v4447
        %v4464 = vtanh.pop %v4448
        %v4465 = vtanh.pop %v4449
        %v4466 = vtanh.pop %v4450
        %v4467 = vtanh.pop %v4451
        %v4468 = vtanh.pop %v4452
        %v4469 = vtanh.pop %v4453
        %v4470 = vtanh.pop %v4454
        %v4471 = vtanh.pop %v4455
        %v4472 = vtanh.pop %v4456
        %v4473 = vtanh.pop %v4457
        %v4474 = vadd.f32 %v4458, 1.0
        %v4475 = vadd.f32 %v4459, 1.0
        %v4476 = vadd.f32 %v4460, 1.0
        %v4477 = vadd.f32 %v4461, 1.0
        %v4478 = vadd.f32 %v4462, 1.0
        %v4479 = vadd.f32 %v4463, 1.0
        %v4480 = vadd.f32 %v4464, 1.0
        %v4481 = vadd.f32 %v4465, 1.0
        %v4482 = vadd.f32 %v4466, 1.0
        %v4483 = vadd.f32 %v4467, 1.0
        %v4484 = vadd.f32 %v4468, 1.0
        %v4485 = vadd.f32 %v4469, 1.0
        %v4486 = vadd.f32 %v4470, 1.0
        %v4487 = vadd.f32 %v4471, 1.0
        %v4488 = vadd.f32 %v4472, 1.0
        %v4489 = vadd.f32 %v4473, 1.0
        %v4490 = vmul.f32 %v4474, 0.5
        %v4491 = vmul.f32 %v4475, 0.5
        %v4492 = vmul.f32 %v4476, 0.5
        %v4493 = vmul.f32 %v4477, 0.5
        %v4494 = vmul.f32 %v4478, 0.5
        %v4495 = vmul.f32 %v4479, 0.5
        %v4496 = vmul.f32 %v4480, 0.5
        %v4497 = vmul.f32 %v4481, 0.5
        %v4498 = vmul.f32 %v4482, 0.5
        %v4499 = vmul.f32 %v4483, 0.5
        %v4500 = vmul.f32 %v4484, 0.5
        %v4501 = vmul.f32 %v4485, 0.5
        %v4502 = vmul.f32 %v4486, 0.5
        %v4503 = vmul.f32 %v4487, 0.5
        %v4504 = vmul.f32 %v4488, 0.5
        %v4505 = vmul.f32 %v4489, 0.5
        %v4506 = vmul.f32 %v4426, 0.5
        %v4507 = vmul.f32 %v4427, 0.5
        %v4508 = vmul.f32 %v4428, 0.5
        %v4509 = vmul.f32 %v4429, 0.5
        %v4510 = vmul.f32 %v4430, 0.5
        %v4511 = vmul.f32 %v4431, 0.5
        %v4512 = vmul.f32 %v4432, 0.5
        %v4513 = vmul.f32 %v4433, 0.5
        %v4514 = vmul.f32 %v4434, 0.5
        %v4515 = vmul.f32 %v4435, 0.5
        %v4516 = vmul.f32 %v4436, 0.5
        %v4517 = vmul.f32 %v4437, 0.5
        %v4518 = vmul.f32 %v4438, 0.5
        %v4519 = vmul.f32 %v4439, 0.5
        %v4520 = vmul.f32 %v4440, 0.5
        %v4521 = vmul.f32 %v4441, 0.5
        %v4522 = vtanh.pop %v4506
        %v4523 = vtanh.pop %v4507
        %v4524 = vtanh.pop %v4508
        %v4525 = vtanh.pop %v4509
        %v4526 = vtanh.pop %v4510
        %v4527 = vtanh.pop %v4511
        %v4528 = vtanh.pop %v4512
        %v4529 = vtanh.pop %v4513
        %v4530 = vtanh.pop %v4514
        %v4531 = vtanh.pop %v4515
        %v4532 = vtanh.pop %v4516
        %v4533 = vtanh.pop %v4517
        %v4534 = vtanh.pop %v4518
        %v4535 = vtanh.pop %v4519
        %v4536 = vtanh.pop %v4520
        %v4537 = vtanh.pop %v4521
        %v4538 = vadd.f32 %v4522, 1.0
        %v4539 = vadd.f32 %v4523, 1.0
        %v4540 = vadd.f32 %v4524, 1.0
        %v4541 = vadd.f32 %v4525, 1.0
        %v4542 = vadd.f32 %v4526, 1.0
        %v4543 = vadd.f32 %v4527, 1.0
        %v4544 = vadd.f32 %v4528, 1.0
        %v4545 = vadd.f32 %v4529, 1.0
        %v4546 = vadd.f32 %v4530, 1.0
        %v4547 = vadd.f32 %v4531, 1.0
        %v4548 = vadd.f32 %v4532, 1.0
        %v4549 = vadd.f32 %v4533, 1.0
        %v4550 = vadd.f32 %v4534, 1.0
        %v4551 = vadd.f32 %v4535, 1.0
        %v4552 = vadd.f32 %v4536, 1.0
        %v4553 = vadd.f32 %v4537, 1.0
        %v4554 = vmul.f32 %v4538, 0.5
        %v4555 = vmul.f32 %v4539, 0.5
        %v4556 = vmul.f32 %v4540, 0.5
        %v4557 = vmul.f32 %v4541, 0.5
        %v4558 = vmul.f32 %v4542, 0.5
        %v4559 = vmul.f32 %v4543, 0.5
        %v4560 = vmul.f32 %v4544, 0.5
        %v4561 = vmul.f32 %v4545, 0.5
        %v4562 = vmul.f32 %v4546, 0.5
        %v4563 = vmul.f32 %v4547, 0.5
        %v4564 = vmul.f32 %v4548, 0.5
        %v4565 = vmul.f32 %v4549, 0.5
        %v4566 = vmul.f32 %v4550, 0.5
        %v4567 = vmul.f32 %v4551, 0.5
        %v4568 = vmul.f32 %v4552, 0.5
        %v4569 = vmul.f32 %v4553, 0.5
        %v4570 = vlaneseq
        %v4571 = vand.u32 %v4570, 127
        %vm4572 = vcmp.eq.s32.totalorder %v4571, 0
        %vm4573 = vcmp.eq.s32.totalorder %v4571, 1
        %vm4574 = vcmp.eq.s32.totalorder %v4571, 2
        %v4575 = vsel %vm4574, %v4490, %v4554
        %v4576 = vsel %vm4574, %v4491, %v4555
        %v4577 = vsel %vm4574, %v4492, %v4556
        %v4578 = vsel %vm4574, %v4493, %v4557
        %v4579 = vsel %vm4574, %v4494, %v4558
        %v4580 = vsel %vm4574, %v4495, %v4559
        %v4581 = vsel %vm4574, %v4496, %v4560
        %v4582 = vsel %vm4574, %v4497, %v4561
        %v4583 = vsel %vm4574, %v4498, %v4562
        %v4584 = vsel %vm4574, %v4499, %v4563
        %v4585 = vsel %vm4574, %v4500, %v4564
        %v4586 = vsel %vm4574, %v4501, %v4565
        %v4587 = vsel %vm4574, %v4502, %v4566
        %v4588 = vsel %vm4574, %v4503, %v4567
        %v4589 = vsel %vm4574, %v4504, %v4568
        %v4590 = vsel %vm4574, %v4505, %v4569
        %v4591 = vsel %vm4573, %v4426, %v4575
        %v4592 = vsel %vm4573, %v4427, %v4576
        %v4593 = vsel %vm4573, %v4428, %v4577
        %v4594 = vsel %vm4573, %v4429, %v4578
        %v4595 = vsel %vm4573, %v4430, %v4579
        %v4596 = vsel %vm4573, %v4431, %v4580
        %v4597 = vsel %vm4573, %v4432, %v4581
        %v4598 = vsel %vm4573, %v4433, %v4582
        %v4599 = vsel %vm4573, %v4434, %v4583
        %v4600 = vsel %vm4573, %v4435, %v4584
        %v4601 = vsel %vm4573, %v4436, %v4585
        %v4602 = vsel %vm4573, %v4437, %v4586
        %v4603 = vsel %vm4573, %v4438, %v4587
        %v4604 = vsel %vm4573, %v4439, %v4588
        %v4605 = vsel %vm4573, %v4440, %v4589
        %v4606 = vsel %vm4573, %v4441, %v4590
        %v4607 = vsel %vm4572, %v4250, %v4591
        %v4608 = vsel %vm4572, %v4251, %v4592
        %v4609 = vsel %vm4572, %v4252, %v4593
        %v4610 = vsel %vm4572, %v4253, %v4594
        %v4611 = vsel %vm4572, %v4254, %v4595
        %v4612 = vsel %vm4572, %v4255, %v4596
        %v4613 = vsel %vm4572, %v4256, %v4597
        %v4614 = vsel %vm4572, %v4257, %v4598
        %v4615 = vsel %vm4572, %v4258, %v4599
        %v4616 = vsel %vm4572, %v4259, %v4600
        %v4617 = vsel %vm4572, %v4260, %v4601
        %v4618 = vsel %vm4572, %v4261, %v4602
        %v4619 = vsel %vm4572, %v4262, %v4603
        %v4620 = vsel %vm4572, %v4263, %v4604
        %v4621 = vsel %vm4572, %v4264, %v4605
        %v4622 = vsel %vm4572, %v4265, %v4606
        %vm4623 = vcmask 31744
        %4624 = vst.msk [vmem:[%s478] sm:$0xff] %vm4623, %v4607
        %4625 = vst.msk [vmem:[%s478 + $0x8] sm:$0xff] %vm4623, %v4608
        %4626 = vst.msk [vmem:[%s478 + $0x10] sm:$0xff] %vm4623, %v4609
        %4627 = vst.msk [vmem:[%s478 + $0x18] sm:$0xff] %vm4623, %v4610
        %4628 = vst.msk [vmem:[%s478 + $0x20] sm:$0xff] %vm4623, %v4611
        %4629 = vst.msk [vmem:[%s478 + $0x28] sm:$0xff] %vm4623, %v4612
        %4630 = vst.msk [vmem:[%s478 + $0x30] sm:$0xff] %vm4623, %v4613
        %4631 = vst.msk [vmem:[%s478 + $0x38] sm:$0xff] %vm4623, %v4614
        %4632 = vst.msk [vmem:[%s478 + $0x40] sm:$0xff] %vm4623, %v4615
        %4633 = vst.msk [vmem:[%s478 + $0x48] sm:$0xff] %vm4623, %v4616
        %4634 = vst.msk [vmem:[%s478 + $0x50] sm:$0xff] %vm4623, %v4617
        %4635 = vst.msk [vmem:[%s478 + $0x58] sm:$0xff] %vm4623, %v4618
        %4636 = vst.msk [vmem:[%s478 + $0x60] sm:$0xff] %vm4623, %v4619
        %4637 = vst.msk [vmem:[%s478 + $0x68] sm:$0xff] %vm4623, %v4620
        %4638 = vst.msk [vmem:[%s478 + $0x70] sm:$0xff] %vm4623, %v4621
        %4639 = vst.msk [vmem:[%s478 + $0x78] sm:$0xff] %vm4623, %v4622
        %v4640 = vld [vmem:[%s457] sm:$0xff]
        %v4641 = vld [vmem:[%s457 + $0x8] sm:$0xff]
        %v4642 = vld [vmem:[%s457 + $0x10] sm:$0xff]
        %v4643 = vld [vmem:[%s457 + $0x18] sm:$0xff]
        %v4644 = vld [vmem:[%s457 + $0x20] sm:$0xff]
        %v4645 = vld [vmem:[%s457 + $0x28] sm:$0xff]
        %v4646 = vld [vmem:[%s457 + $0x30] sm:$0xff]
        %v4647 = vld [vmem:[%s457 + $0x38] sm:$0xff]
        %v4648 = vunpack.c.l.bf16 %v4640
        %v4649 = vunpack.c.h.bf16 %v4640
        %v4650 = vunpack.c.l.bf16 %v4641
        %v4651 = vunpack.c.h.bf16 %v4641
        %v4652 = vunpack.c.l.bf16 %v4642
        %v4653 = vunpack.c.h.bf16 %v4642
        %v4654 = vunpack.c.l.bf16 %v4643
        %v4655 = vunpack.c.h.bf16 %v4643
        %v4656 = vunpack.c.l.bf16 %v4644
        %v4657 = vunpack.c.h.bf16 %v4644
        %v4658 = vunpack.c.l.bf16 %v4645
        %v4659 = vunpack.c.h.bf16 %v4645
        %v4660 = vunpack.c.l.bf16 %v4646
        %v4661 = vunpack.c.h.bf16 %v4646
        %v4662 = vunpack.c.l.bf16 %v4647
        %v4663 = vunpack.c.h.bf16 %v4647
        %v4664 = vld [vmem:[%s464] sm:$0xff]
        %v4665 = vld [vmem:[%s464 + $0x8] sm:$0xff]
        %v4666 = vld [vmem:[%s464 + $0x10] sm:$0xff]
        %v4667 = vld [vmem:[%s464 + $0x18] sm:$0xff]
        %v4668 = vld [vmem:[%s464 + $0x20] sm:$0xff]
        %v4669 = vld [vmem:[%s464 + $0x28] sm:$0xff]
        %v4670 = vld [vmem:[%s464 + $0x30] sm:$0xff]
        %v4671 = vld [vmem:[%s464 + $0x38] sm:$0xff]
        %v4672 = vunpack.c.l.bf16 %v4664
        %v4673 = vunpack.c.h.bf16 %v4664
        %v4674 = vunpack.c.l.bf16 %v4665
        %v4675 = vunpack.c.h.bf16 %v4665
        %v4676 = vunpack.c.l.bf16 %v4666
        %v4677 = vunpack.c.h.bf16 %v4666
        %v4678 = vunpack.c.l.bf16 %v4667
        %v4679 = vunpack.c.h.bf16 %v4667
        %v4680 = vunpack.c.l.bf16 %v4668
        %v4681 = vunpack.c.h.bf16 %v4668
        %v4682 = vunpack.c.l.bf16 %v4669
        %v4683 = vunpack.c.h.bf16 %v4669
        %v4684 = vunpack.c.l.bf16 %v4670
        %v4685 = vunpack.c.h.bf16 %v4670
        %v4686 = vunpack.c.l.bf16 %v4671
        %v4687 = vunpack.c.h.bf16 %v4671
        %s4688 = scalar_lea.vmem %s457, 64 [#allocation14]
        %v4689 = vld [vmem:[%s4688] sm:$0xff]
        %v4690 = vld [vmem:[%s4688 + $0x8] sm:$0xff]
        %v4691 = vld [vmem:[%s4688 + $0x10] sm:$0xff]
        %v4692 = vld [vmem:[%s4688 + $0x18] sm:$0xff]
        %v4693 = vld [vmem:[%s4688 + $0x20] sm:$0xff]
        %v4694 = vld [vmem:[%s4688 + $0x28] sm:$0xff]
        %v4695 = vld [vmem:[%s4688 + $0x30] sm:$0xff]
        %v4696 = vld [vmem:[%s4688 + $0x38] sm:$0xff]
        %v4697 = vunpack.c.l.bf16 %v4689
        %v4698 = vunpack.c.h.bf16 %v4689
        %v4699 = vunpack.c.l.bf16 %v4690
        %v4700 = vunpack.c.h.bf16 %v4690
        %v4701 = vunpack.c.l.bf16 %v4691
        %v4702 = vunpack.c.h.bf16 %v4691
        %v4703 = vunpack.c.l.bf16 %v4692
        %v4704 = vunpack.c.h.bf16 %v4692
        %v4705 = vunpack.c.l.bf16 %v4693
        %v4706 = vunpack.c.h.bf16 %v4693
        %v4707 = vunpack.c.l.bf16 %v4694
        %v4708 = vunpack.c.h.bf16 %v4694
        %v4709 = vunpack.c.l.bf16 %v4695
        %v4710 = vunpack.c.h.bf16 %v4695
        %v4711 = vunpack.c.l.bf16 %v4696
        %v4712 = vunpack.c.h.bf16 %v4696
        %s4713 = scalar_lea.vmem %s464, 64 [#allocation15]
        %v4714 = vld [vmem:[%s4713] sm:$0xff]
        %v4715 = vld [vmem:[%s4713 + $0x8] sm:$0xff]
        %v4716 = vld [vmem:[%s4713 + $0x10] sm:$0xff]
        %v4717 = vld [vmem:[%s4713 + $0x18] sm:$0xff]
        %v4718 = vld [vmem:[%s4713 + $0x20] sm:$0xff]
        %v4719 = vld [vmem:[%s4713 + $0x28] sm:$0xff]
        %v4720 = vld [vmem:[%s4713 + $0x30] sm:$0xff]
        %v4721 = vld [vmem:[%s4713 + $0x38] sm:$0xff]
        %v4722 = vunpack.c.l.bf16 %v4714
        %v4723 = vunpack.c.h.bf16 %v4714
        %v4724 = vunpack.c.l.bf16 %v4715
        %v4725 = vunpack.c.h.bf16 %v4715
        %v4726 = vunpack.c.l.bf16 %v4716
        %v4727 = vunpack.c.h.bf16 %v4716
        %v4728 = vunpack.c.l.bf16 %v4717
        %v4729 = vunpack.c.h.bf16 %v4717
        %v4730 = vunpack.c.l.bf16 %v4718
        %v4731 = vunpack.c.h.bf16 %v4718
        %v4732 = vunpack.c.l.bf16 %v4719
        %v4733 = vunpack.c.h.bf16 %v4719
        %v4734 = vunpack.c.l.bf16 %v4720
        %v4735 = vunpack.c.h.bf16 %v4720
        %v4736 = vunpack.c.l.bf16 %v4721
        %v4737 = vunpack.c.h.bf16 %v4721
        %v4738 = vld [vmem:[%s471] sm:$0xff]
        %v4739 = vld [vmem:[%s471 + $0x8] sm:$0xff]
        %v4740 = vld [vmem:[%s471 + $0x10] sm:$0xff]
        %v4741 = vld [vmem:[%s471 + $0x18] sm:$0xff]
        %v4742 = vld [vmem:[%s471 + $0x20] sm:$0xff]
        %v4743 = vld [vmem:[%s471 + $0x28] sm:$0xff]
        %v4744 = vld [vmem:[%s471 + $0x30] sm:$0xff]
        %v4745 = vld [vmem:[%s471 + $0x38] sm:$0xff]
        %v4746 = vunpack.c.l.bf16 %v4738
        %v4747 = vunpack.c.h.bf16 %v4738
        %v4748 = vunpack.c.l.bf16 %v4739
        %v4749 = vunpack.c.h.bf16 %v4739
        %v4750 = vunpack.c.l.bf16 %v4740
        %v4751 = vunpack.c.h.bf16 %v4740
        %v4752 = vunpack.c.l.bf16 %v4741
        %v4753 = vunpack.c.h.bf16 %v4741
        %v4754 = vunpack.c.l.bf16 %v4742
        %v4755 = vunpack.c.h.bf16 %v4742
        %v4756 = vunpack.c.l.bf16 %v4743
        %v4757 = vunpack.c.h.bf16 %v4743
        %v4758 = vunpack.c.l.bf16 %v4744
        %v4759 = vunpack.c.h.bf16 %v4744
        %v4760 = vunpack.c.l.bf16 %v4745
        %v4761 = vunpack.c.h.bf16 %v4745
        %v4762 = vsub.f32 1.0, %v4490
        %v4763 = vsub.f32 1.0, %v4491
        %v4764 = vsub.f32 1.0, %v4492
        %v4765 = vsub.f32 1.0, %v4493
        %v4766 = vsub.f32 1.0, %v4494
        %v4767 = vsub.f32 1.0, %v4495
        %v4768 = vsub.f32 1.0, %v4496
        %v4769 = vsub.f32 1.0, %v4497
        %v4770 = vsub.f32 1.0, %v4498
        %v4771 = vsub.f32 1.0, %v4499
        %v4772 = vsub.f32 1.0, %v4500
        %v4773 = vsub.f32 1.0, %v4501
        %v4774 = vsub.f32 1.0, %v4502
        %v4775 = vsub.f32 1.0, %v4503
        %v4776 = vsub.f32 1.0, %v4504
        %v4777 = vsub.f32 1.0, %v4505
        %v4778 = vsub.f32 1.0, %v4554
        %v4779 = vsub.f32 1.0, %v4555
        %v4780 = vsub.f32 1.0, %v4556
        %v4781 = vsub.f32 1.0, %v4557
        %v4782 = vsub.f32 1.0, %v4558
        %v4783 = vsub.f32 1.0, %v4559
        %v4784 = vsub.f32 1.0, %v4560
        %v4785 = vsub.f32 1.0, %v4561
        %v4786 = vsub.f32 1.0, %v4562
        %v4787 = vsub.f32 1.0, %v4563
        %v4788 = vsub.f32 1.0, %v4564
        %v4789 = vsub.f32 1.0, %v4565
        %v4790 = vsub.f32 1.0, %v4566
        %v4791 = vsub.f32 1.0, %v4567
        %v4792 = vsub.f32 1.0, %v4568
        %v4793 = vsub.f32 1.0, %v4569
        %v4794 = vmul.f32 %v4762, %v4778
        %v4795 = vmul.f32 %v4763, %v4779
        %v4796 = vmul.f32 %v4764, %v4780
        %v4797 = vmul.f32 %v4765, %v4781
        %v4798 = vmul.f32 %v4766, %v4782
        %v4799 = vmul.f32 %v4767, %v4783
        %v4800 = vmul.f32 %v4768, %v4784
        %v4801 = vmul.f32 %v4769, %v4785
        %v4802 = vmul.f32 %v4770, %v4786
        %v4803 = vmul.f32 %v4771, %v4787
        %v4804 = vmul.f32 %v4772, %v4788
        %v4805 = vmul.f32 %v4773, %v4789
        %v4806 = vmul.f32 %v4774, %v4790
        %v4807 = vmul.f32 %v4775, %v4791
        %v4808 = vmul.f32 %v4776, %v4792
        %v4809 = vmul.f32 %v4777, %v4793
        %v4810 = vsub.f32 1.0, %v4648
        %v4811 = vsub.f32 1.0, %v4649
        %v4812 = vsub.f32 1.0, %v4650
        %v4813 = vsub.f32 1.0, %v4651
        %v4814 = vsub.f32 1.0, %v4652
        %v4815 = vsub.f32 1.0, %v4653
        %v4816 = vsub.f32 1.0, %v4654
        %v4817 = vsub.f32 1.0, %v4655
        %v4818 = vsub.f32 1.0, %v4656
        %v4819 = vsub.f32 1.0, %v4657
        %v4820 = vsub.f32 1.0, %v4658
        %v4821 = vsub.f32 1.0, %v4659
        %v4822 = vsub.f32 1.0, %v4660
        %v4823 = vsub.f32 1.0, %v4661
        %v4824 = vsub.f32 1.0, %v4662
        %v4825 = vsub.f32 1.0, %v4663
        %v4826 = vadd.f32 %v4810, %v4672
        %v4827 = vadd.f32 %v4811, %v4673
        %v4828 = vadd.f32 %v4812, %v4674
        %v4829 = vadd.f32 %v4813, %v4675
        %v4830 = vadd.f32 %v4814, %v4676
        %v4831 = vadd.f32 %v4815, %v4677
        %v4832 = vadd.f32 %v4816, %v4678
        %v4833 = vadd.f32 %v4817, %v4679
        %v4834 = vadd.f32 %v4818, %v4680
        %v4835 = vadd.f32 %v4819, %v4681
        %v4836 = vadd.f32 %v4820, %v4682
        %v4837 = vadd.f32 %v4821, %v4683
        %v4838 = vadd.f32 %v4822, %v4684
        %v4839 = vadd.f32 %v4823, %v4685
        %v4840 = vadd.f32 %v4824, %v4686
        %v4841 = vadd.f32 %v4825, %v4687
        %v4842 = vmul.f32 %v4826, 0.25
        %v4843 = vmul.f32 %v4827, 0.25
        %v4844 = vmul.f32 %v4828, 0.25
        %v4845 = vmul.f32 %v4829, 0.25
        %v4846 = vmul.f32 %v4830, 0.25
        %v4847 = vmul.f32 %v4831, 0.25
        %v4848 = vmul.f32 %v4832, 0.25
        %v4849 = vmul.f32 %v4833, 0.25
        %v4850 = vmul.f32 %v4834, 0.25
        %v4851 = vmul.f32 %v4835, 0.25
        %v4852 = vmul.f32 %v4836, 0.25
        %v4853 = vmul.f32 %v4837, 0.25
        %v4854 = vmul.f32 %v4838, 0.25
        %v4855 = vmul.f32 %v4839, 0.25
        %v4856 = vmul.f32 %v4840, 0.25
        %v4857 = vmul.f32 %v4841, 0.25
        %v4858 = vsub.f32 1.0, %v4722
        %v4859 = vsub.f32 1.0, %v4723
        %v4860 = vsub.f32 1.0, %v4724
        %v4861 = vsub.f32 1.0, %v4725
        %v4862 = vsub.f32 1.0, %v4726
        %v4863 = vsub.f32 1.0, %v4727
        %v4864 = vsub.f32 1.0, %v4728
        %v4865 = vsub.f32 1.0, %v4729
        %v4866 = vsub.f32 1.0, %v4730
        %v4867 = vsub.f32 1.0, %v4731
        %v4868 = vsub.f32 1.0, %v4732
        %v4869 = vsub.f32 1.0, %v4733
        %v4870 = vsub.f32 1.0, %v4734
        %v4871 = vsub.f32 1.0, %v4735
        %v4872 = vsub.f32 1.0, %v4736
        %v4873 = vsub.f32 1.0, %v4737
        %v4874 = vadd.f32 %v4858, %v4697
        %v4875 = vadd.f32 %v4859, %v4698
        %v4876 = vadd.f32 %v4860, %v4699
        %v4877 = vadd.f32 %v4861, %v4700
        %v4878 = vadd.f32 %v4862, %v4701
        %v4879 = vadd.f32 %v4863, %v4702
        %v4880 = vadd.f32 %v4864, %v4703
        %v4881 = vadd.f32 %v4865, %v4704
        %v4882 = vadd.f32 %v4866, %v4705
        %v4883 = vadd.f32 %v4867, %v4706
        %v4884 = vadd.f32 %v4868, %v4707
        %v4885 = vadd.f32 %v4869, %v4708
        %v4886 = vadd.f32 %v4870, %v4709
        %v4887 = vadd.f32 %v4871, %v4710
        %v4888 = vadd.f32 %v4872, %v4711
        %v4889 = vadd.f32 %v4873, %v4712
        %v4890 = vmul.f32 %v4842, %v4874
        %v4891 = vmul.f32 %v4843, %v4875
        %v4892 = vmul.f32 %v4844, %v4876
        %v4893 = vmul.f32 %v4845, %v4877
        %v4894 = vmul.f32 %v4846, %v4878
        %v4895 = vmul.f32 %v4847, %v4879
        %v4896 = vmul.f32 %v4848, %v4880
        %v4897 = vmul.f32 %v4849, %v4881
        %v4898 = vmul.f32 %v4850, %v4882
        %v4899 = vmul.f32 %v4851, %v4883
        %v4900 = vmul.f32 %v4852, %v4884
        %v4901 = vmul.f32 %v4853, %v4885
        %v4902 = vmul.f32 %v4854, %v4886
        %v4903 = vmul.f32 %v4855, %v4887
        %v4904 = vmul.f32 %v4856, %v4888
        %v4905 = vmul.f32 %v4857, %v4889
        %v4906 = vsub.f32 1.0, %v4746
        %v4907 = vsub.f32 1.0, %v4747
        %v4908 = vsub.f32 1.0, %v4748
        %v4909 = vsub.f32 1.0, %v4749
        %v4910 = vsub.f32 1.0, %v4750
        %v4911 = vsub.f32 1.0, %v4751
        %v4912 = vsub.f32 1.0, %v4752
        %v4913 = vsub.f32 1.0, %v4753
        %v4914 = vsub.f32 1.0, %v4754
        %v4915 = vsub.f32 1.0, %v4755
        %v4916 = vsub.f32 1.0, %v4756
        %v4917 = vsub.f32 1.0, %v4757
        %v4918 = vsub.f32 1.0, %v4758
        %v4919 = vsub.f32 1.0, %v4759
        %v4920 = vsub.f32 1.0, %v4760
        %v4921 = vsub.f32 1.0, %v4761
        %v4922 = vmul.f32 %v4890, %v4906
        %v4923 = vmul.f32 %v4891, %v4907
        %v4924 = vmul.f32 %v4892, %v4908
        %v4925 = vmul.f32 %v4893, %v4909
        %v4926 = vmul.f32 %v4894, %v4910
        %v4927 = vmul.f32 %v4895, %v4911
        %v4928 = vmul.f32 %v4896, %v4912
        %v4929 = vmul.f32 %v4897, %v4913
        %v4930 = vmul.f32 %v4898, %v4914
        %v4931 = vmul.f32 %v4899, %v4915
        %v4932 = vmul.f32 %v4900, %v4916
        %v4933 = vmul.f32 %v4901, %v4917
        %v4934 = vmul.f32 %v4902, %v4918
        %v4935 = vmul.f32 %v4903, %v4919
        %v4936 = vmul.f32 %v4904, %v4920
        %v4937 = vmul.f32 %v4905, %v4921
        %v4938 = vmul.f32 %v4922, %v4794
        %v4939 = vmul.f32 %v4923, %v4795
        %v4940 = vmul.f32 %v4924, %v4796
        %v4941 = vmul.f32 %v4925, %v4797
        %v4942 = vmul.f32 %v4926, %v4798
        %v4943 = vmul.f32 %v4927, %v4799
        %v4944 = vmul.f32 %v4928, %v4800
        %v4945 = vmul.f32 %v4929, %v4801
        %v4946 = vmul.f32 %v4930, %v4802
        %v4947 = vmul.f32 %v4931, %v4803
        %v4948 = vmul.f32 %v4932, %v4804
        %v4949 = vmul.f32 %v4933, %v4805
        %v4950 = vmul.f32 %v4934, %v4806
        %v4951 = vmul.f32 %v4935, %v4807
        %v4952 = vmul.f32 %v4936, %v4808
        %v4953 = vmul.f32 %v4937, %v4809
        %v4954 = vmax.f32 %v4938, 0.0
        %v4955 = vmax.f32 %v4939, 0.0
        %v4956 = vmax.f32 %v4940, 0.0
        %v4957 = vmax.f32 %v4941, 0.0
        %v4958 = vmax.f32 %v4942, 0.0
        %v4959 = vmax.f32 %v4943, 0.0
        %v4960 = vmax.f32 %v4944, 0.0
        %v4961 = vmax.f32 %v4945, 0.0
        %v4962 = vmax.f32 %v4946, 0.0
        %v4963 = vmax.f32 %v4947, 0.0
        %v4964 = vmax.f32 %v4948, 0.0
        %v4965 = vmax.f32 %v4949, 0.0
        %v4966 = vmax.f32 %v4950, 0.0
        %v4967 = vmax.f32 %v4951, 0.0
        %v4968 = vmax.f32 %v4952, 0.0
        %v4969 = vmax.f32 %v4953, 0.0
        %v4970 = vmin.f32 %v4954, 1.0
        %v4971 = vmin.f32 %v4955, 1.0
        %v4972 = vmin.f32 %v4956, 1.0
        %v4973 = vmin.f32 %v4957, 1.0
        %v4974 = vmin.f32 %v4958, 1.0
        %v4975 = vmin.f32 %v4959, 1.0
        %v4976 = vmin.f32 %v4960, 1.0
        %v4977 = vmin.f32 %v4961, 1.0
        %v4978 = vmin.f32 %v4962, 1.0
        %v4979 = vmin.f32 %v4963, 1.0
        %v4980 = vmin.f32 %v4964, 1.0
        %v4981 = vmin.f32 %v4965, 1.0
        %v4982 = vmin.f32 %v4966, 1.0
        %v4983 = vmin.f32 %v4967, 1.0
        %v4984 = vmin.f32 %v4968, 1.0
        %v4985 = vmin.f32 %v4969, 1.0
        %v4986 = vpack.c.bf16 %v4971, %v4970
        %v4987 = vpack.c.bf16 %v4973, %v4972
        %v4988 = vpack.c.bf16 %v4975, %v4974
        %v4989 = vpack.c.bf16 %v4977, %v4976
        %v4990 = vpack.c.bf16 %v4979, %v4978
        %v4991 = vpack.c.bf16 %v4981, %v4980
        %v4992 = vpack.c.bf16 %v4983, %v4982
        %v4993 = vpack.c.bf16 %v4985, %v4984
        %4994 = vst [vmem:[%s485] sm:$0xff] %v4986
        %4995 = vst [vmem:[%s485 + $0x8] sm:$0xff] %v4987
        %4996 = vst [vmem:[%s485 + $0x10] sm:$0xff] %v4988
        %4997 = vst [vmem:[%s485 + $0x18] sm:$0xff] %v4989
        %4998 = vst [vmem:[%s485 + $0x20] sm:$0xff] %v4990
        %4999 = vst [vmem:[%s485 + $0x28] sm:$0xff] %v4991
        %5000 = vst [vmem:[%s485 + $0x30] sm:$0xff] %v4992
        %5001 = vst [vmem:[%s485 + $0x38] sm:$0xff] %v4993
        %vm5002 = vcmp.lt.f32.partialorder %v4490, 0.5
        %vm5003 = vcmp.lt.f32.partialorder %v4491, 0.5
        %vm5004 = vcmp.lt.f32.partialorder %v4492, 0.5
        %vm5005 = vcmp.lt.f32.partialorder %v4493, 0.5
        %vm5006 = vcmp.lt.f32.partialorder %v4494, 0.5
        %vm5007 = vcmp.lt.f32.partialorder %v4495, 0.5
        %vm5008 = vcmp.lt.f32.partialorder %v4496, 0.5
        %vm5009 = vcmp.lt.f32.partialorder %v4497, 0.5
        %vm5010 = vcmp.lt.f32.partialorder %v4498, 0.5
        %vm5011 = vcmp.lt.f32.partialorder %v4499, 0.5
        %vm5012 = vcmp.lt.f32.partialorder %v4500, 0.5
        %vm5013 = vcmp.lt.f32.partialorder %v4501, 0.5
        %vm5014 = vcmp.lt.f32.partialorder %v4502, 0.5
        %vm5015 = vcmp.lt.f32.partialorder %v4503, 0.5
        %vm5016 = vcmp.lt.f32.partialorder %v4504, 0.5
        %vm5017 = vcmp.lt.f32.partialorder %v4505, 0.5
        %vm5018 = vcmp.lt.f32.partialorder %v4554, 0.5
        %vm5019 = vcmp.lt.f32.partialorder %v4555, 0.5
        %vm5020 = vcmp.lt.f32.partialorder %v4556, 0.5
        %vm5021 = vcmp.lt.f32.partialorder %v4557, 0.5
        %vm5022 = vcmp.lt.f32.partialorder %v4558, 0.5
        %vm5023 = vcmp.lt.f32.partialorder %v4559, 0.5
        %vm5024 = vcmp.lt.f32.partialorder %v4560, 0.5
        %vm5025 = vcmp.lt.f32.partialorder %v4561, 0.5
        %vm5026 = vcmp.lt.f32.partialorder %v4562, 0.5
        %vm5027 = vcmp.lt.f32.partialorder %v4563, 0.5
        %vm5028 = vcmp.lt.f32.partialorder %v4564, 0.5
        %vm5029 = vcmp.lt.f32.partialorder %v4565, 0.5
        %vm5030 = vcmp.lt.f32.partialorder %v4566, 0.5
        %vm5031 = vcmp.lt.f32.partialorder %v4567, 0.5
        %vm5032 = vcmp.lt.f32.partialorder %v4568, 0.5
        %vm5033 = vcmp.lt.f32.partialorder %v4569, 0.5
        %vm5034 = vmand %vm5002, %vm5018
        %vm5035 = vmand %vm5003, %vm5019
        %vm5036 = vmand %vm5004, %vm5020
        %vm5037 = vmand %vm5005, %vm5021
        %vm5038 = vmand %vm5006, %vm5022
        %vm5039 = vmand %vm5007, %vm5023
        %vm5040 = vmand %vm5008, %vm5024
        %vm5041 = vmand %vm5009, %vm5025
        %vm5042 = vmand %vm5010, %vm5026
        %vm5043 = vmand %vm5011, %vm5027
        %vm5044 = vmand %vm5012, %vm5028
        %vm5045 = vmand %vm5013, %vm5029
        %vm5046 = vmand %vm5014, %vm5030
        %vm5047 = vmand %vm5015, %vm5031
        %vm5048 = vmand %vm5016, %vm5032
        %vm5049 = vmand %vm5017, %vm5033
        %vm5050 = vcmp.lt.f32.partialorder %v4648, 0.5
        %vm5051 = vcmp.lt.f32.partialorder %v4649, 0.5
        %vm5052 = vcmp.lt.f32.partialorder %v4650, 0.5
        %vm5053 = vcmp.lt.f32.partialorder %v4651, 0.5
        %vm5054 = vcmp.lt.f32.partialorder %v4652, 0.5
        %vm5055 = vcmp.lt.f32.partialorder %v4653, 0.5
        %vm5056 = vcmp.lt.f32.partialorder %v4654, 0.5
        %vm5057 = vcmp.lt.f32.partialorder %v4655, 0.5
        %vm5058 = vcmp.lt.f32.partialorder %v4656, 0.5
        %vm5059 = vcmp.lt.f32.partialorder %v4657, 0.5
        %vm5060 = vcmp.lt.f32.partialorder %v4658, 0.5
        %vm5061 = vcmp.lt.f32.partialorder %v4659, 0.5
        %vm5062 = vcmp.lt.f32.partialorder %v4660, 0.5
        %vm5063 = vcmp.lt.f32.partialorder %v4661, 0.5
        %vm5064 = vcmp.lt.f32.partialorder %v4662, 0.5
        %vm5065 = vcmp.lt.f32.partialorder %v4663, 0.5
        %vm5066 = vcmp.lt.f32.partialorder %v4722, 0.5
        %vm5067 = vcmp.lt.f32.partialorder %v4723, 0.5
        %vm5068 = vcmp.lt.f32.partialorder %v4724, 0.5
        %vm5069 = vcmp.lt.f32.partialorder %v4725, 0.5
        %vm5070 = vcmp.lt.f32.partialorder %v4726, 0.5
        %vm5071 = vcmp.lt.f32.partialorder %v4727, 0.5
        %vm5072 = vcmp.lt.f32.partialorder %v4728, 0.5
        %vm5073 = vcmp.lt.f32.partialorder %v4729, 0.5
        %vm5074 = vcmp.lt.f32.partialorder %v4730, 0.5
        %vm5075 = vcmp.lt.f32.partialorder %v4731, 0.5
        %vm5076 = vcmp.lt.f32.partialorder %v4732, 0.5
        %vm5077 = vcmp.lt.f32.partialorder %v4733, 0.5
        %vm5078 = vcmp.lt.f32.partialorder %v4734, 0.5
        %vm5079 = vcmp.lt.f32.partialorder %v4735, 0.5
        %vm5080 = vcmp.lt.f32.partialorder %v4736, 0.5
        %vm5081 = vcmp.lt.f32.partialorder %v4737, 0.5
        %vm5082 = vmand %vm5050, %vm5066
        %vm5083 = vmand %vm5051, %vm5067
        %vm5084 = vmand %vm5052, %vm5068
        %vm5085 = vmand %vm5053, %vm5069
        %vm5086 = vmand %vm5054, %vm5070
        %vm5087 = vmand %vm5055, %vm5071
        %vm5088 = vmand %vm5056, %vm5072
        %vm5089 = vmand %vm5057, %vm5073
        %vm5090 = vmand %vm5058, %vm5074
        %vm5091 = vmand %vm5059, %vm5075
        %vm5092 = vmand %vm5060, %vm5076
        %vm5093 = vmand %vm5061, %vm5077
        %vm5094 = vmand %vm5062, %vm5078
        %vm5095 = vmand %vm5063, %vm5079
        %vm5096 = vmand %vm5064, %vm5080
        %vm5097 = vmand %vm5065, %vm5081
        %vm5098 = vcmp.lt.f32.partialorder %v4746, 0.5
        %vm5099 = vcmp.lt.f32.partialorder %v4747, 0.5
        %vm5100 = vcmp.lt.f32.partialorder %v4748, 0.5
        %vm5101 = vcmp.lt.f32.partialorder %v4749, 0.5
        %vm5102 = vcmp.lt.f32.partialorder %v4750, 0.5
        %vm5103 = vcmp.lt.f32.partialorder %v4751, 0.5
        %vm5104 = vcmp.lt.f32.partialorder %v4752, 0.5
        %vm5105 = vcmp.lt.f32.partialorder %v4753, 0.5
        %vm5106 = vcmp.lt.f32.partialorder %v4754, 0.5
        %vm5107 = vcmp.lt.f32.partialorder %v4755, 0.5
        %vm5108 = vcmp.lt.f32.partialorder %v4756, 0.5
        %vm5109 = vcmp.lt.f32.partialorder %v4757, 0.5
        %vm5110 = vcmp.lt.f32.partialorder %v4758, 0.5
        %vm5111 = vcmp.lt.f32.partialorder %v4759, 0.5
        %vm5112 = vcmp.lt.f32.partialorder %v4760, 0.5
        %vm5113 = vcmp.lt.f32.partialorder %v4761, 0.5
        %vm5114 = vmand %vm5082, %vm5098
        %vm5115 = vmand %vm5083, %vm5099
        %vm5116 = vmand %vm5084, %vm5100
        %vm5117 = vmand %vm5085, %vm5101
        %vm5118 = vmand %vm5086, %vm5102
        %vm5119 = vmand %vm5087, %vm5103
        %vm5120 = vmand %vm5088, %vm5104
        %vm5121 = vmand %vm5089, %vm5105
        %vm5122 = vmand %vm5090, %vm5106
        %vm5123 = vmand %vm5091, %vm5107
        %vm5124 = vmand %vm5092, %vm5108
        %vm5125 = vmand %vm5093, %vm5109
        %vm5126 = vmand %vm5094, %vm5110
        %vm5127 = vmand %vm5095, %vm5111
        %vm5128 = vmand %vm5096, %vm5112
        %vm5129 = vmand %vm5097, %vm5113
        %v5130 = vsel %vm5034, 1, 0
        %v5131 = vsel %vm5035, 1, 0
        %v5132 = vsel %vm5036, 1, 0
        %v5133 = vsel %vm5037, 1, 0
        %v5134 = vsel %vm5038, 1, 0
        %v5135 = vsel %vm5039, 1, 0
        %v5136 = vsel %vm5040, 1, 0
        %v5137 = vsel %vm5041, 1, 0
        %v5138 = vsel %vm5042, 1, 0
        %v5139 = vsel %vm5043, 1, 0
        %v5140 = vsel %vm5044, 1, 0
        %v5141 = vsel %vm5045, 1, 0
        %v5142 = vsel %vm5046, 1, 0
        %v5143 = vsel %vm5047, 1, 0
        %v5144 = vsel %vm5048, 1, 0
        %v5145 = vsel %vm5049, 1, 0
        %vm5146 = vcmp.eq.s32.totalorder %v5130, 1
        %vm5147 = vcmp.eq.s32.totalorder %v5131, 1
        %vm5148 = vcmp.eq.s32.totalorder %v5132, 1
        %vm5149 = vcmp.eq.s32.totalorder %v5133, 1
        %vm5150 = vcmp.eq.s32.totalorder %v5134, 1
        %vm5151 = vcmp.eq.s32.totalorder %v5135, 1
        %vm5152 = vcmp.eq.s32.totalorder %v5136, 1
        %vm5153 = vcmp.eq.s32.totalorder %v5137, 1
        %vm5154 = vcmp.eq.s32.totalorder %v5138, 1
        %vm5155 = vcmp.eq.s32.totalorder %v5139, 1
        %vm5156 = vcmp.eq.s32.totalorder %v5140, 1
        %vm5157 = vcmp.eq.s32.totalorder %v5141, 1
        %vm5158 = vcmp.eq.s32.totalorder %v5142, 1
        %vm5159 = vcmp.eq.s32.totalorder %v5143, 1
        %vm5160 = vcmp.eq.s32.totalorder %v5144, 1
        %vm5161 = vcmp.eq.s32.totalorder %v5145, 1
        %vm5162 = vmand %vm5114, %vm5146
        %vm5163 = vmand %vm5115, %vm5147
        %vm5164 = vmand %vm5116, %vm5148
        %vm5165 = vmand %vm5117, %vm5149
        %vm5166 = vmand %vm5118, %vm5150
        %vm5167 = vmand %vm5119, %vm5151
        %vm5168 = vmand %vm5120, %vm5152
        %vm5169 = vmand %vm5121, %vm5153
        %vm5170 = vmand %vm5122, %vm5154
        %vm5171 = vmand %vm5123, %vm5155
        %vm5172 = vmand %vm5124, %vm5156
        %vm5173 = vmand %vm5125, %vm5157
        %vm5174 = vmand %vm5126, %vm5158
        %vm5175 = vmand %vm5127, %vm5159
        %vm5176 = vmand %vm5128, %vm5160
        %vm5177 = vmand %vm5129, %vm5161
        %vm5178 = vmpackc.low %vm5163, %vm5162
        %vm5179 = vmpackc.low %vm5165, %vm5164
        %vm5180 = vmpackc.even %vm5179, %vm5178
        %vm5181 = vmpackc.low %vm5167, %vm5166
        %vm5182 = vmpackc.low %vm5169, %vm5168
        %vm5183 = vmpackc.even %vm5182, %vm5181
        %vm5184 = vmpackc.low %vm5171, %vm5170
        %vm5185 = vmpackc.low %vm5173, %vm5172
        %vm5186 = vmpackc.even %vm5185, %vm5184
        %vm5187 = vmpackc.low %vm5175, %vm5174
        %vm5188 = vmpackc.low %vm5177, %vm5176
        %vm5189 = vmpackc.even %vm5188, %vm5187
        %v5190 = vsel %vm5180, 16843009, 0
        %v5191 = vsel %vm5183, 16843009, 0
        %v5192 = vsel %vm5186, 16843009, 0
        %v5193 = vsel %vm5189, 16843009, 0
        %5194 = vst [vmem:[%s492] sm:$0xff] %v5190
        %5195 = vst [vmem:[%s492 + $0x8] sm:$0xff] %v5191
        %5196 = vst [vmem:[%s492 + $0x10] sm:$0xff] %v5192
        %5197 = vst [vmem:[%s492 + $0x18] sm:$0xff] %v5193
        %s5198 = sand.u32 %s119, 1
        %s5199 = scalar_lea.sflag [#allocation8], %s5198
        %s5200 = sand.u32 %s119, 1
        %s5201 = smul.addr %s5200, 1280
        %s5202 = scalar_lea.vmem [#allocation11], %s5201
        %s5203 = sand.u32 %s48, 1
        %s5204 = scalar_lea.sflag [#allocation13], %s5203
        %s5205 = sand.u32 %s147, 1
        %s5206 = smul.addr %s5205, 320
        %s5207 = scalar_lea.vmem [#allocation12], %s5206
        %s5208 = sand.u32 %s48, 1
        %s5209 = scalar_lea.sflag [#allocation13], %s5208
        %s5210 = sand.u32 %s175, 1
        %s5211 = smul.addr %s5210, 320
        %s5212 = scalar_lea.vmem [#allocation14], %s5211
        %s5213 = sand.u32 %s48, 1
        %s5214 = scalar_lea.sflag [#allocation16], %s5213
        %s5215 = sand.u32 %s203, 1
        %s5216 = smul.addr %s5215, 320
        %s5217 = scalar_lea.vmem [#allocation15], %s5216
        %s5218 = sand.u32 %s48, 1
        %s5219 = scalar_lea.sflag [#allocation16], %s5218
        %s5220 = sand.u32 %s231, 1
        %s5221 = smul.addr %s5220, 192
        %s5222 = scalar_lea.vmem [#allocation17], %s5221
        %s5223 = sand.u32 %s48, 1
        %s5224 = scalar_lea.sflag [#allocation19], %s5223
        %s5225 = sand.u32 %s259, 1
        %s5226 = smul.addr %s5225, 128
        %s5227 = scalar_lea.vmem [#allocation18], %s5226
        %s5228 = sand.u32 %s48, 1
        %s5229 = scalar_lea.sflag [#allocation19], %s5228
        %s5230 = sand.u32 %s287, 1
        %s5231 = smul.addr %s5230, 64
        %s5232 = scalar_lea.vmem [#allocation20], %s5231
        %s5233 = sand.u32 %s315, 1
        %s5234 = scalar_lea.sflag [#allocation22], %s5233
        %s5235 = sand.u32 %s315, 1
        %s5236 = smul.addr %s5235, 32
        %s5237 = scalar_lea.vmem [#allocation21], %s5236
        // Predicated region
        $region37: #{tpu_custom_call.1} parent=27 // pred_check
          %p5238 = pneg %p129
        $region38: #{tpu_custom_call.1} parent=27 // pred_check_branch
          %5240 = sbr.rel (%p5238) target = $region40
        $region39: #{tpu_custom_call.1} parent=27 // pred_region
          #allocation26 [shape = 'u32[6]{0}', space=smem, size = 0x18, scoped, tag = 'DMA stride descriptor']
          %s5241 = smul.u32 16, %s53
          %s5243 = ssub.s32 20480, 20480
          %5244 = vsyncadd %s5199, %s5243
          %s5245 = smul.addr %s52, 32
          %s5246 = sadd.s32 %s5241, %s5245
          %s5247 = smul.addr %s5246, 128
          %s5248 = scalar_lea.hbm %s4, %s5247
          %s5250 = sshll.u32 1, 14
          %s5251 = sxor.u32 4294967295, %s5250
          %s5254 = sshll.u32 7, 18
          %s5255 = sxor.u32 4294967295, %s5254
          %s5256 = sand.u32 0, %s5255
          %s5258 = sor.u32 %s5256, 0
          %s5260 = sshll.u32 3, 24
          %s5261 = sxor.u32 4294967295, %s5260
          %s5262 = sand.u32 %s5258, %s5261
          %s5264 = sor.u32 %s5262, 0
          %s5265 = sshll.u32 %s5202, 4
          %s5266 = int_to_ptr.vmem [resolvable:$true] %s5265
          %5272 = sst [smem:[#allocation26]] 2048
          %s5273 = scalar_lea.smem [#allocation26], 1
          %5274 = sst [smem:[%s5273]] 8192
          %s5275 = scalar_lea.smem [#allocation26], 2
          %5276 = sst [smem:[%s5275]] 16
          %s5277 = scalar_lea.smem [#allocation26], 3
          %5278 = sst [smem:[%s5277]] 128
          %s5279 = scalar_lea.smem [#allocation26], 4
          %5280 = sst [smem:[%s5279]] 128
          %s5281 = scalar_lea.smem [#allocation26], 5
          %5282 = sst [smem:[%s5281]] 8
          %5284 = dma.general %s5266, 20480, %s5248, %s5199, [#allocation25], [#allocation26], %s5264, 0
        $region40: #{tpu_custom_call.1} parent=27 // pred_fallthru
          _
        // Predicated region
        $region41: #{tpu_custom_call.1} parent=27 // pred_check
          %p5285 = pneg %p157
        $region42: #{tpu_custom_call.1} parent=27 // pred_check_branch
          %5287 = sbr.rel (%p5285) target = $region44
        $region43: #{tpu_custom_call.1} parent=27 // pred_region
          #allocation28 [shape = 'u32[6]{0}', space=smem, size = 0x18, scoped, tag = 'DMA stride descriptor']
          %s5288 = smul.u32 8, %s53
          %s5290 = ssub.s32 5120, 5120
          %5291 = vsyncadd %s5204, %s5290
          %s5292 = smul.addr %s52, 16
          %s5293 = sadd.s32 %s5288, %s5292
          %s5294 = smul.addr %s5293, 128
          %s5295 = scalar_lea.hbm %s5, %s5294
          %s5297 = sshll.u32 1, 14
          %s5298 = sxor.u32 4294967295, %s5297
          %s5301 = sshll.u32 7, 18
          %s5302 = sxor.u32 4294967295, %s5301
          %s5303 = sand.u32 0, %s5302
          %s5305 = sor.u32 %s5303, 0
          %s5307 = sshll.u32 3, 24
          %s5308 = sxor.u32 4294967295, %s5307
          %s5309 = sand.u32 %s5305, %s5308
          %s5311 = sor.u32 %s5309, 0
          %s5312 = sshll.u32 %s5207, 4
          %s5313 = int_to_ptr.vmem [resolvable:$true] %s5312
          %5319 = sst [smem:[#allocation28]] 1024
          %s5320 = scalar_lea.smem [#allocation28], 1
          %5321 = sst [smem:[%s5320]] 4096
          %s5322 = scalar_lea.smem [#allocation28], 2
          %5323 = sst [smem:[%s5322]] 8
          %s5324 = scalar_lea.smem [#allocation28], 3
          %5325 = sst [smem:[%s5324]] 128
          %s5326 = scalar_lea.smem [#allocation28], 4
          %5327 = sst [smem:[%s5326]] 128
          %s5328 = scalar_lea.smem [#allocation28], 5
          %5329 = sst [smem:[%s5328]] 8
          %5331 = dma.general %s5313, 5120, %s5295, %s5204, [#allocation27], [#allocation28], %s5311, 0
        $region44: #{tpu_custom_call.1} parent=27 // pred_fallthru
          _
        // Predicated region
        $region45: #{tpu_custom_call.1} parent=27 // pred_check
          %p5332 = pneg %p185
        $region46: #{tpu_custom_call.1} parent=27 // pred_check_branch
          %5334 = sbr.rel (%p5332) target = $region48
        $region47: #{tpu_custom_call.1} parent=27 // pred_region
          #allocation30 [shape = 'u32[6]{0}', space=smem, size = 0x18, scoped, tag = 'DMA stride descriptor']
          %s5335 = smul.u32 8, %s53
          %s5337 = ssub.s32 5120, 5120
          %5338 = vsyncadd %s5209, %s5337
          %s5339 = smul.addr %s52, 16
          %s5340 = sadd.s32 %s5335, %s5339
          %s5341 = smul.addr %s5340, 128
          %s5342 = scalar_lea.hbm %s6, %s5341
          %s5344 = sshll.u32 1, 14
          %s5345 = sxor.u32 4294967295, %s5344
          %s5348 = sshll.u32 7, 18
          %s5349 = sxor.u32 4294967295, %s5348
          %s5350 = sand.u32 0, %s5349
          %s5352 = sor.u32 %s5350, 0
          %s5354 = sshll.u32 3, 24
          %s5355 = sxor.u32 4294967295, %s5354
          %s5356 = sand.u32 %s5352, %s5355
          %s5358 = sor.u32 %s5356, 0
          %s5359 = sshll.u32 %s5212, 4
          %s5360 = int_to_ptr.vmem [resolvable:$true] %s5359
          %5366 = sst [smem:[#allocation30]] 1024
          %s5367 = scalar_lea.smem [#allocation30], 1
          %5368 = sst [smem:[%s5367]] 4096
          %s5369 = scalar_lea.smem [#allocation30], 2
          %5370 = sst [smem:[%s5369]] 8
          %s5371 = scalar_lea.smem [#allocation30], 3
          %5372 = sst [smem:[%s5371]] 128
          %s5373 = scalar_lea.smem [#allocation30], 4
          %5374 = sst [smem:[%s5373]] 128
          %s5375 = scalar_lea.smem [#allocation30], 5
          %5376 = sst [smem:[%s5375]] 8
          %5378 = dma.general %s5360, 5120, %s5342, %s5209, [#allocation29], [#allocation30], %s5358, 0
        $region48: #{tpu_custom_call.1} parent=27 // pred_fallthru
          _
        // Predicated region
        $region49: #{tpu_custom_call.1} parent=27 // pred_check
          %p5379 = pneg %p213
        $region50: #{tpu_custom_call.1} parent=27 // pred_check_branch
          %5381 = sbr.rel (%p5379) target = $region52
        $region51: #{tpu_custom_call.1} parent=27 // pred_region
          #allocation32 [shape = 'u32[6]{0}', space=smem, size = 0x18, scoped, tag = 'DMA stride descriptor']
          %s5382 = smul.u32 8, %s53
          %s5384 = ssub.s32 5120, 5120
          %5385 = vsyncadd %s5214, %s5384
          %s5386 = smul.addr %s52, 16
          %s5387 = sadd.s32 %s5382, %s5386
          %s5388 = smul.addr %s5387, 128
          %s5389 = scalar_lea.hbm %s7, %s5388
          %s5391 = sshll.u32 1, 14
          %s5392 = sxor.u32 4294967295, %s5391
          %s5395 = sshll.u32 7, 18
          %s5396 = sxor.u32 4294967295, %s5395
          %s5397 = sand.u32 0, %s5396
          %s5399 = sor.u32 %s5397, 0
          %s5401 = sshll.u32 3, 24
          %s5402 = sxor.u32 4294967295, %s5401
          %s5403 = sand.u32 %s5399, %s5402
          %s5405 = sor.u32 %s5403, 0
          %s5406 = sshll.u32 %s5217, 4
          %s5407 = int_to_ptr.vmem [resolvable:$true] %s5406
          %5413 = sst [smem:[#allocation32]] 1024
          %s5414 = scalar_lea.smem [#allocation32], 1
          %5415 = sst [smem:[%s5414]] 4096
          %s5416 = scalar_lea.smem [#allocation32], 2
          %5417 = sst [smem:[%s5416]] 8
          %s5418 = scalar_lea.smem [#allocation32], 3
          %5419 = sst [smem:[%s5418]] 128
          %s5420 = scalar_lea.smem [#allocation32], 4
          %5421 = sst [smem:[%s5420]] 128
          %s5422 = scalar_lea.smem [#allocation32], 5
          %5423 = sst [smem:[%s5422]] 8
          %5425 = dma.general %s5407, 5120, %s5389, %s5214, [#allocation31], [#allocation32], %s5405, 0
        $region52: #{tpu_custom_call.1} parent=27 // pred_fallthru
          _
        // Predicated region
        $region53: #{tpu_custom_call.1} parent=27 // pred_check
          %p5426 = pneg %p241
        $region54: #{tpu_custom_call.1} parent=27 // pred_check_branch
          %5428 = sbr.rel (%p5426) target = $region56
        $region55: #{tpu_custom_call.1} parent=27 // pred_region
          #allocation34 [shape = 'u32[6]{0}', space=smem, size = 0x18, scoped, tag = 'DMA stride descriptor']
          %s5429 = smul.u32 8, %s53
          %s5431 = ssub.s32 3072, 3072
          %5432 = vsyncadd %s5219, %s5431
          %s5433 = smul.addr %s52, 16
          %s5434 = sadd.s32 %s5429, %s5433
          %s5435 = smul.addr %s5434, 128
          %s5436 = scalar_lea.hbm %s8, %s5435
          %s5438 = sshll.u32 1, 14
          %s5439 = sxor.u32 4294967295, %s5438
          %s5442 = sshll.u32 7, 18
          %s5443 = sxor.u32 4294967295, %s5442
          %s5444 = sand.u32 0, %s5443
          %s5446 = sor.u32 %s5444, 0
          %s5448 = sshll.u32 3, 24
          %s5449 = sxor.u32 4294967295, %s5448
          %s5450 = sand.u32 %s5446, %s5449
          %s5452 = sor.u32 %s5450, 0
          %s5453 = sshll.u32 %s5222, 4
          %s5454 = int_to_ptr.vmem [resolvable:$true] %s5453
          %5460 = sst [smem:[#allocation34]] 1024
          %s5461 = scalar_lea.smem [#allocation34], 1
          %5462 = sst [smem:[%s5461]] 4096
          %s5463 = scalar_lea.smem [#allocation34], 2
          %5464 = sst [smem:[%s5463]] 8
          %s5465 = scalar_lea.smem [#allocation34], 3
          %5466 = sst [smem:[%s5465]] 128
          %s5467 = scalar_lea.smem [#allocation34], 4
          %5468 = sst [smem:[%s5467]] 128
          %s5469 = scalar_lea.smem [#allocation34], 5
          %5470 = sst [smem:[%s5469]] 8
          %5472 = dma.general %s5454, 3072, %s5436, %s5219, [#allocation33], [#allocation34], %s5452, 0
        $region56: #{tpu_custom_call.1} parent=27 // pred_fallthru
          _
        // Predicated region
        $region57: #{tpu_custom_call.1} parent=27 // pred_check
          %p5473 = pneg %p269
        $region58: #{tpu_custom_call.1} parent=27 // pred_check_branch
          %5475 = sbr.rel (%p5473) target = $region60
        $region59: #{tpu_custom_call.1} parent=27 // pred_region
          %s5476 = smul.u32 16, %s53
          %s5478 = ssub.s32 2048, 2048
          %5479 = vsyncadd %s5224, %s5478
          %s5480 = smul.addr %s52, 32
          %s5481 = sadd.s32 %s5476, %s5480
          %s5482 = smul.addr %s5481, 128
          %s5483 = scalar_lea.hbm %s9, %s5482
          %s5484 = sshll.u32 %s5227, 4
          %s5485 = int_to_ptr.vmem [resolvable:$true] %s5484
          %5490 = dma.vmem_to_hbm [thread:$0]  %s5485, 2048, %s5483, %s5224, 128, 128, 8
        $region60: #{tpu_custom_call.1} parent=27 // pred_fallthru
          _
        // Predicated region
        $region61: #{tpu_custom_call.1} parent=27 // pred_check
          %p5491 = pneg %p297
        $region62: #{tpu_custom_call.1} parent=27 // pred_check_branch
          %5493 = sbr.rel (%p5491) target = $region64
        $region63: #{tpu_custom_call.1} parent=27 // pred_region
          %s5494 = smul.u32 8, %s53
          %s5496 = ssub.s32 1024, 1024
          %5497 = vsyncadd %s5229, %s5496
          %s5498 = smul.addr %s52, 16
          %s5499 = sadd.s32 %s5494, %s5498
          %s5500 = smul.addr %s5499, 128
          %s5501 = scalar_lea.hbm %s10, %s5500
          %s5502 = sshll.u32 %s5232, 4
          %s5503 = int_to_ptr.vmem [resolvable:$true] %s5502
          %5508 = dma.vmem_to_hbm [thread:$0]  %s5503, 1024, %s5501, %s5229, 128, 128, 8
        $region64: #{tpu_custom_call.1} parent=27 // pred_fallthru
          _
        // Predicated region
        $region65: #{tpu_custom_call.1} parent=27 // pred_check
          %p5509 = pneg %p325
        $region66: #{tpu_custom_call.1} parent=27 // pred_check_branch
          %5511 = sbr.rel (%p5509) target = $region68
        $region67: #{tpu_custom_call.1} parent=27 // pred_region
          %s5512 = smul.u32 4, %s53
          %s5514 = ssub.s32 512, 512
          %5515 = vsyncadd %s5234, %s5514
          %s5516 = smul.addr %s52, 8
          %s5517 = sadd.s32 %s5512, %s5516
          %s5518 = smul.addr %s5517, 128
          %s5519 = scalar_lea.hbm %s11, %s5518
          %s5520 = sshll.u32 %s5237, 4
          %s5521 = int_to_ptr.vmem [resolvable:$true] %s5520
          %5526 = dma.vmem_to_hbm [thread:$0]  %s5521, 512, %s5519, %s5234, 128, 128, 8
        $region68: #{tpu_custom_call.1} parent=27 // pred_fallthru
          _
      $region28: #{tpu_custom_call.1} parent=5 // pred_fallthru
        _
      %p5527 = scmp.le.s32.totalorder 2, %s43
      // Predicated region
      $region69: #{tpu_custom_call.1} parent=5 // pred_check
        %p5528 = pneg %p5527
      $region70: #{tpu_custom_call.1} parent=5 // pred_check_branch
        %5530 = sbr.rel (%p5528) target = $region72
      $region71: #{tpu_custom_call.1} parent=5 // pred_region
        %s5531 = ssub.s32 %s43, 2
        // Predicated region
        $region73: #{tpu_custom_call.1} parent=71 // pred_check
          %p5532 = pneg %p135
        $region74: #{tpu_custom_call.1} parent=71 // pred_check_branch
          %5534 = sbr.rel (%p5532) target = $region76
        $region75: #{tpu_custom_call.1} parent=71 // pred_region
          %s5535 = sand.u32 %s120, 1
          %s5536 = scalar_lea.sflag [#allocation8], %s5535
          %s5537 = sand.u32 %s120, 1
          %s5538 = smul.addr %s5537, 1280
          %s5539 = scalar_lea.vmem [#allocation11], %s5538
          %5540 = dma.done %s5536, 20480
        $region76: #{tpu_custom_call.1} parent=71 // pred_fallthru
          _
        // Predicated region
        $region77: #{tpu_custom_call.1} parent=71 // pred_check
          %p5541 = pneg %p163
        $region78: #{tpu_custom_call.1} parent=71 // pred_check_branch
          %5543 = sbr.rel (%p5541) target = $region80
        $region79: #{tpu_custom_call.1} parent=71 // pred_region
          %s5544 = sand.u32 %s49, 1
          %s5545 = scalar_lea.sflag [#allocation13], %s5544
          %s5546 = sand.u32 %s148, 1
          %s5547 = smul.addr %s5546, 320
          %s5548 = scalar_lea.vmem [#allocation12], %s5547
          %5549 = dma.done %s5545, 5120
        $region80: #{tpu_custom_call.1} parent=71 // pred_fallthru
          _
        // Predicated region
        $region81: #{tpu_custom_call.1} parent=71 // pred_check
          %p5550 = pneg %p191
        $region82: #{tpu_custom_call.1} parent=71 // pred_check_branch
          %5552 = sbr.rel (%p5550) target = $region84
        $region83: #{tpu_custom_call.1} parent=71 // pred_region
          %s5553 = sand.u32 %s49, 1
          %s5554 = scalar_lea.sflag [#allocation13], %s5553
          %s5555 = sand.u32 %s176, 1
          %s5556 = smul.addr %s5555, 320
          %s5557 = scalar_lea.vmem [#allocation14], %s5556
          %5558 = dma.done %s5554, 5120
        $region84: #{tpu_custom_call.1} parent=71 // pred_fallthru
          _
        // Predicated region
        $region85: #{tpu_custom_call.1} parent=71 // pred_check
          %p5559 = pneg %p219
        $region86: #{tpu_custom_call.1} parent=71 // pred_check_branch
          %5561 = sbr.rel (%p5559) target = $region88
        $region87: #{tpu_custom_call.1} parent=71 // pred_region
          %s5562 = sand.u32 %s49, 1
          %s5563 = scalar_lea.sflag [#allocation16], %s5562
          %s5564 = sand.u32 %s204, 1
          %s5565 = smul.addr %s5564, 320
          %s5566 = scalar_lea.vmem [#allocation15], %s5565
          %5567 = dma.done %s5563, 5120
        $region88: #{tpu_custom_call.1} parent=71 // pred_fallthru
          _
        // Predicated region
        $region89: #{tpu_custom_call.1} parent=71 // pred_check
          %p5568 = pneg %p247
        $region90: #{tpu_custom_call.1} parent=71 // pred_check_branch
          %5570 = sbr.rel (%p5568) target = $region92
        $region91: #{tpu_custom_call.1} parent=71 // pred_region
          %s5571 = sand.u32 %s49, 1
          %s5572 = scalar_lea.sflag [#allocation16], %s5571
          %s5573 = sand.u32 %s232, 1
          %s5574 = smul.addr %s5573, 192
          %s5575 = scalar_lea.vmem [#allocation17], %s5574
          %5576 = dma.done %s5572, 3072
        $region92: #{tpu_custom_call.1} parent=71 // pred_fallthru
          _
        // Predicated region
        $region93: #{tpu_custom_call.1} parent=71 // pred_check
          %p5577 = pneg %p275
        $region94: #{tpu_custom_call.1} parent=71 // pred_check_branch
          %5579 = sbr.rel (%p5577) target = $region96
        $region95: #{tpu_custom_call.1} parent=71 // pred_region
          %s5580 = sand.u32 %s49, 1
          %s5581 = scalar_lea.sflag [#allocation19], %s5580
          %s5582 = sand.u32 %s260, 1
          %s5583 = smul.addr %s5582, 128
          %s5584 = scalar_lea.vmem [#allocation18], %s5583
          %5585 = dma.done %s5581, 2048
        $region96: #{tpu_custom_call.1} parent=71 // pred_fallthru
          _
        // Predicated region
        $region97: #{tpu_custom_call.1} parent=71 // pred_check
          %p5586 = pneg %p303
        $region98: #{tpu_custom_call.1} parent=71 // pred_check_branch
          %5588 = sbr.rel (%p5586) target = $region100
        $region99: #{tpu_custom_call.1} parent=71 // pred_region
          %s5589 = sand.u32 %s49, 1
          %s5590 = scalar_lea.sflag [#allocation19], %s5589
          %s5591 = sand.u32 %s288, 1
          %s5592 = smul.addr %s5591, 64
          %s5593 = scalar_lea.vmem [#allocation20], %s5592
          %5594 = dma.done %s5590, 1024
        $region100: #{tpu_custom_call.1} parent=71 // pred_fallthru
          _
        // Predicated region
        $region101: #{tpu_custom_call.1} parent=71 // pred_check
          %p5595 = pneg %p331
        $region102: #{tpu_custom_call.1} parent=71 // pred_check_branch
          %5597 = sbr.rel (%p5595) target = $region104
        $region103: #{tpu_custom_call.1} parent=71 // pred_region
          %s5598 = sand.u32 %s316, 1
          %s5599 = scalar_lea.sflag [#allocation22], %s5598
          %s5600 = sand.u32 %s316, 1
          %s5601 = smul.addr %s5600, 32
          %s5602 = scalar_lea.vmem [#allocation21], %s5601
          %5603 = dma.done %s5599, 512
        $region104: #{tpu_custom_call.1} parent=71 // pred_fallthru
          _
      $region72: #{tpu_custom_call.1} parent=5 // pred_fallthru
        _
    $region6: #{tpu_custom_call.1} parent=1 // loop_footer
      %s47 = sadd.s32 1, %s43
    $region7: #{tpu_custom_call.1} parent=1 // loop_footer_branch
      %42 = sbr.rel target = $region3
    $region8: #{tpu_custom_call.1} parent=1 // loop_exit
      _
    %5604 = vsyncpa [#allocation7], 1
    %s5605 = scalar_lea.sflag [#allocation7], 1
    %5606 = vsyncpa %s5605, 1
    %5607 = vsyncpa [#allocation10], 1
    %5608 = vsyncpa [#allocation8], 1
    %s5609 = scalar_lea.sflag [#allocation8], 1
    %5610 = vsyncpa %s5609, 1
    %5611 = vsyncpa [#allocation13], 1
    %s5612 = scalar_lea.sflag [#allocation13], 1
    %5613 = vsyncpa %s5612, 1
    %5614 = vsyncpa [#allocation16], 1
    %s5615 = scalar_lea.sflag [#allocation16], 1
    %5616 = vsyncpa %s5615, 1
    %5617 = vsyncpa [#allocation19], 1
    %s5618 = scalar_lea.sflag [#allocation19], 1
    %5619 = vsyncpa %s5618, 1
    %5620 = vsyncpa [#allocation22], 1
    %s5621 = scalar_lea.sflag [#allocation22], 1
    %5622 = vsyncpa %s5621, 1

</llo_original>
